<compile_context>
chip_gen: v5e
topology: v5e:2x2
jax: 0.10.0
libtpu: 0.0.40
codegen_flags: <defaults>
</compile_context>

<pallas_src>
import jax
import jax.numpy as jnp
from jax import lax
from jax.experimental import pallas as pl
from jax.experimental.pallas import tpu as pltpu


LAYER_CFG = [  # (in_channels, out_channels, kernel_size) as in the nn.Module
    (1, 16, 11),
    (16, 16, 7),
    (16, 16, 5),
    (16, 16, 3),
    (16, 16, 3),
    (16, 1, 1),
]


# ------------------------------- kernels -------------------------------------
def sparse_conv_kernel(xp_ref, mp_ref, w_ref, b_ref, o_ref, mo_ref):
    """One SparseConv layer on a tile of B*H*W output pixels.

    xp_ref : (TN, K*K*Cin) bf16  im2col patches of (mask * x)
    mp_ref : (TN, K*K)     f32   validity-mask patches (zero padded)
    w_ref  : (K*K*Cin, Cout) bf16 conv weights (HWIO flattened, no bias)
    b_ref  : (1, Cout)     f32   learnable bias
    o_ref  : (TN, Cout)    bf16  layer output x'
    mo_ref : (TN, 1)       f32   max-pooled validity mask
    """
    # conv(validity_mask * x): masking already folded in -> one MXU matmul.
    acc = jnp.dot(xp_ref[...], w_ref[...], preferred_element_type=jnp.float32)
    mp = mp_ref[...]
    # count_valid_entries == ones-kernel conv == sum over taps.
    cnt = jnp.sum(mp, axis=1, keepdims=True)
    norm = pl.reciprocal(cnt + 1e-8, approx=True)          # EUP slot
    y = jnp.maximum(acc * norm + b_ref[...], 0.0)          # bias + ReLU (f32)
    o_ref[...] = y.astype(o_ref.dtype)
    # MaxPool2d(K, stride=1, pad=K//2): mask is binary & non-negative, so the
    # zero-padded patch max equals the -inf-padded max-pool.
    mo_ref[...] = jnp.max(mp, axis=1, keepdims=True)


def sparse_conv_fused_last_kernel(xp_ref, mp_ref, w_ref, b_ref,
                                  w6_ref, b6_ref, o_ref):
    """Layer 5 (3x3, 16->16) with the 1x1 layer 6 (16->1) fused in the epilogue.

    w6_ref : (1, 16) f32  layer-6 1x1 conv weights as a channel row
    b6_ref : (1, 1)  f32  layer-6 bias
    o_ref  : (TN, 1) f32  final network output
    """
    acc = jnp.dot(xp_ref[...], w_ref[...], preferred_element_type=jnp.float32)
    mp = mp_ref[...]
    cnt = jnp.sum(mp, axis=1, keepdims=True)
    norm = pl.reciprocal(cnt + 1e-8, approx=True)
    y5 = jnp.maximum(acc * norm + b_ref[...], 0.0)          # (TN, 16) f32
    m5 = jnp.max(mp, axis=1, keepdims=True)                 # (TN, 1) binary
    # Layer 6: 1x1 conv == per-pixel weighted channel sum (VPU mul + reduce);
    # count_valid_entries with K=1 is the mask itself; K=1 max-pool is the
    # identity (and the final mask is discarded by the network anyway).
    acc6 = jnp.sum(y5 * m5 * w6_ref[...], axis=1, keepdims=True)   # (TN, 1)
    norm6 = pl.reciprocal(m5 + 1e-8, approx=True)
    o_ref[...] = jnp.maximum(acc6 * norm6 + b6_ref[...], 0.0)


# ------------------------------- wrappers -------------------------------------
def _extract_patches(a_pad, K, H, W):
    # a_pad: (B, H+K-1, W+K-1, C) -> (B, H, W, K*K, C); tap order (kh, kw)
    slices = [a_pad[:, kh:kh + H, kw:kw + W, :]
              for kh in range(K) for kw in range(K)]
    return jnp.stack(slices, axis=3)


def _pick_tile_n(N):
    """Largest power-of-two row tile that divides N; prefer >= 2 grid steps
    so ('parallel',) can use both v7x TensorCores."""
    candidates = (2048, 1024, 512, 256, 128)
    for t in candidates:
        if N % t == 0 and N // t >= 2:
            return t
    for t in candidates:
        if N % t == 0:
            return t
    raise ValueError("B*H*W must be a multiple of 128")


def sparse_conv_layer(x, mask, w, b, K, tile_n=None, fuse=None):
    """x: (B,H,W,Cin), mask: (B,H,W,1), w: (K,K,Cin,Cout), b: (1,Cout).

    If `fuse=(w6, b6)` (HWIO (1,1,Cout,1) weights and (1,1) bias of the final
    1x1 SparseConv) the last layer is executed inside the same kernel and the
    final (B,H,W,1) output is returned directly.
    """
    B, H, W, Cin = x.shape
    Cout = w.shape[-1]
    p = K // 2
    K2 = K * K
    N = B * H * W
    if tile_n is None:
        tile_n = _pick_tile_n(N)
    assert N % tile_n == 0, "B*H*W must be a multiple of the row tile"

    pad4 = ((0, 0), (p, p), (p, p), (0, 0))
    # Pre-mask x in the wrapper (zero padding commutes with masking) and cast
    # the big patch stream + weights to bf16; mask patches stay f32 (small).
    xm_pad = jnp.pad((mask * x).astype(jnp.bfloat16), pad4)
    m_pad = jnp.pad(mask.astype(jnp.float32), pad4)

    xp = _extract_patches(xm_pad, K, H, W).reshape(N, K2 * Cin)
    mp = _extract_patches(m_pad, K, H, W).reshape(N, K2)
    wf = w.reshape(K2 * Cin, Cout).astype(jnp.bfloat16)

    grid = (N // tile_n,)
    in_specs = [
        pl.BlockSpec((tile_n, K2 * Cin), lambda i: (i, 0)),
        pl.BlockSpec((tile_n, K2), lambda i: (i, 0)),
        pl.BlockSpec((K2 * Cin, Cout), lambda i: (0, 0)),
        pl.BlockSpec((1, Cout), lambda i: (0, 0)),
    ]
    cparams = pltpu.CompilerParams(dimension_semantics=("parallel",))

    if fuse is None:
        out, mout = pl.pallas_call(
            sparse_conv_kernel,
            out_shape=(jax.ShapeDtypeStruct((N, Cout), jnp.bfloat16),
                       jax.ShapeDtypeStruct((N, 1), jnp.float32)),
            grid=grid,
            in_specs=in_specs,
            out_specs=(pl.BlockSpec((tile_n, Cout), lambda i: (i, 0)),
                       pl.BlockSpec((tile_n, 1), lambda i: (i, 0))),
            compiler_params=cparams,
        )(xp, mp, wf, b)
        return out.reshape(B, H, W, Cout), mout.reshape(B, H, W, 1)

    w6, b6 = fuse
    w6_row = w6.reshape(1, Cout).astype(jnp.float32)   # (1, 16)
    b6 = b6.reshape(1, 1).astype(jnp.float32)
    out = pl.pallas_call(
        sparse_conv_fused_last_kernel,
        out_shape=jax.ShapeDtypeStruct((N, 1), jnp.float32),
        grid=grid,
        in_specs=in_specs + [
            pl.BlockSpec((1, Cout), lambda i: (0, 0)),
            pl.BlockSpec((1, 1), lambda i: (0, 0)),
        ],
        out_specs=pl.BlockSpec((tile_n, 1), lambda i: (i, 0)),
        compiler_params=cparams,
    )(xp, mp, wf, b, w6_row, b6)
    return out.reshape(B, H, W, 1)


def init_params(key):
    """Deterministic synthetic parameters (shapes match the nn.Module)."""
    params = []
    for (cin, cout, k) in LAYER_CFG:
        key, kw_key, kb_key = jax.random.split(key, 3)
        fan_in = cin * k * k
        bound = 1.0 / jnp.sqrt(fan_in)
        w = jax.random.uniform(kw_key, (k, k, cin, cout), jnp.float32,
                               minval=-bound, maxval=bound)
        b = jax.random.uniform(kb_key, (1, cout), jnp.float32)  # torch.rand
        params.append((w, b, k))
    return params


def sparse_conv_network(x, validity_mask, params):
    # Fuse the final 1x1 layer into the epilogue of the penultimate layer.
    *head, (w5, b5, k5), (w6, b6, k6) = params
    assert k6 == 1
    for (w, b, k) in head:
        x, validity_mask = sparse_conv_layer(x, validity_mask, w, b, k)
    return sparse_conv_layer(x, validity_mask, w5, b5, k5, fuse=(w6, b6))


# ----------------------- pure-JAX reference for checking ---------------------
def _reference_layer(x, mask, w, b, K):
    p = K // 2
    dn = ('NHWC', 'HWIO', 'NHWC')
    y = lax.conv_general_dilated(mask * x, w, (1, 1), ((p, p), (p, p)),
                                 dimension_numbers=dn)
    ones = jnp.ones((K, K, 1, 1), jnp.float32)
    cnt = lax.conv_general_dilated(mask, ones, (1, 1), ((p, p), (p, p)),
                                   dimension_numbers=dn)
    y = y * (1.0 / (cnt + 1e-8)) + b.reshape(1, 1, 1, -1)
    y = jnp.maximum(y, 0.0)
    mask = lax.reduce_window(mask, -jnp.inf, lax.max, (1, K, K, 1),
                             (1, 1, 1, 1), ((0, 0), (p, p), (p, p), (0, 0)))
    return y, mask


def _reference_network(x, mask, params):
    for (w, b, k) in params:
        x, mask = _reference_layer(x, mask, w, b, k)
    return x


if __name__ == "__main__":
    key = jax.random.PRNGKey(0)
    k_param, k_x, k_m = jax.random.split(key, 3)

    params = init_params(k_param)

    B, H, W = 2, 16, 16
    x = jax.random.normal(k_x, (B, H, W, 1), jnp.float32)
    validity_mask = jax.random.bernoulli(k_m, 0.6, (B, H, W, 1)).astype(
        jnp.float32)

    net = jax.jit(lambda xx, mm: sparse_conv_network(xx, mm, params))
    out = jax.block_until_ready(net(x, validity_mask))
    assert out.shape == (B, H, W, 1)

    ref = jax.block_until_ready(_reference_network(x, validity_mask, params))
    max_err = float(jnp.max(jnp.abs(out - ref)))
    assert jnp.allclose(out, ref, rtol=1e-2, atol=1e-2), max_err

    print("KERNEL_OK")
</pallas_src>

<mosaic_0001>
module attributes {stable_mosaic.version = 11 : i64} {
  func.func @sparse_conv_kernel(%arg0: i32, %arg1: memref<256x121xbf16, #tpu.memory_space<vmem>>, %arg2: memref<256x121xf32, #tpu.memory_space<vmem>>, %arg3: memref<121x16xbf16, #tpu.memory_space<vmem>>, %arg4: memref<1x16xf32, #tpu.memory_space<vmem>>, %arg5: memref<256x16xbf16, #tpu.memory_space<vmem>>, %arg6: memref<256x1xf32, #tpu.memory_space<vmem>>) attributes {dimension_semantics = [#tpu.dimension_semantics<parallel>], iteration_bounds = array<i64: 2>, scalar_prefetch = 0 : i64, scratch_operands = 0 : i64, tpu.core_type = #tpu.core_type<tc>, window_params = [{transform_indices = @transform_0, window_bounds = array<i64: 256, 121>}, {transform_indices = @transform_1, window_bounds = array<i64: 256, 121>}, {pipeline_mode = #tpu.pipeline_mode<synchronous>, transform_indices = @transform_2, window_bounds = array<i64: 121, 16>}, {pipeline_mode = #tpu.pipeline_mode<synchronous>, transform_indices = @transform_3, window_bounds = array<i64: 1, 16>}, {transform_indices = @transform_4, window_bounds = array<i64: 256, 16>}, {transform_indices = @transform_5, window_bounds = array<i64: 256, 1>}]} {
    %c0 = arith.constant 0 : index
    %c0_0 = arith.constant 0 : index
    %0 = vector.load %arg1[%c0, %c0_0] : memref<256x121xbf16, #tpu.memory_space<vmem>>, vector<256x121xbf16>
    %c0_1 = arith.constant 0 : index
    %c0_2 = arith.constant 0 : index
    %1 = vector.load %arg3[%c0_1, %c0_2] : memref<121x16xbf16, #tpu.memory_space<vmem>>, vector<121x16xbf16>
    %cst = arith.constant dense<0.000000e+00> : vector<256x16xf32>
    %2 = tpu.matmul %0, %1, %cst {dimension_numbers = #tpu.dot_dimension_numbers<[1], [0], [0], [1], [0, 0, 1, 1], [], []>} : vector<256x121xbf16>, vector<121x16xbf16>, vector<256x16xf32> -> vector<256x16xf32>
    %c0_3 = arith.constant 0 : index
    %c0_4 = arith.constant 0 : index
    %3 = vector.load %arg2[%c0_3, %c0_4] : memref<256x121xf32, #tpu.memory_space<vmem>>, vector<256x121xf32>
    %cst_5 = arith.constant dense<0.000000e+00> : vector<256xf32>
    %4 = vector.multi_reduction <add>, %3, %cst_5 [1] : vector<256x121xf32> to vector<256xf32>
    %5 = vector.shape_cast %4 : vector<256xf32> to vector<256x1xf32>
    %cst_6 = arith.constant 9.99999993E-9 : f32
    %6 = vector.broadcast %cst_6 : f32 to vector<256x1xf32>
    %7 = arith.addf %5, %6 : vector<256x1xf32>
    %8 = tpu.reciprocal %7 {approx = true} : vector<256x1xf32> -> vector<256x1xf32>
    %9 = vector.broadcast %8 : vector<256x1xf32> to vector<256x16xf32>
    %10 = arith.mulf %2, %9 : vector<256x16xf32>
    %c0_7 = arith.constant 0 : index
    %c0_8 = arith.constant 0 : index
    %11 = vector.load %arg4[%c0_7, %c0_8] : memref<1x16xf32, #tpu.memory_space<vmem>>, vector<1x16xf32>
    %12 = vector.broadcast %11 : vector<1x16xf32> to vector<256x16xf32>
    %13 = arith.addf %10, %12 : vector<256x16xf32>
    %cst_9 = arith.constant 0.000000e+00 : f32
    %14 = vector.broadcast %cst_9 : f32 to vector<256x16xf32>
    %15 = arith.maximumf %13, %14 : vector<256x16xf32>
    %16 = arith.truncf %15 : vector<256x16xf32> to vector<256x16xbf16>
    %c0_10 = arith.constant 0 : index
    %c0_11 = arith.constant 0 : index
    %17 = vector.load %arg5[%c0_10, %c0_11] : memref<256x16xbf16, #tpu.memory_space<vmem>>, vector<256x16xbf16>
    tpu.vector_store %arg5[%c0_10, %c0_11], %16 {strides = array<i32>} : memref<256x16xbf16, #tpu.memory_space<vmem>>, vector<256x16xbf16>,
    %cst_12 = arith.constant dense<0xFF800000> : vector<256xf32>
    %18 = vector.multi_reduction <maximumf>, %3, %cst_12 [1] : vector<256x121xf32> to vector<256xf32>
    %19 = vector.shape_cast %18 : vector<256xf32> to vector<256x1xf32>
    %c0_13 = arith.constant 0 : index
    %c0_14 = arith.constant 0 : index
    %20 = vector.load %arg6[%c0_13, %c0_14] : memref<256x1xf32, #tpu.memory_space<vmem>>, vector<256x1xf32>
    tpu.vector_store %arg6[%c0_13, %c0_14], %19 {strides = array<i32>} : memref<256x1xf32, #tpu.memory_space<vmem>>, vector<256x1xf32>,
    return
  }
  func.func @transform_0(%arg0: i32) -> (i32, i32) {
    %c0_i32 = arith.constant 0 : i32
    %c0_i32_0 = arith.constant 0 : i32
    return %arg0, %c0_i32 : i32, i32
  }
  func.func @transform_1(%arg0: i32) -> (i32, i32) {
    %c0_i32 = arith.constant 0 : i32
    %c0_i32_0 = arith.constant 0 : i32
    return %arg0, %c0_i32 : i32, i32
  }
  func.func @transform_2(%arg0: i32) -> (i32, i32) {
    %c0_i32 = arith.constant 0 : i32
    %c0_i32_0 = arith.constant 0 : i32
    %c0_i32_1 = arith.constant 0 : i32
    return %c0_i32, %c0_i32_0 : i32, i32
  }
  func.func @transform_3(%arg0: i32) -> (i32, i32) {
    %c0_i32 = arith.constant 0 : i32
    %c0_i32_0 = arith.constant 0 : i32
    %c0_i32_1 = arith.constant 0 : i32
    return %c0_i32, %c0_i32_0 : i32, i32
  }
  func.func @transform_4(%arg0: i32) -> (i32, i32) {
    %c0_i32 = arith.constant 0 : i32
    %c0_i32_0 = arith.constant 0 : i32
    return %arg0, %c0_i32 : i32, i32
  }
  func.func @transform_5(%arg0: i32) -> (i32, i32) {
    %c0_i32 = arith.constant 0 : i32
    %c0_i32_0 = arith.constant 0 : i32
    return %arg0, %c0_i32 : i32, i32
  }
}

module attributes {stable_mosaic.version = 11 : i64} {
  func.func @sparse_conv_kernel(%arg0: i32, %arg1: memref<256x784xbf16, #tpu.memory_space<vmem>>, %arg2: memref<256x49xf32, #tpu.memory_space<vmem>>, %arg3: memref<784x16xbf16, #tpu.memory_space<vmem>>, %arg4: memref<1x16xf32, #tpu.memory_space<vmem>>, %arg5: memref<256x16xbf16, #tpu.memory_space<vmem>>, %arg6: memref<256x1xf32, #tpu.memory_space<vmem>>) attributes {dimension_semantics = [#tpu.dimension_semantics<parallel>], iteration_bounds = array<i64: 2>, scalar_prefetch = 0 : i64, scratch_operands = 0 : i64, tpu.core_type = #tpu.core_type<tc>, window_params = [{transform_indices = @transform_0, window_bounds = array<i64: 256, 784>}, {transform_indices = @transform_1, window_bounds = array<i64: 256, 49>}, {pipeline_mode = #tpu.pipeline_mode<synchronous>, transform_indices = @transform_2, window_bounds = array<i64: 784, 16>}, {pipeline_mode = #tpu.pipeline_mode<synchronous>, transform_indices = @transform_3, window_bounds = array<i64: 1, 16>}, {transform_indices = @transform_4, window_bounds = array<i64: 256, 16>}, {transform_indices = @transform_5, window_bounds = array<i64: 256, 1>}]} {
    %c0 = arith.constant 0 : index
    %c0_0 = arith.constant 0 : index
    %0 = vector.load %arg1[%c0, %c0_0] : memref<256x784xbf16, #tpu.memory_space<vmem>>, vector<256x784xbf16>
    %c0_1 = arith.constant 0 : index
    %c0_2 = arith.constant 0 : index
    %1 = vector.load %arg3[%c0_1, %c0_2] : memref<784x16xbf16, #tpu.memory_space<vmem>>, vector<784x16xbf16>
    %cst = arith.constant dense<0.000000e+00> : vector<256x16xf32>
    %2 = tpu.matmul %0, %1, %cst {dimension_numbers = #tpu.dot_dimension_numbers<[1], [0], [0], [1], [0, 0, 1, 1], [], []>} : vector<256x784xbf16>, vector<784x16xbf16>, vector<256x16xf32> -> vector<256x16xf32>
    %c0_3 = arith.constant 0 : index
    %c0_4 = arith.constant 0 : index
    %3 = vector.load %arg2[%c0_3, %c0_4] : memref<256x49xf32, #tpu.memory_space<vmem>>, vector<256x49xf32>
    %cst_5 = arith.constant dense<0.000000e+00> : vector<256xf32>
    %4 = vector.multi_reduction <add>, %3, %cst_5 [1] : vector<256x49xf32> to vector<256xf32>
    %5 = vector.shape_cast %4 : vector<256xf32> to vector<256x1xf32>
    %cst_6 = arith.constant 9.99999993E-9 : f32
    %6 = vector.broadcast %cst_6 : f32 to vector<256x1xf32>
    %7 = arith.addf %5, %6 : vector<256x1xf32>
    %8 = tpu.reciprocal %7 {approx = true} : vector<256x1xf32> -> vector<256x1xf32>
    %9 = vector.broadcast %8 : vector<256x1xf32> to vector<256x16xf32>
    %10 = arith.mulf %2, %9 : vector<256x16xf32>
    %c0_7 = arith.constant 0 : index
    %c0_8 = arith.constant 0 : index
    %11 = vector.load %arg4[%c0_7, %c0_8] : memref<1x16xf32, #tpu.memory_space<vmem>>, vector<1x16xf32>
    %12 = vector.broadcast %11 : vector<1x16xf32> to vector<256x16xf32>
    %13 = arith.addf %10, %12 : vector<256x16xf32>
    %cst_9 = arith.constant 0.000000e+00 : f32
    %14 = vector.broadcast %cst_9 : f32 to vector<256x16xf32>
    %15 = arith.maximumf %13, %14 : vector<256x16xf32>
    %16 = arith.truncf %15 : vector<256x16xf32> to vector<256x16xbf16>
    %c0_10 = arith.constant 0 : index
    %c0_11 = arith.constant 0 : index
    %17 = vector.load %arg5[%c0_10, %c0_11] : memref<256x16xbf16, #tpu.memory_space<vmem>>, vector<256x16xbf16>
    tpu.vector_store %arg5[%c0_10, %c0_11], %16 {strides = array<i32>} : memref<256x16xbf16, #tpu.memory_space<vmem>>, vector<256x16xbf16>,
    %cst_12 = arith.constant dense<0xFF800000> : vector<256xf32>
    %18 = vector.multi_reduction <maximumf>, %3, %cst_12 [1] : vector<256x49xf32> to vector<256xf32>
    %19 = vector.shape_cast %18 : vector<256xf32> to vector<256x1xf32>
    %c0_13 = arith.constant 0 : index
    %c0_14 = arith.constant 0 : index
    %20 = vector.load %arg6[%c0_13, %c0_14] : memref<256x1xf32, #tpu.memory_space<vmem>>, vector<256x1xf32>
    tpu.vector_store %arg6[%c0_13, %c0_14], %19 {strides = array<i32>} : memref<256x1xf32, #tpu.memory_space<vmem>>, vector<256x1xf32>,
    return
  }
  func.func @transform_0(%arg0: i32) -> (i32, i32) {
    %c0_i32 = arith.constant 0 : i32
    %c0_i32_0 = arith.constant 0 : i32
    return %arg0, %c0_i32 : i32, i32
  }
  func.func @transform_1(%arg0: i32) -> (i32, i32) {
    %c0_i32 = arith.constant 0 : i32
    %c0_i32_0 = arith.constant 0 : i32
    return %arg0, %c0_i32 : i32, i32
  }
  func.func @transform_2(%arg0: i32) -> (i32, i32) {
    %c0_i32 = arith.constant 0 : i32
    %c0_i32_0 = arith.constant 0 : i32
    %c0_i32_1 = arith.constant 0 : i32
    return %c0_i32, %c0_i32_0 : i32, i32
  }
  func.func @transform_3(%arg0: i32) -> (i32, i32) {
    %c0_i32 = arith.constant 0 : i32
    %c0_i32_0 = arith.constant 0 : i32
    %c0_i32_1 = arith.constant 0 : i32
    return %c0_i32, %c0_i32_0 : i32, i32
  }
  func.func @transform_4(%arg0: i32) -> (i32, i32) {
    %c0_i32 = arith.constant 0 : i32
    %c0_i32_0 = arith.constant 0 : i32
    return %arg0, %c0_i32 : i32, i32
  }
  func.func @transform_5(%arg0: i32) -> (i32, i32) {
    %c0_i32 = arith.constant 0 : i32
    %c0_i32_0 = arith.constant 0 : i32
    return %arg0, %c0_i32 : i32, i32
  }
}

module attributes {stable_mosaic.version = 11 : i64} {
  func.func @sparse_conv_kernel(%arg0: i32, %arg1: memref<256x400xbf16, #tpu.memory_space<vmem>>, %arg2: memref<256x25xf32, #tpu.memory_space<vmem>>, %arg3: memref<400x16xbf16, #tpu.memory_space<vmem>>, %arg4: memref<1x16xf32, #tpu.memory_space<vmem>>, %arg5: memref<256x16xbf16, #tpu.memory_space<vmem>>, %arg6: memref<256x1xf32, #tpu.memory_space<vmem>>) attributes {dimension_semantics = [#tpu.dimension_semantics<parallel>], iteration_bounds = array<i64: 2>, scalar_prefetch = 0 : i64, scratch_operands = 0 : i64, tpu.core_type = #tpu.core_type<tc>, window_params = [{transform_indices = @transform_0, window_bounds = array<i64: 256, 400>}, {transform_indices = @transform_1, window_bounds = array<i64: 256, 25>}, {pipeline_mode = #tpu.pipeline_mode<synchronous>, transform_indices = @transform_2, window_bounds = array<i64: 400, 16>}, {pipeline_mode = #tpu.pipeline_mode<synchronous>, transform_indices = @transform_3, window_bounds = array<i64: 1, 16>}, {transform_indices = @transform_4, window_bounds = array<i64: 256, 16>}, {transform_indices = @transform_5, window_bounds = array<i64: 256, 1>}]} {
    %c0 = arith.constant 0 : index
    %c0_0 = arith.constant 0 : index
    %0 = vector.load %arg1[%c0, %c0_0] : memref<256x400xbf16, #tpu.memory_space<vmem>>, vector<256x400xbf16>
    %c0_1 = arith.constant 0 : index
    %c0_2 = arith.constant 0 : index
    %1 = vector.load %arg3[%c0_1, %c0_2] : memref<400x16xbf16, #tpu.memory_space<vmem>>, vector<400x16xbf16>
    %cst = arith.constant dense<0.000000e+00> : vector<256x16xf32>
    %2 = tpu.matmul %0, %1, %cst {dimension_numbers = #tpu.dot_dimension_numbers<[1], [0], [0], [1], [0, 0, 1, 1], [], []>} : vector<256x400xbf16>, vector<400x16xbf16>, vector<256x16xf32> -> vector<256x16xf32>
    %c0_3 = arith.constant 0 : index
    %c0_4 = arith.constant 0 : index
    %3 = vector.load %arg2[%c0_3, %c0_4] : memref<256x25xf32, #tpu.memory_space<vmem>>, vector<256x25xf32>
    %cst_5 = arith.constant dense<0.000000e+00> : vector<256xf32>
    %4 = vector.multi_reduction <add>, %3, %cst_5 [1] : vector<256x25xf32> to vector<256xf32>
    %5 = vector.shape_cast %4 : vector<256xf32> to vector<256x1xf32>
    %cst_6 = arith.constant 9.99999993E-9 : f32
    %6 = vector.broadcast %cst_6 : f32 to vector<256x1xf32>
    %7 = arith.addf %5, %6 : vector<256x1xf32>
    %8 = tpu.reciprocal %7 {approx = true} : vector<256x1xf32> -> vector<256x1xf32>
    %9 = vector.broadcast %8 : vector<256x1xf32> to vector<256x16xf32>
    %10 = arith.mulf %2, %9 : vector<256x16xf32>
    %c0_7 = arith.constant 0 : index
    %c0_8 = arith.constant 0 : index
    %11 = vector.load %arg4[%c0_7, %c0_8] : memref<1x16xf32, #tpu.memory_space<vmem>>, vector<1x16xf32>
    %12 = vector.broadcast %11 : vector<1x16xf32> to vector<256x16xf32>
    %13 = arith.addf %10, %12 : vector<256x16xf32>
    %cst_9 = arith.constant 0.000000e+00 : f32
    %14 = vector.broadcast %cst_9 : f32 to vector<256x16xf32>
    %15 = arith.maximumf %13, %14 : vector<256x16xf32>
    %16 = arith.truncf %15 : vector<256x16xf32> to vector<256x16xbf16>
    %c0_10 = arith.constant 0 : index
    %c0_11 = arith.constant 0 : index
    %17 = vector.load %arg5[%c0_10, %c0_11] : memref<256x16xbf16, #tpu.memory_space<vmem>>, vector<256x16xbf16>
    tpu.vector_store %arg5[%c0_10, %c0_11], %16 {strides = array<i32>} : memref<256x16xbf16, #tpu.memory_space<vmem>>, vector<256x16xbf16>,
    %cst_12 = arith.constant dense<0xFF800000> : vector<256xf32>
    %18 = vector.multi_reduction <maximumf>, %3, %cst_12 [1] : vector<256x25xf32> to vector<256xf32>
    %19 = vector.shape_cast %18 : vector<256xf32> to vector<256x1xf32>
    %c0_13 = arith.constant 0 : index
    %c0_14 = arith.constant 0 : index
    %20 = vector.load %arg6[%c0_13, %c0_14] : memref<256x1xf32, #tpu.memory_space<vmem>>, vector<256x1xf32>
    tpu.vector_store %arg6[%c0_13, %c0_14], %19 {strides = array<i32>} : memref<256x1xf32, #tpu.memory_space<vmem>>, vector<256x1xf32>,
    return
  }
  func.func @transform_0(%arg0: i32) -> (i32, i32) {
    %c0_i32 = arith.constant 0 : i32
    %c0_i32_0 = arith.constant 0 : i32
    return %arg0, %c0_i32 : i32, i32
  }
  func.func @transform_1(%arg0: i32) -> (i32, i32) {
    %c0_i32 = arith.constant 0 : i32
    %c0_i32_0 = arith.constant 0 : i32
    return %arg0, %c0_i32 : i32, i32
  }
  func.func @transform_2(%arg0: i32) -> (i32, i32) {
    %c0_i32 = arith.constant 0 : i32
    %c0_i32_0 = arith.constant 0 : i32
    %c0_i32_1 = arith.constant 0 : i32
    return %c0_i32, %c0_i32_0 : i32, i32
  }
  func.func @transform_3(%arg0: i32) -> (i32, i32) {
    %c0_i32 = arith.constant 0 : i32
    %c0_i32_0 = arith.constant 0 : i32
    %c0_i32_1 = arith.constant 0 : i32
    return %c0_i32, %c0_i32_0 : i32, i32
  }
  func.func @transform_4(%arg0: i32) -> (i32, i32) {
    %c0_i32 = arith.constant 0 : i32
    %c0_i32_0 = arith.constant 0 : i32
    return %arg0, %c0_i32 : i32, i32
  }
  func.func @transform_5(%arg0: i32) -> (i32, i32) {
    %c0_i32 = arith.constant 0 : i32
    %c0_i32_0 = arith.constant 0 : i32
    return %arg0, %c0_i32 : i32, i32
  }
}

module attributes {stable_mosaic.version = 11 : i64} {
  func.func @sparse_conv_kernel(%arg0: i32, %arg1: memref<256x144xbf16, #tpu.memory_space<vmem>>, %arg2: memref<256x9xf32, #tpu.memory_space<vmem>>, %arg3: memref<144x16xbf16, #tpu.memory_space<vmem>>, %arg4: memref<1x16xf32, #tpu.memory_space<vmem>>, %arg5: memref<256x16xbf16, #tpu.memory_space<vmem>>, %arg6: memref<256x1xf32, #tpu.memory_space<vmem>>) attributes {dimension_semantics = [#tpu.dimension_semantics<parallel>], iteration_bounds = array<i64: 2>, scalar_prefetch = 0 : i64, scratch_operands = 0 : i64, tpu.core_type = #tpu.core_type<tc>, window_params = [{transform_indices = @transform_0, window_bounds = array<i64: 256, 144>}, {transform_indices = @transform_1, window_bounds = array<i64: 256, 9>}, {pipeline_mode = #tpu.pipeline_mode<synchronous>, transform_indices = @transform_2, window_bounds = array<i64: 144, 16>}, {pipeline_mode = #tpu.pipeline_mode<synchronous>, transform_indices = @transform_3, window_bounds = array<i64: 1, 16>}, {transform_indices = @transform_4, window_bounds = array<i64: 256, 16>}, {transform_indices = @transform_5, window_bounds = array<i64: 256, 1>}]} {
    %c0 = arith.constant 0 : index
    %c0_0 = arith.constant 0 : index
    %0 = vector.load %arg1[%c0, %c0_0] : memref<256x144xbf16, #tpu.memory_space<vmem>>, vector<256x144xbf16>
    %c0_1 = arith.constant 0 : index
    %c0_2 = arith.constant 0 : index
    %1 = vector.load %arg3[%c0_1, %c0_2] : memref<144x16xbf16, #tpu.memory_space<vmem>>, vector<144x16xbf16>
    %cst = arith.constant dense<0.000000e+00> : vector<256x16xf32>
    %2 = tpu.matmul %0, %1, %cst {dimension_numbers = #tpu.dot_dimension_numbers<[1], [0], [0], [1], [0, 0, 1, 1], [], []>} : vector<256x144xbf16>, vector<144x16xbf16>, vector<256x16xf32> -> vector<256x16xf32>
    %c0_3 = arith.constant 0 : index
    %c0_4 = arith.constant 0 : index
    %3 = vector.load %arg2[%c0_3, %c0_4] : memref<256x9xf32, #tpu.memory_space<vmem>>, vector<256x9xf32>
    %cst_5 = arith.constant dense<0.000000e+00> : vector<256xf32>
    %4 = vector.multi_reduction <add>, %3, %cst_5 [1] : vector<256x9xf32> to vector<256xf32>
    %5 = vector.shape_cast %4 : vector<256xf32> to vector<256x1xf32>
    %cst_6 = arith.constant 9.99999993E-9 : f32
    %6 = vector.broadcast %cst_6 : f32 to vector<256x1xf32>
    %7 = arith.addf %5, %6 : vector<256x1xf32>
    %8 = tpu.reciprocal %7 {approx = true} : vector<256x1xf32> -> vector<256x1xf32>
    %9 = vector.broadcast %8 : vector<256x1xf32> to vector<256x16xf32>
    %10 = arith.mulf %2, %9 : vector<256x16xf32>
    %c0_7 = arith.constant 0 : index
    %c0_8 = arith.constant 0 : index
    %11 = vector.load %arg4[%c0_7, %c0_8] : memref<1x16xf32, #tpu.memory_space<vmem>>, vector<1x16xf32>
    %12 = vector.broadcast %11 : vector<1x16xf32> to vector<256x16xf32>
    %13 = arith.addf %10, %12 : vector<256x16xf32>
    %cst_9 = arith.constant 0.000000e+00 : f32
    %14 = vector.broadcast %cst_9 : f32 to vector<256x16xf32>
    %15 = arith.maximumf %13, %14 : vector<256x16xf32>
    %16 = arith.truncf %15 : vector<256x16xf32> to vector<256x16xbf16>
    %c0_10 = arith.constant 0 : index
    %c0_11 = arith.constant 0 : index
    %17 = vector.load %arg5[%c0_10, %c0_11] : memref<256x16xbf16, #tpu.memory_space<vmem>>, vector<256x16xbf16>
    tpu.vector_store %arg5[%c0_10, %c0_11], %16 {strides = array<i32>} : memref<256x16xbf16, #tpu.memory_space<vmem>>, vector<256x16xbf16>,
    %cst_12 = arith.constant dense<0xFF800000> : vector<256xf32>
    %18 = vector.multi_reduction <maximumf>, %3, %cst_12 [1] : vector<256x9xf32> to vector<256xf32>
    %19 = vector.shape_cast %18 : vector<256xf32> to vector<256x1xf32>
    %c0_13 = arith.constant 0 : index
    %c0_14 = arith.constant 0 : index
    %20 = vector.load %arg6[%c0_13, %c0_14] : memref<256x1xf32, #tpu.memory_space<vmem>>, vector<256x1xf32>
    tpu.vector_store %arg6[%c0_13, %c0_14], %19 {strides = array<i32>} : memref<256x1xf32, #tpu.memory_space<vmem>>, vector<256x1xf32>,
    return
  }
  func.func @transform_0(%arg0: i32) -> (i32, i32) {
    %c0_i32 = arith.constant 0 : i32
    %c0_i32_0 = arith.constant 0 : i32
    return %arg0, %c0_i32 : i32, i32
  }
  func.func @transform_1(%arg0: i32) -> (i32, i32) {
    %c0_i32 = arith.constant 0 : i32
    %c0_i32_0 = arith.constant 0 : i32
    return %arg0, %c0_i32 : i32, i32
  }
  func.func @transform_2(%arg0: i32) -> (i32, i32) {
    %c0_i32 = arith.constant 0 : i32
    %c0_i32_0 = arith.constant 0 : i32
    %c0_i32_1 = arith.constant 0 : i32
    return %c0_i32, %c0_i32_0 : i32, i32
  }
  func.func @transform_3(%arg0: i32) -> (i32, i32) {
    %c0_i32 = arith.constant 0 : i32
    %c0_i32_0 = arith.constant 0 : i32
    %c0_i32_1 = arith.constant 0 : i32
    return %c0_i32, %c0_i32_0 : i32, i32
  }
  func.func @transform_4(%arg0: i32) -> (i32, i32) {
    %c0_i32 = arith.constant 0 : i32
    %c0_i32_0 = arith.constant 0 : i32
    return %arg0, %c0_i32 : i32, i32
  }
  func.func @transform_5(%arg0: i32) -> (i32, i32) {
    %c0_i32 = arith.constant 0 : i32
    %c0_i32_0 = arith.constant 0 : i32
    return %arg0, %c0_i32 : i32, i32
  }
}

module attributes {stable_mosaic.version = 11 : i64} {
  func.func @sparse_conv_fused_last_kernel(%arg0: i32, %arg1: memref<256x144xbf16, #tpu.memory_space<vmem>>, %arg2: memref<256x9xf32, #tpu.memory_space<vmem>>, %arg3: memref<144x16xbf16, #tpu.memory_space<vmem>>, %arg4: memref<1x16xf32, #tpu.memory_space<vmem>>, %arg5: memref<1x16xf32, #tpu.memory_space<vmem>>, %arg6: memref<1x1xf32, #tpu.memory_space<vmem>>, %arg7: memref<256x1xf32, #tpu.memory_space<vmem>>) attributes {dimension_semantics = [#tpu.dimension_semantics<parallel>], iteration_bounds = array<i64: 2>, scalar_prefetch = 0 : i64, scratch_operands = 0 : i64, tpu.core_type = #tpu.core_type<tc>, window_params = [{transform_indices = @transform_0, window_bounds = array<i64: 256, 144>}, {transform_indices = @transform_1, window_bounds = array<i64: 256, 9>}, {pipeline_mode = #tpu.pipeline_mode<synchronous>, transform_indices = @transform_2, window_bounds = array<i64: 144, 16>}, {pipeline_mode = #tpu.pipeline_mode<synchronous>, transform_indices = @transform_3, window_bounds = array<i64: 1, 16>}, {pipeline_mode = #tpu.pipeline_mode<synchronous>, transform_indices = @transform_4, window_bounds = array<i64: 1, 16>}, {pipeline_mode = #tpu.pipeline_mode<synchronous>, transform_indices = @transform_5, window_bounds = array<i64: 1, 1>}, {transform_indices = @transform_6, window_bounds = array<i64: 256, 1>}]} {
    %c0 = arith.constant 0 : index
    %c0_0 = arith.constant 0 : index
    %0 = vector.load %arg1[%c0, %c0_0] : memref<256x144xbf16, #tpu.memory_space<vmem>>, vector<256x144xbf16>
    %c0_1 = arith.constant 0 : index
    %c0_2 = arith.constant 0 : index
    %1 = vector.load %arg3[%c0_1, %c0_2] : memref<144x16xbf16, #tpu.memory_space<vmem>>, vector<144x16xbf16>
    %cst = arith.constant dense<0.000000e+00> : vector<256x16xf32>
    %2 = tpu.matmul %0, %1, %cst {dimension_numbers = #tpu.dot_dimension_numbers<[1], [0], [0], [1], [0, 0, 1, 1], [], []>} : vector<256x144xbf16>, vector<144x16xbf16>, vector<256x16xf32> -> vector<256x16xf32>
    %c0_3 = arith.constant 0 : index
    %c0_4 = arith.constant 0 : index
    %3 = vector.load %arg2[%c0_3, %c0_4] : memref<256x9xf32, #tpu.memory_space<vmem>>, vector<256x9xf32>
    %cst_5 = arith.constant dense<0.000000e+00> : vector<256xf32>
    %4 = vector.multi_reduction <add>, %3, %cst_5 [1] : vector<256x9xf32> to vector<256xf32>
    %5 = vector.shape_cast %4 : vector<256xf32> to vector<256x1xf32>
    %cst_6 = arith.constant 9.99999993E-9 : f32
    %6 = vector.broadcast %cst_6 : f32 to vector<256x1xf32>
    %7 = arith.addf %5, %6 : vector<256x1xf32>
    %8 = tpu.reciprocal %7 {approx = true} : vector<256x1xf32> -> vector<256x1xf32>
    %9 = vector.broadcast %8 : vector<256x1xf32> to vector<256x16xf32>
    %10 = arith.mulf %2, %9 : vector<256x16xf32>
    %c0_7 = arith.constant 0 : index
    %c0_8 = arith.constant 0 : index
    %11 = vector.load %arg4[%c0_7, %c0_8] : memref<1x16xf32, #tpu.memory_space<vmem>>, vector<1x16xf32>
    %12 = vector.broadcast %11 : vector<1x16xf32> to vector<256x16xf32>
    %13 = arith.addf %10, %12 : vector<256x16xf32>
    %cst_9 = arith.constant 0.000000e+00 : f32
    %14 = vector.broadcast %cst_9 : f32 to vector<256x16xf32>
    %15 = arith.maximumf %13, %14 : vector<256x16xf32>
    %cst_10 = arith.constant dense<0xFF800000> : vector<256xf32>
    %16 = vector.multi_reduction <maximumf>, %3, %cst_10 [1] : vector<256x9xf32> to vector<256xf32>
    %17 = vector.shape_cast %16 : vector<256xf32> to vector<256x1xf32>
    %18 = vector.broadcast %17 : vector<256x1xf32> to vector<256x16xf32>
    %19 = arith.mulf %15, %18 : vector<256x16xf32>
    %c0_11 = arith.constant 0 : index
    %c0_12 = arith.constant 0 : index
    %20 = vector.load %arg5[%c0_11, %c0_12] : memref<1x16xf32, #tpu.memory_space<vmem>>, vector<1x16xf32>
    %21 = vector.broadcast %20 : vector<1x16xf32> to vector<256x16xf32>
    %22 = arith.mulf %19, %21 : vector<256x16xf32>
    %cst_13 = arith.constant dense<0.000000e+00> : vector<256xf32>
    %23 = vector.multi_reduction <add>, %22, %cst_13 [1] : vector<256x16xf32> to vector<256xf32>
    %24 = vector.shape_cast %23 : vector<256xf32> to vector<256x1xf32>
    %cst_14 = arith.constant 9.99999993E-9 : f32
    %25 = vector.broadcast %cst_14 : f32 to vector<256x1xf32>
    %26 = arith.addf %17, %25 : vector<256x1xf32>
    %27 = tpu.reciprocal %26 {approx = true} : vector<256x1xf32> -> vector<256x1xf32>
    %28 = arith.mulf %24, %27 : vector<256x1xf32>
    %c0_15 = arith.constant 0 : index
    %c0_16 = arith.constant 0 : index
    %29 = vector.load %arg6[%c0_15, %c0_16] : memref<1x1xf32, #tpu.memory_space<vmem>>, vector<1x1xf32>
    %30 = vector.broadcast %29 : vector<1x1xf32> to vector<256x1xf32>
    %31 = arith.addf %28, %30 : vector<256x1xf32>
    %cst_17 = arith.constant 0.000000e+00 : f32
    %32 = vector.broadcast %cst_17 : f32 to vector<256x1xf32>
    %33 = arith.maximumf %31, %32 : vector<256x1xf32>
    %c0_18 = arith.constant 0 : index
    %c0_19 = arith.constant 0 : index
    %34 = vector.load %arg7[%c0_18, %c0_19] : memref<256x1xf32, #tpu.memory_space<vmem>>, vector<256x1xf32>
    tpu.vector_store %arg7[%c0_18, %c0_19], %33 {strides = array<i32>} : memref<256x1xf32, #tpu.memory_space<vmem>>, vector<256x1xf32>,
    return
  }
  func.func @transform_0(%arg0: i32) -> (i32, i32) {
    %c0_i32 = arith.constant 0 : i32
    %c0_i32_0 = arith.constant 0 : i32
    return %arg0, %c0_i32 : i32, i32
  }
  func.func @transform_1(%arg0: i32) -> (i32, i32) {
    %c0_i32 = arith.constant 0 : i32
    %c0_i32_0 = arith.constant 0 : i32
    return %arg0, %c0_i32 : i32, i32
  }
  func.func @transform_2(%arg0: i32) -> (i32, i32) {
    %c0_i32 = arith.constant 0 : i32
    %c0_i32_0 = arith.constant 0 : i32
    %c0_i32_1 = arith.constant 0 : i32
    return %c0_i32, %c0_i32_0 : i32, i32
  }
  func.func @transform_3(%arg0: i32) -> (i32, i32) {
    %c0_i32 = arith.constant 0 : i32
    %c0_i32_0 = arith.constant 0 : i32
    %c0_i32_1 = arith.constant 0 : i32
    return %c0_i32, %c0_i32_0 : i32, i32
  }
  func.func @transform_4(%arg0: i32) -> (i32, i32) {
    %c0_i32 = arith.constant 0 : i32
    %c0_i32_0 = arith.constant 0 : i32
    %c0_i32_1 = arith.constant 0 : i32
    return %c0_i32, %c0_i32_0 : i32, i32
  }
  func.func @transform_5(%arg0: i32) -> (i32, i32) {
    %c0_i32 = arith.constant 0 : i32
    %c0_i32_0 = arith.constant 0 : i32
    %c0_i32_1 = arith.constant 0 : i32
    return %c0_i32, %c0_i32_0 : i32, i32
  }
  func.func @transform_6(%arg0: i32) -> (i32, i32) {
    %c0_i32 = arith.constant 0 : i32
    %c0_i32_0 = arith.constant 0 : i32
    return %arg0, %c0_i32 : i32, i32
  }
}

</mosaic_0001>

<llo_original>
// kernel: _lambda_.5
$region0: #{_lambda_.5}
  #allocation0 [shape = 'u32[]', space=smem, size = 0x4, offset = 0x4, fixed_abs, tag = 'smem constant byte address 0x4 - core index']
  #allocation1 [shape = 'u32[72,128]{1,0:T(1,128)}', space=vmem, size = 0x9000, scoped, tag = 'internal scratch']
  %s0 = inlined_call_operand.vmem [shape: bf16[512,121], index: 0, kind: input, shape index: {}]
  %s1 = inlined_call_operand.vmem [shape: f32[512,121], index: 1, kind: input, shape index: {}]
  %s2 = inlined_call_operand.vmem [shape: bf16[121,16], index: 2, kind: input, shape index: {}]
  %s3 = inlined_call_operand.vmem [shape: f32[1,16], index: 3, kind: input, shape index: {}]
  %s4 = inlined_call_operand.vmem [shape: bf16[512,16], index: 4, kind: output, shape index: {0}]
  %s5 = inlined_call_operand.vmem [shape: f32[512,1], index: 5, kind: output, shape index: {1}]
  %6 = xla_tuple %s4, %s5
  %s7 = sld [smem:[#allocation0]]
  $region57: #{_lambda_.5} parent=0
    _
  %s9 = ssub.s32 1, %s7
  %s10 = scalar_select 0, %s9, %s7
  loop: start=0, step=1, limit=4
  $region2: #{_lambda_.5} parent=0 // loop_pre_header
    _
  $region3: #{_lambda_.5} parent=0 // loop_header
    %s12 = sphi 0, %s16
    %p13 = scmp.ge.s32.totalorder %s12, 4
    %s22 = sphi 0, %s24
    %s25 = sphi 0, %s22
    %s26 = sphi 0, %s25
    %s42 = sphi 0, %s26
    %s48 = sphi 0, %s50
    %s51 = sphi 0, %s48
    %s52 = sphi 0, %s51
    %s68 = sphi 0, %s52
    %s72 = sphi 0, %s72
    %s74 = sphi 0, %s72
    %s75 = sphi 0, %s74
    %s89 = sphi 0, %s75
    %s93 = sphi 0, %s93
    %s95 = sphi 0, %s93
    %s96 = sphi 0, %s95
    %s110 = sphi 0, %s96
    %s116 = sphi 0, %s118
    %s119 = sphi 0, %s116
    %s120 = sphi 0, %s119
    %s136 = sphi 0, %s120
    %s142 = sphi 0, %s144
    %s145 = sphi 0, %s142
    %s146 = sphi 0, %s145
    %s162 = sphi 0, %s146
  $region4: #{_lambda_.5} parent=0 // loop_header_branch
    %15 = sbr.rel (%p13) target = $region8
  $region5: #{_lambda_.5} parent=0 // loop_body
    %s17 = ssub.s32 %s12, 1
    %s18 = ssub.s32 %s12, 2
    %s19 = sadd.s32 %s12, 1
    %s20 = ssub.s32 %s12, %s19
    %p21 = scmp.eq.s32.totalorder %s20, 0
    %s23 = sadd.s32 %s22, 1
    %s24 = scalar_select %p21, %s22, %s23
    %p27 = pneg %p21
    %p28 = scmp.eq.s32.totalorder %s12, 1
    %p29 = por %p27, %p28
    %p30 = scmp.ne.s32.totalorder %s22, %s25
    %p31 = scmp.eq.s32.totalorder %s12, 0
    %p32 = por %p30, %p31
    %p33 = scmp.ne.s32.totalorder %s22, %s25
    %p34 = scmp.eq.s32.totalorder %s17, 1
    %p35 = por %p33, %p34
    %p36 = scmp.ne.s32.totalorder %s25, %s26
    %p37 = scmp.eq.s32.totalorder %s17, 0
    %p38 = por %p36, %p37
    %p39 = scmp.ne.s32.totalorder %s25, %s26
    %p40 = scmp.eq.s32.totalorder %s18, 1
    %p41 = por %p39, %p40
    %p43 = scmp.ne.s32.totalorder %s26, %s42
    %p44 = scmp.eq.s32.totalorder %s18, 0
    %p45 = por %p43, %p44
    %s46 = ssub.s32 %s12, %s19
    %p47 = scmp.eq.s32.totalorder %s46, 0
    %s49 = sadd.s32 %s48, 1
    %s50 = scalar_select %p47, %s48, %s49
    %p53 = pneg %p47
    %p54 = scmp.eq.s32.totalorder %s12, 1
    %p55 = por %p53, %p54
    %p56 = scmp.ne.s32.totalorder %s48, %s51
    %p57 = scmp.eq.s32.totalorder %s12, 0
    %p58 = por %p56, %p57
    %p59 = scmp.ne.s32.totalorder %s48, %s51
    %p60 = scmp.eq.s32.totalorder %s17, 1
    %p61 = por %p59, %p60
    %p62 = scmp.ne.s32.totalorder %s51, %s52
    %p63 = scmp.eq.s32.totalorder %s17, 0
    %p64 = por %p62, %p63
    %p65 = scmp.ne.s32.totalorder %s51, %s52
    %p66 = scmp.eq.s32.totalorder %s18, 1
    %p67 = por %p65, %p66
    %p69 = scmp.ne.s32.totalorder %s52, %s68
    %p70 = scmp.eq.s32.totalorder %s18, 0
    %p71 = por %p69, %p70
    %s73 = sadd.s32 %s72, 1
    %p76 = scmp.eq.s32.totalorder %s12, 1
    %p77 = scmp.ne.s32.totalorder %s72, %s74
    %p78 = scmp.eq.s32.totalorder %s12, 0
    %p79 = por %p77, %p78
    %p80 = scmp.ne.s32.totalorder %s72, %s74
    %p81 = scmp.eq.s32.totalorder %s17, 1
    %p82 = por %p80, %p81
    %p83 = scmp.ne.s32.totalorder %s74, %s75
    %p84 = scmp.eq.s32.totalorder %s17, 0
    %p85 = por %p83, %p84
    %p86 = scmp.ne.s32.totalorder %s74, %s75
    %p87 = scmp.eq.s32.totalorder %s18, 1
    %p88 = por %p86, %p87
    %p90 = scmp.ne.s32.totalorder %s75, %s89
    %p91 = scmp.eq.s32.totalorder %s18, 0
    %p92 = por %p90, %p91
    %s94 = sadd.s32 %s93, 1
    %p97 = scmp.eq.s32.totalorder %s12, 1
    %p98 = scmp.ne.s32.totalorder %s93, %s95
    %p99 = scmp.eq.s32.totalorder %s12, 0
    %p100 = por %p98, %p99
    %p101 = scmp.ne.s32.totalorder %s93, %s95
    %p102 = scmp.eq.s32.totalorder %s17, 1
    %p103 = por %p101, %p102
    %p104 = scmp.ne.s32.totalorder %s95, %s96
    %p105 = scmp.eq.s32.totalorder %s17, 0
    %p106 = por %p104, %p105
    %p107 = scmp.ne.s32.totalorder %s95, %s96
    %p108 = scmp.eq.s32.totalorder %s18, 1
    %p109 = por %p107, %p108
    %p111 = scmp.ne.s32.totalorder %s96, %s110
    %p112 = scmp.eq.s32.totalorder %s18, 0
    %p113 = por %p111, %p112
    %s114 = ssub.s32 %s12, %s19
    %p115 = scmp.eq.s32.totalorder %s114, 0
    %s117 = sadd.s32 %s116, 1
    %s118 = scalar_select %p115, %s116, %s117
    %p121 = pneg %p115
    %p122 = scmp.eq.s32.totalorder %s12, 1
    %p123 = por %p121, %p122
    %p124 = scmp.ne.s32.totalorder %s116, %s119
    %p125 = scmp.eq.s32.totalorder %s12, 0
    %p126 = por %p124, %p125
    %p127 = scmp.ne.s32.totalorder %s116, %s119
    %p128 = scmp.eq.s32.totalorder %s17, 1
    %p129 = por %p127, %p128
    %p130 = scmp.ne.s32.totalorder %s119, %s120
    %p131 = scmp.eq.s32.totalorder %s17, 0
    %p132 = por %p130, %p131
    %p133 = scmp.ne.s32.totalorder %s119, %s120
    %p134 = scmp.eq.s32.totalorder %s18, 1
    %p135 = por %p133, %p134
    %p137 = scmp.ne.s32.totalorder %s120, %s136
    %p138 = scmp.eq.s32.totalorder %s18, 0
    %p139 = por %p137, %p138
    %s140 = ssub.s32 %s12, %s19
    %p141 = scmp.eq.s32.totalorder %s140, 0
    %s143 = sadd.s32 %s142, 1
    %s144 = scalar_select %p141, %s142, %s143
    %p147 = pneg %p141
    %p148 = scmp.eq.s32.totalorder %s12, 1
    %p149 = por %p147, %p148
    %p150 = scmp.ne.s32.totalorder %s142, %s145
    %p151 = scmp.eq.s32.totalorder %s12, 0
    %p152 = por %p150, %p151
    %p153 = scmp.ne.s32.totalorder %s142, %s145
    %p154 = scmp.eq.s32.totalorder %s17, 1
    %p155 = por %p153, %p154
    %p156 = scmp.ne.s32.totalorder %s145, %s146
    %p157 = scmp.eq.s32.totalorder %s17, 0
    %p158 = por %p156, %p157
    %p159 = scmp.ne.s32.totalorder %s145, %s146
    %p160 = scmp.eq.s32.totalorder %s18, 1
    %p161 = por %p159, %p160
    %p163 = scmp.ne.s32.totalorder %s146, %s162
    %p164 = scmp.eq.s32.totalorder %s18, 0
    %p165 = por %p163, %p164
    %p166 = scmp.le.s32.totalorder 1, %s12
    %p167 = scmp.lt.s32.totalorder %s12, 3
    %p168 = pnand %p166, %p167
    %p169 = pneg %p168
    // Predicated region
    $region9: #{_lambda_.5} parent=5 // pred_check
      _
    $region10: #{_lambda_.5} parent=5 // pred_check_branch
      %171 = sbr.rel (%p168) target = $region12
    $region11: #{_lambda_.5} parent=5 // pred_region
      %s172 = ssub.s32 %s12, 1
      // Predicated region
      $region13: #{_lambda_.5} parent=11 // pred_check
        %p173 = pneg %p85
      $region14: #{_lambda_.5} parent=11 // pred_check_branch
        %175 = sbr.rel (%p173) target = $region16
      $region15: #{_lambda_.5} parent=11 // pred_region
        _
      $region16: #{_lambda_.5} parent=11 // pred_fallthru
        _
      // Predicated region
      $region17: #{_lambda_.5} parent=11 // pred_check
        %p176 = pneg %p106
      $region18: #{_lambda_.5} parent=11 // pred_check_branch
        %178 = sbr.rel (%p176) target = $region20
      $region19: #{_lambda_.5} parent=11 // pred_region
        _
      $region20: #{_lambda_.5} parent=11 // pred_fallthru
        _
    $region12: #{_lambda_.5} parent=5 // pred_fallthru
      _
    %p179 = scmp.lt.s32.totalorder %s12, 2
    // Predicated region
    $region21: #{_lambda_.5} parent=5 // pred_check
      %p180 = pneg %p179
    $region22: #{_lambda_.5} parent=5 // pred_check_branch
      %182 = sbr.rel (%p180) target = $region24
    $region23: #{_lambda_.5} parent=5 // pred_region
      // Predicated region
      $region25: #{_lambda_.5} parent=23 // pred_check
        %p183 = pneg %p32
      $region26: #{_lambda_.5} parent=23 // pred_check_branch
        %185 = sbr.rel (%p183) target = $region28
      $region27: #{_lambda_.5} parent=23 // pred_region
        %s186 = smul.u32 32, %s12
        %p187 = scmp.lt.s32.totalorder %s186, 63
        %s188 = scalar_select %p187, %s186, 63
        %s189 = smul.addr %s188, 4
        %s190 = scalar_lea.vmem %s0, %s189
        %s191 = smul.u32 32, %s12
      $region28: #{_lambda_.5} parent=23 // pred_fallthru
        _
      // Predicated region
      $region29: #{_lambda_.5} parent=23 // pred_check
        %p192 = pneg %p58
      $region30: #{_lambda_.5} parent=23 // pred_check_branch
        %194 = sbr.rel (%p192) target = $region32
      $region31: #{_lambda_.5} parent=23 // pred_region
        %s195 = smul.u32 32, %s12
        %p196 = scmp.lt.s32.totalorder %s195, 63
        %s197 = scalar_select %p196, %s195, 63
        %s198 = smul.addr %s197, 8
        %s199 = scalar_lea.vmem %s1, %s198
        %s200 = smul.u32 32, %s12
      $region32: #{_lambda_.5} parent=23 // pred_fallthru
        _
    $region24: #{_lambda_.5} parent=5 // pred_fallthru
      _
    %p201 = scmp.le.s32.totalorder 1, %s12
    %p202 = scmp.lt.s32.totalorder %s12, 3
    %p203 = pnand %p201, %p202
    %p204 = pneg %p203
    // Predicated region
    $region33: #{_lambda_.5} parent=5 // pred_check
      _
    $region34: #{_lambda_.5} parent=5 // pred_check_branch
      %206 = sbr.rel (%p203) target = $region36
    $region35: #{_lambda_.5} parent=5 // pred_region
      %s207 = ssub.s32 %s12, 1
      %s208 = smul.u32 32, %s17
      %p209 = scmp.lt.s32.totalorder %s208, 63
      %s210 = scalar_select %p209, %s208, 63
      %s211 = smul.addr %s210, 4
      %s212 = scalar_lea.vmem %s0, %s211
      %p213 = pneg %p38
      %p214 = pneg %p35
      %s215 = smul.u32 32, %s17
      %p216 = scmp.lt.s32.totalorder %s215, 63
      %s217 = scalar_select %p216, %s215, 63
      %s218 = smul.addr %s217, 8
      %s219 = scalar_lea.vmem %s1, %s218
      %p220 = pneg %p64
      %p221 = pneg %p61
      %p222 = pneg %p85
      %p223 = pneg %p82
      %p224 = pneg %p106
      %p225 = pneg %p103
      %p226 = pneg %p132
      %p227 = pneg %p129
      %s228 = smul.u32 32, %s17
      %p229 = scmp.lt.s32.totalorder %s228, 63
      %s230 = scalar_select %p229, %s228, 63
      %s231 = smul.addr %s230, 4
      %s232 = scalar_lea.vmem %s4, %s231
      %p233 = pneg %p158
      %p234 = pneg %p155
      %s235 = smul.u32 32, %s17
      %p236 = scmp.lt.s32.totalorder %s235, 63
      %s237 = scalar_select %p236, %s235, 63
      %s238 = smul.addr %s237, 8
      %s239 = scalar_lea.vmem %s5, %s238
      %s240 = smul.u32 32, %s17
      %p241 = scmp.lt.s32.totalorder %s240, 63
      %s242 = scalar_select %p241, %s240, 63
      %s243 = smul.addr %s242, 4
      %s244 = scalar_lea.vmem %s0, %s243
      %s245 = smul.u32 32, %s17
      %s246 = smul.u32 32, %s17
      %p247 = scmp.lt.s32.totalorder %s246, 63
      %s248 = scalar_select %p247, %s246, 63
      %s249 = smul.addr %s248, 8
      %s250 = scalar_lea.vmem %s1, %s249
      %s251 = smul.u32 32, %s17
      %s252 = smul.u32 32, %s17
      %p253 = scmp.lt.s32.totalorder %s252, 63
      %s254 = scalar_select %p253, %s252, 63
      %s255 = smul.addr %s254, 4
      %s256 = scalar_lea.vmem %s4, %s255
      %s257 = smul.u32 32, %s17
      %s258 = smul.u32 32, %s17
      %p259 = scmp.lt.s32.totalorder %s258, 63
      %s260 = scalar_select %p259, %s258, 63
      %s261 = smul.addr %s260, 8
      %s262 = scalar_lea.vmem %s5, %s261
      %s263 = smul.u32 32, %s17
      %v264 = vld [vmem:[%s244] sm:$0xf]
      %v265 = vld [vmem:[%s244 + $0x4] sm:$0xf]
      %v266 = vld [vmem:[%s244 + $0x8] sm:$0xf]
      %v267 = vld [vmem:[%s244 + $0xc] sm:$0xf]
      %v268 = vld [vmem:[%s244 + $0x10] sm:$0xf]
      %v269 = vld [vmem:[%s244 + $0x14] sm:$0xf]
      %v270 = vld [vmem:[%s244 + $0x18] sm:$0xf]
      %v271 = vld [vmem:[%s244 + $0x1c] sm:$0xf]
      %v272 = vld [vmem:[%s244 + $0x20] sm:$0xf]
      %v273 = vld [vmem:[%s244 + $0x24] sm:$0xf]
      %v274 = vld [vmem:[%s244 + $0x28] sm:$0xf]
      %v275 = vld [vmem:[%s244 + $0x2c] sm:$0xf]
      %v276 = vld [vmem:[%s244 + $0x30] sm:$0xf]
      %v277 = vld [vmem:[%s244 + $0x34] sm:$0xf]
      %v278 = vld [vmem:[%s244 + $0x38] sm:$0xf]
      %v279 = vld [vmem:[%s244 + $0x3c] sm:$0xf]
      %v280 = vld [vmem:[%s244 + $0x40] sm:$0xf]
      %v281 = vld [vmem:[%s244 + $0x44] sm:$0xf]
      %v282 = vld [vmem:[%s244 + $0x48] sm:$0xf]
      %v283 = vld [vmem:[%s244 + $0x4c] sm:$0xf]
      %v284 = vld [vmem:[%s244 + $0x50] sm:$0xf]
      %v285 = vld [vmem:[%s244 + $0x54] sm:$0xf]
      %v286 = vld [vmem:[%s244 + $0x58] sm:$0xf]
      %v287 = vld [vmem:[%s244 + $0x5c] sm:$0xf]
      %v288 = vld [vmem:[%s244 + $0x60] sm:$0xf]
      %v289 = vld [vmem:[%s244 + $0x64] sm:$0xf]
      %v290 = vld [vmem:[%s244 + $0x68] sm:$0xf]
      %v291 = vld [vmem:[%s244 + $0x6c] sm:$0xf]
      %v292 = vld [vmem:[%s244 + $0x70] sm:$0xf]
      %v293 = vld [vmem:[%s244 + $0x74] sm:$0xf]
      %v294 = vld [vmem:[%s244 + $0x78] sm:$0xf]
      %v295 = vld [vmem:[%s244 + $0x7c] sm:$0xf]
      %v296 = vld [vmem:[%s2] sm:$0xf]
      %v297 = vld [vmem:[%s2 + $0x4] sm:$0xf]
      %v298 = vld [vmem:[%s2 + $0x8] sm:$0xf]
      %v299 = vld [vmem:[%s2 + $0xc] sm:$0xf]
      %v300 = vld [vmem:[%s2 + $0x10] sm:$0xf]
      %v301 = vld [vmem:[%s2 + $0x14] sm:$0xf]
      %v302 = vld [vmem:[%s2 + $0x18] sm:$0xf]
      %v303 = vld [vmem:[%s2 + $0x1c] sm:$0xf]
      %v304 = vld [vmem:[%s2 + $0x20] sm:$0xf]
      %v305 = vld [vmem:[%s2 + $0x24] sm:$0xf]
      %v306 = vld [vmem:[%s2 + $0x28] sm:$0xf]
      %v307 = vld [vmem:[%s2 + $0x2c] sm:$0xf]
      %v308 = vld [vmem:[%s2 + $0x30] sm:$0xf]
      %v309 = vld [vmem:[%s2 + $0x34] sm:$0xf]
      %v310 = vld [vmem:[%s2 + $0x38] sm:$0xf]
      %v311 = vld [vmem:[%s2 + $0x3c] sm:$0x1]
      %v344 = vunpack.c.l.b16 %v264
      %v345 = vunpack.c.l.b16 %v265
      %v346 = vunpack.c.l.b16 %v266
      %v347 = vunpack.c.l.b16 %v267
      %v348 = vunpack.c.l.b16 %v268
      %v349 = vunpack.c.l.b16 %v269
      %v350 = vunpack.c.l.b16 %v270
      %v351 = vunpack.c.l.b16 %v271
      %v352 = vunpack.c.l.b16 %v272
      %v353 = vunpack.c.l.b16 %v273
      %v354 = vunpack.c.l.b16 %v274
      %v355 = vunpack.c.l.b16 %v275
      %v356 = vunpack.c.l.b16 %v276
      %v357 = vunpack.c.l.b16 %v277
      %v358 = vunpack.c.l.b16 %v278
      %v359 = vunpack.c.l.b16 %v279
      %v360 = vunpack.c.l.b16 %v280
      %v361 = vunpack.c.l.b16 %v281
      %v362 = vunpack.c.l.b16 %v282
      %v363 = vunpack.c.l.b16 %v283
      %v364 = vunpack.c.l.b16 %v284
      %v365 = vunpack.c.l.b16 %v285
      %v366 = vunpack.c.l.b16 %v286
      %v367 = vunpack.c.l.b16 %v287
      %v368 = vunpack.c.l.b16 %v288
      %v369 = vunpack.c.l.b16 %v289
      %v370 = vunpack.c.l.b16 %v290
      %v371 = vunpack.c.l.b16 %v291
      %v372 = vunpack.c.l.b16 %v292
      %v373 = vunpack.c.l.b16 %v293
      %v374 = vunpack.c.l.b16 %v294
      %v375 = vunpack.c.l.b16 %v295
      %v376 = vpack.c.b16 %v345, %v344
      %v377 = vpack.c.b16 %v347, %v346
      %v378 = vpack.c.b16 %v349, %v348
      %v379 = vpack.c.b16 %v351, %v350
      %v380 = vpack.c.b16 %v353, %v352
      %v381 = vpack.c.b16 %v355, %v354
      %v382 = vpack.c.b16 %v357, %v356
      %v383 = vpack.c.b16 %v359, %v358
      %v384 = vpack.c.b16 %v361, %v360
      %v385 = vpack.c.b16 %v363, %v362
      %v386 = vpack.c.b16 %v365, %v364
      %v387 = vpack.c.b16 %v367, %v366
      %v388 = vpack.c.b16 %v369, %v368
      %v389 = vpack.c.b16 %v371, %v370
      %v390 = vpack.c.b16 %v373, %v372
      %v391 = vpack.c.b16 %v375, %v374
      %v408 = vunpack.c.l.b16 %v296
      %v409 = vunpack.c.l.b16 %v297
      %v410 = vunpack.c.l.b16 %v298
      %v411 = vunpack.c.l.b16 %v299
      %v412 = vunpack.c.l.b16 %v300
      %v413 = vunpack.c.l.b16 %v301
      %v414 = vunpack.c.l.b16 %v302
      %v415 = vunpack.c.l.b16 %v303
      %v416 = vunpack.c.l.b16 %v304
      %v417 = vunpack.c.l.b16 %v305
      %v418 = vunpack.c.l.b16 %v306
      %v419 = vunpack.c.l.b16 %v307
      %v420 = vunpack.c.l.b16 %v308
      %v421 = vunpack.c.l.b16 %v309
      %v422 = vunpack.c.l.b16 %v310
      %v423 = vunpack.c.l.b16 %v311
      %v424 = vpack.c.b16 %v409, %v408
      %v425 = vpack.c.b16 %v411, %v410
      %v426 = vpack.c.b16 %v413, %v412
      %v427 = vpack.c.b16 %v415, %v414
      %v428 = vpack.c.b16 %v417, %v416
      %v429 = vpack.c.b16 %v419, %v418
      %v430 = vpack.c.b16 %v421, %v420
      %v431 = vpack.c.b16 %v423, %v422
      %vm439 = vcmask 990208
      %v441 = vsel %vm439, %v376, 0
      %v444 = vsel %vm439, %v377, 0
      %v447 = vsel %vm439, %v378, 0
      %v450 = vsel %vm439, %v379, 0
      %v453 = vsel %vm439, %v380, 0
      %v456 = vsel %vm439, %v381, 0
      %v459 = vsel %vm439, %v382, 0
      %v462 = vsel %vm439, %v383, 0
      %v465 = vsel %vm439, %v384, 0
      %v468 = vsel %vm439, %v385, 0
      %v471 = vsel %vm439, %v386, 0
      %v474 = vsel %vm439, %v387, 0
      %v477 = vsel %vm439, %v388, 0
      %v480 = vsel %vm439, %v389, 0
      %v483 = vsel %vm439, %v390, 0
      %v486 = vsel %vm439, %v391, 0
      %vm488 = vcmask 1043456
      %vm489 = vcmask 1044480
      %v490 = vsel %vm488, 4294967295, 65535
      %v491 = vsel %vm489, %v490, 0
      %v493 = vand.u32 %v431, %v491
      %495 = vmatpush.bf16.msra.mxu0 %v493
      %496 = vmatpush.bf16.msra.mxu0 %v430
      %497 = vmatpush.bf16.msra.mxu0 %v429
      %498 = vmatpush.bf16.msra.mxu0 %v428
      %499 = vmatpush.bf16.msra.mxu0 %v427
      %500 = vmatpush.bf16.msra.mxu0 %v426
      %501 = vmatpush.bf16.msra.mxu0 %v425
      %502 = vmatpush.bf16.msra.mxu0 %v424
      %503 = vmatmul.bf16.gmra.mxu0 %v441
      %v504 = vpop.f32.mrf.mxu0
      %v505 = vadd.f32 0.0, %v504
      %v506 = vpop.f32.mrf.mxu0
      %v507 = vadd.f32 0.0, %v506
      %508 = vmatmul.bf16.gmra.mxu0 %v444
      %v509 = vpop.f32.mrf.mxu0
      %v510 = vadd.f32 0.0, %v509
      %v511 = vpop.f32.mrf.mxu0
      %v512 = vadd.f32 0.0, %v511
      %513 = vmatmul.bf16.gmra.mxu0 %v447
      %v514 = vpop.f32.mrf.mxu0
      %v515 = vadd.f32 0.0, %v514
      %v516 = vpop.f32.mrf.mxu0
      %v517 = vadd.f32 0.0, %v516
      %518 = vmatmul.bf16.gmra.mxu0 %v450
      %v519 = vpop.f32.mrf.mxu0
      %v520 = vadd.f32 0.0, %v519
      %v521 = vpop.f32.mrf.mxu0
      %v522 = vadd.f32 0.0, %v521
      %523 = vmatmul.bf16.gmra.mxu0 %v453
      %v524 = vpop.f32.mrf.mxu0
      %v525 = vadd.f32 0.0, %v524
      %v526 = vpop.f32.mrf.mxu0
      %v527 = vadd.f32 0.0, %v526
      %528 = vmatmul.bf16.gmra.mxu0 %v456
      %v529 = vpop.f32.mrf.mxu0
      %v530 = vadd.f32 0.0, %v529
      %v531 = vpop.f32.mrf.mxu0
      %v532 = vadd.f32 0.0, %v531
      %533 = vmatmul.bf16.gmra.mxu0 %v459
      %v534 = vpop.f32.mrf.mxu0
      %v535 = vadd.f32 0.0, %v534
      %v536 = vpop.f32.mrf.mxu0
      %v537 = vadd.f32 0.0, %v536
      %538 = vmatmul.bf16.gmra.mxu0 %v462
      %v539 = vpop.f32.mrf.mxu0
      %v540 = vadd.f32 0.0, %v539
      %v541 = vpop.f32.mrf.mxu0
      %v542 = vadd.f32 0.0, %v541
      %543 = vmatmul.bf16.gmra.mxu0 %v465
      %v544 = vpop.f32.mrf.mxu0
      %v545 = vadd.f32 0.0, %v544
      %v546 = vpop.f32.mrf.mxu0
      %v547 = vadd.f32 0.0, %v546
      %548 = vmatmul.bf16.gmra.mxu0 %v468
      %v549 = vpop.f32.mrf.mxu0
      %v550 = vadd.f32 0.0, %v549
      %v551 = vpop.f32.mrf.mxu0
      %v552 = vadd.f32 0.0, %v551
      %553 = vmatmul.bf16.gmra.mxu0 %v471
      %v554 = vpop.f32.mrf.mxu0
      %v555 = vadd.f32 0.0, %v554
      %v556 = vpop.f32.mrf.mxu0
      %v557 = vadd.f32 0.0, %v556
      %558 = vmatmul.bf16.gmra.mxu0 %v474
      %v559 = vpop.f32.mrf.mxu0
      %v560 = vadd.f32 0.0, %v559
      %v561 = vpop.f32.mrf.mxu0
      %v562 = vadd.f32 0.0, %v561
      %563 = vmatmul.bf16.gmra.mxu0 %v477
      %v564 = vpop.f32.mrf.mxu0
      %v565 = vadd.f32 0.0, %v564
      %v566 = vpop.f32.mrf.mxu0
      %v567 = vadd.f32 0.0, %v566
      %568 = vmatmul.bf16.gmra.mxu0 %v480
      %v569 = vpop.f32.mrf.mxu0
      %v570 = vadd.f32 0.0, %v569
      %v571 = vpop.f32.mrf.mxu0
      %v572 = vadd.f32 0.0, %v571
      %573 = vmatmul.bf16.gmra.mxu0 %v483
      %v574 = vpop.f32.mrf.mxu0
      %v575 = vadd.f32 0.0, %v574
      %v576 = vpop.f32.mrf.mxu0
      %v577 = vadd.f32 0.0, %v576
      %578 = vmatmul.bf16.gmra.mxu0 %v486
      %v579 = vpop.f32.mrf.mxu0
      %v580 = vadd.f32 0.0, %v579
      %v581 = vpop.f32.mrf.mxu0
      %v582 = vadd.f32 0.0, %v581
      %583 = vdwg.mxu0
      %v584 = vld [vmem:[%s250] sm:$0xff]
      %v585 = vld [vmem:[%s250 + $0x8] sm:$0xff]
      %v586 = vld [vmem:[%s250 + $0x10] sm:$0xff]
      %v587 = vld [vmem:[%s250 + $0x18] sm:$0xff]
      %v588 = vld [vmem:[%s250 + $0x20] sm:$0xff]
      %v589 = vld [vmem:[%s250 + $0x28] sm:$0xff]
      %v590 = vld [vmem:[%s250 + $0x30] sm:$0xff]
      %v591 = vld [vmem:[%s250 + $0x38] sm:$0xff]
      %v592 = vld [vmem:[%s250 + $0x40] sm:$0xff]
      %v593 = vld [vmem:[%s250 + $0x48] sm:$0xff]
      %v594 = vld [vmem:[%s250 + $0x50] sm:$0xff]
      %v595 = vld [vmem:[%s250 + $0x58] sm:$0xff]
      %v596 = vld [vmem:[%s250 + $0x60] sm:$0xff]
      %v597 = vld [vmem:[%s250 + $0x68] sm:$0xff]
      %v598 = vld [vmem:[%s250 + $0x70] sm:$0xff]
      %v599 = vld [vmem:[%s250 + $0x78] sm:$0xff]
      %v600 = vld [vmem:[%s250 + $0x80] sm:$0xff]
      %v601 = vld [vmem:[%s250 + $0x88] sm:$0xff]
      %v602 = vld [vmem:[%s250 + $0x90] sm:$0xff]
      %v603 = vld [vmem:[%s250 + $0x98] sm:$0xff]
      %v604 = vld [vmem:[%s250 + $0xa0] sm:$0xff]
      %v605 = vld [vmem:[%s250 + $0xa8] sm:$0xff]
      %v606 = vld [vmem:[%s250 + $0xb0] sm:$0xff]
      %v607 = vld [vmem:[%s250 + $0xb8] sm:$0xff]
      %v608 = vld [vmem:[%s250 + $0xc0] sm:$0xff]
      %v609 = vld [vmem:[%s250 + $0xc8] sm:$0xff]
      %v610 = vld [vmem:[%s250 + $0xd0] sm:$0xff]
      %v611 = vld [vmem:[%s250 + $0xd8] sm:$0xff]
      %v612 = vld [vmem:[%s250 + $0xe0] sm:$0xff]
      %v613 = vld [vmem:[%s250 + $0xe8] sm:$0xff]
      %v614 = vld [vmem:[%s250 + $0xf0] sm:$0xff]
      %v615 = vld [vmem:[%s250 + $0xf8] sm:$0xff]
      %v616 = vsel %vm439, %v584, 0.0
      %617 = vadd.xlane.f32.xlu0 %v616
      %v618 = vpop.xlane.xlu0 %617
      %v619 = vsel %vm439, %v585, 0.0
      %620 = vadd.xlane.f32.xlu0 %v619
      %v621 = vpop.xlane.xlu0 %620
      %v622 = vsel %vm439, %v586, 0.0
      %623 = vadd.xlane.f32.xlu0 %v622
      %v624 = vpop.xlane.xlu0 %623
      %v625 = vsel %vm439, %v587, 0.0
      %626 = vadd.xlane.f32.xlu0 %v625
      %v627 = vpop.xlane.xlu0 %626
      %v628 = vsel %vm439, %v588, 0.0
      %629 = vadd.xlane.f32.xlu0 %v628
      %v630 = vpop.xlane.xlu0 %629
      %v631 = vsel %vm439, %v589, 0.0
      %632 = vadd.xlane.f32.xlu0 %v631
      %v633 = vpop.xlane.xlu0 %632
      %v634 = vsel %vm439, %v590, 0.0
      %635 = vadd.xlane.f32.xlu0 %v634
      %v636 = vpop.xlane.xlu0 %635
      %v637 = vsel %vm439, %v591, 0.0
      %638 = vadd.xlane.f32.xlu0 %v637
      %v639 = vpop.xlane.xlu0 %638
      %v640 = vsel %vm439, %v592, 0.0
      %641 = vadd.xlane.f32.xlu0 %v640
      %v642 = vpop.xlane.xlu0 %641
      %v643 = vsel %vm439, %v593, 0.0
      %644 = vadd.xlane.f32.xlu0 %v643
      %v645 = vpop.xlane.xlu0 %644
      %v646 = vsel %vm439, %v594, 0.0
      %647 = vadd.xlane.f32.xlu0 %v646
      %v648 = vpop.xlane.xlu0 %647
      %v649 = vsel %vm439, %v595, 0.0
      %650 = vadd.xlane.f32.xlu0 %v649
      %v651 = vpop.xlane.xlu0 %650
      %v652 = vsel %vm439, %v596, 0.0
      %653 = vadd.xlane.f32.xlu0 %v652
      %v654 = vpop.xlane.xlu0 %653
      %v655 = vsel %vm439, %v597, 0.0
      %656 = vadd.xlane.f32.xlu0 %v655
      %v657 = vpop.xlane.xlu0 %656
      %v658 = vsel %vm439, %v598, 0.0
      %659 = vadd.xlane.f32.xlu0 %v658
      %v660 = vpop.xlane.xlu0 %659
      %v661 = vsel %vm439, %v599, 0.0
      %662 = vadd.xlane.f32.xlu0 %v661
      %v663 = vpop.xlane.xlu0 %662
      %v664 = vsel %vm439, %v600, 0.0
      %665 = vadd.xlane.f32.xlu0 %v664
      %v666 = vpop.xlane.xlu0 %665
      %v667 = vsel %vm439, %v601, 0.0
      %668 = vadd.xlane.f32.xlu0 %v667
      %v669 = vpop.xlane.xlu0 %668
      %v670 = vsel %vm439, %v602, 0.0
      %671 = vadd.xlane.f32.xlu0 %v670
      %v672 = vpop.xlane.xlu0 %671
      %v673 = vsel %vm439, %v603, 0.0
      %674 = vadd.xlane.f32.xlu0 %v673
      %v675 = vpop.xlane.xlu0 %674
      %v676 = vsel %vm439, %v604, 0.0
      %677 = vadd.xlane.f32.xlu0 %v676
      %v678 = vpop.xlane.xlu0 %677
      %v679 = vsel %vm439, %v605, 0.0
      %680 = vadd.xlane.f32.xlu0 %v679
      %v681 = vpop.xlane.xlu0 %680
      %v682 = vsel %vm439, %v606, 0.0
      %683 = vadd.xlane.f32.xlu0 %v682
      %v684 = vpop.xlane.xlu0 %683
      %v685 = vsel %vm439, %v607, 0.0
      %686 = vadd.xlane.f32.xlu0 %v685
      %v687 = vpop.xlane.xlu0 %686
      %v688 = vsel %vm439, %v608, 0.0
      %689 = vadd.xlane.f32.xlu0 %v688
      %v690 = vpop.xlane.xlu0 %689
      %v691 = vsel %vm439, %v609, 0.0
      %692 = vadd.xlane.f32.xlu0 %v691
      %v693 = vpop.xlane.xlu0 %692
      %v694 = vsel %vm439, %v610, 0.0
      %695 = vadd.xlane.f32.xlu0 %v694
      %v696 = vpop.xlane.xlu0 %695
      %v697 = vsel %vm439, %v611, 0.0
      %698 = vadd.xlane.f32.xlu0 %v697
      %v699 = vpop.xlane.xlu0 %698
      %v700 = vsel %vm439, %v612, 0.0
      %701 = vadd.xlane.f32.xlu0 %v700
      %v702 = vpop.xlane.xlu0 %701
      %v703 = vsel %vm439, %v613, 0.0
      %704 = vadd.xlane.f32.xlu0 %v703
      %v705 = vpop.xlane.xlu0 %704
      %v706 = vsel %vm439, %v614, 0.0
      %707 = vadd.xlane.f32.xlu0 %v706
      %v708 = vpop.xlane.xlu0 %707
      %v709 = vsel %vm439, %v615, 0.0
      %710 = vadd.xlane.f32.xlu0 %v709
      %v711 = vpop.xlane.xlu0 %710
      %v712 = vadd.f32 %v618, 1e-08
      %v713 = vadd.f32 %v621, 1e-08
      %v714 = vadd.f32 %v624, 1e-08
      %v715 = vadd.f32 %v627, 1e-08
      %v716 = vadd.f32 %v630, 1e-08
      %v717 = vadd.f32 %v633, 1e-08
      %v718 = vadd.f32 %v636, 1e-08
      %v719 = vadd.f32 %v639, 1e-08
      %v720 = vadd.f32 %v642, 1e-08
      %v721 = vadd.f32 %v645, 1e-08
      %v722 = vadd.f32 %v648, 1e-08
      %v723 = vadd.f32 %v651, 1e-08
      %v724 = vadd.f32 %v654, 1e-08
      %v725 = vadd.f32 %v657, 1e-08
      %v726 = vadd.f32 %v660, 1e-08
      %v727 = vadd.f32 %v663, 1e-08
      %v728 = vadd.f32 %v666, 1e-08
      %v729 = vadd.f32 %v669, 1e-08
      %v730 = vadd.f32 %v672, 1e-08
      %v731 = vadd.f32 %v675, 1e-08
      %v732 = vadd.f32 %v678, 1e-08
      %v733 = vadd.f32 %v681, 1e-08
      %v734 = vadd.f32 %v684, 1e-08
      %v735 = vadd.f32 %v687, 1e-08
      %v736 = vadd.f32 %v690, 1e-08
      %v737 = vadd.f32 %v693, 1e-08
      %v738 = vadd.f32 %v696, 1e-08
      %v739 = vadd.f32 %v699, 1e-08
      %v740 = vadd.f32 %v702, 1e-08
      %v741 = vadd.f32 %v705, 1e-08
      %v742 = vadd.f32 %v708, 1e-08
      %v743 = vadd.f32 %v711, 1e-08
      %v744 = vrcp.pop %v712
      %v745 = vrcp.pop %v713
      %v746 = vrcp.pop %v714
      %v747 = vrcp.pop %v715
      %v748 = vrcp.pop %v716
      %v749 = vrcp.pop %v717
      %v750 = vrcp.pop %v718
      %v751 = vrcp.pop %v719
      %v752 = vrcp.pop %v720
      %v753 = vrcp.pop %v721
      %v754 = vrcp.pop %v722
      %v755 = vrcp.pop %v723
      %v756 = vrcp.pop %v724
      %v757 = vrcp.pop %v725
      %v758 = vrcp.pop %v726
      %v759 = vrcp.pop %v727
      %v760 = vrcp.pop %v728
      %v761 = vrcp.pop %v729
      %v762 = vrcp.pop %v730
      %v763 = vrcp.pop %v731
      %v764 = vrcp.pop %v732
      %v765 = vrcp.pop %v733
      %v766 = vrcp.pop %v734
      %v767 = vrcp.pop %v735
      %v768 = vrcp.pop %v736
      %v769 = vrcp.pop %v737
      %v770 = vrcp.pop %v738
      %v771 = vrcp.pop %v739
      %v772 = vrcp.pop %v740
      %v773 = vrcp.pop %v741
      %v774 = vrcp.pop %v742
      %v775 = vrcp.pop %v743
      %v776 = vmul.f32 %v505, %v744
      %v777 = vmul.f32 %v507, %v745
      %v778 = vmul.f32 %v510, %v746
      %v779 = vmul.f32 %v512, %v747
      %v780 = vmul.f32 %v515, %v748
      %v781 = vmul.f32 %v517, %v749
      %v782 = vmul.f32 %v520, %v750
      %v783 = vmul.f32 %v522, %v751
      %v784 = vmul.f32 %v525, %v752
      %v785 = vmul.f32 %v527, %v753
      %v786 = vmul.f32 %v530, %v754
      %v787 = vmul.f32 %v532, %v755
      %v788 = vmul.f32 %v535, %v756
      %v789 = vmul.f32 %v537, %v757
      %v790 = vmul.f32 %v540, %v758
      %v791 = vmul.f32 %v542, %v759
      %v792 = vmul.f32 %v545, %v760
      %v793 = vmul.f32 %v547, %v761
      %v794 = vmul.f32 %v550, %v762
      %v795 = vmul.f32 %v552, %v763
      %v796 = vmul.f32 %v555, %v764
      %v797 = vmul.f32 %v557, %v765
      %v798 = vmul.f32 %v560, %v766
      %v799 = vmul.f32 %v562, %v767
      %v800 = vmul.f32 %v565, %v768
      %v801 = vmul.f32 %v567, %v769
      %v802 = vmul.f32 %v570, %v770
      %v803 = vmul.f32 %v572, %v771
      %v804 = vmul.f32 %v575, %v772
      %v805 = vmul.f32 %v577, %v773
      %v806 = vmul.f32 %v580, %v774
      %v807 = vmul.f32 %v582, %v775
      %v808 = vld [vmem:[%s3] sm:$0x1]
      %v810 = vperm.slane %v808, 0
      %v812 = vadd.f32 %v776, %v810
      %v813 = vadd.f32 %v777, %v810
      %v814 = vadd.f32 %v778, %v810
      %v815 = vadd.f32 %v779, %v810
      %v816 = vadd.f32 %v780, %v810
      %v817 = vadd.f32 %v781, %v810
      %v818 = vadd.f32 %v782, %v810
      %v819 = vadd.f32 %v783, %v810
      %v820 = vadd.f32 %v784, %v810
      %v821 = vadd.f32 %v785, %v810
      %v822 = vadd.f32 %v786, %v810
      %v823 = vadd.f32 %v787, %v810
      %v824 = vadd.f32 %v788, %v810
      %v825 = vadd.f32 %v789, %v810
      %v826 = vadd.f32 %v790, %v810
      %v827 = vadd.f32 %v791, %v810
      %v828 = vadd.f32 %v792, %v810
      %v829 = vadd.f32 %v793, %v810
      %v830 = vadd.f32 %v794, %v810
      %v831 = vadd.f32 %v795, %v810
      %v832 = vadd.f32 %v796, %v810
      %v833 = vadd.f32 %v797, %v810
      %v834 = vadd.f32 %v798, %v810
      %v835 = vadd.f32 %v799, %v810
      %v836 = vadd.f32 %v800, %v810
      %v837 = vadd.f32 %v801, %v810
      %v838 = vadd.f32 %v802, %v810
      %v839 = vadd.f32 %v803, %v810
      %v840 = vadd.f32 %v804, %v810
      %v841 = vadd.f32 %v805, %v810
      %v842 = vadd.f32 %v806, %v810
      %v843 = vadd.f32 %v807, %v810
      %v844 = vmax.f32 %v812, 0.0
      %v845 = vmax.f32 %v813, 0.0
      %v846 = vmax.f32 %v814, 0.0
      %v847 = vmax.f32 %v815, 0.0
      %v848 = vmax.f32 %v816, 0.0
      %v849 = vmax.f32 %v817, 0.0
      %v850 = vmax.f32 %v818, 0.0
      %v851 = vmax.f32 %v819, 0.0
      %v852 = vmax.f32 %v820, 0.0
      %v853 = vmax.f32 %v821, 0.0
      %v854 = vmax.f32 %v822, 0.0
      %v855 = vmax.f32 %v823, 0.0
      %v856 = vmax.f32 %v824, 0.0
      %v857 = vmax.f32 %v825, 0.0
      %v858 = vmax.f32 %v826, 0.0
      %v859 = vmax.f32 %v827, 0.0
      %v860 = vmax.f32 %v828, 0.0
      %v861 = vmax.f32 %v829, 0.0
      %v862 = vmax.f32 %v830, 0.0
      %v863 = vmax.f32 %v831, 0.0
      %v864 = vmax.f32 %v832, 0.0
      %v865 = vmax.f32 %v833, 0.0
      %v866 = vmax.f32 %v834, 0.0
      %v867 = vmax.f32 %v835, 0.0
      %v868 = vmax.f32 %v836, 0.0
      %v869 = vmax.f32 %v837, 0.0
      %v870 = vmax.f32 %v838, 0.0
      %v871 = vmax.f32 %v839, 0.0
      %v872 = vmax.f32 %v840, 0.0
      %v873 = vmax.f32 %v841, 0.0
      %v874 = vmax.f32 %v842, 0.0
      %v875 = vmax.f32 %v843, 0.0
      %v876 = vpack.c.bf16 %v844, %v844
      %v877 = vpack.c.bf16 %v845, %v845
      %v878 = vpack.c.bf16 %v846, %v846
      %v879 = vpack.c.bf16 %v847, %v847
      %v880 = vpack.c.bf16 %v848, %v848
      %v881 = vpack.c.bf16 %v849, %v849
      %v882 = vpack.c.bf16 %v850, %v850
      %v883 = vpack.c.bf16 %v851, %v851
      %v884 = vpack.c.bf16 %v852, %v852
      %v885 = vpack.c.bf16 %v853, %v853
      %v886 = vpack.c.bf16 %v854, %v854
      %v887 = vpack.c.bf16 %v855, %v855
      %v888 = vpack.c.bf16 %v856, %v856
      %v889 = vpack.c.bf16 %v857, %v857
      %v890 = vpack.c.bf16 %v858, %v858
      %v891 = vpack.c.bf16 %v859, %v859
      %v892 = vpack.c.bf16 %v860, %v860
      %v893 = vpack.c.bf16 %v861, %v861
      %v894 = vpack.c.bf16 %v862, %v862
      %v895 = vpack.c.bf16 %v863, %v863
      %v896 = vpack.c.bf16 %v864, %v864
      %v897 = vpack.c.bf16 %v865, %v865
      %v898 = vpack.c.bf16 %v866, %v866
      %v899 = vpack.c.bf16 %v867, %v867
      %v900 = vpack.c.bf16 %v868, %v868
      %v901 = vpack.c.bf16 %v869, %v869
      %v902 = vpack.c.bf16 %v870, %v870
      %v903 = vpack.c.bf16 %v871, %v871
      %v904 = vpack.c.bf16 %v872, %v872
      %v905 = vpack.c.bf16 %v873, %v873
      %v906 = vpack.c.bf16 %v874, %v874
      %v907 = vpack.c.bf16 %v875, %v875
      %vm908 = vcmask 125952
      %909 = vst.msk [vmem:[%s256] sm:$0xf] %vm908, %v876
      %910 = vst.msk [vmem:[%s256 + $0x4] sm:$0xf] %vm908, %v877
      %911 = vst.msk [vmem:[%s256 + $0x8] sm:$0xf] %vm908, %v878
      %912 = vst.msk [vmem:[%s256 + $0xc] sm:$0xf] %vm908, %v879
      %913 = vst.msk [vmem:[%s256 + $0x10] sm:$0xf] %vm908, %v880
      %914 = vst.msk [vmem:[%s256 + $0x14] sm:$0xf] %vm908, %v881
      %915 = vst.msk [vmem:[%s256 + $0x18] sm:$0xf] %vm908, %v882
      %916 = vst.msk [vmem:[%s256 + $0x1c] sm:$0xf] %vm908, %v883
      %917 = vst.msk [vmem:[%s256 + $0x20] sm:$0xf] %vm908, %v884
      %918 = vst.msk [vmem:[%s256 + $0x24] sm:$0xf] %vm908, %v885
      %919 = vst.msk [vmem:[%s256 + $0x28] sm:$0xf] %vm908, %v886
      %920 = vst.msk [vmem:[%s256 + $0x2c] sm:$0xf] %vm908, %v887
      %921 = vst.msk [vmem:[%s256 + $0x30] sm:$0xf] %vm908, %v888
      %922 = vst.msk [vmem:[%s256 + $0x34] sm:$0xf] %vm908, %v889
      %923 = vst.msk [vmem:[%s256 + $0x38] sm:$0xf] %vm908, %v890
      %924 = vst.msk [vmem:[%s256 + $0x3c] sm:$0xf] %vm908, %v891
      %925 = vst.msk [vmem:[%s256 + $0x40] sm:$0xf] %vm908, %v892
      %926 = vst.msk [vmem:[%s256 + $0x44] sm:$0xf] %vm908, %v893
      %927 = vst.msk [vmem:[%s256 + $0x48] sm:$0xf] %vm908, %v894
      %928 = vst.msk [vmem:[%s256 + $0x4c] sm:$0xf] %vm908, %v895
      %929 = vst.msk [vmem:[%s256 + $0x50] sm:$0xf] %vm908, %v896
      %930 = vst.msk [vmem:[%s256 + $0x54] sm:$0xf] %vm908, %v897
      %931 = vst.msk [vmem:[%s256 + $0x58] sm:$0xf] %vm908, %v898
      %932 = vst.msk [vmem:[%s256 + $0x5c] sm:$0xf] %vm908, %v899
      %933 = vst.msk [vmem:[%s256 + $0x60] sm:$0xf] %vm908, %v900
      %934 = vst.msk [vmem:[%s256 + $0x64] sm:$0xf] %vm908, %v901
      %935 = vst.msk [vmem:[%s256 + $0x68] sm:$0xf] %vm908, %v902
      %936 = vst.msk [vmem:[%s256 + $0x6c] sm:$0xf] %vm908, %v903
      %937 = vst.msk [vmem:[%s256 + $0x70] sm:$0xf] %vm908, %v904
      %938 = vst.msk [vmem:[%s256 + $0x74] sm:$0xf] %vm908, %v905
      %939 = vst.msk [vmem:[%s256 + $0x78] sm:$0xf] %vm908, %v906
      %940 = vst.msk [vmem:[%s256 + $0x7c] sm:$0xf] %vm908, %v907
      %v941 = vsel %vm439, %v584, -inf
      %942 = vmax.xlane.f32.xlu0 %v941
      %v943 = vpop.xlane.xlu0 %942
      %v944 = vsel %vm439, %v585, -inf
      %945 = vmax.xlane.f32.xlu0 %v944
      %v946 = vpop.xlane.xlu0 %945
      %v947 = vsel %vm439, %v586, -inf
      %948 = vmax.xlane.f32.xlu0 %v947
      %v949 = vpop.xlane.xlu0 %948
      %v950 = vsel %vm439, %v587, -inf
      %951 = vmax.xlane.f32.xlu0 %v950
      %v952 = vpop.xlane.xlu0 %951
      %v953 = vsel %vm439, %v588, -inf
      %954 = vmax.xlane.f32.xlu0 %v953
      %v955 = vpop.xlane.xlu0 %954
      %v956 = vsel %vm439, %v589, -inf
      %957 = vmax.xlane.f32.xlu0 %v956
      %v958 = vpop.xlane.xlu0 %957
      %v959 = vsel %vm439, %v590, -inf
      %960 = vmax.xlane.f32.xlu0 %v959
      %v961 = vpop.xlane.xlu0 %960
      %v962 = vsel %vm439, %v591, -inf
      %963 = vmax.xlane.f32.xlu0 %v962
      %v964 = vpop.xlane.xlu0 %963
      %v965 = vsel %vm439, %v592, -inf
      %966 = vmax.xlane.f32.xlu0 %v965
      %v967 = vpop.xlane.xlu0 %966
      %v968 = vsel %vm439, %v593, -inf
      %969 = vmax.xlane.f32.xlu0 %v968
      %v970 = vpop.xlane.xlu0 %969
      %v971 = vsel %vm439, %v594, -inf
      %972 = vmax.xlane.f32.xlu0 %v971
      %v973 = vpop.xlane.xlu0 %972
      %v974 = vsel %vm439, %v595, -inf
      %975 = vmax.xlane.f32.xlu0 %v974
      %v976 = vpop.xlane.xlu0 %975
      %v977 = vsel %vm439, %v596, -inf
      %978 = vmax.xlane.f32.xlu0 %v977
      %v979 = vpop.xlane.xlu0 %978
      %v980 = vsel %vm439, %v597, -inf
      %981 = vmax.xlane.f32.xlu0 %v980
      %v982 = vpop.xlane.xlu0 %981
      %v983 = vsel %vm439, %v598, -inf
      %984 = vmax.xlane.f32.xlu0 %v983
      %v985 = vpop.xlane.xlu0 %984
      %v986 = vsel %vm439, %v599, -inf
      %987 = vmax.xlane.f32.xlu0 %v986
      %v988 = vpop.xlane.xlu0 %987
      %v989 = vsel %vm439, %v600, -inf
      %990 = vmax.xlane.f32.xlu0 %v989
      %v991 = vpop.xlane.xlu0 %990
      %v992 = vsel %vm439, %v601, -inf
      %993 = vmax.xlane.f32.xlu0 %v992
      %v994 = vpop.xlane.xlu0 %993
      %v995 = vsel %vm439, %v602, -inf
      %996 = vmax.xlane.f32.xlu0 %v995
      %v997 = vpop.xlane.xlu0 %996
      %v998 = vsel %vm439, %v603, -inf
      %999 = vmax.xlane.f32.xlu0 %v998
      %v1000 = vpop.xlane.xlu0 %999
      %v1001 = vsel %vm439, %v604, -inf
      %1002 = vmax.xlane.f32.xlu0 %v1001
      %v1003 = vpop.xlane.xlu0 %1002
      %v1004 = vsel %vm439, %v605, -inf
      %1005 = vmax.xlane.f32.xlu0 %v1004
      %v1006 = vpop.xlane.xlu0 %1005
      %v1007 = vsel %vm439, %v606, -inf
      %1008 = vmax.xlane.f32.xlu0 %v1007
      %v1009 = vpop.xlane.xlu0 %1008
      %v1010 = vsel %vm439, %v607, -inf
      %1011 = vmax.xlane.f32.xlu0 %v1010
      %v1012 = vpop.xlane.xlu0 %1011
      %v1013 = vsel %vm439, %v608, -inf
      %1014 = vmax.xlane.f32.xlu0 %v1013
      %v1015 = vpop.xlane.xlu0 %1014
      %v1016 = vsel %vm439, %v609, -inf
      %1017 = vmax.xlane.f32.xlu0 %v1016
      %v1018 = vpop.xlane.xlu0 %1017
      %v1019 = vsel %vm439, %v610, -inf
      %1020 = vmax.xlane.f32.xlu0 %v1019
      %v1021 = vpop.xlane.xlu0 %1020
      %v1022 = vsel %vm439, %v611, -inf
      %1023 = vmax.xlane.f32.xlu0 %v1022
      %v1024 = vpop.xlane.xlu0 %1023
      %v1025 = vsel %vm439, %v612, -inf
      %1026 = vmax.xlane.f32.xlu0 %v1025
      %v1027 = vpop.xlane.xlu0 %1026
      %v1028 = vsel %vm439, %v613, -inf
      %1029 = vmax.xlane.f32.xlu0 %v1028
      %v1030 = vpop.xlane.xlu0 %1029
      %v1031 = vsel %vm439, %v614, -inf
      %1032 = vmax.xlane.f32.xlu0 %v1031
      %v1033 = vpop.xlane.xlu0 %1032
      %v1034 = vsel %vm439, %v615, -inf
      %1035 = vmax.xlane.f32.xlu0 %v1034
      %v1036 = vpop.xlane.xlu0 %1035
      %vm1037 = vcmask 7168
      %1038 = vst.msk [vmem:[%s262] sm:$0xff] %vm1037, %v943
      %1039 = vst.msk [vmem:[%s262 + $0x8] sm:$0xff] %vm1037, %v946
      %1040 = vst.msk [vmem:[%s262 + $0x10] sm:$0xff] %vm1037, %v949
      %1041 = vst.msk [vmem:[%s262 + $0x18] sm:$0xff] %vm1037, %v952
      %1042 = vst.msk [vmem:[%s262 + $0x20] sm:$0xff] %vm1037, %v955
      %1043 = vst.msk [vmem:[%s262 + $0x28] sm:$0xff] %vm1037, %v958
      %1044 = vst.msk [vmem:[%s262 + $0x30] sm:$0xff] %vm1037, %v961
      %1045 = vst.msk [vmem:[%s262 + $0x38] sm:$0xff] %vm1037, %v964
      %1046 = vst.msk [vmem:[%s262 + $0x40] sm:$0xff] %vm1037, %v967
      %1047 = vst.msk [vmem:[%s262 + $0x48] sm:$0xff] %vm1037, %v970
      %1048 = vst.msk [vmem:[%s262 + $0x50] sm:$0xff] %vm1037, %v973
      %1049 = vst.msk [vmem:[%s262 + $0x58] sm:$0xff] %vm1037, %v976
      %1050 = vst.msk [vmem:[%s262 + $0x60] sm:$0xff] %vm1037, %v979
      %1051 = vst.msk [vmem:[%s262 + $0x68] sm:$0xff] %vm1037, %v982
      %1052 = vst.msk [vmem:[%s262 + $0x70] sm:$0xff] %vm1037, %v985
      %1053 = vst.msk [vmem:[%s262 + $0x78] sm:$0xff] %vm1037, %v988
      %1054 = vst.msk [vmem:[%s262 + $0x80] sm:$0xff] %vm1037, %v991
      %1055 = vst.msk [vmem:[%s262 + $0x88] sm:$0xff] %vm1037, %v994
      %1056 = vst.msk [vmem:[%s262 + $0x90] sm:$0xff] %vm1037, %v997
      %1057 = vst.msk [vmem:[%s262 + $0x98] sm:$0xff] %vm1037, %v1000
      %1058 = vst.msk [vmem:[%s262 + $0xa0] sm:$0xff] %vm1037, %v1003
      %1059 = vst.msk [vmem:[%s262 + $0xa8] sm:$0xff] %vm1037, %v1006
      %1060 = vst.msk [vmem:[%s262 + $0xb0] sm:$0xff] %vm1037, %v1009
      %1061 = vst.msk [vmem:[%s262 + $0xb8] sm:$0xff] %vm1037, %v1012
      %1062 = vst.msk [vmem:[%s262 + $0xc0] sm:$0xff] %vm1037, %v1015
      %1063 = vst.msk [vmem:[%s262 + $0xc8] sm:$0xff] %vm1037, %v1018
      %1064 = vst.msk [vmem:[%s262 + $0xd0] sm:$0xff] %vm1037, %v1021
      %1065 = vst.msk [vmem:[%s262 + $0xd8] sm:$0xff] %vm1037, %v1024
      %1066 = vst.msk [vmem:[%s262 + $0xe0] sm:$0xff] %vm1037, %v1027
      %1067 = vst.msk [vmem:[%s262 + $0xe8] sm:$0xff] %vm1037, %v1030
      %1068 = vst.msk [vmem:[%s262 + $0xf0] sm:$0xff] %vm1037, %v1033
      %1069 = vst.msk [vmem:[%s262 + $0xf8] sm:$0xff] %vm1037, %v1036
      %s1070 = smul.u32 32, %s17
      %p1071 = scmp.lt.s32.totalorder %s1070, 63
      %s1072 = scalar_select %p1071, %s1070, 63
      %s1073 = smul.addr %s1072, 4
      %s1074 = scalar_lea.vmem %s4, %s1073
      %s1075 = smul.u32 32, %s17
      %p1076 = scmp.lt.s32.totalorder %s1075, 63
      %s1077 = scalar_select %p1076, %s1075, 63
      %s1078 = smul.addr %s1077, 8
      %s1079 = scalar_lea.vmem %s5, %s1078
      // Predicated region
      $region37: #{_lambda_.5} parent=35 // pred_check
        %p1080 = pneg %p129
      $region38: #{_lambda_.5} parent=35 // pred_check_branch
        %1082 = sbr.rel (%p1080) target = $region40
      $region39: #{_lambda_.5} parent=35 // pred_region
        %s1083 = smul.u32 32, %s17
      $region40: #{_lambda_.5} parent=35 // pred_fallthru
        _
      // Predicated region
      $region41: #{_lambda_.5} parent=35 // pred_check
        %p1084 = pneg %p155
      $region42: #{_lambda_.5} parent=35 // pred_check_branch
        %1086 = sbr.rel (%p1084) target = $region44
      $region43: #{_lambda_.5} parent=35 // pred_region
        %s1087 = smul.u32 32, %s17
      $region44: #{_lambda_.5} parent=35 // pred_fallthru
        _
    $region36: #{_lambda_.5} parent=5 // pred_fallthru
      _
    %p1088 = scmp.le.s32.totalorder 2, %s12
    // Predicated region
    $region45: #{_lambda_.5} parent=5 // pred_check
      %p1089 = pneg %p1088
    $region46: #{_lambda_.5} parent=5 // pred_check_branch
      %1091 = sbr.rel (%p1089) target = $region48
    $region47: #{_lambda_.5} parent=5 // pred_region
      %s1092 = ssub.s32 %s12, 2
      // Predicated region
      $region49: #{_lambda_.5} parent=47 // pred_check
        %p1093 = pneg %p135
      $region50: #{_lambda_.5} parent=47 // pred_check_branch
        %1095 = sbr.rel (%p1093) target = $region52
      $region51: #{_lambda_.5} parent=47 // pred_region
        %s1096 = smul.u32 32, %s18
        %p1097 = scmp.lt.s32.totalorder %s1096, 63
        %s1098 = scalar_select %p1097, %s1096, 63
        %s1099 = smul.addr %s1098, 4
        %s1100 = scalar_lea.vmem %s4, %s1099
      $region52: #{_lambda_.5} parent=47 // pred_fallthru
        _
      // Predicated region
      $region53: #{_lambda_.5} parent=47 // pred_check
        %p1101 = pneg %p161
      $region54: #{_lambda_.5} parent=47 // pred_check_branch
        %1103 = sbr.rel (%p1101) target = $region56
      $region55: #{_lambda_.5} parent=47 // pred_region
        %s1104 = smul.u32 32, %s18
        %p1105 = scmp.lt.s32.totalorder %s1104, 63
        %s1106 = scalar_select %p1105, %s1104, 63
        %s1107 = smul.addr %s1106, 8
        %s1108 = scalar_lea.vmem %s5, %s1107
      $region56: #{_lambda_.5} parent=47 // pred_fallthru
        _
    $region48: #{_lambda_.5} parent=5 // pred_fallthru
      _
  $region6: #{_lambda_.5} parent=0 // loop_footer
    %s16 = sadd.s32 1, %s12
  $region7: #{_lambda_.5} parent=0 // loop_footer_branch
    %11 = sbr.rel target = $region3
  $region8: #{_lambda_.5} parent=0 // loop_exit
    _

// kernel: mul.19
$region0: #{mul.19}
  %s0 = inlined_call_operand.vmem [shape: f32[512], index: 0, kind: input, shape index: {}]
  %s1 = inlined_call_operand.vmem [shape: f32[2,16,16], index: 1, kind: output, shape index: {}]
  $region1: #{mul.19} parent=0
    #allocation0 [shape = 'u8[4096]{0}', space=vmem, size = 0x1000, scoped, tag = 'scoped mem for input reshape']
    %s3 = ssub.s32 16, 1
    %v4 = vld [vmem:[%s0] sm:%s3]
    %5 = vst [vmem:[#allocation0] sm:%s3] %v4
    %v6 = vld [vmem:[#allocation0] sm:$0xf]
    %vm7 = vcmask 130048
    %8 = vst.msk [vmem:[%s1] ss:$8 sm:$0xf] %vm7, %v6
    %v9 = vld [vmem:[#allocation0] sm:$0xf]
    %10 = vrot.lane.b32.xlu0 %v9, 112
    %v11 = vpop.permute.xlu0 %10
    %vm12 = vcmask 130048
    %s13 = scalar_lea.vmem %s1, 1
    %14 = vst.msk [vmem:[%s13] ss:$8 sm:$0xf] %vm12, %v11
    %v15 = vld [vmem:[#allocation0] sm:$0xf]
    %16 = vrot.lane.b32.xlu0 %v15, 96
    %v17 = vpop.permute.xlu0 %16
    %vm18 = vcmask 130048
    %s19 = scalar_lea.vmem %s1, 2
    %20 = vst.msk [vmem:[%s19] ss:$8 sm:$0xf] %vm18, %v17
    %v21 = vld [vmem:[#allocation0] sm:$0xf]
    %22 = vrot.lane.b32.xlu0 %v21, 80
    %v23 = vpop.permute.xlu0 %22
    %vm24 = vcmask 130048
    %s25 = scalar_lea.vmem %s1, 3
    %26 = vst.msk [vmem:[%s25] ss:$8 sm:$0xf] %vm24, %v23
    %v27 = vld [vmem:[#allocation0] sm:$0xf]
    %28 = vrot.lane.b32.xlu0 %v27, 64
    %v29 = vpop.permute.xlu0 %28
    %vm30 = vcmask 130048
    %s31 = scalar_lea.vmem %s1, 4
    %32 = vst.msk [vmem:[%s31] ss:$8 sm:$0xf] %vm30, %v29
    %v33 = vld [vmem:[#allocation0] sm:$0xf]
    %34 = vrot.lane.b32.xlu0 %v33, 48
    %v35 = vpop.permute.xlu0 %34
    %vm36 = vcmask 130048
    %s37 = scalar_lea.vmem %s1, 5
    %38 = vst.msk [vmem:[%s37] ss:$8 sm:$0xf] %vm36, %v35
    %v39 = vld [vmem:[#allocation0] sm:$0xf]
    %40 = vrot.lane.b32.xlu0 %v39, 32
    %v41 = vpop.permute.xlu0 %40
    %vm42 = vcmask 130048
    %s43 = scalar_lea.vmem %s1, 6
    %44 = vst.msk [vmem:[%s43] ss:$8 sm:$0xf] %vm42, %v41
    %v45 = vld [vmem:[#allocation0] sm:$0xf]
    %46 = vrot.lane.b32.xlu0 %v45, 16
    %v47 = vpop.permute.xlu0 %46
    %vm48 = vcmask 130048
    %s49 = scalar_lea.vmem %s1, 7
    %50 = vst.msk [vmem:[%s49] ss:$8 sm:$0xf] %vm48, %v47

// kernel: _lambda_.6
$region0: #{_lambda_.6}
  #allocation0 [shape = 'u32[]', space=smem, size = 0x4, offset = 0x4, fixed_abs, tag = 'smem constant byte address 0x4 - core index']
  #allocation1 [shape = 'u32[72,128]{1,0:T(1,128)}', space=vmem, size = 0x9000, scoped, tag = 'internal scratch']
  %s0 = inlined_call_operand.vmem [shape: bf16[512,784], index: 0, kind: input, shape index: {}]
  %s1 = inlined_call_operand.vmem [shape: f32[512,49], index: 1, kind: input, shape index: {}]
  %s2 = inlined_call_operand.vmem [shape: bf16[784,16], index: 2, kind: input, shape index: {}]
  %s3 = inlined_call_operand.vmem [shape: f32[1,16], index: 3, kind: input, shape index: {}]
  %s4 = inlined_call_operand.vmem [shape: bf16[512,16], index: 4, kind: output, shape index: {0}]
  %s5 = inlined_call_operand.vmem [shape: f32[512,1], index: 5, kind: output, shape index: {1}]
  %6 = xla_tuple %s4, %s5
  %s7 = sld [smem:[#allocation0]]
  $region57: #{_lambda_.6} parent=0
    _
  %s9 = ssub.s32 1, %s7
  %s10 = scalar_select 0, %s9, %s7
  loop: start=0, step=1, limit=4
  $region2: #{_lambda_.6} parent=0 // loop_pre_header
    _
  $region3: #{_lambda_.6} parent=0 // loop_header
    %s12 = sphi 0, %s16
    %p13 = scmp.ge.s32.totalorder %s12, 4
    %s22 = sphi 0, %s24
    %s25 = sphi 0, %s22
    %s26 = sphi 0, %s25
    %s42 = sphi 0, %s26
    %s48 = sphi 0, %s50
    %s51 = sphi 0, %s48
    %s52 = sphi 0, %s51
    %s68 = sphi 0, %s52
    %s72 = sphi 0, %s72
    %s74 = sphi 0, %s72
    %s75 = sphi 0, %s74
    %s89 = sphi 0, %s75
    %s93 = sphi 0, %s93
    %s95 = sphi 0, %s93
    %s96 = sphi 0, %s95
    %s110 = sphi 0, %s96
    %s116 = sphi 0, %s118
    %s119 = sphi 0, %s116
    %s120 = sphi 0, %s119
    %s136 = sphi 0, %s120
    %s142 = sphi 0, %s144
    %s145 = sphi 0, %s142
    %s146 = sphi 0, %s145
    %s162 = sphi 0, %s146
  $region4: #{_lambda_.6} parent=0 // loop_header_branch
    %15 = sbr.rel (%p13) target = $region8
  $region5: #{_lambda_.6} parent=0 // loop_body
    %s17 = ssub.s32 %s12, 1
    %s18 = ssub.s32 %s12, 2
    %s19 = sadd.s32 %s12, 1
    %s20 = ssub.s32 %s12, %s19
    %p21 = scmp.eq.s32.totalorder %s20, 0
    %s23 = sadd.s32 %s22, 1
    %s24 = scalar_select %p21, %s22, %s23
    %p27 = pneg %p21
    %p28 = scmp.eq.s32.totalorder %s12, 1
    %p29 = por %p27, %p28
    %p30 = scmp.ne.s32.totalorder %s22, %s25
    %p31 = scmp.eq.s32.totalorder %s12, 0
    %p32 = por %p30, %p31
    %p33 = scmp.ne.s32.totalorder %s22, %s25
    %p34 = scmp.eq.s32.totalorder %s17, 1
    %p35 = por %p33, %p34
    %p36 = scmp.ne.s32.totalorder %s25, %s26
    %p37 = scmp.eq.s32.totalorder %s17, 0
    %p38 = por %p36, %p37
    %p39 = scmp.ne.s32.totalorder %s25, %s26
    %p40 = scmp.eq.s32.totalorder %s18, 1
    %p41 = por %p39, %p40
    %p43 = scmp.ne.s32.totalorder %s26, %s42
    %p44 = scmp.eq.s32.totalorder %s18, 0
    %p45 = por %p43, %p44
    %s46 = ssub.s32 %s12, %s19
    %p47 = scmp.eq.s32.totalorder %s46, 0
    %s49 = sadd.s32 %s48, 1
    %s50 = scalar_select %p47, %s48, %s49
    %p53 = pneg %p47
    %p54 = scmp.eq.s32.totalorder %s12, 1
    %p55 = por %p53, %p54
    %p56 = scmp.ne.s32.totalorder %s48, %s51
    %p57 = scmp.eq.s32.totalorder %s12, 0
    %p58 = por %p56, %p57
    %p59 = scmp.ne.s32.totalorder %s48, %s51
    %p60 = scmp.eq.s32.totalorder %s17, 1
    %p61 = por %p59, %p60
    %p62 = scmp.ne.s32.totalorder %s51, %s52
    %p63 = scmp.eq.s32.totalorder %s17, 0
    %p64 = por %p62, %p63
    %p65 = scmp.ne.s32.totalorder %s51, %s52
    %p66 = scmp.eq.s32.totalorder %s18, 1
    %p67 = por %p65, %p66
    %p69 = scmp.ne.s32.totalorder %s52, %s68
    %p70 = scmp.eq.s32.totalorder %s18, 0
    %p71 = por %p69, %p70
    %s73 = sadd.s32 %s72, 1
    %p76 = scmp.eq.s32.totalorder %s12, 1
    %p77 = scmp.ne.s32.totalorder %s72, %s74
    %p78 = scmp.eq.s32.totalorder %s12, 0
    %p79 = por %p77, %p78
    %p80 = scmp.ne.s32.totalorder %s72, %s74
    %p81 = scmp.eq.s32.totalorder %s17, 1
    %p82 = por %p80, %p81
    %p83 = scmp.ne.s32.totalorder %s74, %s75
    %p84 = scmp.eq.s32.totalorder %s17, 0
    %p85 = por %p83, %p84
    %p86 = scmp.ne.s32.totalorder %s74, %s75
    %p87 = scmp.eq.s32.totalorder %s18, 1
    %p88 = por %p86, %p87
    %p90 = scmp.ne.s32.totalorder %s75, %s89
    %p91 = scmp.eq.s32.totalorder %s18, 0
    %p92 = por %p90, %p91
    %s94 = sadd.s32 %s93, 1
    %p97 = scmp.eq.s32.totalorder %s12, 1
    %p98 = scmp.ne.s32.totalorder %s93, %s95
    %p99 = scmp.eq.s32.totalorder %s12, 0
    %p100 = por %p98, %p99
    %p101 = scmp.ne.s32.totalorder %s93, %s95
    %p102 = scmp.eq.s32.totalorder %s17, 1
    %p103 = por %p101, %p102
    %p104 = scmp.ne.s32.totalorder %s95, %s96
    %p105 = scmp.eq.s32.totalorder %s17, 0
    %p106 = por %p104, %p105
    %p107 = scmp.ne.s32.totalorder %s95, %s96
    %p108 = scmp.eq.s32.totalorder %s18, 1
    %p109 = por %p107, %p108
    %p111 = scmp.ne.s32.totalorder %s96, %s110
    %p112 = scmp.eq.s32.totalorder %s18, 0
    %p113 = por %p111, %p112
    %s114 = ssub.s32 %s12, %s19
    %p115 = scmp.eq.s32.totalorder %s114, 0
    %s117 = sadd.s32 %s116, 1
    %s118 = scalar_select %p115, %s116, %s117
    %p121 = pneg %p115
    %p122 = scmp.eq.s32.totalorder %s12, 1
    %p123 = por %p121, %p122
    %p124 = scmp.ne.s32.totalorder %s116, %s119
    %p125 = scmp.eq.s32.totalorder %s12, 0
    %p126 = por %p124, %p125
    %p127 = scmp.ne.s32.totalorder %s116, %s119
    %p128 = scmp.eq.s32.totalorder %s17, 1
    %p129 = por %p127, %p128
    %p130 = scmp.ne.s32.totalorder %s119, %s120
    %p131 = scmp.eq.s32.totalorder %s17, 0
    %p132 = por %p130, %p131
    %p133 = scmp.ne.s32.totalorder %s119, %s120
    %p134 = scmp.eq.s32.totalorder %s18, 1
    %p135 = por %p133, %p134
    %p137 = scmp.ne.s32.totalorder %s120, %s136
    %p138 = scmp.eq.s32.totalorder %s18, 0
    %p139 = por %p137, %p138
    %s140 = ssub.s32 %s12, %s19
    %p141 = scmp.eq.s32.totalorder %s140, 0
    %s143 = sadd.s32 %s142, 1
    %s144 = scalar_select %p141, %s142, %s143
    %p147 = pneg %p141
    %p148 = scmp.eq.s32.totalorder %s12, 1
    %p149 = por %p147, %p148
    %p150 = scmp.ne.s32.totalorder %s142, %s145
    %p151 = scmp.eq.s32.totalorder %s12, 0
    %p152 = por %p150, %p151
    %p153 = scmp.ne.s32.totalorder %s142, %s145
    %p154 = scmp.eq.s32.totalorder %s17, 1
    %p155 = por %p153, %p154
    %p156 = scmp.ne.s32.totalorder %s145, %s146
    %p157 = scmp.eq.s32.totalorder %s17, 0
    %p158 = por %p156, %p157
    %p159 = scmp.ne.s32.totalorder %s145, %s146
    %p160 = scmp.eq.s32.totalorder %s18, 1
    %p161 = por %p159, %p160
    %p163 = scmp.ne.s32.totalorder %s146, %s162
    %p164 = scmp.eq.s32.totalorder %s18, 0
    %p165 = por %p163, %p164
    %p166 = scmp.le.s32.totalorder 1, %s12
    %p167 = scmp.lt.s32.totalorder %s12, 3
    %p168 = pnand %p166, %p167
    %p169 = pneg %p168
    // Predicated region
    $region9: #{_lambda_.6} parent=5 // pred_check
      _
    $region10: #{_lambda_.6} parent=5 // pred_check_branch
      %171 = sbr.rel (%p168) target = $region12
    $region11: #{_lambda_.6} parent=5 // pred_region
      %s172 = ssub.s32 %s12, 1
      // Predicated region
      $region13: #{_lambda_.6} parent=11 // pred_check
        %p173 = pneg %p85
      $region14: #{_lambda_.6} parent=11 // pred_check_branch
        %175 = sbr.rel (%p173) target = $region16
      $region15: #{_lambda_.6} parent=11 // pred_region
        _
      $region16: #{_lambda_.6} parent=11 // pred_fallthru
        _
      // Predicated region
      $region17: #{_lambda_.6} parent=11 // pred_check
        %p176 = pneg %p106
      $region18: #{_lambda_.6} parent=11 // pred_check_branch
        %178 = sbr.rel (%p176) target = $region20
      $region19: #{_lambda_.6} parent=11 // pred_region
        _
      $region20: #{_lambda_.6} parent=11 // pred_fallthru
        _
    $region12: #{_lambda_.6} parent=5 // pred_fallthru
      _
    %p179 = scmp.lt.s32.totalorder %s12, 2
    // Predicated region
    $region21: #{_lambda_.6} parent=5 // pred_check
      %p180 = pneg %p179
    $region22: #{_lambda_.6} parent=5 // pred_check_branch
      %182 = sbr.rel (%p180) target = $region24
    $region23: #{_lambda_.6} parent=5 // pred_region
      // Predicated region
      $region25: #{_lambda_.6} parent=23 // pred_check
        %p183 = pneg %p32
      $region26: #{_lambda_.6} parent=23 // pred_check_branch
        %185 = sbr.rel (%p183) target = $region28
      $region27: #{_lambda_.6} parent=23 // pred_region
        %s186 = smul.u32 32, %s12
        %p187 = scmp.lt.s32.totalorder %s186, 63
        %s188 = scalar_select %p187, %s186, 63
        %s189 = smul.addr %s188, 7
        %s190 = smul.addr %s189, 4
        %s191 = scalar_lea.vmem %s0, %s190
        %s192 = smul.u32 32, %s12
      $region28: #{_lambda_.6} parent=23 // pred_fallthru
        _
      // Predicated region
      $region29: #{_lambda_.6} parent=23 // pred_check
        %p193 = pneg %p58
      $region30: #{_lambda_.6} parent=23 // pred_check_branch
        %195 = sbr.rel (%p193) target = $region32
      $region31: #{_lambda_.6} parent=23 // pred_region
        %s196 = smul.u32 32, %s12
        %p197 = scmp.lt.s32.totalorder %s196, 63
        %s198 = scalar_select %p197, %s196, 63
        %s199 = smul.addr %s198, 8
        %s200 = scalar_lea.vmem %s1, %s199
        %s201 = smul.u32 32, %s12
      $region32: #{_lambda_.6} parent=23 // pred_fallthru
        _
    $region24: #{_lambda_.6} parent=5 // pred_fallthru
      _
    %p202 = scmp.le.s32.totalorder 1, %s12
    %p203 = scmp.lt.s32.totalorder %s12, 3
    %p204 = pnand %p202, %p203
    %p205 = pneg %p204
    // Predicated region
    $region33: #{_lambda_.6} parent=5 // pred_check
      _
    $region34: #{_lambda_.6} parent=5 // pred_check_branch
      %207 = sbr.rel (%p204) target = $region36
    $region35: #{_lambda_.6} parent=5 // pred_region
      %s208 = ssub.s32 %s12, 1
      %s209 = smul.u32 32, %s17
      %p210 = scmp.lt.s32.totalorder %s209, 63
      %s211 = scalar_select %p210, %s209, 63
      %s212 = smul.addr %s211, 7
      %s213 = smul.addr %s212, 4
      %s214 = scalar_lea.vmem %s0, %s213
      %p215 = pneg %p38
      %p216 = pneg %p35
      %s217 = smul.u32 32, %s17
      %p218 = scmp.lt.s32.totalorder %s217, 63
      %s219 = scalar_select %p218, %s217, 63
      %s220 = smul.addr %s219, 8
      %s221 = scalar_lea.vmem %s1, %s220
      %p222 = pneg %p64
      %p223 = pneg %p61
      %p224 = pneg %p85
      %p225 = pneg %p82
      %p226 = pneg %p106
      %p227 = pneg %p103
      %p228 = pneg %p132
      %p229 = pneg %p129
      %s230 = smul.u32 32, %s17
      %p231 = scmp.lt.s32.totalorder %s230, 63
      %s232 = scalar_select %p231, %s230, 63
      %s233 = smul.addr %s232, 4
      %s234 = scalar_lea.vmem %s4, %s233
      %p235 = pneg %p158
      %p236 = pneg %p155
      %s237 = smul.u32 32, %s17
      %p238 = scmp.lt.s32.totalorder %s237, 63
      %s239 = scalar_select %p238, %s237, 63
      %s240 = smul.addr %s239, 8
      %s241 = scalar_lea.vmem %s5, %s240
      %s242 = smul.u32 32, %s17
      %p243 = scmp.lt.s32.totalorder %s242, 63
      %s244 = scalar_select %p243, %s242, 63
      %s245 = smul.addr %s244, 7
      %s246 = smul.addr %s245, 4
      %s247 = scalar_lea.vmem %s0, %s246
      %s248 = smul.u32 32, %s17
      %s249 = smul.u32 32, %s17
      %p250 = scmp.lt.s32.totalorder %s249, 63
      %s251 = scalar_select %p250, %s249, 63
      %s252 = smul.addr %s251, 8
      %s253 = scalar_lea.vmem %s1, %s252
      %s254 = smul.u32 32, %s17
      %s255 = smul.u32 32, %s17
      %p256 = scmp.lt.s32.totalorder %s255, 63
      %s257 = scalar_select %p256, %s255, 63
      %s258 = smul.addr %s257, 4
      %s259 = scalar_lea.vmem %s4, %s258
      %s260 = smul.u32 32, %s17
      %s261 = smul.u32 32, %s17
      %p262 = scmp.lt.s32.totalorder %s261, 63
      %s263 = scalar_select %p262, %s261, 63
      %s264 = smul.addr %s263, 8
      %s265 = scalar_lea.vmem %s5, %s264
      %s266 = smul.u32 32, %s17
      %v268 = vld [vmem:[%s247] sm:$0xff]
      %v269 = vld [vmem:[%s247 + $0x8] sm:$0xff]
      %v270 = vld [vmem:[%s247 + $0x10] sm:$0xff]
      %v271 = vld [vmem:[%s247 + $0x18] sm:$0xf]
      %v272 = vld [vmem:[%s247 + $0x1c] sm:$0xff]
      %v273 = vld [vmem:[%s247 + $0x24] sm:$0xff]
      %v274 = vld [vmem:[%s247 + $0x2c] sm:$0xff]
      %v275 = vld [vmem:[%s247 + $0x34] sm:$0xf]
      %v276 = vld [vmem:[%s247 + $0x38] sm:$0xff]
      %v277 = vld [vmem:[%s247 + $0x40] sm:$0xff]
      %v278 = vld [vmem:[%s247 + $0x48] sm:$0xff]
      %v279 = vld [vmem:[%s247 + $0x50] sm:$0xf]
      %v280 = vld [vmem:[%s247 + $0x54] sm:$0xff]
      %v281 = vld [vmem:[%s247 + $0x5c] sm:$0xff]
      %v282 = vld [vmem:[%s247 + $0x64] sm:$0xff]
      %v283 = vld [vmem:[%s247 + $0x6c] sm:$0xf]
      %v284 = vld [vmem:[%s247 + $0x70] sm:$0xff]
      %v285 = vld [vmem:[%s247 + $0x78] sm:$0xff]
      %v286 = vld [vmem:[%s247 + $0x80] sm:$0xff]
      %v287 = vld [vmem:[%s247 + $0x88] sm:$0xf]
      %v288 = vld [vmem:[%s247 + $0x8c] sm:$0xff]
      %v289 = vld [vmem:[%s247 + $0x94] sm:$0xff]
      %v290 = vld [vmem:[%s247 + $0x9c] sm:$0xff]
      %v291 = vld [vmem:[%s247 + $0xa4] sm:$0xf]
      %v292 = vld [vmem:[%s247 + $0xa8] sm:$0xff]
      %v293 = vld [vmem:[%s247 + $0xb0] sm:$0xff]
      %v294 = vld [vmem:[%s247 + $0xb8] sm:$0xff]
      %v295 = vld [vmem:[%s247 + $0xc0] sm:$0xf]
      %v296 = vld [vmem:[%s247 + $0xc4] sm:$0xff]
      %v297 = vld [vmem:[%s247 + $0xcc] sm:$0xff]
      %v298 = vld [vmem:[%s247 + $0xd4] sm:$0xff]
      %v299 = vld [vmem:[%s247 + $0xdc] sm:$0xf]
      %v300 = vld [vmem:[%s247 + $0xe0] sm:$0xff]
      %v301 = vld [vmem:[%s247 + $0xe8] sm:$0xff]
      %v302 = vld [vmem:[%s247 + $0xf0] sm:$0xff]
      %v303 = vld [vmem:[%s247 + $0xf8] sm:$0xf]
      %v304 = vld [vmem:[%s247 + $0xfc] sm:$0xff]
      %v305 = vld [vmem:[%s247 + $0x104] sm:$0xff]
      %v306 = vld [vmem:[%s247 + $0x10c] sm:$0xff]
      %v307 = vld [vmem:[%s247 + $0x114] sm:$0xf]
      %v308 = vld [vmem:[%s247 + $0x118] sm:$0xff]
      %v309 = vld [vmem:[%s247 + $0x120] sm:$0xff]
      %v310 = vld [vmem:[%s247 + $0x128] sm:$0xff]
      %v311 = vld [vmem:[%s247 + $0x130] sm:$0xf]
      %v312 = vld [vmem:[%s247 + $0x134] sm:$0xff]
      %v313 = vld [vmem:[%s247 + $0x13c] sm:$0xff]
      %v314 = vld [vmem:[%s247 + $0x144] sm:$0xff]
      %v315 = vld [vmem:[%s247 + $0x14c] sm:$0xf]
      %v316 = vld [vmem:[%s247 + $0x150] sm:$0xff]
      %v317 = vld [vmem:[%s247 + $0x158] sm:$0xff]
      %v318 = vld [vmem:[%s247 + $0x160] sm:$0xff]
      %v319 = vld [vmem:[%s247 + $0x168] sm:$0xf]
      %v320 = vld [vmem:[%s247 + $0x16c] sm:$0xff]
      %v321 = vld [vmem:[%s247 + $0x174] sm:$0xff]
      %v322 = vld [vmem:[%s247 + $0x17c] sm:$0xff]
      %v323 = vld [vmem:[%s247 + $0x184] sm:$0xf]
      %v324 = vld [vmem:[%s247 + $0x188] sm:$0xff]
      %v325 = vld [vmem:[%s247 + $0x190] sm:$0xff]
      %v326 = vld [vmem:[%s247 + $0x198] sm:$0xff]
      %v327 = vld [vmem:[%s247 + $0x1a0] sm:$0xf]
      %v328 = vld [vmem:[%s247 + $0x1a4] sm:$0xff]
      %v329 = vld [vmem:[%s247 + $0x1ac] sm:$0xff]
      %v330 = vld [vmem:[%s247 + $0x1b4] sm:$0xff]
      %v331 = vld [vmem:[%s247 + $0x1bc] sm:$0xf]
      %v332 = vld [vmem:[%s247 + $0x1c0] sm:$0xff]
      %v333 = vld [vmem:[%s247 + $0x1c8] sm:$0xff]
      %v334 = vld [vmem:[%s247 + $0x1d0] sm:$0xff]
      %v335 = vld [vmem:[%s247 + $0x1d8] sm:$0xf]
      %v336 = vld [vmem:[%s247 + $0x1dc] sm:$0xff]
      %v337 = vld [vmem:[%s247 + $0x1e4] sm:$0xff]
      %v338 = vld [vmem:[%s247 + $0x1ec] sm:$0xff]
      %v339 = vld [vmem:[%s247 + $0x1f4] sm:$0xf]
      %v340 = vld [vmem:[%s247 + $0x1f8] sm:$0xff]
      %v341 = vld [vmem:[%s247 + $0x200] sm:$0xff]
      %v342 = vld [vmem:[%s247 + $0x208] sm:$0xff]
      %v343 = vld [vmem:[%s247 + $0x210] sm:$0xf]
      %v344 = vld [vmem:[%s247 + $0x214] sm:$0xff]
      %v345 = vld [vmem:[%s247 + $0x21c] sm:$0xff]
      %v346 = vld [vmem:[%s247 + $0x224] sm:$0xff]
      %v347 = vld [vmem:[%s247 + $0x22c] sm:$0xf]
      %v348 = vld [vmem:[%s247 + $0x230] sm:$0xff]
      %v349 = vld [vmem:[%s247 + $0x238] sm:$0xff]
      %v350 = vld [vmem:[%s247 + $0x240] sm:$0xff]
      %v351 = vld [vmem:[%s247 + $0x248] sm:$0xf]
      %v352 = vld [vmem:[%s247 + $0x24c] sm:$0xff]
      %v353 = vld [vmem:[%s247 + $0x254] sm:$0xff]
      %v354 = vld [vmem:[%s247 + $0x25c] sm:$0xff]
      %v355 = vld [vmem:[%s247 + $0x264] sm:$0xf]
      %v356 = vld [vmem:[%s247 + $0x268] sm:$0xff]
      %v357 = vld [vmem:[%s247 + $0x270] sm:$0xff]
      %v358 = vld [vmem:[%s247 + $0x278] sm:$0xff]
      %v359 = vld [vmem:[%s247 + $0x280] sm:$0xf]
      %v360 = vld [vmem:[%s247 + $0x284] sm:$0xff]
      %v361 = vld [vmem:[%s247 + $0x28c] sm:$0xff]
      %v362 = vld [vmem:[%s247 + $0x294] sm:$0xff]
      %v363 = vld [vmem:[%s247 + $0x29c] sm:$0xf]
      %v364 = vld [vmem:[%s247 + $0x2a0] sm:$0xff]
      %v365 = vld [vmem:[%s247 + $0x2a8] sm:$0xff]
      %v366 = vld [vmem:[%s247 + $0x2b0] sm:$0xff]
      %v367 = vld [vmem:[%s247 + $0x2b8] sm:$0xf]
      %v368 = vld [vmem:[%s247 + $0x2bc] sm:$0xff]
      %v369 = vld [vmem:[%s247 + $0x2c4] sm:$0xff]
      %v370 = vld [vmem:[%s247 + $0x2cc] sm:$0xff]
      %v371 = vld [vmem:[%s247 + $0x2d4] sm:$0xf]
      %v372 = vld [vmem:[%s247 + $0x2d8] sm:$0xff]
      %v373 = vld [vmem:[%s247 + $0x2e0] sm:$0xff]
      %v374 = vld [vmem:[%s247 + $0x2e8] sm:$0xff]
      %v375 = vld [vmem:[%s247 + $0x2f0] sm:$0xf]
      %v376 = vld [vmem:[%s247 + $0x2f4] sm:$0xff]
      %v377 = vld [vmem:[%s247 + $0x2fc] sm:$0xff]
      %v378 = vld [vmem:[%s247 + $0x304] sm:$0xff]
      %v379 = vld [vmem:[%s247 + $0x30c] sm:$0xf]
      %v380 = vld [vmem:[%s247 + $0x310] sm:$0xff]
      %v381 = vld [vmem:[%s247 + $0x318] sm:$0xff]
      %v382 = vld [vmem:[%s247 + $0x320] sm:$0xff]
      %v383 = vld [vmem:[%s247 + $0x328] sm:$0xf]
      %v384 = vld [vmem:[%s247 + $0x32c] sm:$0xff]
      %v385 = vld [vmem:[%s247 + $0x334] sm:$0xff]
      %v386 = vld [vmem:[%s247 + $0x33c] sm:$0xff]
      %v387 = vld [vmem:[%s247 + $0x344] sm:$0xf]
      %v388 = vld [vmem:[%s247 + $0x348] sm:$0xff]
      %v389 = vld [vmem:[%s247 + $0x350] sm:$0xff]
      %v390 = vld [vmem:[%s247 + $0x358] sm:$0xff]
      %v391 = vld [vmem:[%s247 + $0x360] sm:$0xf]
      %v392 = vld [vmem:[%s247 + $0x364] sm:$0xff]
      %v393 = vld [vmem:[%s247 + $0x36c] sm:$0xff]
      %v394 = vld [vmem:[%s247 + $0x374] sm:$0xff]
      %v395 = vld [vmem:[%s247 + $0x37c] sm:$0xf]
      %v396 = vld [vmem:[%s2] sm:$0xf]
      %v397 = vld [vmem:[%s2 + $0x4] sm:$0xf]
      %v398 = vld [vmem:[%s2 + $0x8] sm:$0xf]
      %v399 = vld [vmem:[%s2 + $0xc] sm:$0xf]
      %v400 = vld [vmem:[%s2 + $0x10] sm:$0xf]
      %v401 = vld [vmem:[%s2 + $0x14] sm:$0xf]
      %v402 = vld [vmem:[%s2 + $0x18] sm:$0xf]
      %v403 = vld [vmem:[%s2 + $0x1c] sm:$0xf]
      %v404 = vld [vmem:[%s2 + $0x20] sm:$0xf]
      %v405 = vld [vmem:[%s2 + $0x24] sm:$0xf]
      %v406 = vld [vmem:[%s2 + $0x28] sm:$0xf]
      %v407 = vld [vmem:[%s2 + $0x2c] sm:$0xf]
      %v408 = vld [vmem:[%s2 + $0x30] sm:$0xf]
      %v409 = vld [vmem:[%s2 + $0x34] sm:$0xf]
      %v410 = vld [vmem:[%s2 + $0x38] sm:$0xf]
      %v411 = vld [vmem:[%s2 + $0x3c] sm:$0xf]
      %v412 = vld [vmem:[%s2 + $0x40] sm:$0xf]
      %v413 = vld [vmem:[%s2 + $0x44] sm:$0xf]
      %v414 = vld [vmem:[%s2 + $0x48] sm:$0xf]
      %v415 = vld [vmem:[%s2 + $0x4c] sm:$0xf]
      %v416 = vld [vmem:[%s2 + $0x50] sm:$0xf]
      %v417 = vld [vmem:[%s2 + $0x54] sm:$0xf]
      %v418 = vld [vmem:[%s2 + $0x58] sm:$0xf]
      %v419 = vld [vmem:[%s2 + $0x5c] sm:$0xf]
      %v420 = vld [vmem:[%s2 + $0x60] sm:$0xf]
      %v421 = vld [vmem:[%s2 + $0x64] sm:$0xf]
      %v422 = vld [vmem:[%s2 + $0x68] sm:$0xf]
      %v423 = vld [vmem:[%s2 + $0x6c] sm:$0xf]
      %v424 = vld [vmem:[%s2 + $0x70] sm:$0xf]
      %v425 = vld [vmem:[%s2 + $0x74] sm:$0xf]
      %v426 = vld [vmem:[%s2 + $0x78] sm:$0xf]
      %v427 = vld [vmem:[%s2 + $0x7c] sm:$0xf]
      %v428 = vld [vmem:[%s2 + $0x80] sm:$0xf]
      %v429 = vld [vmem:[%s2 + $0x84] sm:$0xf]
      %v430 = vld [vmem:[%s2 + $0x88] sm:$0xf]
      %v431 = vld [vmem:[%s2 + $0x8c] sm:$0xf]
      %v432 = vld [vmem:[%s2 + $0x90] sm:$0xf]
      %v433 = vld [vmem:[%s2 + $0x94] sm:$0xf]
      %v434 = vld [vmem:[%s2 + $0x98] sm:$0xf]
      %v435 = vld [vmem:[%s2 + $0x9c] sm:$0xf]
      %v436 = vld [vmem:[%s2 + $0xa0] sm:$0xf]
      %v437 = vld [vmem:[%s2 + $0xa4] sm:$0xf]
      %v438 = vld [vmem:[%s2 + $0xa8] sm:$0xf]
      %v439 = vld [vmem:[%s2 + $0xac] sm:$0xf]
      %v440 = vld [vmem:[%s2 + $0xb0] sm:$0xf]
      %v441 = vld [vmem:[%s2 + $0xb4] sm:$0xf]
      %v442 = vld [vmem:[%s2 + $0xb8] sm:$0xf]
      %v443 = vld [vmem:[%s2 + $0xbc] sm:$0xf]
      %v444 = vld [vmem:[%s2 + $0xc0] sm:$0xf]
      %v445 = vld [vmem:[%s2 + $0xc4] sm:$0xf]
      %v446 = vld [vmem:[%s2 + $0xc8] sm:$0xf]
      %v447 = vld [vmem:[%s2 + $0xcc] sm:$0xf]
      %v448 = vld [vmem:[%s2 + $0xd0] sm:$0xf]
      %v449 = vld [vmem:[%s2 + $0xd4] sm:$0xf]
      %v450 = vld [vmem:[%s2 + $0xd8] sm:$0xf]
      %v451 = vld [vmem:[%s2 + $0xdc] sm:$0xf]
      %v452 = vld [vmem:[%s2 + $0xe0] sm:$0xf]
      %v453 = vld [vmem:[%s2 + $0xe4] sm:$0xf]
      %v454 = vld [vmem:[%s2 + $0xe8] sm:$0xf]
      %v455 = vld [vmem:[%s2 + $0xec] sm:$0xf]
      %v456 = vld [vmem:[%s2 + $0xf0] sm:$0xf]
      %v457 = vld [vmem:[%s2 + $0xf4] sm:$0xf]
      %v458 = vld [vmem:[%s2 + $0xf8] sm:$0xf]
      %v459 = vld [vmem:[%s2 + $0xfc] sm:$0xf]
      %v460 = vld [vmem:[%s2 + $0x100] sm:$0xf]
      %v461 = vld [vmem:[%s2 + $0x104] sm:$0xf]
      %v462 = vld [vmem:[%s2 + $0x108] sm:$0xf]
      %v463 = vld [vmem:[%s2 + $0x10c] sm:$0xf]
      %v464 = vld [vmem:[%s2 + $0x110] sm:$0xf]
      %v465 = vld [vmem:[%s2 + $0x114] sm:$0xf]
      %v466 = vld [vmem:[%s2 + $0x118] sm:$0xf]
      %v467 = vld [vmem:[%s2 + $0x11c] sm:$0xf]
      %v468 = vld [vmem:[%s2 + $0x120] sm:$0xf]
      %v469 = vld [vmem:[%s2 + $0x124] sm:$0xf]
      %v470 = vld [vmem:[%s2 + $0x128] sm:$0xf]
      %v471 = vld [vmem:[%s2 + $0x12c] sm:$0xf]
      %v472 = vld [vmem:[%s2 + $0x130] sm:$0xf]
      %v473 = vld [vmem:[%s2 + $0x134] sm:$0xf]
      %v474 = vld [vmem:[%s2 + $0x138] sm:$0xf]
      %v475 = vld [vmem:[%s2 + $0x13c] sm:$0xf]
      %v476 = vld [vmem:[%s2 + $0x140] sm:$0xf]
      %v477 = vld [vmem:[%s2 + $0x144] sm:$0xf]
      %v478 = vld [vmem:[%s2 + $0x148] sm:$0xf]
      %v479 = vld [vmem:[%s2 + $0x14c] sm:$0xf]
      %v480 = vld [vmem:[%s2 + $0x150] sm:$0xf]
      %v481 = vld [vmem:[%s2 + $0x154] sm:$0xf]
      %v482 = vld [vmem:[%s2 + $0x158] sm:$0xf]
      %v483 = vld [vmem:[%s2 + $0x15c] sm:$0xf]
      %v484 = vld [vmem:[%s2 + $0x160] sm:$0xf]
      %v485 = vld [vmem:[%s2 + $0x164] sm:$0xf]
      %v486 = vld [vmem:[%s2 + $0x168] sm:$0xf]
      %v487 = vld [vmem:[%s2 + $0x16c] sm:$0xf]
      %v488 = vld [vmem:[%s2 + $0x170] sm:$0xf]
      %v489 = vld [vmem:[%s2 + $0x174] sm:$0xf]
      %v490 = vld [vmem:[%s2 + $0x178] sm:$0xf]
      %v491 = vld [vmem:[%s2 + $0x17c] sm:$0xf]
      %v492 = vld [vmem:[%s2 + $0x180] sm:$0xf]
      %v493 = vld [vmem:[%s2 + $0x184] sm:$0xf]
      %v622 = vunpack.c.l.b16 %v268
      %v623 = vunpack.c.h.b16 %v268
      %v624 = vunpack.c.l.b16 %v269
      %v625 = vunpack.c.h.b16 %v269
      %v626 = vunpack.c.l.b16 %v270
      %v627 = vunpack.c.h.b16 %v270
      %v628 = vunpack.c.l.b16 %v271
      %v629 = vunpack.c.l.b16 %v272
      %v630 = vunpack.c.h.b16 %v272
      %v631 = vunpack.c.l.b16 %v273
      %v632 = vunpack.c.h.b16 %v273
      %v633 = vunpack.c.l.b16 %v274
      %v634 = vunpack.c.h.b16 %v274
      %v635 = vunpack.c.l.b16 %v275
      %v636 = vunpack.c.l.b16 %v276
      %v637 = vunpack.c.h.b16 %v276
      %v638 = vunpack.c.l.b16 %v277
      %v639 = vunpack.c.h.b16 %v277
      %v640 = vunpack.c.l.b16 %v278
      %v641 = vunpack.c.h.b16 %v278
      %v642 = vunpack.c.l.b16 %v279
      %v643 = vunpack.c.l.b16 %v280
      %v644 = vunpack.c.h.b16 %v280
      %v645 = vunpack.c.l.b16 %v281
      %v646 = vunpack.c.h.b16 %v281
      %v647 = vunpack.c.l.b16 %v282
      %v648 = vunpack.c.h.b16 %v282
      %v649 = vunpack.c.l.b16 %v283
      %v650 = vunpack.c.l.b16 %v284
      %v651 = vunpack.c.h.b16 %v284
      %v652 = vunpack.c.l.b16 %v285
      %v653 = vunpack.c.h.b16 %v285
      %v654 = vunpack.c.l.b16 %v286
      %v655 = vunpack.c.h.b16 %v286
      %v656 = vunpack.c.l.b16 %v287
      %v657 = vunpack.c.l.b16 %v288
      %v658 = vunpack.c.h.b16 %v288
      %v659 = vunpack.c.l.b16 %v289
      %v660 = vunpack.c.h.b16 %v289
      %v661 = vunpack.c.l.b16 %v290
      %v662 = vunpack.c.h.b16 %v290
      %v663 = vunpack.c.l.b16 %v291
      %v664 = vunpack.c.l.b16 %v292
      %v665 = vunpack.c.h.b16 %v292
      %v666 = vunpack.c.l.b16 %v293
      %v667 = vunpack.c.h.b16 %v293
      %v668 = vunpack.c.l.b16 %v294
      %v669 = vunpack.c.h.b16 %v294
      %v670 = vunpack.c.l.b16 %v295
      %v671 = vunpack.c.l.b16 %v296
      %v672 = vunpack.c.h.b16 %v296
      %v673 = vunpack.c.l.b16 %v297
      %v674 = vunpack.c.h.b16 %v297
      %v675 = vunpack.c.l.b16 %v298
      %v676 = vunpack.c.h.b16 %v298
      %v677 = vunpack.c.l.b16 %v299
      %v678 = vunpack.c.l.b16 %v300
      %v679 = vunpack.c.h.b16 %v300
      %v680 = vunpack.c.l.b16 %v301
      %v681 = vunpack.c.h.b16 %v301
      %v682 = vunpack.c.l.b16 %v302
      %v683 = vunpack.c.h.b16 %v302
      %v684 = vunpack.c.l.b16 %v303
      %v685 = vunpack.c.l.b16 %v304
      %v686 = vunpack.c.h.b16 %v304
      %v687 = vunpack.c.l.b16 %v305
      %v688 = vunpack.c.h.b16 %v305
      %v689 = vunpack.c.l.b16 %v306
      %v690 = vunpack.c.h.b16 %v306
      %v691 = vunpack.c.l.b16 %v307
      %v692 = vunpack.c.l.b16 %v308
      %v693 = vunpack.c.h.b16 %v308
      %v694 = vunpack.c.l.b16 %v309
      %v695 = vunpack.c.h.b16 %v309
      %v696 = vunpack.c.l.b16 %v310
      %v697 = vunpack.c.h.b16 %v310
      %v698 = vunpack.c.l.b16 %v311
      %v699 = vunpack.c.l.b16 %v312
      %v700 = vunpack.c.h.b16 %v312
      %v701 = vunpack.c.l.b16 %v313
      %v702 = vunpack.c.h.b16 %v313
      %v703 = vunpack.c.l.b16 %v314
      %v704 = vunpack.c.h.b16 %v314
      %v705 = vunpack.c.l.b16 %v315
      %v706 = vunpack.c.l.b16 %v316
      %v707 = vunpack.c.h.b16 %v316
      %v708 = vunpack.c.l.b16 %v317
      %v709 = vunpack.c.h.b16 %v317
      %v710 = vunpack.c.l.b16 %v318
      %v711 = vunpack.c.h.b16 %v318
      %v712 = vunpack.c.l.b16 %v319
      %v713 = vunpack.c.l.b16 %v320
      %v714 = vunpack.c.h.b16 %v320
      %v715 = vunpack.c.l.b16 %v321
      %v716 = vunpack.c.h.b16 %v321
      %v717 = vunpack.c.l.b16 %v322
      %v718 = vunpack.c.h.b16 %v322
      %v719 = vunpack.c.l.b16 %v323
      %v720 = vunpack.c.l.b16 %v324
      %v721 = vunpack.c.h.b16 %v324
      %v722 = vunpack.c.l.b16 %v325
      %v723 = vunpack.c.h.b16 %v325
      %v724 = vunpack.c.l.b16 %v326
      %v725 = vunpack.c.h.b16 %v326
      %v726 = vunpack.c.l.b16 %v327
      %v727 = vunpack.c.l.b16 %v328
      %v728 = vunpack.c.h.b16 %v328
      %v729 = vunpack.c.l.b16 %v329
      %v730 = vunpack.c.h.b16 %v329
      %v731 = vunpack.c.l.b16 %v330
      %v732 = vunpack.c.h.b16 %v330
      %v733 = vunpack.c.l.b16 %v331
      %v734 = vunpack.c.l.b16 %v332
      %v735 = vunpack.c.h.b16 %v332
      %v736 = vunpack.c.l.b16 %v333
      %v737 = vunpack.c.h.b16 %v333
      %v738 = vunpack.c.l.b16 %v334
      %v739 = vunpack.c.h.b16 %v334
      %v740 = vunpack.c.l.b16 %v335
      %v741 = vunpack.c.l.b16 %v336
      %v742 = vunpack.c.h.b16 %v336
      %v743 = vunpack.c.l.b16 %v337
      %v744 = vunpack.c.h.b16 %v337
      %v745 = vunpack.c.l.b16 %v338
      %v746 = vunpack.c.h.b16 %v338
      %v747 = vunpack.c.l.b16 %v339
      %v748 = vunpack.c.l.b16 %v340
      %v749 = vunpack.c.h.b16 %v340
      %v750 = vunpack.c.l.b16 %v341
      %v751 = vunpack.c.h.b16 %v341
      %v752 = vunpack.c.l.b16 %v342
      %v753 = vunpack.c.h.b16 %v342
      %v754 = vunpack.c.l.b16 %v343
      %v755 = vunpack.c.l.b16 %v344
      %v756 = vunpack.c.h.b16 %v344
      %v757 = vunpack.c.l.b16 %v345
      %v758 = vunpack.c.h.b16 %v345
      %v759 = vunpack.c.l.b16 %v346
      %v760 = vunpack.c.h.b16 %v346
      %v761 = vunpack.c.l.b16 %v347
      %v762 = vunpack.c.l.b16 %v348
      %v763 = vunpack.c.h.b16 %v348
      %v764 = vunpack.c.l.b16 %v349
      %v765 = vunpack.c.h.b16 %v349
      %v766 = vunpack.c.l.b16 %v350
      %v767 = vunpack.c.h.b16 %v350
      %v768 = vunpack.c.l.b16 %v351
      %v769 = vunpack.c.l.b16 %v352
      %v770 = vunpack.c.h.b16 %v352
      %v771 = vunpack.c.l.b16 %v353
      %v772 = vunpack.c.h.b16 %v353
      %v773 = vunpack.c.l.b16 %v354
      %v774 = vunpack.c.h.b16 %v354
      %v775 = vunpack.c.l.b16 %v355
      %v776 = vunpack.c.l.b16 %v356
      %v777 = vunpack.c.h.b16 %v356
      %v778 = vunpack.c.l.b16 %v357
      %v779 = vunpack.c.h.b16 %v357
      %v780 = vunpack.c.l.b16 %v358
      %v781 = vunpack.c.h.b16 %v358
      %v782 = vunpack.c.l.b16 %v359
      %v783 = vunpack.c.l.b16 %v360
      %v784 = vunpack.c.h.b16 %v360
      %v785 = vunpack.c.l.b16 %v361
      %v786 = vunpack.c.h.b16 %v361
      %v787 = vunpack.c.l.b16 %v362
      %v788 = vunpack.c.h.b16 %v362
      %v789 = vunpack.c.l.b16 %v363
      %v790 = vunpack.c.l.b16 %v364
      %v791 = vunpack.c.h.b16 %v364
      %v792 = vunpack.c.l.b16 %v365
      %v793 = vunpack.c.h.b16 %v365
      %v794 = vunpack.c.l.b16 %v366
      %v795 = vunpack.c.h.b16 %v366
      %v796 = vunpack.c.l.b16 %v367
      %v797 = vunpack.c.l.b16 %v368
      %v798 = vunpack.c.h.b16 %v368
      %v799 = vunpack.c.l.b16 %v369
      %v800 = vunpack.c.h.b16 %v369
      %v801 = vunpack.c.l.b16 %v370
      %v802 = vunpack.c.h.b16 %v370
      %v803 = vunpack.c.l.b16 %v371
      %v804 = vunpack.c.l.b16 %v372
      %v805 = vunpack.c.h.b16 %v372
      %v806 = vunpack.c.l.b16 %v373
      %v807 = vunpack.c.h.b16 %v373
      %v808 = vunpack.c.l.b16 %v374
      %v809 = vunpack.c.h.b16 %v374
      %v810 = vunpack.c.l.b16 %v375
      %v811 = vunpack.c.l.b16 %v376
      %v812 = vunpack.c.h.b16 %v376
      %v813 = vunpack.c.l.b16 %v377
      %v814 = vunpack.c.h.b16 %v377
      %v815 = vunpack.c.l.b16 %v378
      %v816 = vunpack.c.h.b16 %v378
      %v817 = vunpack.c.l.b16 %v379
      %v818 = vunpack.c.l.b16 %v380
      %v819 = vunpack.c.h.b16 %v380
      %v820 = vunpack.c.l.b16 %v381
      %v821 = vunpack.c.h.b16 %v381
      %v822 = vunpack.c.l.b16 %v382
      %v823 = vunpack.c.h.b16 %v382
      %v824 = vunpack.c.l.b16 %v383
      %v825 = vunpack.c.l.b16 %v384
      %v826 = vunpack.c.h.b16 %v384
      %v827 = vunpack.c.l.b16 %v385
      %v828 = vunpack.c.h.b16 %v385
      %v829 = vunpack.c.l.b16 %v386
      %v830 = vunpack.c.h.b16 %v386
      %v831 = vunpack.c.l.b16 %v387
      %v832 = vunpack.c.l.b16 %v388
      %v833 = vunpack.c.h.b16 %v388
      %v834 = vunpack.c.l.b16 %v389
      %v835 = vunpack.c.h.b16 %v389
      %v836 = vunpack.c.l.b16 %v390
      %v837 = vunpack.c.h.b16 %v390
      %v838 = vunpack.c.l.b16 %v391
      %v839 = vunpack.c.l.b16 %v392
      %v840 = vunpack.c.h.b16 %v392
      %v841 = vunpack.c.l.b16 %v393
      %v842 = vunpack.c.h.b16 %v393
      %v843 = vunpack.c.l.b16 %v394
      %v844 = vunpack.c.h.b16 %v394
      %v845 = vunpack.c.l.b16 %v395
      %v846 = vpack.c.b16 %v629, %v622
      %v847 = vpack.c.b16 %v630, %v623
      %v848 = vpack.c.b16 %v631, %v624
      %v849 = vpack.c.b16 %v632, %v625
      %v850 = vpack.c.b16 %v633, %v626
      %v851 = vpack.c.b16 %v634, %v627
      %v852 = vpack.c.b16 %v635, %v628
      %v853 = vpack.c.b16 %v643, %v636
      %v854 = vpack.c.b16 %v644, %v637
      %v855 = vpack.c.b16 %v645, %v638
      %v856 = vpack.c.b16 %v646, %v639
      %v857 = vpack.c.b16 %v647, %v640
      %v858 = vpack.c.b16 %v648, %v641
      %v859 = vpack.c.b16 %v649, %v642
      %v860 = vpack.c.b16 %v657, %v650
      %v861 = vpack.c.b16 %v658, %v651
      %v862 = vpack.c.b16 %v659, %v652
      %v863 = vpack.c.b16 %v660, %v653
      %v864 = vpack.c.b16 %v661, %v654
      %v865 = vpack.c.b16 %v662, %v655
      %v866 = vpack.c.b16 %v663, %v656
      %v867 = vpack.c.b16 %v671, %v664
      %v868 = vpack.c.b16 %v672, %v665
      %v869 = vpack.c.b16 %v673, %v666
      %v870 = vpack.c.b16 %v674, %v667
      %v871 = vpack.c.b16 %v675, %v668
      %v872 = vpack.c.b16 %v676, %v669
      %v873 = vpack.c.b16 %v677, %v670
      %v874 = vpack.c.b16 %v685, %v678
      %v875 = vpack.c.b16 %v686, %v679
      %v876 = vpack.c.b16 %v687, %v680
      %v877 = vpack.c.b16 %v688, %v681
      %v878 = vpack.c.b16 %v689, %v682
      %v879 = vpack.c.b16 %v690, %v683
      %v880 = vpack.c.b16 %v691, %v684
      %v881 = vpack.c.b16 %v699, %v692
      %v882 = vpack.c.b16 %v700, %v693
      %v883 = vpack.c.b16 %v701, %v694
      %v884 = vpack.c.b16 %v702, %v695
      %v885 = vpack.c.b16 %v703, %v696
      %v886 = vpack.c.b16 %v704, %v697
      %v887 = vpack.c.b16 %v705, %v698
      %v888 = vpack.c.b16 %v713, %v706
      %v889 = vpack.c.b16 %v714, %v707
      %v890 = vpack.c.b16 %v715, %v708
      %v891 = vpack.c.b16 %v716, %v709
      %v892 = vpack.c.b16 %v717, %v710
      %v893 = vpack.c.b16 %v718, %v711
      %v894 = vpack.c.b16 %v719, %v712
      %v895 = vpack.c.b16 %v727, %v720
      %v896 = vpack.c.b16 %v728, %v721
      %v897 = vpack.c.b16 %v729, %v722
      %v898 = vpack.c.b16 %v730, %v723
      %v899 = vpack.c.b16 %v731, %v724
      %v900 = vpack.c.b16 %v732, %v725
      %v901 = vpack.c.b16 %v733, %v726
      %v902 = vpack.c.b16 %v741, %v734
      %v903 = vpack.c.b16 %v742, %v735
      %v904 = vpack.c.b16 %v743, %v736
      %v905 = vpack.c.b16 %v744, %v737
      %v906 = vpack.c.b16 %v745, %v738
      %v907 = vpack.c.b16 %v746, %v739
      %v908 = vpack.c.b16 %v747, %v740
      %v909 = vpack.c.b16 %v755, %v748
      %v910 = vpack.c.b16 %v756, %v749
      %v911 = vpack.c.b16 %v757, %v750
      %v912 = vpack.c.b16 %v758, %v751
      %v913 = vpack.c.b16 %v759, %v752
      %v914 = vpack.c.b16 %v760, %v753
      %v915 = vpack.c.b16 %v761, %v754
      %v916 = vpack.c.b16 %v769, %v762
      %v917 = vpack.c.b16 %v770, %v763
      %v918 = vpack.c.b16 %v771, %v764
      %v919 = vpack.c.b16 %v772, %v765
      %v920 = vpack.c.b16 %v773, %v766
      %v921 = vpack.c.b16 %v774, %v767
      %v922 = vpack.c.b16 %v775, %v768
      %v923 = vpack.c.b16 %v783, %v776
      %v924 = vpack.c.b16 %v784, %v777
      %v925 = vpack.c.b16 %v785, %v778
      %v926 = vpack.c.b16 %v786, %v779
      %v927 = vpack.c.b16 %v787, %v780
      %v928 = vpack.c.b16 %v788, %v781
      %v929 = vpack.c.b16 %v789, %v782
      %v930 = vpack.c.b16 %v797, %v790
      %v931 = vpack.c.b16 %v798, %v791
      %v932 = vpack.c.b16 %v799, %v792
      %v933 = vpack.c.b16 %v800, %v793
      %v934 = vpack.c.b16 %v801, %v794
      %v935 = vpack.c.b16 %v802, %v795
      %v936 = vpack.c.b16 %v803, %v796
      %v937 = vpack.c.b16 %v811, %v804
      %v938 = vpack.c.b16 %v812, %v805
      %v939 = vpack.c.b16 %v813, %v806
      %v940 = vpack.c.b16 %v814, %v807
      %v941 = vpack.c.b16 %v815, %v808
      %v942 = vpack.c.b16 %v816, %v809
      %v943 = vpack.c.b16 %v817, %v810
      %v944 = vpack.c.b16 %v825, %v818
      %v945 = vpack.c.b16 %v826, %v819
      %v946 = vpack.c.b16 %v827, %v820
      %v947 = vpack.c.b16 %v828, %v821
      %v948 = vpack.c.b16 %v829, %v822
      %v949 = vpack.c.b16 %v830, %v823
      %v950 = vpack.c.b16 %v831, %v824
      %v951 = vpack.c.b16 %v839, %v832
      %v952 = vpack.c.b16 %v840, %v833
      %v953 = vpack.c.b16 %v841, %v834
      %v954 = vpack.c.b16 %v842, %v835
      %v955 = vpack.c.b16 %v843, %v836
      %v956 = vpack.c.b16 %v844, %v837
      %v957 = vpack.c.b16 %v845, %v838
      %v1152 = vunpack.c.l.b16 %v396
      %v1153 = vunpack.c.l.b16 %v397
      %v1154 = vunpack.c.l.b16 %v398
      %v1155 = vunpack.c.l.b16 %v399
      %v1156 = vunpack.c.l.b16 %v400
      %v1157 = vunpack.c.l.b16 %v401
      %v1158 = vunpack.c.l.b16 %v402
      %v1159 = vunpack.c.l.b16 %v403
      %v1160 = vunpack.c.l.b16 %v404
      %v1161 = vunpack.c.l.b16 %v405
      %v1162 = vunpack.c.l.b16 %v406
      %v1163 = vunpack.c.l.b16 %v407
      %v1164 = vunpack.c.l.b16 %v408
      %v1165 = vunpack.c.l.b16 %v409
      %v1166 = vunpack.c.l.b16 %v410
      %v1167 = vunpack.c.l.b16 %v411
      %v1168 = vunpack.c.l.b16 %v412
      %v1169 = vunpack.c.l.b16 %v413
      %v1170 = vunpack.c.l.b16 %v414
      %v1171 = vunpack.c.l.b16 %v415
      %v1172 = vunpack.c.l.b16 %v416
      %v1173 = vunpack.c.l.b16 %v417
      %v1174 = vunpack.c.l.b16 %v418
      %v1175 = vunpack.c.l.b16 %v419
      %v1176 = vunpack.c.l.b16 %v420
      %v1177 = vunpack.c.l.b16 %v421
      %v1178 = vunpack.c.l.b16 %v422
      %v1179 = vunpack.c.l.b16 %v423
      %v1180 = vunpack.c.l.b16 %v424
      %v1181 = vunpack.c.l.b16 %v425
      %v1182 = vunpack.c.l.b16 %v426
      %v1183 = vunpack.c.l.b16 %v427
      %v1184 = vunpack.c.l.b16 %v428
      %v1185 = vunpack.c.l.b16 %v429
      %v1186 = vunpack.c.l.b16 %v430
      %v1187 = vunpack.c.l.b16 %v431
      %v1188 = vunpack.c.l.b16 %v432
      %v1189 = vunpack.c.l.b16 %v433
      %v1190 = vunpack.c.l.b16 %v434
      %v1191 = vunpack.c.l.b16 %v435
      %v1192 = vunpack.c.l.b16 %v436
      %v1193 = vunpack.c.l.b16 %v437
      %v1194 = vunpack.c.l.b16 %v438
      %v1195 = vunpack.c.l.b16 %v439
      %v1196 = vunpack.c.l.b16 %v440
      %v1197 = vunpack.c.l.b16 %v441
      %v1198 = vunpack.c.l.b16 %v442
      %v1199 = vunpack.c.l.b16 %v443
      %v1200 = vunpack.c.l.b16 %v444
      %v1201 = vunpack.c.l.b16 %v445
      %v1202 = vunpack.c.l.b16 %v446
      %v1203 = vunpack.c.l.b16 %v447
      %v1204 = vunpack.c.l.b16 %v448
      %v1205 = vunpack.c.l.b16 %v449
      %v1206 = vunpack.c.l.b16 %v450
      %v1207 = vunpack.c.l.b16 %v451
      %v1208 = vunpack.c.l.b16 %v452
      %v1209 = vunpack.c.l.b16 %v453
      %v1210 = vunpack.c.l.b16 %v454
      %v1211 = vunpack.c.l.b16 %v455
      %v1212 = vunpack.c.l.b16 %v456
      %v1213 = vunpack.c.l.b16 %v457
      %v1214 = vunpack.c.l.b16 %v458
      %v1215 = vunpack.c.l.b16 %v459
      %v1216 = vunpack.c.l.b16 %v460
      %v1217 = vunpack.c.l.b16 %v461
      %v1218 = vunpack.c.l.b16 %v462
      %v1219 = vunpack.c.l.b16 %v463
      %v1220 = vunpack.c.l.b16 %v464
      %v1221 = vunpack.c.l.b16 %v465
      %v1222 = vunpack.c.l.b16 %v466
      %v1223 = vunpack.c.l.b16 %v467
      %v1224 = vunpack.c.l.b16 %v468
      %v1225 = vunpack.c.l.b16 %v469
      %v1226 = vunpack.c.l.b16 %v470
      %v1227 = vunpack.c.l.b16 %v471
      %v1228 = vunpack.c.l.b16 %v472
      %v1229 = vunpack.c.l.b16 %v473
      %v1230 = vunpack.c.l.b16 %v474
      %v1231 = vunpack.c.l.b16 %v475
      %v1232 = vunpack.c.l.b16 %v476
      %v1233 = vunpack.c.l.b16 %v477
      %v1234 = vunpack.c.l.b16 %v478
      %v1235 = vunpack.c.l.b16 %v479
      %v1236 = vunpack.c.l.b16 %v480
      %v1237 = vunpack.c.l.b16 %v481
      %v1238 = vunpack.c.l.b16 %v482
      %v1239 = vunpack.c.l.b16 %v483
      %v1240 = vunpack.c.l.b16 %v484
      %v1241 = vunpack.c.l.b16 %v485
      %v1242 = vunpack.c.l.b16 %v486
      %v1243 = vunpack.c.l.b16 %v487
      %v1244 = vunpack.c.l.b16 %v488
      %v1245 = vunpack.c.l.b16 %v489
      %v1246 = vunpack.c.l.b16 %v490
      %v1247 = vunpack.c.l.b16 %v491
      %v1248 = vunpack.c.l.b16 %v492
      %v1249 = vunpack.c.l.b16 %v493
      %v1250 = vpack.c.b16 %v1153, %v1152
      %v1251 = vpack.c.b16 %v1155, %v1154
      %v1252 = vpack.c.b16 %v1157, %v1156
      %v1253 = vpack.c.b16 %v1159, %v1158
      %v1254 = vpack.c.b16 %v1161, %v1160
      %v1255 = vpack.c.b16 %v1163, %v1162
      %v1256 = vpack.c.b16 %v1165, %v1164
      %v1257 = vpack.c.b16 %v1167, %v1166
      %v1258 = vpack.c.b16 %v1169, %v1168
      %v1259 = vpack.c.b16 %v1171, %v1170
      %v1260 = vpack.c.b16 %v1173, %v1172
      %v1261 = vpack.c.b16 %v1175, %v1174
      %v1262 = vpack.c.b16 %v1177, %v1176
      %v1263 = vpack.c.b16 %v1179, %v1178
      %v1264 = vpack.c.b16 %v1181, %v1180
      %v1265 = vpack.c.b16 %v1183, %v1182
      %v1266 = vpack.c.b16 %v1185, %v1184
      %v1267 = vpack.c.b16 %v1187, %v1186
      %v1268 = vpack.c.b16 %v1189, %v1188
      %v1269 = vpack.c.b16 %v1191, %v1190
      %v1270 = vpack.c.b16 %v1193, %v1192
      %v1271 = vpack.c.b16 %v1195, %v1194
      %v1272 = vpack.c.b16 %v1197, %v1196
      %v1273 = vpack.c.b16 %v1199, %v1198
      %v1274 = vpack.c.b16 %v1201, %v1200
      %v1275 = vpack.c.b16 %v1203, %v1202
      %v1276 = vpack.c.b16 %v1205, %v1204
      %v1277 = vpack.c.b16 %v1207, %v1206
      %v1278 = vpack.c.b16 %v1209, %v1208
      %v1279 = vpack.c.b16 %v1211, %v1210
      %v1280 = vpack.c.b16 %v1213, %v1212
      %v1281 = vpack.c.b16 %v1215, %v1214
      %v1282 = vpack.c.b16 %v1217, %v1216
      %v1283 = vpack.c.b16 %v1219, %v1218
      %v1284 = vpack.c.b16 %v1221, %v1220
      %v1285 = vpack.c.b16 %v1223, %v1222
      %v1286 = vpack.c.b16 %v1225, %v1224
      %v1287 = vpack.c.b16 %v1227, %v1226
      %v1288 = vpack.c.b16 %v1229, %v1228
      %v1289 = vpack.c.b16 %v1231, %v1230
      %v1290 = vpack.c.b16 %v1233, %v1232
      %v1291 = vpack.c.b16 %v1235, %v1234
      %v1292 = vpack.c.b16 %v1237, %v1236
      %v1293 = vpack.c.b16 %v1239, %v1238
      %v1294 = vpack.c.b16 %v1241, %v1240
      %v1295 = vpack.c.b16 %v1243, %v1242
      %v1296 = vpack.c.b16 %v1245, %v1244
      %v1297 = vpack.c.b16 %v1247, %v1246
      %v1298 = vpack.c.b16 %v1249, %v1248
      %vm1348 = vcmask 130048
      %v1350 = vsel %vm1348, %v852, 0
      %v1353 = vsel %vm1348, %v859, 0
      %v1356 = vsel %vm1348, %v866, 0
      %v1359 = vsel %vm1348, %v873, 0
      %v1362 = vsel %vm1348, %v880, 0
      %v1365 = vsel %vm1348, %v887, 0
      %v1368 = vsel %vm1348, %v894, 0
      %v1371 = vsel %vm1348, %v901, 0
      %v1374 = vsel %vm1348, %v908, 0
      %v1377 = vsel %vm1348, %v915, 0
      %v1380 = vsel %vm1348, %v922, 0
      %v1383 = vsel %vm1348, %v929, 0
      %v1386 = vsel %vm1348, %v936, 0
      %v1389 = vsel %vm1348, %v943, 0
      %v1392 = vsel %vm1348, %v950, 0
      %v1395 = vsel %vm1348, %v957, 0
      %1397 = vmatpush.bf16.msra.mxu0 %v1257
      %1398 = vmatpush.bf16.msra.mxu0 %v1256
      %1399 = vmatpush.bf16.msra.mxu0 %v1255
      %1400 = vmatpush.bf16.msra.mxu0 %v1254
      %1401 = vmatpush.bf16.msra.mxu0 %v1253
      %1402 = vmatpush.bf16.msra.mxu0 %v1252
      %1403 = vmatpush.bf16.msra.mxu0 %v1251
      %1404 = vmatpush.bf16.msra.mxu0 %v1250
      %1405 = vmatmul.bf16.gmra.mxu0 %v846
      %v1406 = vpop.f32.mrf.mxu0
      %v1407 = vadd.f32 0.0, %v1406
      %v1408 = vpop.f32.mrf.mxu0
      %v1409 = vadd.f32 0.0, %v1408
      %1410 = vmatmul.bf16.gmra.mxu0 %v853
      %v1411 = vpop.f32.mrf.mxu0
      %v1412 = vadd.f32 0.0, %v1411
      %v1413 = vpop.f32.mrf.mxu0
      %v1414 = vadd.f32 0.0, %v1413
      %1415 = vmatmul.bf16.gmra.mxu0 %v860
      %v1416 = vpop.f32.mrf.mxu0
      %v1417 = vadd.f32 0.0, %v1416
      %v1418 = vpop.f32.mrf.mxu0
      %v1419 = vadd.f32 0.0, %v1418
      %1420 = vmatmul.bf16.gmra.mxu0 %v867
      %v1421 = vpop.f32.mrf.mxu0
      %v1422 = vadd.f32 0.0, %v1421
      %v1423 = vpop.f32.mrf.mxu0
      %v1424 = vadd.f32 0.0, %v1423
      %1425 = vmatmul.bf16.gmra.mxu0 %v874
      %v1426 = vpop.f32.mrf.mxu0
      %v1427 = vadd.f32 0.0, %v1426
      %v1428 = vpop.f32.mrf.mxu0
      %v1429 = vadd.f32 0.0, %v1428
      %1430 = vmatmul.bf16.gmra.mxu0 %v881
      %v1431 = vpop.f32.mrf.mxu0
      %v1432 = vadd.f32 0.0, %v1431
      %v1433 = vpop.f32.mrf.mxu0
      %v1434 = vadd.f32 0.0, %v1433
      %1435 = vmatmul.bf16.gmra.mxu0 %v888
      %v1436 = vpop.f32.mrf.mxu0
      %v1437 = vadd.f32 0.0, %v1436
      %v1438 = vpop.f32.mrf.mxu0
      %v1439 = vadd.f32 0.0, %v1438
      %1440 = vmatmul.bf16.gmra.mxu0 %v895
      %v1441 = vpop.f32.mrf.mxu0
      %v1442 = vadd.f32 0.0, %v1441
      %v1443 = vpop.f32.mrf.mxu0
      %v1444 = vadd.f32 0.0, %v1443
      %1445 = vmatmul.bf16.gmra.mxu0 %v902
      %v1446 = vpop.f32.mrf.mxu0
      %v1447 = vadd.f32 0.0, %v1446
      %v1448 = vpop.f32.mrf.mxu0
      %v1449 = vadd.f32 0.0, %v1448
      %1450 = vmatmul.bf16.gmra.mxu0 %v909
      %v1451 = vpop.f32.mrf.mxu0
      %v1452 = vadd.f32 0.0, %v1451
      %v1453 = vpop.f32.mrf.mxu0
      %v1454 = vadd.f32 0.0, %v1453
      %1455 = vmatmul.bf16.gmra.mxu0 %v916
      %v1456 = vpop.f32.mrf.mxu0
      %v1457 = vadd.f32 0.0, %v1456
      %v1458 = vpop.f32.mrf.mxu0
      %v1459 = vadd.f32 0.0, %v1458
      %1460 = vmatmul.bf16.gmra.mxu0 %v923
      %v1461 = vpop.f32.mrf.mxu0
      %v1462 = vadd.f32 0.0, %v1461
      %v1463 = vpop.f32.mrf.mxu0
      %v1464 = vadd.f32 0.0, %v1463
      %1465 = vmatmul.bf16.gmra.mxu0 %v930
      %v1466 = vpop.f32.mrf.mxu0
      %v1467 = vadd.f32 0.0, %v1466
      %v1468 = vpop.f32.mrf.mxu0
      %v1469 = vadd.f32 0.0, %v1468
      %1470 = vmatmul.bf16.gmra.mxu0 %v937
      %v1471 = vpop.f32.mrf.mxu0
      %v1472 = vadd.f32 0.0, %v1471
      %v1473 = vpop.f32.mrf.mxu0
      %v1474 = vadd.f32 0.0, %v1473
      %1475 = vmatmul.bf16.gmra.mxu0 %v944
      %v1476 = vpop.f32.mrf.mxu0
      %v1477 = vadd.f32 0.0, %v1476
      %v1478 = vpop.f32.mrf.mxu0
      %v1479 = vadd.f32 0.0, %v1478
      %1480 = vmatmul.bf16.gmra.mxu0 %v951
      %v1481 = vpop.f32.mrf.mxu0
      %v1482 = vadd.f32 0.0, %v1481
      %v1483 = vpop.f32.mrf.mxu0
      %v1484 = vadd.f32 0.0, %v1483
      %1485 = vdwg.mxu0
      %1486 = vmatpush.bf16.msra.mxu0 %v1265
      %1487 = vmatpush.bf16.msra.mxu0 %v1264
      %1488 = vmatpush.bf16.msra.mxu0 %v1263
      %1489 = vmatpush.bf16.msra.mxu0 %v1262
      %1490 = vmatpush.bf16.msra.mxu0 %v1261
      %1491 = vmatpush.bf16.msra.mxu0 %v1260
      %1492 = vmatpush.bf16.msra.mxu0 %v1259
      %1493 = vmatpush.bf16.msra.mxu0 %v1258
      %1494 = vmatmul.bf16.gmra.mxu0 %v847
      %v1495 = vpop.f32.mrf.mxu0
      %v1496 = vadd.f32 %v1407, %v1495
      %v1497 = vpop.f32.mrf.mxu0
      %v1498 = vadd.f32 %v1409, %v1497
      %1499 = vmatmul.bf16.gmra.mxu0 %v854
      %v1500 = vpop.f32.mrf.mxu0
      %v1501 = vadd.f32 %v1412, %v1500
      %v1502 = vpop.f32.mrf.mxu0
      %v1503 = vadd.f32 %v1414, %v1502
      %1504 = vmatmul.bf16.gmra.mxu0 %v861
      %v1505 = vpop.f32.mrf.mxu0
      %v1506 = vadd.f32 %v1417, %v1505
      %v1507 = vpop.f32.mrf.mxu0
      %v1508 = vadd.f32 %v1419, %v1507
      %1509 = vmatmul.bf16.gmra.mxu0 %v868
      %v1510 = vpop.f32.mrf.mxu0
      %v1511 = vadd.f32 %v1422, %v1510
      %v1512 = vpop.f32.mrf.mxu0
      %v1513 = vadd.f32 %v1424, %v1512
      %1514 = vmatmul.bf16.gmra.mxu0 %v875
      %v1515 = vpop.f32.mrf.mxu0
      %v1516 = vadd.f32 %v1427, %v1515
      %v1517 = vpop.f32.mrf.mxu0
      %v1518 = vadd.f32 %v1429, %v1517
      %1519 = vmatmul.bf16.gmra.mxu0 %v882
      %v1520 = vpop.f32.mrf.mxu0
      %v1521 = vadd.f32 %v1432, %v1520
      %v1522 = vpop.f32.mrf.mxu0
      %v1523 = vadd.f32 %v1434, %v1522
      %1524 = vmatmul.bf16.gmra.mxu0 %v889
      %v1525 = vpop.f32.mrf.mxu0
      %v1526 = vadd.f32 %v1437, %v1525
      %v1527 = vpop.f32.mrf.mxu0
      %v1528 = vadd.f32 %v1439, %v1527
      %1529 = vmatmul.bf16.gmra.mxu0 %v896
      %v1530 = vpop.f32.mrf.mxu0
      %v1531 = vadd.f32 %v1442, %v1530
      %v1532 = vpop.f32.mrf.mxu0
      %v1533 = vadd.f32 %v1444, %v1532
      %1534 = vmatmul.bf16.gmra.mxu0 %v903
      %v1535 = vpop.f32.mrf.mxu0
      %v1536 = vadd.f32 %v1447, %v1535
      %v1537 = vpop.f32.mrf.mxu0
      %v1538 = vadd.f32 %v1449, %v1537
      %1539 = vmatmul.bf16.gmra.mxu0 %v910
      %v1540 = vpop.f32.mrf.mxu0
      %v1541 = vadd.f32 %v1452, %v1540
      %v1542 = vpop.f32.mrf.mxu0
      %v1543 = vadd.f32 %v1454, %v1542
      %1544 = vmatmul.bf16.gmra.mxu0 %v917
      %v1545 = vpop.f32.mrf.mxu0
      %v1546 = vadd.f32 %v1457, %v1545
      %v1547 = vpop.f32.mrf.mxu0
      %v1548 = vadd.f32 %v1459, %v1547
      %1549 = vmatmul.bf16.gmra.mxu0 %v924
      %v1550 = vpop.f32.mrf.mxu0
      %v1551 = vadd.f32 %v1462, %v1550
      %v1552 = vpop.f32.mrf.mxu0
      %v1553 = vadd.f32 %v1464, %v1552
      %1554 = vmatmul.bf16.gmra.mxu0 %v931
      %v1555 = vpop.f32.mrf.mxu0
      %v1556 = vadd.f32 %v1467, %v1555
      %v1557 = vpop.f32.mrf.mxu0
      %v1558 = vadd.f32 %v1469, %v1557
      %1559 = vmatmul.bf16.gmra.mxu0 %v938
      %v1560 = vpop.f32.mrf.mxu0
      %v1561 = vadd.f32 %v1472, %v1560
      %v1562 = vpop.f32.mrf.mxu0
      %v1563 = vadd.f32 %v1474, %v1562
      %1564 = vmatmul.bf16.gmra.mxu0 %v945
      %v1565 = vpop.f32.mrf.mxu0
      %v1566 = vadd.f32 %v1477, %v1565
      %v1567 = vpop.f32.mrf.mxu0
      %v1568 = vadd.f32 %v1479, %v1567
      %1569 = vmatmul.bf16.gmra.mxu0 %v952
      %v1570 = vpop.f32.mrf.mxu0
      %v1571 = vadd.f32 %v1482, %v1570
      %v1572 = vpop.f32.mrf.mxu0
      %v1573 = vadd.f32 %v1484, %v1572
      %1574 = vdwg.mxu0
      %1575 = vmatpush.bf16.msra.mxu0 %v1273
      %1576 = vmatpush.bf16.msra.mxu0 %v1272
      %1577 = vmatpush.bf16.msra.mxu0 %v1271
      %1578 = vmatpush.bf16.msra.mxu0 %v1270
      %1579 = vmatpush.bf16.msra.mxu0 %v1269
      %1580 = vmatpush.bf16.msra.mxu0 %v1268
      %1581 = vmatpush.bf16.msra.mxu0 %v1267
      %1582 = vmatpush.bf16.msra.mxu0 %v1266
      %1583 = vmatmul.bf16.gmra.mxu0 %v848
      %v1584 = vpop.f32.mrf.mxu0
      %v1585 = vadd.f32 %v1496, %v1584
      %v1586 = vpop.f32.mrf.mxu0
      %v1587 = vadd.f32 %v1498, %v1586
      %1588 = vmatmul.bf16.gmra.mxu0 %v855
      %v1589 = vpop.f32.mrf.mxu0
      %v1590 = vadd.f32 %v1501, %v1589
      %v1591 = vpop.f32.mrf.mxu0
      %v1592 = vadd.f32 %v1503, %v1591
      %1593 = vmatmul.bf16.gmra.mxu0 %v862
      %v1594 = vpop.f32.mrf.mxu0
      %v1595 = vadd.f32 %v1506, %v1594
      %v1596 = vpop.f32.mrf.mxu0
      %v1597 = vadd.f32 %v1508, %v1596
      %1598 = vmatmul.bf16.gmra.mxu0 %v869
      %v1599 = vpop.f32.mrf.mxu0
      %v1600 = vadd.f32 %v1511, %v1599
      %v1601 = vpop.f32.mrf.mxu0
      %v1602 = vadd.f32 %v1513, %v1601
      %1603 = vmatmul.bf16.gmra.mxu0 %v876
      %v1604 = vpop.f32.mrf.mxu0
      %v1605 = vadd.f32 %v1516, %v1604
      %v1606 = vpop.f32.mrf.mxu0
      %v1607 = vadd.f32 %v1518, %v1606
      %1608 = vmatmul.bf16.gmra.mxu0 %v883
      %v1609 = vpop.f32.mrf.mxu0
      %v1610 = vadd.f32 %v1521, %v1609
      %v1611 = vpop.f32.mrf.mxu0
      %v1612 = vadd.f32 %v1523, %v1611
      %1613 = vmatmul.bf16.gmra.mxu0 %v890
      %v1614 = vpop.f32.mrf.mxu0
      %v1615 = vadd.f32 %v1526, %v1614
      %v1616 = vpop.f32.mrf.mxu0
      %v1617 = vadd.f32 %v1528, %v1616
      %1618 = vmatmul.bf16.gmra.mxu0 %v897
      %v1619 = vpop.f32.mrf.mxu0
      %v1620 = vadd.f32 %v1531, %v1619
      %v1621 = vpop.f32.mrf.mxu0
      %v1622 = vadd.f32 %v1533, %v1621
      %1623 = vmatmul.bf16.gmra.mxu0 %v904
      %v1624 = vpop.f32.mrf.mxu0
      %v1625 = vadd.f32 %v1536, %v1624
      %v1626 = vpop.f32.mrf.mxu0
      %v1627 = vadd.f32 %v1538, %v1626
      %1628 = vmatmul.bf16.gmra.mxu0 %v911
      %v1629 = vpop.f32.mrf.mxu0
      %v1630 = vadd.f32 %v1541, %v1629
      %v1631 = vpop.f32.mrf.mxu0
      %v1632 = vadd.f32 %v1543, %v1631
      %1633 = vmatmul.bf16.gmra.mxu0 %v918
      %v1634 = vpop.f32.mrf.mxu0
      %v1635 = vadd.f32 %v1546, %v1634
      %v1636 = vpop.f32.mrf.mxu0
      %v1637 = vadd.f32 %v1548, %v1636
      %1638 = vmatmul.bf16.gmra.mxu0 %v925
      %v1639 = vpop.f32.mrf.mxu0
      %v1640 = vadd.f32 %v1551, %v1639
      %v1641 = vpop.f32.mrf.mxu0
      %v1642 = vadd.f32 %v1553, %v1641
      %1643 = vmatmul.bf16.gmra.mxu0 %v932
      %v1644 = vpop.f32.mrf.mxu0
      %v1645 = vadd.f32 %v1556, %v1644
      %v1646 = vpop.f32.mrf.mxu0
      %v1647 = vadd.f32 %v1558, %v1646
      %1648 = vmatmul.bf16.gmra.mxu0 %v939
      %v1649 = vpop.f32.mrf.mxu0
      %v1650 = vadd.f32 %v1561, %v1649
      %v1651 = vpop.f32.mrf.mxu0
      %v1652 = vadd.f32 %v1563, %v1651
      %1653 = vmatmul.bf16.gmra.mxu0 %v946
      %v1654 = vpop.f32.mrf.mxu0
      %v1655 = vadd.f32 %v1566, %v1654
      %v1656 = vpop.f32.mrf.mxu0
      %v1657 = vadd.f32 %v1568, %v1656
      %1658 = vmatmul.bf16.gmra.mxu0 %v953
      %v1659 = vpop.f32.mrf.mxu0
      %v1660 = vadd.f32 %v1571, %v1659
      %v1661 = vpop.f32.mrf.mxu0
      %v1662 = vadd.f32 %v1573, %v1661
      %1663 = vdwg.mxu0
      %1664 = vmatpush.bf16.msra.mxu0 %v1281
      %1665 = vmatpush.bf16.msra.mxu0 %v1280
      %1666 = vmatpush.bf16.msra.mxu0 %v1279
      %1667 = vmatpush.bf16.msra.mxu0 %v1278
      %1668 = vmatpush.bf16.msra.mxu0 %v1277
      %1669 = vmatpush.bf16.msra.mxu0 %v1276
      %1670 = vmatpush.bf16.msra.mxu0 %v1275
      %1671 = vmatpush.bf16.msra.mxu0 %v1274
      %1672 = vmatmul.bf16.gmra.mxu0 %v849
      %v1673 = vpop.f32.mrf.mxu0
      %v1674 = vadd.f32 %v1585, %v1673
      %v1675 = vpop.f32.mrf.mxu0
      %v1676 = vadd.f32 %v1587, %v1675
      %1677 = vmatmul.bf16.gmra.mxu0 %v856
      %v1678 = vpop.f32.mrf.mxu0
      %v1679 = vadd.f32 %v1590, %v1678
      %v1680 = vpop.f32.mrf.mxu0
      %v1681 = vadd.f32 %v1592, %v1680
      %1682 = vmatmul.bf16.gmra.mxu0 %v863
      %v1683 = vpop.f32.mrf.mxu0
      %v1684 = vadd.f32 %v1595, %v1683
      %v1685 = vpop.f32.mrf.mxu0
      %v1686 = vadd.f32 %v1597, %v1685
      %1687 = vmatmul.bf16.gmra.mxu0 %v870
      %v1688 = vpop.f32.mrf.mxu0
      %v1689 = vadd.f32 %v1600, %v1688
      %v1690 = vpop.f32.mrf.mxu0
      %v1691 = vadd.f32 %v1602, %v1690
      %1692 = vmatmul.bf16.gmra.mxu0 %v877
      %v1693 = vpop.f32.mrf.mxu0
      %v1694 = vadd.f32 %v1605, %v1693
      %v1695 = vpop.f32.mrf.mxu0
      %v1696 = vadd.f32 %v1607, %v1695
      %1697 = vmatmul.bf16.gmra.mxu0 %v884
      %v1698 = vpop.f32.mrf.mxu0
      %v1699 = vadd.f32 %v1610, %v1698
      %v1700 = vpop.f32.mrf.mxu0
      %v1701 = vadd.f32 %v1612, %v1700
      %1702 = vmatmul.bf16.gmra.mxu0 %v891
      %v1703 = vpop.f32.mrf.mxu0
      %v1704 = vadd.f32 %v1615, %v1703
      %v1705 = vpop.f32.mrf.mxu0
      %v1706 = vadd.f32 %v1617, %v1705
      %1707 = vmatmul.bf16.gmra.mxu0 %v898
      %v1708 = vpop.f32.mrf.mxu0
      %v1709 = vadd.f32 %v1620, %v1708
      %v1710 = vpop.f32.mrf.mxu0
      %v1711 = vadd.f32 %v1622, %v1710
      %1712 = vmatmul.bf16.gmra.mxu0 %v905
      %v1713 = vpop.f32.mrf.mxu0
      %v1714 = vadd.f32 %v1625, %v1713
      %v1715 = vpop.f32.mrf.mxu0
      %v1716 = vadd.f32 %v1627, %v1715
      %1717 = vmatmul.bf16.gmra.mxu0 %v912
      %v1718 = vpop.f32.mrf.mxu0
      %v1719 = vadd.f32 %v1630, %v1718
      %v1720 = vpop.f32.mrf.mxu0
      %v1721 = vadd.f32 %v1632, %v1720
      %1722 = vmatmul.bf16.gmra.mxu0 %v919
      %v1723 = vpop.f32.mrf.mxu0
      %v1724 = vadd.f32 %v1635, %v1723
      %v1725 = vpop.f32.mrf.mxu0
      %v1726 = vadd.f32 %v1637, %v1725
      %1727 = vmatmul.bf16.gmra.mxu0 %v926
      %v1728 = vpop.f32.mrf.mxu0
      %v1729 = vadd.f32 %v1640, %v1728
      %v1730 = vpop.f32.mrf.mxu0
      %v1731 = vadd.f32 %v1642, %v1730
      %1732 = vmatmul.bf16.gmra.mxu0 %v933
      %v1733 = vpop.f32.mrf.mxu0
      %v1734 = vadd.f32 %v1645, %v1733
      %v1735 = vpop.f32.mrf.mxu0
      %v1736 = vadd.f32 %v1647, %v1735
      %1737 = vmatmul.bf16.gmra.mxu0 %v940
      %v1738 = vpop.f32.mrf.mxu0
      %v1739 = vadd.f32 %v1650, %v1738
      %v1740 = vpop.f32.mrf.mxu0
      %v1741 = vadd.f32 %v1652, %v1740
      %1742 = vmatmul.bf16.gmra.mxu0 %v947
      %v1743 = vpop.f32.mrf.mxu0
      %v1744 = vadd.f32 %v1655, %v1743
      %v1745 = vpop.f32.mrf.mxu0
      %v1746 = vadd.f32 %v1657, %v1745
      %1747 = vmatmul.bf16.gmra.mxu0 %v954
      %v1748 = vpop.f32.mrf.mxu0
      %v1749 = vadd.f32 %v1660, %v1748
      %v1750 = vpop.f32.mrf.mxu0
      %v1751 = vadd.f32 %v1662, %v1750
      %1752 = vdwg.mxu0
      %1753 = vmatpush.bf16.msra.mxu0 %v1289
      %1754 = vmatpush.bf16.msra.mxu0 %v1288
      %1755 = vmatpush.bf16.msra.mxu0 %v1287
      %1756 = vmatpush.bf16.msra.mxu0 %v1286
      %1757 = vmatpush.bf16.msra.mxu0 %v1285
      %1758 = vmatpush.bf16.msra.mxu0 %v1284
      %1759 = vmatpush.bf16.msra.mxu0 %v1283
      %1760 = vmatpush.bf16.msra.mxu0 %v1282
      %1761 = vmatmul.bf16.gmra.mxu0 %v850
      %v1762 = vpop.f32.mrf.mxu0
      %v1763 = vadd.f32 %v1674, %v1762
      %v1764 = vpop.f32.mrf.mxu0
      %v1765 = vadd.f32 %v1676, %v1764
      %1766 = vmatmul.bf16.gmra.mxu0 %v857
      %v1767 = vpop.f32.mrf.mxu0
      %v1768 = vadd.f32 %v1679, %v1767
      %v1769 = vpop.f32.mrf.mxu0
      %v1770 = vadd.f32 %v1681, %v1769
      %1771 = vmatmul.bf16.gmra.mxu0 %v864
      %v1772 = vpop.f32.mrf.mxu0
      %v1773 = vadd.f32 %v1684, %v1772
      %v1774 = vpop.f32.mrf.mxu0
      %v1775 = vadd.f32 %v1686, %v1774
      %1776 = vmatmul.bf16.gmra.mxu0 %v871
      %v1777 = vpop.f32.mrf.mxu0
      %v1778 = vadd.f32 %v1689, %v1777
      %v1779 = vpop.f32.mrf.mxu0
      %v1780 = vadd.f32 %v1691, %v1779
      %1781 = vmatmul.bf16.gmra.mxu0 %v878
      %v1782 = vpop.f32.mrf.mxu0
      %v1783 = vadd.f32 %v1694, %v1782
      %v1784 = vpop.f32.mrf.mxu0
      %v1785 = vadd.f32 %v1696, %v1784
      %1786 = vmatmul.bf16.gmra.mxu0 %v885
      %v1787 = vpop.f32.mrf.mxu0
      %v1788 = vadd.f32 %v1699, %v1787
      %v1789 = vpop.f32.mrf.mxu0
      %v1790 = vadd.f32 %v1701, %v1789
      %1791 = vmatmul.bf16.gmra.mxu0 %v892
      %v1792 = vpop.f32.mrf.mxu0
      %v1793 = vadd.f32 %v1704, %v1792
      %v1794 = vpop.f32.mrf.mxu0
      %v1795 = vadd.f32 %v1706, %v1794
      %1796 = vmatmul.bf16.gmra.mxu0 %v899
      %v1797 = vpop.f32.mrf.mxu0
      %v1798 = vadd.f32 %v1709, %v1797
      %v1799 = vpop.f32.mrf.mxu0
      %v1800 = vadd.f32 %v1711, %v1799
      %1801 = vmatmul.bf16.gmra.mxu0 %v906
      %v1802 = vpop.f32.mrf.mxu0
      %v1803 = vadd.f32 %v1714, %v1802
      %v1804 = vpop.f32.mrf.mxu0
      %v1805 = vadd.f32 %v1716, %v1804
      %1806 = vmatmul.bf16.gmra.mxu0 %v913
      %v1807 = vpop.f32.mrf.mxu0
      %v1808 = vadd.f32 %v1719, %v1807
      %v1809 = vpop.f32.mrf.mxu0
      %v1810 = vadd.f32 %v1721, %v1809
      %1811 = vmatmul.bf16.gmra.mxu0 %v920
      %v1812 = vpop.f32.mrf.mxu0
      %v1813 = vadd.f32 %v1724, %v1812
      %v1814 = vpop.f32.mrf.mxu0
      %v1815 = vadd.f32 %v1726, %v1814
      %1816 = vmatmul.bf16.gmra.mxu0 %v927
      %v1817 = vpop.f32.mrf.mxu0
      %v1818 = vadd.f32 %v1729, %v1817
      %v1819 = vpop.f32.mrf.mxu0
      %v1820 = vadd.f32 %v1731, %v1819
      %1821 = vmatmul.bf16.gmra.mxu0 %v934
      %v1822 = vpop.f32.mrf.mxu0
      %v1823 = vadd.f32 %v1734, %v1822
      %v1824 = vpop.f32.mrf.mxu0
      %v1825 = vadd.f32 %v1736, %v1824
      %1826 = vmatmul.bf16.gmra.mxu0 %v941
      %v1827 = vpop.f32.mrf.mxu0
      %v1828 = vadd.f32 %v1739, %v1827
      %v1829 = vpop.f32.mrf.mxu0
      %v1830 = vadd.f32 %v1741, %v1829
      %1831 = vmatmul.bf16.gmra.mxu0 %v948
      %v1832 = vpop.f32.mrf.mxu0
      %v1833 = vadd.f32 %v1744, %v1832
      %v1834 = vpop.f32.mrf.mxu0
      %v1835 = vadd.f32 %v1746, %v1834
      %1836 = vmatmul.bf16.gmra.mxu0 %v955
      %v1837 = vpop.f32.mrf.mxu0
      %v1838 = vadd.f32 %v1749, %v1837
      %v1839 = vpop.f32.mrf.mxu0
      %v1840 = vadd.f32 %v1751, %v1839
      %1841 = vdwg.mxu0
      %1842 = vmatpush.bf16.msra.mxu0 %v1297
      %1843 = vmatpush.bf16.msra.mxu0 %v1296
      %1844 = vmatpush.bf16.msra.mxu0 %v1295
      %1845 = vmatpush.bf16.msra.mxu0 %v1294
      %1846 = vmatpush.bf16.msra.mxu0 %v1293
      %1847 = vmatpush.bf16.msra.mxu0 %v1292
      %1848 = vmatpush.bf16.msra.mxu0 %v1291
      %1849 = vmatpush.bf16.msra.mxu0 %v1290
      %1850 = vmatmul.bf16.gmra.mxu0 %v851
      %v1851 = vpop.f32.mrf.mxu0
      %v1852 = vadd.f32 %v1763, %v1851
      %v1853 = vpop.f32.mrf.mxu0
      %v1854 = vadd.f32 %v1765, %v1853
      %1855 = vmatmul.bf16.gmra.mxu0 %v858
      %v1856 = vpop.f32.mrf.mxu0
      %v1857 = vadd.f32 %v1768, %v1856
      %v1858 = vpop.f32.mrf.mxu0
      %v1859 = vadd.f32 %v1770, %v1858
      %1860 = vmatmul.bf16.gmra.mxu0 %v865
      %v1861 = vpop.f32.mrf.mxu0
      %v1862 = vadd.f32 %v1773, %v1861
      %v1863 = vpop.f32.mrf.mxu0
      %v1864 = vadd.f32 %v1775, %v1863
      %1865 = vmatmul.bf16.gmra.mxu0 %v872
      %v1866 = vpop.f32.mrf.mxu0
      %v1867 = vadd.f32 %v1778, %v1866
      %v1868 = vpop.f32.mrf.mxu0
      %v1869 = vadd.f32 %v1780, %v1868
      %1870 = vmatmul.bf16.gmra.mxu0 %v879
      %v1871 = vpop.f32.mrf.mxu0
      %v1872 = vadd.f32 %v1783, %v1871
      %v1873 = vpop.f32.mrf.mxu0
      %v1874 = vadd.f32 %v1785, %v1873
      %1875 = vmatmul.bf16.gmra.mxu0 %v886
      %v1876 = vpop.f32.mrf.mxu0
      %v1877 = vadd.f32 %v1788, %v1876
      %v1878 = vpop.f32.mrf.mxu0
      %v1879 = vadd.f32 %v1790, %v1878
      %1880 = vmatmul.bf16.gmra.mxu0 %v893
      %v1881 = vpop.f32.mrf.mxu0
      %v1882 = vadd.f32 %v1793, %v1881
      %v1883 = vpop.f32.mrf.mxu0
      %v1884 = vadd.f32 %v1795, %v1883
      %1885 = vmatmul.bf16.gmra.mxu0 %v900
      %v1886 = vpop.f32.mrf.mxu0
      %v1887 = vadd.f32 %v1798, %v1886
      %v1888 = vpop.f32.mrf.mxu0
      %v1889 = vadd.f32 %v1800, %v1888
      %1890 = vmatmul.bf16.gmra.mxu0 %v907
      %v1891 = vpop.f32.mrf.mxu0
      %v1892 = vadd.f32 %v1803, %v1891
      %v1893 = vpop.f32.mrf.mxu0
      %v1894 = vadd.f32 %v1805, %v1893
      %1895 = vmatmul.bf16.gmra.mxu0 %v914
      %v1896 = vpop.f32.mrf.mxu0
      %v1897 = vadd.f32 %v1808, %v1896
      %v1898 = vpop.f32.mrf.mxu0
      %v1899 = vadd.f32 %v1810, %v1898
      %1900 = vmatmul.bf16.gmra.mxu0 %v921
      %v1901 = vpop.f32.mrf.mxu0
      %v1902 = vadd.f32 %v1813, %v1901
      %v1903 = vpop.f32.mrf.mxu0
      %v1904 = vadd.f32 %v1815, %v1903
      %1905 = vmatmul.bf16.gmra.mxu0 %v928
      %v1906 = vpop.f32.mrf.mxu0
      %v1907 = vadd.f32 %v1818, %v1906
      %v1908 = vpop.f32.mrf.mxu0
      %v1909 = vadd.f32 %v1820, %v1908
      %1910 = vmatmul.bf16.gmra.mxu0 %v935
      %v1911 = vpop.f32.mrf.mxu0
      %v1912 = vadd.f32 %v1823, %v1911
      %v1913 = vpop.f32.mrf.mxu0
      %v1914 = vadd.f32 %v1825, %v1913
      %1915 = vmatmul.bf16.gmra.mxu0 %v942
      %v1916 = vpop.f32.mrf.mxu0
      %v1917 = vadd.f32 %v1828, %v1916
      %v1918 = vpop.f32.mrf.mxu0
      %v1919 = vadd.f32 %v1830, %v1918
      %1920 = vmatmul.bf16.gmra.mxu0 %v949
      %v1921 = vpop.f32.mrf.mxu0
      %v1922 = vadd.f32 %v1833, %v1921
      %v1923 = vpop.f32.mrf.mxu0
      %v1924 = vadd.f32 %v1835, %v1923
      %1925 = vmatmul.bf16.gmra.mxu0 %v956
      %v1926 = vpop.f32.mrf.mxu0
      %v1927 = vadd.f32 %v1838, %v1926
      %v1928 = vpop.f32.mrf.mxu0
      %v1929 = vadd.f32 %v1840, %v1928
      %1930 = vdwg.mxu0
      %1931 = vmatpush.bf16.msra.mxu0 0
      %1932 = vmatpush.bf16.msra.mxu0 0
      %1933 = vmatpush.bf16.msra.mxu0 0
      %1934 = vmatpush.bf16.msra.mxu0 0
      %1935 = vmatpush.bf16.msra.mxu0 0
      %1936 = vmatpush.bf16.msra.mxu0 0
      %1937 = vmatpush.bf16.msra.mxu0 0
      %1938 = vmatpush.bf16.msra.mxu0 %v1298
      %1939 = vmatmul.bf16.gmra.mxu0 %v1350
      %v1940 = vpop.f32.mrf.mxu0
      %v1941 = vadd.f32 %v1852, %v1940
      %v1942 = vpop.f32.mrf.mxu0
      %v1943 = vadd.f32 %v1854, %v1942
      %1944 = vmatmul.bf16.gmra.mxu0 %v1353
      %v1945 = vpop.f32.mrf.mxu0
      %v1946 = vadd.f32 %v1857, %v1945
      %v1947 = vpop.f32.mrf.mxu0
      %v1948 = vadd.f32 %v1859, %v1947
      %1949 = vmatmul.bf16.gmra.mxu0 %v1356
      %v1950 = vpop.f32.mrf.mxu0
      %v1951 = vadd.f32 %v1862, %v1950
      %v1952 = vpop.f32.mrf.mxu0
      %v1953 = vadd.f32 %v1864, %v1952
      %1954 = vmatmul.bf16.gmra.mxu0 %v1359
      %v1955 = vpop.f32.mrf.mxu0
      %v1956 = vadd.f32 %v1867, %v1955
      %v1957 = vpop.f32.mrf.mxu0
      %v1958 = vadd.f32 %v1869, %v1957
      %1959 = vmatmul.bf16.gmra.mxu0 %v1362
      %v1960 = vpop.f32.mrf.mxu0
      %v1961 = vadd.f32 %v1872, %v1960
      %v1962 = vpop.f32.mrf.mxu0
      %v1963 = vadd.f32 %v1874, %v1962
      %1964 = vmatmul.bf16.gmra.mxu0 %v1365
      %v1965 = vpop.f32.mrf.mxu0
      %v1966 = vadd.f32 %v1877, %v1965
      %v1967 = vpop.f32.mrf.mxu0
      %v1968 = vadd.f32 %v1879, %v1967
      %1969 = vmatmul.bf16.gmra.mxu0 %v1368
      %v1970 = vpop.f32.mrf.mxu0
      %v1971 = vadd.f32 %v1882, %v1970
      %v1972 = vpop.f32.mrf.mxu0
      %v1973 = vadd.f32 %v1884, %v1972
      %1974 = vmatmul.bf16.gmra.mxu0 %v1371
      %v1975 = vpop.f32.mrf.mxu0
      %v1976 = vadd.f32 %v1887, %v1975
      %v1977 = vpop.f32.mrf.mxu0
      %v1978 = vadd.f32 %v1889, %v1977
      %1979 = vmatmul.bf16.gmra.mxu0 %v1374
      %v1980 = vpop.f32.mrf.mxu0
      %v1981 = vadd.f32 %v1892, %v1980
      %v1982 = vpop.f32.mrf.mxu0
      %v1983 = vadd.f32 %v1894, %v1982
      %1984 = vmatmul.bf16.gmra.mxu0 %v1377
      %v1985 = vpop.f32.mrf.mxu0
      %v1986 = vadd.f32 %v1897, %v1985
      %v1987 = vpop.f32.mrf.mxu0
      %v1988 = vadd.f32 %v1899, %v1987
      %1989 = vmatmul.bf16.gmra.mxu0 %v1380
      %v1990 = vpop.f32.mrf.mxu0
      %v1991 = vadd.f32 %v1902, %v1990
      %v1992 = vpop.f32.mrf.mxu0
      %v1993 = vadd.f32 %v1904, %v1992
      %1994 = vmatmul.bf16.gmra.mxu0 %v1383
      %v1995 = vpop.f32.mrf.mxu0
      %v1996 = vadd.f32 %v1907, %v1995
      %v1997 = vpop.f32.mrf.mxu0
      %v1998 = vadd.f32 %v1909, %v1997
      %1999 = vmatmul.bf16.gmra.mxu0 %v1386
      %v2000 = vpop.f32.mrf.mxu0
      %v2001 = vadd.f32 %v1912, %v2000
      %v2002 = vpop.f32.mrf.mxu0
      %v2003 = vadd.f32 %v1914, %v2002
      %2004 = vmatmul.bf16.gmra.mxu0 %v1389
      %v2005 = vpop.f32.mrf.mxu0
      %v2006 = vadd.f32 %v1917, %v2005
      %v2007 = vpop.f32.mrf.mxu0
      %v2008 = vadd.f32 %v1919, %v2007
      %2009 = vmatmul.bf16.gmra.mxu0 %v1392
      %v2010 = vpop.f32.mrf.mxu0
      %v2011 = vadd.f32 %v1922, %v2010
      %v2012 = vpop.f32.mrf.mxu0
      %v2013 = vadd.f32 %v1924, %v2012
      %2014 = vmatmul.bf16.gmra.mxu0 %v1395
      %v2015 = vpop.f32.mrf.mxu0
      %v2016 = vadd.f32 %v1927, %v2015
      %v2017 = vpop.f32.mrf.mxu0
      %v2018 = vadd.f32 %v1929, %v2017
      %2019 = vdwg.mxu0
      %v2020 = vld [vmem:[%s253] sm:$0xff]
      %v2021 = vld [vmem:[%s253 + $0x8] sm:$0xff]
      %v2022 = vld [vmem:[%s253 + $0x10] sm:$0xff]
      %v2023 = vld [vmem:[%s253 + $0x18] sm:$0xff]
      %v2024 = vld [vmem:[%s253 + $0x20] sm:$0xff]
      %v2025 = vld [vmem:[%s253 + $0x28] sm:$0xff]
      %v2026 = vld [vmem:[%s253 + $0x30] sm:$0xff]
      %v2027 = vld [vmem:[%s253 + $0x38] sm:$0xff]
      %v2028 = vld [vmem:[%s253 + $0x40] sm:$0xff]
      %v2029 = vld [vmem:[%s253 + $0x48] sm:$0xff]
      %v2030 = vld [vmem:[%s253 + $0x50] sm:$0xff]
      %v2031 = vld [vmem:[%s253 + $0x58] sm:$0xff]
      %v2032 = vld [vmem:[%s253 + $0x60] sm:$0xff]
      %v2033 = vld [vmem:[%s253 + $0x68] sm:$0xff]
      %v2034 = vld [vmem:[%s253 + $0x70] sm:$0xff]
      %v2035 = vld [vmem:[%s253 + $0x78] sm:$0xff]
      %v2036 = vld [vmem:[%s253 + $0x80] sm:$0xff]
      %v2037 = vld [vmem:[%s253 + $0x88] sm:$0xff]
      %v2038 = vld [vmem:[%s253 + $0x90] sm:$0xff]
      %v2039 = vld [vmem:[%s253 + $0x98] sm:$0xff]
      %v2040 = vld [vmem:[%s253 + $0xa0] sm:$0xff]
      %v2041 = vld [vmem:[%s253 + $0xa8] sm:$0xff]
      %v2042 = vld [vmem:[%s253 + $0xb0] sm:$0xff]
      %v2043 = vld [vmem:[%s253 + $0xb8] sm:$0xff]
      %v2044 = vld [vmem:[%s253 + $0xc0] sm:$0xff]
      %v2045 = vld [vmem:[%s253 + $0xc8] sm:$0xff]
      %v2046 = vld [vmem:[%s253 + $0xd0] sm:$0xff]
      %v2047 = vld [vmem:[%s253 + $0xd8] sm:$0xff]
      %v2048 = vld [vmem:[%s253 + $0xe0] sm:$0xff]
      %v2049 = vld [vmem:[%s253 + $0xe8] sm:$0xff]
      %v2050 = vld [vmem:[%s253 + $0xf0] sm:$0xff]
      %v2051 = vld [vmem:[%s253 + $0xf8] sm:$0xff]
      %vm2052 = vcmask 400384
      %v2053 = vsel %vm2052, %v2020, 0.0
      %2054 = vadd.xlane.f32.xlu0 %v2053
      %v2055 = vpop.xlane.xlu0 %2054
      %v2056 = vsel %vm2052, %v2021, 0.0
      %2057 = vadd.xlane.f32.xlu0 %v2056
      %v2058 = vpop.xlane.xlu0 %2057
      %v2059 = vsel %vm2052, %v2022, 0.0
      %2060 = vadd.xlane.f32.xlu0 %v2059
      %v2061 = vpop.xlane.xlu0 %2060
      %v2062 = vsel %vm2052, %v2023, 0.0
      %2063 = vadd.xlane.f32.xlu0 %v2062
      %v2064 = vpop.xlane.xlu0 %2063
      %v2065 = vsel %vm2052, %v2024, 0.0
      %2066 = vadd.xlane.f32.xlu0 %v2065
      %v2067 = vpop.xlane.xlu0 %2066
      %v2068 = vsel %vm2052, %v2025, 0.0
      %2069 = vadd.xlane.f32.xlu0 %v2068
      %v2070 = vpop.xlane.xlu0 %2069
      %v2071 = vsel %vm2052, %v2026, 0.0
      %2072 = vadd.xlane.f32.xlu0 %v2071
      %v2073 = vpop.xlane.xlu0 %2072
      %v2074 = vsel %vm2052, %v2027, 0.0
      %2075 = vadd.xlane.f32.xlu0 %v2074
      %v2076 = vpop.xlane.xlu0 %2075
      %v2077 = vsel %vm2052, %v2028, 0.0
      %2078 = vadd.xlane.f32.xlu0 %v2077
      %v2079 = vpop.xlane.xlu0 %2078
      %v2080 = vsel %vm2052, %v2029, 0.0
      %2081 = vadd.xlane.f32.xlu0 %v2080
      %v2082 = vpop.xlane.xlu0 %2081
      %v2083 = vsel %vm2052, %v2030, 0.0
      %2084 = vadd.xlane.f32.xlu0 %v2083
      %v2085 = vpop.xlane.xlu0 %2084
      %v2086 = vsel %vm2052, %v2031, 0.0
      %2087 = vadd.xlane.f32.xlu0 %v2086
      %v2088 = vpop.xlane.xlu0 %2087
      %v2089 = vsel %vm2052, %v2032, 0.0
      %2090 = vadd.xlane.f32.xlu0 %v2089
      %v2091 = vpop.xlane.xlu0 %2090
      %v2092 = vsel %vm2052, %v2033, 0.0
      %2093 = vadd.xlane.f32.xlu0 %v2092
      %v2094 = vpop.xlane.xlu0 %2093
      %v2095 = vsel %vm2052, %v2034, 0.0
      %2096 = vadd.xlane.f32.xlu0 %v2095
      %v2097 = vpop.xlane.xlu0 %2096
      %v2098 = vsel %vm2052, %v2035, 0.0
      %2099 = vadd.xlane.f32.xlu0 %v2098
      %v2100 = vpop.xlane.xlu0 %2099
      %v2101 = vsel %vm2052, %v2036, 0.0
      %2102 = vadd.xlane.f32.xlu0 %v2101
      %v2103 = vpop.xlane.xlu0 %2102
      %v2104 = vsel %vm2052, %v2037, 0.0
      %2105 = vadd.xlane.f32.xlu0 %v2104
      %v2106 = vpop.xlane.xlu0 %2105
      %v2107 = vsel %vm2052, %v2038, 0.0
      %2108 = vadd.xlane.f32.xlu0 %v2107
      %v2109 = vpop.xlane.xlu0 %2108
      %v2110 = vsel %vm2052, %v2039, 0.0
      %2111 = vadd.xlane.f32.xlu0 %v2110
      %v2112 = vpop.xlane.xlu0 %2111
      %v2113 = vsel %vm2052, %v2040, 0.0
      %2114 = vadd.xlane.f32.xlu0 %v2113
      %v2115 = vpop.xlane.xlu0 %2114
      %v2116 = vsel %vm2052, %v2041, 0.0
      %2117 = vadd.xlane.f32.xlu0 %v2116
      %v2118 = vpop.xlane.xlu0 %2117
      %v2119 = vsel %vm2052, %v2042, 0.0
      %2120 = vadd.xlane.f32.xlu0 %v2119
      %v2121 = vpop.xlane.xlu0 %2120
      %v2122 = vsel %vm2052, %v2043, 0.0
      %2123 = vadd.xlane.f32.xlu0 %v2122
      %v2124 = vpop.xlane.xlu0 %2123
      %v2125 = vsel %vm2052, %v2044, 0.0
      %2126 = vadd.xlane.f32.xlu0 %v2125
      %v2127 = vpop.xlane.xlu0 %2126
      %v2128 = vsel %vm2052, %v2045, 0.0
      %2129 = vadd.xlane.f32.xlu0 %v2128
      %v2130 = vpop.xlane.xlu0 %2129
      %v2131 = vsel %vm2052, %v2046, 0.0
      %2132 = vadd.xlane.f32.xlu0 %v2131
      %v2133 = vpop.xlane.xlu0 %2132
      %v2134 = vsel %vm2052, %v2047, 0.0
      %2135 = vadd.xlane.f32.xlu0 %v2134
      %v2136 = vpop.xlane.xlu0 %2135
      %v2137 = vsel %vm2052, %v2048, 0.0
      %2138 = vadd.xlane.f32.xlu0 %v2137
      %v2139 = vpop.xlane.xlu0 %2138
      %v2140 = vsel %vm2052, %v2049, 0.0
      %2141 = vadd.xlane.f32.xlu0 %v2140
      %v2142 = vpop.xlane.xlu0 %2141
      %v2143 = vsel %vm2052, %v2050, 0.0
      %2144 = vadd.xlane.f32.xlu0 %v2143
      %v2145 = vpop.xlane.xlu0 %2144
      %v2146 = vsel %vm2052, %v2051, 0.0
      %2147 = vadd.xlane.f32.xlu0 %v2146
      %v2148 = vpop.xlane.xlu0 %2147
      %v2149 = vadd.f32 %v2055, 1e-08
      %v2150 = vadd.f32 %v2058, 1e-08
      %v2151 = vadd.f32 %v2061, 1e-08
      %v2152 = vadd.f32 %v2064, 1e-08
      %v2153 = vadd.f32 %v2067, 1e-08
      %v2154 = vadd.f32 %v2070, 1e-08
      %v2155 = vadd.f32 %v2073, 1e-08
      %v2156 = vadd.f32 %v2076, 1e-08
      %v2157 = vadd.f32 %v2079, 1e-08
      %v2158 = vadd.f32 %v2082, 1e-08
      %v2159 = vadd.f32 %v2085, 1e-08
      %v2160 = vadd.f32 %v2088, 1e-08
      %v2161 = vadd.f32 %v2091, 1e-08
      %v2162 = vadd.f32 %v2094, 1e-08
      %v2163 = vadd.f32 %v2097, 1e-08
      %v2164 = vadd.f32 %v2100, 1e-08
      %v2165 = vadd.f32 %v2103, 1e-08
      %v2166 = vadd.f32 %v2106, 1e-08
      %v2167 = vadd.f32 %v2109, 1e-08
      %v2168 = vadd.f32 %v2112, 1e-08
      %v2169 = vadd.f32 %v2115, 1e-08
      %v2170 = vadd.f32 %v2118, 1e-08
      %v2171 = vadd.f32 %v2121, 1e-08
      %v2172 = vadd.f32 %v2124, 1e-08
      %v2173 = vadd.f32 %v2127, 1e-08
      %v2174 = vadd.f32 %v2130, 1e-08
      %v2175 = vadd.f32 %v2133, 1e-08
      %v2176 = vadd.f32 %v2136, 1e-08
      %v2177 = vadd.f32 %v2139, 1e-08
      %v2178 = vadd.f32 %v2142, 1e-08
      %v2179 = vadd.f32 %v2145, 1e-08
      %v2180 = vadd.f32 %v2148, 1e-08
      %v2181 = vrcp.pop %v2149
      %v2182 = vrcp.pop %v2150
      %v2183 = vrcp.pop %v2151
      %v2184 = vrcp.pop %v2152
      %v2185 = vrcp.pop %v2153
      %v2186 = vrcp.pop %v2154
      %v2187 = vrcp.pop %v2155
      %v2188 = vrcp.pop %v2156
      %v2189 = vrcp.pop %v2157
      %v2190 = vrcp.pop %v2158
      %v2191 = vrcp.pop %v2159
      %v2192 = vrcp.pop %v2160
      %v2193 = vrcp.pop %v2161
      %v2194 = vrcp.pop %v2162
      %v2195 = vrcp.pop %v2163
      %v2196 = vrcp.pop %v2164
      %v2197 = vrcp.pop %v2165
      %v2198 = vrcp.pop %v2166
      %v2199 = vrcp.pop %v2167
      %v2200 = vrcp.pop %v2168
      %v2201 = vrcp.pop %v2169
      %v2202 = vrcp.pop %v2170
      %v2203 = vrcp.pop %v2171
      %v2204 = vrcp.pop %v2172
      %v2205 = vrcp.pop %v2173
      %v2206 = vrcp.pop %v2174
      %v2207 = vrcp.pop %v2175
      %v2208 = vrcp.pop %v2176
      %v2209 = vrcp.pop %v2177
      %v2210 = vrcp.pop %v2178
      %v2211 = vrcp.pop %v2179
      %v2212 = vrcp.pop %v2180
      %v2213 = vmul.f32 %v1941, %v2181
      %v2214 = vmul.f32 %v1943, %v2182
      %v2215 = vmul.f32 %v1946, %v2183
      %v2216 = vmul.f32 %v1948, %v2184
      %v2217 = vmul.f32 %v1951, %v2185
      %v2218 = vmul.f32 %v1953, %v2186
      %v2219 = vmul.f32 %v1956, %v2187
      %v2220 = vmul.f32 %v1958, %v2188
      %v2221 = vmul.f32 %v1961, %v2189
      %v2222 = vmul.f32 %v1963, %v2190
      %v2223 = vmul.f32 %v1966, %v2191
      %v2224 = vmul.f32 %v1968, %v2192
      %v2225 = vmul.f32 %v1971, %v2193
      %v2226 = vmul.f32 %v1973, %v2194
      %v2227 = vmul.f32 %v1976, %v2195
      %v2228 = vmul.f32 %v1978, %v2196
      %v2229 = vmul.f32 %v1981, %v2197
      %v2230 = vmul.f32 %v1983, %v2198
      %v2231 = vmul.f32 %v1986, %v2199
      %v2232 = vmul.f32 %v1988, %v2200
      %v2233 = vmul.f32 %v1991, %v2201
      %v2234 = vmul.f32 %v1993, %v2202
      %v2235 = vmul.f32 %v1996, %v2203
      %v2236 = vmul.f32 %v1998, %v2204
      %v2237 = vmul.f32 %v2001, %v2205
      %v2238 = vmul.f32 %v2003, %v2206
      %v2239 = vmul.f32 %v2006, %v2207
      %v2240 = vmul.f32 %v2008, %v2208
      %v2241 = vmul.f32 %v2011, %v2209
      %v2242 = vmul.f32 %v2013, %v2210
      %v2243 = vmul.f32 %v2016, %v2211
      %v2244 = vmul.f32 %v2018, %v2212
      %v2245 = vld [vmem:[%s3] sm:$0x1]
      %v2247 = vperm.slane %v2245, 0
      %v2249 = vadd.f32 %v2213, %v2247
      %v2250 = vadd.f32 %v2214, %v2247
      %v2251 = vadd.f32 %v2215, %v2247
      %v2252 = vadd.f32 %v2216, %v2247
      %v2253 = vadd.f32 %v2217, %v2247
      %v2254 = vadd.f32 %v2218, %v2247
      %v2255 = vadd.f32 %v2219, %v2247
      %v2256 = vadd.f32 %v2220, %v2247
      %v2257 = vadd.f32 %v2221, %v2247
      %v2258 = vadd.f32 %v2222, %v2247
      %v2259 = vadd.f32 %v2223, %v2247
      %v2260 = vadd.f32 %v2224, %v2247
      %v2261 = vadd.f32 %v2225, %v2247
      %v2262 = vadd.f32 %v2226, %v2247
      %v2263 = vadd.f32 %v2227, %v2247
      %v2264 = vadd.f32 %v2228, %v2247
      %v2265 = vadd.f32 %v2229, %v2247
      %v2266 = vadd.f32 %v2230, %v2247
      %v2267 = vadd.f32 %v2231, %v2247
      %v2268 = vadd.f32 %v2232, %v2247
      %v2269 = vadd.f32 %v2233, %v2247
      %v2270 = vadd.f32 %v2234, %v2247
      %v2271 = vadd.f32 %v2235, %v2247
      %v2272 = vadd.f32 %v2236, %v2247
      %v2273 = vadd.f32 %v2237, %v2247
      %v2274 = vadd.f32 %v2238, %v2247
      %v2275 = vadd.f32 %v2239, %v2247
      %v2276 = vadd.f32 %v2240, %v2247
      %v2277 = vadd.f32 %v2241, %v2247
      %v2278 = vadd.f32 %v2242, %v2247
      %v2279 = vadd.f32 %v2243, %v2247
      %v2280 = vadd.f32 %v2244, %v2247
      %v2281 = vmax.f32 %v2249, 0.0
      %v2282 = vmax.f32 %v2250, 0.0
      %v2283 = vmax.f32 %v2251, 0.0
      %v2284 = vmax.f32 %v2252, 0.0
      %v2285 = vmax.f32 %v2253, 0.0
      %v2286 = vmax.f32 %v2254, 0.0
      %v2287 = vmax.f32 %v2255, 0.0
      %v2288 = vmax.f32 %v2256, 0.0
      %v2289 = vmax.f32 %v2257, 0.0
      %v2290 = vmax.f32 %v2258, 0.0
      %v2291 = vmax.f32 %v2259, 0.0
      %v2292 = vmax.f32 %v2260, 0.0
      %v2293 = vmax.f32 %v2261, 0.0
      %v2294 = vmax.f32 %v2262, 0.0
      %v2295 = vmax.f32 %v2263, 0.0
      %v2296 = vmax.f32 %v2264, 0.0
      %v2297 = vmax.f32 %v2265, 0.0
      %v2298 = vmax.f32 %v2266, 0.0
      %v2299 = vmax.f32 %v2267, 0.0
      %v2300 = vmax.f32 %v2268, 0.0
      %v2301 = vmax.f32 %v2269, 0.0
      %v2302 = vmax.f32 %v2270, 0.0
      %v2303 = vmax.f32 %v2271, 0.0
      %v2304 = vmax.f32 %v2272, 0.0
      %v2305 = vmax.f32 %v2273, 0.0
      %v2306 = vmax.f32 %v2274, 0.0
      %v2307 = vmax.f32 %v2275, 0.0
      %v2308 = vmax.f32 %v2276, 0.0
      %v2309 = vmax.f32 %v2277, 0.0
      %v2310 = vmax.f32 %v2278, 0.0
      %v2311 = vmax.f32 %v2279, 0.0
      %v2312 = vmax.f32 %v2280, 0.0
      %v2313 = vpack.c.bf16 %v2281, %v2281
      %v2314 = vpack.c.bf16 %v2282, %v2282
      %v2315 = vpack.c.bf16 %v2283, %v2283
      %v2316 = vpack.c.bf16 %v2284, %v2284
      %v2317 = vpack.c.bf16 %v2285, %v2285
      %v2318 = vpack.c.bf16 %v2286, %v2286
      %v2319 = vpack.c.bf16 %v2287, %v2287
      %v2320 = vpack.c.bf16 %v2288, %v2288
      %v2321 = vpack.c.bf16 %v2289, %v2289
      %v2322 = vpack.c.bf16 %v2290, %v2290
      %v2323 = vpack.c.bf16 %v2291, %v2291
      %v2324 = vpack.c.bf16 %v2292, %v2292
      %v2325 = vpack.c.bf16 %v2293, %v2293
      %v2326 = vpack.c.bf16 %v2294, %v2294
      %v2327 = vpack.c.bf16 %v2295, %v2295
      %v2328 = vpack.c.bf16 %v2296, %v2296
      %v2329 = vpack.c.bf16 %v2297, %v2297
      %v2330 = vpack.c.bf16 %v2298, %v2298
      %v2331 = vpack.c.bf16 %v2299, %v2299
      %v2332 = vpack.c.bf16 %v2300, %v2300
      %v2333 = vpack.c.bf16 %v2301, %v2301
      %v2334 = vpack.c.bf16 %v2302, %v2302
      %v2335 = vpack.c.bf16 %v2303, %v2303
      %v2336 = vpack.c.bf16 %v2304, %v2304
      %v2337 = vpack.c.bf16 %v2305, %v2305
      %v2338 = vpack.c.bf16 %v2306, %v2306
      %v2339 = vpack.c.bf16 %v2307, %v2307
      %v2340 = vpack.c.bf16 %v2308, %v2308
      %v2341 = vpack.c.bf16 %v2309, %v2309
      %v2342 = vpack.c.bf16 %v2310, %v2310
      %v2343 = vpack.c.bf16 %v2311, %v2311
      %v2344 = vpack.c.bf16 %v2312, %v2312
      %vm2345 = vcmask 125952
      %2346 = vst.msk [vmem:[%s259] sm:$0xf] %vm2345, %v2313
      %2347 = vst.msk [vmem:[%s259 + $0x4] sm:$0xf] %vm2345, %v2314
      %2348 = vst.msk [vmem:[%s259 + $0x8] sm:$0xf] %vm2345, %v2315
      %2349 = vst.msk [vmem:[%s259 + $0xc] sm:$0xf] %vm2345, %v2316
      %2350 = vst.msk [vmem:[%s259 + $0x10] sm:$0xf] %vm2345, %v2317
      %2351 = vst.msk [vmem:[%s259 + $0x14] sm:$0xf] %vm2345, %v2318
      %2352 = vst.msk [vmem:[%s259 + $0x18] sm:$0xf] %vm2345, %v2319
      %2353 = vst.msk [vmem:[%s259 + $0x1c] sm:$0xf] %vm2345, %v2320
      %2354 = vst.msk [vmem:[%s259 + $0x20] sm:$0xf] %vm2345, %v2321
      %2355 = vst.msk [vmem:[%s259 + $0x24] sm:$0xf] %vm2345, %v2322
      %2356 = vst.msk [vmem:[%s259 + $0x28] sm:$0xf] %vm2345, %v2323
      %2357 = vst.msk [vmem:[%s259 + $0x2c] sm:$0xf] %vm2345, %v2324
      %2358 = vst.msk [vmem:[%s259 + $0x30] sm:$0xf] %vm2345, %v2325
      %2359 = vst.msk [vmem:[%s259 + $0x34] sm:$0xf] %vm2345, %v2326
      %2360 = vst.msk [vmem:[%s259 + $0x38] sm:$0xf] %vm2345, %v2327
      %2361 = vst.msk [vmem:[%s259 + $0x3c] sm:$0xf] %vm2345, %v2328
      %2362 = vst.msk [vmem:[%s259 + $0x40] sm:$0xf] %vm2345, %v2329
      %2363 = vst.msk [vmem:[%s259 + $0x44] sm:$0xf] %vm2345, %v2330
      %2364 = vst.msk [vmem:[%s259 + $0x48] sm:$0xf] %vm2345, %v2331
      %2365 = vst.msk [vmem:[%s259 + $0x4c] sm:$0xf] %vm2345, %v2332
      %2366 = vst.msk [vmem:[%s259 + $0x50] sm:$0xf] %vm2345, %v2333
      %2367 = vst.msk [vmem:[%s259 + $0x54] sm:$0xf] %vm2345, %v2334
      %2368 = vst.msk [vmem:[%s259 + $0x58] sm:$0xf] %vm2345, %v2335
      %2369 = vst.msk [vmem:[%s259 + $0x5c] sm:$0xf] %vm2345, %v2336
      %2370 = vst.msk [vmem:[%s259 + $0x60] sm:$0xf] %vm2345, %v2337
      %2371 = vst.msk [vmem:[%s259 + $0x64] sm:$0xf] %vm2345, %v2338
      %2372 = vst.msk [vmem:[%s259 + $0x68] sm:$0xf] %vm2345, %v2339
      %2373 = vst.msk [vmem:[%s259 + $0x6c] sm:$0xf] %vm2345, %v2340
      %2374 = vst.msk [vmem:[%s259 + $0x70] sm:$0xf] %vm2345, %v2341
      %2375 = vst.msk [vmem:[%s259 + $0x74] sm:$0xf] %vm2345, %v2342
      %2376 = vst.msk [vmem:[%s259 + $0x78] sm:$0xf] %vm2345, %v2343
      %2377 = vst.msk [vmem:[%s259 + $0x7c] sm:$0xf] %vm2345, %v2344
      %v2378 = vsel %vm2052, %v2020, -inf
      %2379 = vmax.xlane.f32.xlu0 %v2378
      %v2380 = vpop.xlane.xlu0 %2379
      %v2381 = vsel %vm2052, %v2021, -inf
      %2382 = vmax.xlane.f32.xlu0 %v2381
      %v2383 = vpop.xlane.xlu0 %2382
      %v2384 = vsel %vm2052, %v2022, -inf
      %2385 = vmax.xlane.f32.xlu0 %v2384
      %v2386 = vpop.xlane.xlu0 %2385
      %v2387 = vsel %vm2052, %v2023, -inf
      %2388 = vmax.xlane.f32.xlu0 %v2387
      %v2389 = vpop.xlane.xlu0 %2388
      %v2390 = vsel %vm2052, %v2024, -inf
      %2391 = vmax.xlane.f32.xlu0 %v2390
      %v2392 = vpop.xlane.xlu0 %2391
      %v2393 = vsel %vm2052, %v2025, -inf
      %2394 = vmax.xlane.f32.xlu0 %v2393
      %v2395 = vpop.xlane.xlu0 %2394
      %v2396 = vsel %vm2052, %v2026, -inf
      %2397 = vmax.xlane.f32.xlu0 %v2396
      %v2398 = vpop.xlane.xlu0 %2397
      %v2399 = vsel %vm2052, %v2027, -inf
      %2400 = vmax.xlane.f32.xlu0 %v2399
      %v2401 = vpop.xlane.xlu0 %2400
      %v2402 = vsel %vm2052, %v2028, -inf
      %2403 = vmax.xlane.f32.xlu0 %v2402
      %v2404 = vpop.xlane.xlu0 %2403
      %v2405 = vsel %vm2052, %v2029, -inf
      %2406 = vmax.xlane.f32.xlu0 %v2405
      %v2407 = vpop.xlane.xlu0 %2406
      %v2408 = vsel %vm2052, %v2030, -inf
      %2409 = vmax.xlane.f32.xlu0 %v2408
      %v2410 = vpop.xlane.xlu0 %2409
      %v2411 = vsel %vm2052, %v2031, -inf
      %2412 = vmax.xlane.f32.xlu0 %v2411
      %v2413 = vpop.xlane.xlu0 %2412
      %v2414 = vsel %vm2052, %v2032, -inf
      %2415 = vmax.xlane.f32.xlu0 %v2414
      %v2416 = vpop.xlane.xlu0 %2415
      %v2417 = vsel %vm2052, %v2033, -inf
      %2418 = vmax.xlane.f32.xlu0 %v2417
      %v2419 = vpop.xlane.xlu0 %2418
      %v2420 = vsel %vm2052, %v2034, -inf
      %2421 = vmax.xlane.f32.xlu0 %v2420
      %v2422 = vpop.xlane.xlu0 %2421
      %v2423 = vsel %vm2052, %v2035, -inf
      %2424 = vmax.xlane.f32.xlu0 %v2423
      %v2425 = vpop.xlane.xlu0 %2424
      %v2426 = vsel %vm2052, %v2036, -inf
      %2427 = vmax.xlane.f32.xlu0 %v2426
      %v2428 = vpop.xlane.xlu0 %2427
      %v2429 = vsel %vm2052, %v2037, -inf
      %2430 = vmax.xlane.f32.xlu0 %v2429
      %v2431 = vpop.xlane.xlu0 %2430
      %v2432 = vsel %vm2052, %v2038, -inf
      %2433 = vmax.xlane.f32.xlu0 %v2432
      %v2434 = vpop.xlane.xlu0 %2433
      %v2435 = vsel %vm2052, %v2039, -inf
      %2436 = vmax.xlane.f32.xlu0 %v2435
      %v2437 = vpop.xlane.xlu0 %2436
      %v2438 = vsel %vm2052, %v2040, -inf
      %2439 = vmax.xlane.f32.xlu0 %v2438
      %v2440 = vpop.xlane.xlu0 %2439
      %v2441 = vsel %vm2052, %v2041, -inf
      %2442 = vmax.xlane.f32.xlu0 %v2441
      %v2443 = vpop.xlane.xlu0 %2442
      %v2444 = vsel %vm2052, %v2042, -inf
      %2445 = vmax.xlane.f32.xlu0 %v2444
      %v2446 = vpop.xlane.xlu0 %2445
      %v2447 = vsel %vm2052, %v2043, -inf
      %2448 = vmax.xlane.f32.xlu0 %v2447
      %v2449 = vpop.xlane.xlu0 %2448
      %v2450 = vsel %vm2052, %v2044, -inf
      %2451 = vmax.xlane.f32.xlu0 %v2450
      %v2452 = vpop.xlane.xlu0 %2451
      %v2453 = vsel %vm2052, %v2045, -inf
      %2454 = vmax.xlane.f32.xlu0 %v2453
      %v2455 = vpop.xlane.xlu0 %2454
      %v2456 = vsel %vm2052, %v2046, -inf
      %2457 = vmax.xlane.f32.xlu0 %v2456
      %v2458 = vpop.xlane.xlu0 %2457
      %v2459 = vsel %vm2052, %v2047, -inf
      %2460 = vmax.xlane.f32.xlu0 %v2459
      %v2461 = vpop.xlane.xlu0 %2460
      %v2462 = vsel %vm2052, %v2048, -inf
      %2463 = vmax.xlane.f32.xlu0 %v2462
      %v2464 = vpop.xlane.xlu0 %2463
      %v2465 = vsel %vm2052, %v2049, -inf
      %2466 = vmax.xlane.f32.xlu0 %v2465
      %v2467 = vpop.xlane.xlu0 %2466
      %v2468 = vsel %vm2052, %v2050, -inf
      %2469 = vmax.xlane.f32.xlu0 %v2468
      %v2470 = vpop.xlane.xlu0 %2469
      %v2471 = vsel %vm2052, %v2051, -inf
      %2472 = vmax.xlane.f32.xlu0 %v2471
      %v2473 = vpop.xlane.xlu0 %2472
      %vm2474 = vcmask 7168
      %2475 = vst.msk [vmem:[%s265] sm:$0xff] %vm2474, %v2380
      %2476 = vst.msk [vmem:[%s265 + $0x8] sm:$0xff] %vm2474, %v2383
      %2477 = vst.msk [vmem:[%s265 + $0x10] sm:$0xff] %vm2474, %v2386
      %2478 = vst.msk [vmem:[%s265 + $0x18] sm:$0xff] %vm2474, %v2389
      %2479 = vst.msk [vmem:[%s265 + $0x20] sm:$0xff] %vm2474, %v2392
      %2480 = vst.msk [vmem:[%s265 + $0x28] sm:$0xff] %vm2474, %v2395
      %2481 = vst.msk [vmem:[%s265 + $0x30] sm:$0xff] %vm2474, %v2398
      %2482 = vst.msk [vmem:[%s265 + $0x38] sm:$0xff] %vm2474, %v2401
      %2483 = vst.msk [vmem:[%s265 + $0x40] sm:$0xff] %vm2474, %v2404
      %2484 = vst.msk [vmem:[%s265 + $0x48] sm:$0xff] %vm2474, %v2407
      %2485 = vst.msk [vmem:[%s265 + $0x50] sm:$0xff] %vm2474, %v2410
      %2486 = vst.msk [vmem:[%s265 + $0x58] sm:$0xff] %vm2474, %v2413
      %2487 = vst.msk [vmem:[%s265 + $0x60] sm:$0xff] %vm2474, %v2416
      %2488 = vst.msk [vmem:[%s265 + $0x68] sm:$0xff] %vm2474, %v2419
      %2489 = vst.msk [vmem:[%s265 + $0x70] sm:$0xff] %vm2474, %v2422
      %2490 = vst.msk [vmem:[%s265 + $0x78] sm:$0xff] %vm2474, %v2425
      %2491 = vst.msk [vmem:[%s265 + $0x80] sm:$0xff] %vm2474, %v2428
      %2492 = vst.msk [vmem:[%s265 + $0x88] sm:$0xff] %vm2474, %v2431
      %2493 = vst.msk [vmem:[%s265 + $0x90] sm:$0xff] %vm2474, %v2434
      %2494 = vst.msk [vmem:[%s265 + $0x98] sm:$0xff] %vm2474, %v2437
      %2495 = vst.msk [vmem:[%s265 + $0xa0] sm:$0xff] %vm2474, %v2440
      %2496 = vst.msk [vmem:[%s265 + $0xa8] sm:$0xff] %vm2474, %v2443
      %2497 = vst.msk [vmem:[%s265 + $0xb0] sm:$0xff] %vm2474, %v2446
      %2498 = vst.msk [vmem:[%s265 + $0xb8] sm:$0xff] %vm2474, %v2449
      %2499 = vst.msk [vmem:[%s265 + $0xc0] sm:$0xff] %vm2474, %v2452
      %2500 = vst.msk [vmem:[%s265 + $0xc8] sm:$0xff] %vm2474, %v2455
      %2501 = vst.msk [vmem:[%s265 + $0xd0] sm:$0xff] %vm2474, %v2458
      %2502 = vst.msk [vmem:[%s265 + $0xd8] sm:$0xff] %vm2474, %v2461
      %2503 = vst.msk [vmem:[%s265 + $0xe0] sm:$0xff] %vm2474, %v2464
      %2504 = vst.msk [vmem:[%s265 + $0xe8] sm:$0xff] %vm2474, %v2467
      %2505 = vst.msk [vmem:[%s265 + $0xf0] sm:$0xff] %vm2474, %v2470
      %2506 = vst.msk [vmem:[%s265 + $0xf8] sm:$0xff] %vm2474, %v2473
      %s2507 = smul.u32 32, %s17
      %p2508 = scmp.lt.s32.totalorder %s2507, 63
      %s2509 = scalar_select %p2508, %s2507, 63
      %s2510 = smul.addr %s2509, 4
      %s2511 = scalar_lea.vmem %s4, %s2510
      %s2512 = smul.u32 32, %s17
      %p2513 = scmp.lt.s32.totalorder %s2512, 63
      %s2514 = scalar_select %p2513, %s2512, 63
      %s2515 = smul.addr %s2514, 8
      %s2516 = scalar_lea.vmem %s5, %s2515
      // Predicated region
      $region37: #{_lambda_.6} parent=35 // pred_check
        %p2517 = pneg %p129
      $region38: #{_lambda_.6} parent=35 // pred_check_branch
        %2519 = sbr.rel (%p2517) target = $region40
      $region39: #{_lambda_.6} parent=35 // pred_region
        %s2520 = smul.u32 32, %s17
      $region40: #{_lambda_.6} parent=35 // pred_fallthru
        _
      // Predicated region
      $region41: #{_lambda_.6} parent=35 // pred_check
        %p2521 = pneg %p155
      $region42: #{_lambda_.6} parent=35 // pred_check_branch
        %2523 = sbr.rel (%p2521) target = $region44
      $region43: #{_lambda_.6} parent=35 // pred_region
        %s2524 = smul.u32 32, %s17
      $region44: #{_lambda_.6} parent=35 // pred_fallthru
        _
    $region36: #{_lambda_.6} parent=5 // pred_fallthru
      _
    %p2525 = scmp.le.s32.totalorder 2, %s12
    // Predicated region
    $region45: #{_lambda_.6} parent=5 // pred_check
      %p2526 = pneg %p2525
    $region46: #{_lambda_.6} parent=5 // pred_check_branch
      %2528 = sbr.rel (%p2526) target = $region48
    $region47: #{_lambda_.6} parent=5 // pred_region
      %s2529 = ssub.s32 %s12, 2
      // Predicated region
      $region49: #{_lambda_.6} parent=47 // pred_check
        %p2530 = pneg %p135
      $region50: #{_lambda_.6} parent=47 // pred_check_branch
        %2532 = sbr.rel (%p2530) target = $region52
      $region51: #{_lambda_.6} parent=47 // pred_region
        %s2533 = smul.u32 32, %s18
        %p2534 = scmp.lt.s32.totalorder %s2533, 63
        %s2535 = scalar_select %p2534, %s2533, 63
        %s2536 = smul.addr %s2535, 4
        %s2537 = scalar_lea.vmem %s4, %s2536
      $region52: #{_lambda_.6} parent=47 // pred_fallthru
        _
      // Predicated region
      $region53: #{_lambda_.6} parent=47 // pred_check
        %p2538 = pneg %p161
      $region54: #{_lambda_.6} parent=47 // pred_check_branch
        %2540 = sbr.rel (%p2538) target = $region56
      $region55: #{_lambda_.6} parent=47 // pred_region
        %s2541 = smul.u32 32, %s18
        %p2542 = scmp.lt.s32.totalorder %s2541, 63
        %s2543 = scalar_select %p2542, %s2541, 63
        %s2544 = smul.addr %s2543, 8
        %s2545 = scalar_lea.vmem %s5, %s2544
      $region56: #{_lambda_.6} parent=47 // pred_fallthru
        _
    $region48: #{_lambda_.6} parent=5 // pred_fallthru
      _
  $region6: #{_lambda_.6} parent=0 // loop_footer
    %s16 = sadd.s32 1, %s12
  $region7: #{_lambda_.6} parent=0 // loop_footer_branch
    %11 = sbr.rel target = $region3
  $region8: #{_lambda_.6} parent=0 // loop_exit
    _

// kernel: _lambda_.7
$region0: #{_lambda_.7}
  #allocation0 [shape = 'u32[]', space=smem, size = 0x4, offset = 0x4, fixed_abs, tag = 'smem constant byte address 0x4 - core index']
  #allocation1 [shape = 'u32[72,128]{1,0:T(1,128)}', space=vmem, size = 0x9000, scoped, tag = 'internal scratch']
  %s0 = inlined_call_operand.vmem [shape: bf16[512,400], index: 0, kind: input, shape index: {}]
  %s1 = inlined_call_operand.vmem [shape: f32[512,25], index: 1, kind: input, shape index: {}]
  %s2 = inlined_call_operand.vmem [shape: bf16[400,16], index: 2, kind: input, shape index: {}]
  %s3 = inlined_call_operand.vmem [shape: f32[1,16], index: 3, kind: input, shape index: {}]
  %s4 = inlined_call_operand.vmem [shape: bf16[512,16], index: 4, kind: output, shape index: {0}]
  %s5 = inlined_call_operand.vmem [shape: f32[512,1], index: 5, kind: output, shape index: {1}]
  %6 = xla_tuple %s4, %s5
  %s7 = sld [smem:[#allocation0]]
  $region57: #{_lambda_.7} parent=0
    _
  %s9 = ssub.s32 1, %s7
  %s10 = scalar_select 0, %s9, %s7
  loop: start=0, step=1, limit=4
  $region2: #{_lambda_.7} parent=0 // loop_pre_header
    _
  $region3: #{_lambda_.7} parent=0 // loop_header
    %s12 = sphi 0, %s16
    %p13 = scmp.ge.s32.totalorder %s12, 4
    %s22 = sphi 0, %s24
    %s25 = sphi 0, %s22
    %s26 = sphi 0, %s25
    %s42 = sphi 0, %s26
    %s48 = sphi 0, %s50
    %s51 = sphi 0, %s48
    %s52 = sphi 0, %s51
    %s68 = sphi 0, %s52
    %s72 = sphi 0, %s72
    %s74 = sphi 0, %s72
    %s75 = sphi 0, %s74
    %s89 = sphi 0, %s75
    %s93 = sphi 0, %s93
    %s95 = sphi 0, %s93
    %s96 = sphi 0, %s95
    %s110 = sphi 0, %s96
    %s116 = sphi 0, %s118
    %s119 = sphi 0, %s116
    %s120 = sphi 0, %s119
    %s136 = sphi 0, %s120
    %s142 = sphi 0, %s144
    %s145 = sphi 0, %s142
    %s146 = sphi 0, %s145
    %s162 = sphi 0, %s146
  $region4: #{_lambda_.7} parent=0 // loop_header_branch
    %15 = sbr.rel (%p13) target = $region8
  $region5: #{_lambda_.7} parent=0 // loop_body
    %s17 = ssub.s32 %s12, 1
    %s18 = ssub.s32 %s12, 2
    %s19 = sadd.s32 %s12, 1
    %s20 = ssub.s32 %s12, %s19
    %p21 = scmp.eq.s32.totalorder %s20, 0
    %s23 = sadd.s32 %s22, 1
    %s24 = scalar_select %p21, %s22, %s23
    %p27 = pneg %p21
    %p28 = scmp.eq.s32.totalorder %s12, 1
    %p29 = por %p27, %p28
    %p30 = scmp.ne.s32.totalorder %s22, %s25
    %p31 = scmp.eq.s32.totalorder %s12, 0
    %p32 = por %p30, %p31
    %p33 = scmp.ne.s32.totalorder %s22, %s25
    %p34 = scmp.eq.s32.totalorder %s17, 1
    %p35 = por %p33, %p34
    %p36 = scmp.ne.s32.totalorder %s25, %s26
    %p37 = scmp.eq.s32.totalorder %s17, 0
    %p38 = por %p36, %p37
    %p39 = scmp.ne.s32.totalorder %s25, %s26
    %p40 = scmp.eq.s32.totalorder %s18, 1
    %p41 = por %p39, %p40
    %p43 = scmp.ne.s32.totalorder %s26, %s42
    %p44 = scmp.eq.s32.totalorder %s18, 0
    %p45 = por %p43, %p44
    %s46 = ssub.s32 %s12, %s19
    %p47 = scmp.eq.s32.totalorder %s46, 0
    %s49 = sadd.s32 %s48, 1
    %s50 = scalar_select %p47, %s48, %s49
    %p53 = pneg %p47
    %p54 = scmp.eq.s32.totalorder %s12, 1
    %p55 = por %p53, %p54
    %p56 = scmp.ne.s32.totalorder %s48, %s51
    %p57 = scmp.eq.s32.totalorder %s12, 0
    %p58 = por %p56, %p57
    %p59 = scmp.ne.s32.totalorder %s48, %s51
    %p60 = scmp.eq.s32.totalorder %s17, 1
    %p61 = por %p59, %p60
    %p62 = scmp.ne.s32.totalorder %s51, %s52
    %p63 = scmp.eq.s32.totalorder %s17, 0
    %p64 = por %p62, %p63
    %p65 = scmp.ne.s32.totalorder %s51, %s52
    %p66 = scmp.eq.s32.totalorder %s18, 1
    %p67 = por %p65, %p66
    %p69 = scmp.ne.s32.totalorder %s52, %s68
    %p70 = scmp.eq.s32.totalorder %s18, 0
    %p71 = por %p69, %p70
    %s73 = sadd.s32 %s72, 1
    %p76 = scmp.eq.s32.totalorder %s12, 1
    %p77 = scmp.ne.s32.totalorder %s72, %s74
    %p78 = scmp.eq.s32.totalorder %s12, 0
    %p79 = por %p77, %p78
    %p80 = scmp.ne.s32.totalorder %s72, %s74
    %p81 = scmp.eq.s32.totalorder %s17, 1
    %p82 = por %p80, %p81
    %p83 = scmp.ne.s32.totalorder %s74, %s75
    %p84 = scmp.eq.s32.totalorder %s17, 0
    %p85 = por %p83, %p84
    %p86 = scmp.ne.s32.totalorder %s74, %s75
    %p87 = scmp.eq.s32.totalorder %s18, 1
    %p88 = por %p86, %p87
    %p90 = scmp.ne.s32.totalorder %s75, %s89
    %p91 = scmp.eq.s32.totalorder %s18, 0
    %p92 = por %p90, %p91
    %s94 = sadd.s32 %s93, 1
    %p97 = scmp.eq.s32.totalorder %s12, 1
    %p98 = scmp.ne.s32.totalorder %s93, %s95
    %p99 = scmp.eq.s32.totalorder %s12, 0
    %p100 = por %p98, %p99
    %p101 = scmp.ne.s32.totalorder %s93, %s95
    %p102 = scmp.eq.s32.totalorder %s17, 1
    %p103 = por %p101, %p102
    %p104 = scmp.ne.s32.totalorder %s95, %s96
    %p105 = scmp.eq.s32.totalorder %s17, 0
    %p106 = por %p104, %p105
    %p107 = scmp.ne.s32.totalorder %s95, %s96
    %p108 = scmp.eq.s32.totalorder %s18, 1
    %p109 = por %p107, %p108
    %p111 = scmp.ne.s32.totalorder %s96, %s110
    %p112 = scmp.eq.s32.totalorder %s18, 0
    %p113 = por %p111, %p112
    %s114 = ssub.s32 %s12, %s19
    %p115 = scmp.eq.s32.totalorder %s114, 0
    %s117 = sadd.s32 %s116, 1
    %s118 = scalar_select %p115, %s116, %s117
    %p121 = pneg %p115
    %p122 = scmp.eq.s32.totalorder %s12, 1
    %p123 = por %p121, %p122
    %p124 = scmp.ne.s32.totalorder %s116, %s119
    %p125 = scmp.eq.s32.totalorder %s12, 0
    %p126 = por %p124, %p125
    %p127 = scmp.ne.s32.totalorder %s116, %s119
    %p128 = scmp.eq.s32.totalorder %s17, 1
    %p129 = por %p127, %p128
    %p130 = scmp.ne.s32.totalorder %s119, %s120
    %p131 = scmp.eq.s32.totalorder %s17, 0
    %p132 = por %p130, %p131
    %p133 = scmp.ne.s32.totalorder %s119, %s120
    %p134 = scmp.eq.s32.totalorder %s18, 1
    %p135 = por %p133, %p134
    %p137 = scmp.ne.s32.totalorder %s120, %s136
    %p138 = scmp.eq.s32.totalorder %s18, 0
    %p139 = por %p137, %p138
    %s140 = ssub.s32 %s12, %s19
    %p141 = scmp.eq.s32.totalorder %s140, 0
    %s143 = sadd.s32 %s142, 1
    %s144 = scalar_select %p141, %s142, %s143
    %p147 = pneg %p141
    %p148 = scmp.eq.s32.totalorder %s12, 1
    %p149 = por %p147, %p148
    %p150 = scmp.ne.s32.totalorder %s142, %s145
    %p151 = scmp.eq.s32.totalorder %s12, 0
    %p152 = por %p150, %p151
    %p153 = scmp.ne.s32.totalorder %s142, %s145
    %p154 = scmp.eq.s32.totalorder %s17, 1
    %p155 = por %p153, %p154
    %p156 = scmp.ne.s32.totalorder %s145, %s146
    %p157 = scmp.eq.s32.totalorder %s17, 0
    %p158 = por %p156, %p157
    %p159 = scmp.ne.s32.totalorder %s145, %s146
    %p160 = scmp.eq.s32.totalorder %s18, 1
    %p161 = por %p159, %p160
    %p163 = scmp.ne.s32.totalorder %s146, %s162
    %p164 = scmp.eq.s32.totalorder %s18, 0
    %p165 = por %p163, %p164
    %p166 = scmp.le.s32.totalorder 1, %s12
    %p167 = scmp.lt.s32.totalorder %s12, 3
    %p168 = pnand %p166, %p167
    %p169 = pneg %p168
    // Predicated region
    $region9: #{_lambda_.7} parent=5 // pred_check
      _
    $region10: #{_lambda_.7} parent=5 // pred_check_branch
      %171 = sbr.rel (%p168) target = $region12
    $region11: #{_lambda_.7} parent=5 // pred_region
      %s172 = ssub.s32 %s12, 1
      // Predicated region
      $region13: #{_lambda_.7} parent=11 // pred_check
        %p173 = pneg %p85
      $region14: #{_lambda_.7} parent=11 // pred_check_branch
        %175 = sbr.rel (%p173) target = $region16
      $region15: #{_lambda_.7} parent=11 // pred_region
        _
      $region16: #{_lambda_.7} parent=11 // pred_fallthru
        _
      // Predicated region
      $region17: #{_lambda_.7} parent=11 // pred_check
        %p176 = pneg %p106
      $region18: #{_lambda_.7} parent=11 // pred_check_branch
        %178 = sbr.rel (%p176) target = $region20
      $region19: #{_lambda_.7} parent=11 // pred_region
        _
      $region20: #{_lambda_.7} parent=11 // pred_fallthru
        _
    $region12: #{_lambda_.7} parent=5 // pred_fallthru
      _
    %p179 = scmp.lt.s32.totalorder %s12, 2
    // Predicated region
    $region21: #{_lambda_.7} parent=5 // pred_check
      %p180 = pneg %p179
    $region22: #{_lambda_.7} parent=5 // pred_check_branch
      %182 = sbr.rel (%p180) target = $region24
    $region23: #{_lambda_.7} parent=5 // pred_region
      // Predicated region
      $region25: #{_lambda_.7} parent=23 // pred_check
        %p183 = pneg %p32
      $region26: #{_lambda_.7} parent=23 // pred_check_branch
        %185 = sbr.rel (%p183) target = $region28
      $region27: #{_lambda_.7} parent=23 // pred_region
        %s186 = smul.u32 32, %s12
        %p187 = scmp.lt.s32.totalorder %s186, 63
        %s188 = scalar_select %p187, %s186, 63
        %s189 = smul.addr %s188, 4
        %s190 = smul.addr %s189, 4
        %s191 = scalar_lea.vmem %s0, %s190
        %s192 = smul.u32 32, %s12
      $region28: #{_lambda_.7} parent=23 // pred_fallthru
        _
      // Predicated region
      $region29: #{_lambda_.7} parent=23 // pred_check
        %p193 = pneg %p58
      $region30: #{_lambda_.7} parent=23 // pred_check_branch
        %195 = sbr.rel (%p193) target = $region32
      $region31: #{_lambda_.7} parent=23 // pred_region
        %s196 = smul.u32 32, %s12
        %p197 = scmp.lt.s32.totalorder %s196, 63
        %s198 = scalar_select %p197, %s196, 63
        %s199 = smul.addr %s198, 8
        %s200 = scalar_lea.vmem %s1, %s199
        %s201 = smul.u32 32, %s12
      $region32: #{_lambda_.7} parent=23 // pred_fallthru
        _
    $region24: #{_lambda_.7} parent=5 // pred_fallthru
      _
    %p202 = scmp.le.s32.totalorder 1, %s12
    %p203 = scmp.lt.s32.totalorder %s12, 3
    %p204 = pnand %p202, %p203
    %p205 = pneg %p204
    // Predicated region
    $region33: #{_lambda_.7} parent=5 // pred_check
      _
    $region34: #{_lambda_.7} parent=5 // pred_check_branch
      %207 = sbr.rel (%p204) target = $region36
    $region35: #{_lambda_.7} parent=5 // pred_region
      %s208 = ssub.s32 %s12, 1
      %s209 = smul.u32 32, %s17
      %p210 = scmp.lt.s32.totalorder %s209, 63
      %s211 = scalar_select %p210, %s209, 63
      %s212 = smul.addr %s211, 4
      %s213 = smul.addr %s212, 4
      %s214 = scalar_lea.vmem %s0, %s213
      %p215 = pneg %p38
      %p216 = pneg %p35
      %s217 = smul.u32 32, %s17
      %p218 = scmp.lt.s32.totalorder %s217, 63
      %s219 = scalar_select %p218, %s217, 63
      %s220 = smul.addr %s219, 8
      %s221 = scalar_lea.vmem %s1, %s220
      %p222 = pneg %p64
      %p223 = pneg %p61
      %p224 = pneg %p85
      %p225 = pneg %p82
      %p226 = pneg %p106
      %p227 = pneg %p103
      %p228 = pneg %p132
      %p229 = pneg %p129
      %s230 = smul.u32 32, %s17
      %p231 = scmp.lt.s32.totalorder %s230, 63
      %s232 = scalar_select %p231, %s230, 63
      %s233 = smul.addr %s232, 4
      %s234 = scalar_lea.vmem %s4, %s233
      %p235 = pneg %p158
      %p236 = pneg %p155
      %s237 = smul.u32 32, %s17
      %p238 = scmp.lt.s32.totalorder %s237, 63
      %s239 = scalar_select %p238, %s237, 63
      %s240 = smul.addr %s239, 8
      %s241 = scalar_lea.vmem %s5, %s240
      %s242 = smul.u32 32, %s17
      %p243 = scmp.lt.s32.totalorder %s242, 63
      %s244 = scalar_select %p243, %s242, 63
      %s245 = smul.addr %s244, 4
      %s246 = smul.addr %s245, 4
      %s247 = scalar_lea.vmem %s0, %s246
      %s248 = smul.u32 32, %s17
      %s249 = smul.u32 32, %s17
      %p250 = scmp.lt.s32.totalorder %s249, 63
      %s251 = scalar_select %p250, %s249, 63
      %s252 = smul.addr %s251, 8
      %s253 = scalar_lea.vmem %s1, %s252
      %s254 = smul.u32 32, %s17
      %s255 = smul.u32 32, %s17
      %p256 = scmp.lt.s32.totalorder %s255, 63
      %s257 = scalar_select %p256, %s255, 63
      %s258 = smul.addr %s257, 4
      %s259 = scalar_lea.vmem %s4, %s258
      %s260 = smul.u32 32, %s17
      %s261 = smul.u32 32, %s17
      %p262 = scmp.lt.s32.totalorder %s261, 63
      %s263 = scalar_select %p262, %s261, 63
      %s264 = smul.addr %s263, 8
      %s265 = scalar_lea.vmem %s5, %s264
      %s266 = smul.u32 32, %s17
      %v268 = vld [vmem:[%s247] sm:$0xff]
      %v269 = vld [vmem:[%s247 + $0x8] sm:$0xff]
      %v270 = vld [vmem:[%s247 + $0x10] sm:$0xff]
      %v271 = vld [vmem:[%s247 + $0x18] sm:$0xff]
      %v272 = vld [vmem:[%s247 + $0x20] sm:$0xff]
      %v273 = vld [vmem:[%s247 + $0x28] sm:$0xff]
      %v274 = vld [vmem:[%s247 + $0x30] sm:$0xff]
      %v275 = vld [vmem:[%s247 + $0x38] sm:$0xff]
      %v276 = vld [vmem:[%s247 + $0x40] sm:$0xff]
      %v277 = vld [vmem:[%s247 + $0x48] sm:$0xff]
      %v278 = vld [vmem:[%s247 + $0x50] sm:$0xff]
      %v279 = vld [vmem:[%s247 + $0x58] sm:$0xff]
      %v280 = vld [vmem:[%s247 + $0x60] sm:$0xff]
      %v281 = vld [vmem:[%s247 + $0x68] sm:$0xff]
      %v282 = vld [vmem:[%s247 + $0x70] sm:$0xff]
      %v283 = vld [vmem:[%s247 + $0x78] sm:$0xff]
      %v284 = vld [vmem:[%s247 + $0x80] sm:$0xff]
      %v285 = vld [vmem:[%s247 + $0x88] sm:$0xff]
      %v286 = vld [vmem:[%s247 + $0x90] sm:$0xff]
      %v287 = vld [vmem:[%s247 + $0x98] sm:$0xff]
      %v288 = vld [vmem:[%s247 + $0xa0] sm:$0xff]
      %v289 = vld [vmem:[%s247 + $0xa8] sm:$0xff]
      %v290 = vld [vmem:[%s247 + $0xb0] sm:$0xff]
      %v291 = vld [vmem:[%s247 + $0xb8] sm:$0xff]
      %v292 = vld [vmem:[%s247 + $0xc0] sm:$0xff]
      %v293 = vld [vmem:[%s247 + $0xc8] sm:$0xff]
      %v294 = vld [vmem:[%s247 + $0xd0] sm:$0xff]
      %v295 = vld [vmem:[%s247 + $0xd8] sm:$0xff]
      %v296 = vld [vmem:[%s247 + $0xe0] sm:$0xff]
      %v297 = vld [vmem:[%s247 + $0xe8] sm:$0xff]
      %v298 = vld [vmem:[%s247 + $0xf0] sm:$0xff]
      %v299 = vld [vmem:[%s247 + $0xf8] sm:$0xff]
      %v300 = vld [vmem:[%s247 + $0x100] sm:$0xff]
      %v301 = vld [vmem:[%s247 + $0x108] sm:$0xff]
      %v302 = vld [vmem:[%s247 + $0x110] sm:$0xff]
      %v303 = vld [vmem:[%s247 + $0x118] sm:$0xff]
      %v304 = vld [vmem:[%s247 + $0x120] sm:$0xff]
      %v305 = vld [vmem:[%s247 + $0x128] sm:$0xff]
      %v306 = vld [vmem:[%s247 + $0x130] sm:$0xff]
      %v307 = vld [vmem:[%s247 + $0x138] sm:$0xff]
      %v308 = vld [vmem:[%s247 + $0x140] sm:$0xff]
      %v309 = vld [vmem:[%s247 + $0x148] sm:$0xff]
      %v310 = vld [vmem:[%s247 + $0x150] sm:$0xff]
      %v311 = vld [vmem:[%s247 + $0x158] sm:$0xff]
      %v312 = vld [vmem:[%s247 + $0x160] sm:$0xff]
      %v313 = vld [vmem:[%s247 + $0x168] sm:$0xff]
      %v314 = vld [vmem:[%s247 + $0x170] sm:$0xff]
      %v315 = vld [vmem:[%s247 + $0x178] sm:$0xff]
      %v316 = vld [vmem:[%s247 + $0x180] sm:$0xff]
      %v317 = vld [vmem:[%s247 + $0x188] sm:$0xff]
      %v318 = vld [vmem:[%s247 + $0x190] sm:$0xff]
      %v319 = vld [vmem:[%s247 + $0x198] sm:$0xff]
      %v320 = vld [vmem:[%s247 + $0x1a0] sm:$0xff]
      %v321 = vld [vmem:[%s247 + $0x1a8] sm:$0xff]
      %v322 = vld [vmem:[%s247 + $0x1b0] sm:$0xff]
      %v323 = vld [vmem:[%s247 + $0x1b8] sm:$0xff]
      %v324 = vld [vmem:[%s247 + $0x1c0] sm:$0xff]
      %v325 = vld [vmem:[%s247 + $0x1c8] sm:$0xff]
      %v326 = vld [vmem:[%s247 + $0x1d0] sm:$0xff]
      %v327 = vld [vmem:[%s247 + $0x1d8] sm:$0xff]
      %v328 = vld [vmem:[%s247 + $0x1e0] sm:$0xff]
      %v329 = vld [vmem:[%s247 + $0x1e8] sm:$0xff]
      %v330 = vld [vmem:[%s247 + $0x1f0] sm:$0xff]
      %v331 = vld [vmem:[%s247 + $0x1f8] sm:$0xff]
      %v332 = vld [vmem:[%s2] sm:$0xf]
      %v333 = vld [vmem:[%s2 + $0x4] sm:$0xf]
      %v334 = vld [vmem:[%s2 + $0x8] sm:$0xf]
      %v335 = vld [vmem:[%s2 + $0xc] sm:$0xf]
      %v336 = vld [vmem:[%s2 + $0x10] sm:$0xf]
      %v337 = vld [vmem:[%s2 + $0x14] sm:$0xf]
      %v338 = vld [vmem:[%s2 + $0x18] sm:$0xf]
      %v339 = vld [vmem:[%s2 + $0x1c] sm:$0xf]
      %v340 = vld [vmem:[%s2 + $0x20] sm:$0xf]
      %v341 = vld [vmem:[%s2 + $0x24] sm:$0xf]
      %v342 = vld [vmem:[%s2 + $0x28] sm:$0xf]
      %v343 = vld [vmem:[%s2 + $0x2c] sm:$0xf]
      %v344 = vld [vmem:[%s2 + $0x30] sm:$0xf]
      %v345 = vld [vmem:[%s2 + $0x34] sm:$0xf]
      %v346 = vld [vmem:[%s2 + $0x38] sm:$0xf]
      %v347 = vld [vmem:[%s2 + $0x3c] sm:$0xf]
      %v348 = vld [vmem:[%s2 + $0x40] sm:$0xf]
      %v349 = vld [vmem:[%s2 + $0x44] sm:$0xf]
      %v350 = vld [vmem:[%s2 + $0x48] sm:$0xf]
      %v351 = vld [vmem:[%s2 + $0x4c] sm:$0xf]
      %v352 = vld [vmem:[%s2 + $0x50] sm:$0xf]
      %v353 = vld [vmem:[%s2 + $0x54] sm:$0xf]
      %v354 = vld [vmem:[%s2 + $0x58] sm:$0xf]
      %v355 = vld [vmem:[%s2 + $0x5c] sm:$0xf]
      %v356 = vld [vmem:[%s2 + $0x60] sm:$0xf]
      %v357 = vld [vmem:[%s2 + $0x64] sm:$0xf]
      %v358 = vld [vmem:[%s2 + $0x68] sm:$0xf]
      %v359 = vld [vmem:[%s2 + $0x6c] sm:$0xf]
      %v360 = vld [vmem:[%s2 + $0x70] sm:$0xf]
      %v361 = vld [vmem:[%s2 + $0x74] sm:$0xf]
      %v362 = vld [vmem:[%s2 + $0x78] sm:$0xf]
      %v363 = vld [vmem:[%s2 + $0x7c] sm:$0xf]
      %v364 = vld [vmem:[%s2 + $0x80] sm:$0xf]
      %v365 = vld [vmem:[%s2 + $0x84] sm:$0xf]
      %v366 = vld [vmem:[%s2 + $0x88] sm:$0xf]
      %v367 = vld [vmem:[%s2 + $0x8c] sm:$0xf]
      %v368 = vld [vmem:[%s2 + $0x90] sm:$0xf]
      %v369 = vld [vmem:[%s2 + $0x94] sm:$0xf]
      %v370 = vld [vmem:[%s2 + $0x98] sm:$0xf]
      %v371 = vld [vmem:[%s2 + $0x9c] sm:$0xf]
      %v372 = vld [vmem:[%s2 + $0xa0] sm:$0xf]
      %v373 = vld [vmem:[%s2 + $0xa4] sm:$0xf]
      %v374 = vld [vmem:[%s2 + $0xa8] sm:$0xf]
      %v375 = vld [vmem:[%s2 + $0xac] sm:$0xf]
      %v376 = vld [vmem:[%s2 + $0xb0] sm:$0xf]
      %v377 = vld [vmem:[%s2 + $0xb4] sm:$0xf]
      %v378 = vld [vmem:[%s2 + $0xb8] sm:$0xf]
      %v379 = vld [vmem:[%s2 + $0xbc] sm:$0xf]
      %v380 = vld [vmem:[%s2 + $0xc0] sm:$0xf]
      %v381 = vld [vmem:[%s2 + $0xc4] sm:$0xf]
      %v446 = vunpack.c.l.b16 %v268
      %v447 = vunpack.c.h.b16 %v268
      %v448 = vunpack.c.l.b16 %v269
      %v449 = vunpack.c.h.b16 %v269
      %v450 = vunpack.c.l.b16 %v270
      %v451 = vunpack.c.h.b16 %v270
      %v452 = vunpack.c.l.b16 %v271
      %v453 = vunpack.c.h.b16 %v271
      %v454 = vunpack.c.l.b16 %v272
      %v455 = vunpack.c.h.b16 %v272
      %v456 = vunpack.c.l.b16 %v273
      %v457 = vunpack.c.h.b16 %v273
      %v458 = vunpack.c.l.b16 %v274
      %v459 = vunpack.c.h.b16 %v274
      %v460 = vunpack.c.l.b16 %v275
      %v461 = vunpack.c.h.b16 %v275
      %v462 = vunpack.c.l.b16 %v276
      %v463 = vunpack.c.h.b16 %v276
      %v464 = vunpack.c.l.b16 %v277
      %v465 = vunpack.c.h.b16 %v277
      %v466 = vunpack.c.l.b16 %v278
      %v467 = vunpack.c.h.b16 %v278
      %v468 = vunpack.c.l.b16 %v279
      %v469 = vunpack.c.h.b16 %v279
      %v470 = vunpack.c.l.b16 %v280
      %v471 = vunpack.c.h.b16 %v280
      %v472 = vunpack.c.l.b16 %v281
      %v473 = vunpack.c.h.b16 %v281
      %v474 = vunpack.c.l.b16 %v282
      %v475 = vunpack.c.h.b16 %v282
      %v476 = vunpack.c.l.b16 %v283
      %v477 = vunpack.c.h.b16 %v283
      %v478 = vunpack.c.l.b16 %v284
      %v479 = vunpack.c.h.b16 %v284
      %v480 = vunpack.c.l.b16 %v285
      %v481 = vunpack.c.h.b16 %v285
      %v482 = vunpack.c.l.b16 %v286
      %v483 = vunpack.c.h.b16 %v286
      %v484 = vunpack.c.l.b16 %v287
      %v485 = vunpack.c.h.b16 %v287
      %v486 = vunpack.c.l.b16 %v288
      %v487 = vunpack.c.h.b16 %v288
      %v488 = vunpack.c.l.b16 %v289
      %v489 = vunpack.c.h.b16 %v289
      %v490 = vunpack.c.l.b16 %v290
      %v491 = vunpack.c.h.b16 %v290
      %v492 = vunpack.c.l.b16 %v291
      %v493 = vunpack.c.h.b16 %v291
      %v494 = vunpack.c.l.b16 %v292
      %v495 = vunpack.c.h.b16 %v292
      %v496 = vunpack.c.l.b16 %v293
      %v497 = vunpack.c.h.b16 %v293
      %v498 = vunpack.c.l.b16 %v294
      %v499 = vunpack.c.h.b16 %v294
      %v500 = vunpack.c.l.b16 %v295
      %v501 = vunpack.c.h.b16 %v295
      %v502 = vunpack.c.l.b16 %v296
      %v503 = vunpack.c.h.b16 %v296
      %v504 = vunpack.c.l.b16 %v297
      %v505 = vunpack.c.h.b16 %v297
      %v506 = vunpack.c.l.b16 %v298
      %v507 = vunpack.c.h.b16 %v298
      %v508 = vunpack.c.l.b16 %v299
      %v509 = vunpack.c.h.b16 %v299
      %v510 = vunpack.c.l.b16 %v300
      %v511 = vunpack.c.h.b16 %v300
      %v512 = vunpack.c.l.b16 %v301
      %v513 = vunpack.c.h.b16 %v301
      %v514 = vunpack.c.l.b16 %v302
      %v515 = vunpack.c.h.b16 %v302
      %v516 = vunpack.c.l.b16 %v303
      %v517 = vunpack.c.h.b16 %v303
      %v518 = vunpack.c.l.b16 %v304
      %v519 = vunpack.c.h.b16 %v304
      %v520 = vunpack.c.l.b16 %v305
      %v521 = vunpack.c.h.b16 %v305
      %v522 = vunpack.c.l.b16 %v306
      %v523 = vunpack.c.h.b16 %v306
      %v524 = vunpack.c.l.b16 %v307
      %v525 = vunpack.c.h.b16 %v307
      %v526 = vunpack.c.l.b16 %v308
      %v527 = vunpack.c.h.b16 %v308
      %v528 = vunpack.c.l.b16 %v309
      %v529 = vunpack.c.h.b16 %v309
      %v530 = vunpack.c.l.b16 %v310
      %v531 = vunpack.c.h.b16 %v310
      %v532 = vunpack.c.l.b16 %v311
      %v533 = vunpack.c.h.b16 %v311
      %v534 = vunpack.c.l.b16 %v312
      %v535 = vunpack.c.h.b16 %v312
      %v536 = vunpack.c.l.b16 %v313
      %v537 = vunpack.c.h.b16 %v313
      %v538 = vunpack.c.l.b16 %v314
      %v539 = vunpack.c.h.b16 %v314
      %v540 = vunpack.c.l.b16 %v315
      %v541 = vunpack.c.h.b16 %v315
      %v542 = vunpack.c.l.b16 %v316
      %v543 = vunpack.c.h.b16 %v316
      %v544 = vunpack.c.l.b16 %v317
      %v545 = vunpack.c.h.b16 %v317
      %v546 = vunpack.c.l.b16 %v318
      %v547 = vunpack.c.h.b16 %v318
      %v548 = vunpack.c.l.b16 %v319
      %v549 = vunpack.c.h.b16 %v319
      %v550 = vunpack.c.l.b16 %v320
      %v551 = vunpack.c.h.b16 %v320
      %v552 = vunpack.c.l.b16 %v321
      %v553 = vunpack.c.h.b16 %v321
      %v554 = vunpack.c.l.b16 %v322
      %v555 = vunpack.c.h.b16 %v322
      %v556 = vunpack.c.l.b16 %v323
      %v557 = vunpack.c.h.b16 %v323
      %v558 = vunpack.c.l.b16 %v324
      %v559 = vunpack.c.h.b16 %v324
      %v560 = vunpack.c.l.b16 %v325
      %v561 = vunpack.c.h.b16 %v325
      %v562 = vunpack.c.l.b16 %v326
      %v563 = vunpack.c.h.b16 %v326
      %v564 = vunpack.c.l.b16 %v327
      %v565 = vunpack.c.h.b16 %v327
      %v566 = vunpack.c.l.b16 %v328
      %v567 = vunpack.c.h.b16 %v328
      %v568 = vunpack.c.l.b16 %v329
      %v569 = vunpack.c.h.b16 %v329
      %v570 = vunpack.c.l.b16 %v330
      %v571 = vunpack.c.h.b16 %v330
      %v572 = vunpack.c.l.b16 %v331
      %v573 = vunpack.c.h.b16 %v331
      %v574 = vpack.c.b16 %v450, %v446
      %v575 = vpack.c.b16 %v451, %v447
      %v576 = vpack.c.b16 %v452, %v448
      %v577 = vpack.c.b16 %v453, %v449
      %v578 = vpack.c.b16 %v458, %v454
      %v579 = vpack.c.b16 %v459, %v455
      %v580 = vpack.c.b16 %v460, %v456
      %v581 = vpack.c.b16 %v461, %v457
      %v582 = vpack.c.b16 %v466, %v462
      %v583 = vpack.c.b16 %v467, %v463
      %v584 = vpack.c.b16 %v468, %v464
      %v585 = vpack.c.b16 %v469, %v465
      %v586 = vpack.c.b16 %v474, %v470
      %v587 = vpack.c.b16 %v475, %v471
      %v588 = vpack.c.b16 %v476, %v472
      %v589 = vpack.c.b16 %v477, %v473
      %v590 = vpack.c.b16 %v482, %v478
      %v591 = vpack.c.b16 %v483, %v479
      %v592 = vpack.c.b16 %v484, %v480
      %v593 = vpack.c.b16 %v485, %v481
      %v594 = vpack.c.b16 %v490, %v486
      %v595 = vpack.c.b16 %v491, %v487
      %v596 = vpack.c.b16 %v492, %v488
      %v597 = vpack.c.b16 %v493, %v489
      %v598 = vpack.c.b16 %v498, %v494
      %v599 = vpack.c.b16 %v499, %v495
      %v600 = vpack.c.b16 %v500, %v496
      %v601 = vpack.c.b16 %v501, %v497
      %v602 = vpack.c.b16 %v506, %v502
      %v603 = vpack.c.b16 %v507, %v503
      %v604 = vpack.c.b16 %v508, %v504
      %v605 = vpack.c.b16 %v509, %v505
      %v606 = vpack.c.b16 %v514, %v510
      %v607 = vpack.c.b16 %v515, %v511
      %v608 = vpack.c.b16 %v516, %v512
      %v609 = vpack.c.b16 %v517, %v513
      %v610 = vpack.c.b16 %v522, %v518
      %v611 = vpack.c.b16 %v523, %v519
      %v612 = vpack.c.b16 %v524, %v520
      %v613 = vpack.c.b16 %v525, %v521
      %v614 = vpack.c.b16 %v530, %v526
      %v615 = vpack.c.b16 %v531, %v527
      %v616 = vpack.c.b16 %v532, %v528
      %v617 = vpack.c.b16 %v533, %v529
      %v618 = vpack.c.b16 %v538, %v534
      %v619 = vpack.c.b16 %v539, %v535
      %v620 = vpack.c.b16 %v540, %v536
      %v621 = vpack.c.b16 %v541, %v537
      %v622 = vpack.c.b16 %v546, %v542
      %v623 = vpack.c.b16 %v547, %v543
      %v624 = vpack.c.b16 %v548, %v544
      %v625 = vpack.c.b16 %v549, %v545
      %v626 = vpack.c.b16 %v554, %v550
      %v627 = vpack.c.b16 %v555, %v551
      %v628 = vpack.c.b16 %v556, %v552
      %v629 = vpack.c.b16 %v557, %v553
      %v630 = vpack.c.b16 %v562, %v558
      %v631 = vpack.c.b16 %v563, %v559
      %v632 = vpack.c.b16 %v564, %v560
      %v633 = vpack.c.b16 %v565, %v561
      %v634 = vpack.c.b16 %v570, %v566
      %v635 = vpack.c.b16 %v571, %v567
      %v636 = vpack.c.b16 %v572, %v568
      %v637 = vpack.c.b16 %v573, %v569
      %v736 = vunpack.c.l.b16 %v332
      %v737 = vunpack.c.l.b16 %v333
      %v738 = vunpack.c.l.b16 %v334
      %v739 = vunpack.c.l.b16 %v335
      %v740 = vunpack.c.l.b16 %v336
      %v741 = vunpack.c.l.b16 %v337
      %v742 = vunpack.c.l.b16 %v338
      %v743 = vunpack.c.l.b16 %v339
      %v744 = vunpack.c.l.b16 %v340
      %v745 = vunpack.c.l.b16 %v341
      %v746 = vunpack.c.l.b16 %v342
      %v747 = vunpack.c.l.b16 %v343
      %v748 = vunpack.c.l.b16 %v344
      %v749 = vunpack.c.l.b16 %v345
      %v750 = vunpack.c.l.b16 %v346
      %v751 = vunpack.c.l.b16 %v347
      %v752 = vunpack.c.l.b16 %v348
      %v753 = vunpack.c.l.b16 %v349
      %v754 = vunpack.c.l.b16 %v350
      %v755 = vunpack.c.l.b16 %v351
      %v756 = vunpack.c.l.b16 %v352
      %v757 = vunpack.c.l.b16 %v353
      %v758 = vunpack.c.l.b16 %v354
      %v759 = vunpack.c.l.b16 %v355
      %v760 = vunpack.c.l.b16 %v356
      %v761 = vunpack.c.l.b16 %v357
      %v762 = vunpack.c.l.b16 %v358
      %v763 = vunpack.c.l.b16 %v359
      %v764 = vunpack.c.l.b16 %v360
      %v765 = vunpack.c.l.b16 %v361
      %v766 = vunpack.c.l.b16 %v362
      %v767 = vunpack.c.l.b16 %v363
      %v768 = vunpack.c.l.b16 %v364
      %v769 = vunpack.c.l.b16 %v365
      %v770 = vunpack.c.l.b16 %v366
      %v771 = vunpack.c.l.b16 %v367
      %v772 = vunpack.c.l.b16 %v368
      %v773 = vunpack.c.l.b16 %v369
      %v774 = vunpack.c.l.b16 %v370
      %v775 = vunpack.c.l.b16 %v371
      %v776 = vunpack.c.l.b16 %v372
      %v777 = vunpack.c.l.b16 %v373
      %v778 = vunpack.c.l.b16 %v374
      %v779 = vunpack.c.l.b16 %v375
      %v780 = vunpack.c.l.b16 %v376
      %v781 = vunpack.c.l.b16 %v377
      %v782 = vunpack.c.l.b16 %v378
      %v783 = vunpack.c.l.b16 %v379
      %v784 = vunpack.c.l.b16 %v380
      %v785 = vunpack.c.l.b16 %v381
      %v786 = vpack.c.b16 %v737, %v736
      %v787 = vpack.c.b16 %v739, %v738
      %v788 = vpack.c.b16 %v741, %v740
      %v789 = vpack.c.b16 %v743, %v742
      %v790 = vpack.c.b16 %v745, %v744
      %v791 = vpack.c.b16 %v747, %v746
      %v792 = vpack.c.b16 %v749, %v748
      %v793 = vpack.c.b16 %v751, %v750
      %v794 = vpack.c.b16 %v753, %v752
      %v795 = vpack.c.b16 %v755, %v754
      %v796 = vpack.c.b16 %v757, %v756
      %v797 = vpack.c.b16 %v759, %v758
      %v798 = vpack.c.b16 %v761, %v760
      %v799 = vpack.c.b16 %v763, %v762
      %v800 = vpack.c.b16 %v765, %v764
      %v801 = vpack.c.b16 %v767, %v766
      %v802 = vpack.c.b16 %v769, %v768
      %v803 = vpack.c.b16 %v771, %v770
      %v804 = vpack.c.b16 %v773, %v772
      %v805 = vpack.c.b16 %v775, %v774
      %v806 = vpack.c.b16 %v777, %v776
      %v807 = vpack.c.b16 %v779, %v778
      %v808 = vpack.c.b16 %v781, %v780
      %v809 = vpack.c.b16 %v783, %v782
      %v810 = vpack.c.b16 %v785, %v784
      %vm836 = vcmask 130048
      %v838 = vsel %vm836, %v577, 0
      %v841 = vsel %vm836, %v581, 0
      %v844 = vsel %vm836, %v585, 0
      %v847 = vsel %vm836, %v589, 0
      %v850 = vsel %vm836, %v593, 0
      %v853 = vsel %vm836, %v597, 0
      %v856 = vsel %vm836, %v601, 0
      %v859 = vsel %vm836, %v605, 0
      %v862 = vsel %vm836, %v609, 0
      %v865 = vsel %vm836, %v613, 0
      %v868 = vsel %vm836, %v617, 0
      %v871 = vsel %vm836, %v621, 0
      %v874 = vsel %vm836, %v625, 0
      %v877 = vsel %vm836, %v629, 0
      %v880 = vsel %vm836, %v633, 0
      %v883 = vsel %vm836, %v637, 0
      %885 = vmatpush.bf16.msra.mxu0 %v793
      %886 = vmatpush.bf16.msra.mxu0 %v792
      %887 = vmatpush.bf16.msra.mxu0 %v791
      %888 = vmatpush.bf16.msra.mxu0 %v790
      %889 = vmatpush.bf16.msra.mxu0 %v789
      %890 = vmatpush.bf16.msra.mxu0 %v788
      %891 = vmatpush.bf16.msra.mxu0 %v787
      %892 = vmatpush.bf16.msra.mxu0 %v786
      %893 = vmatmul.bf16.gmra.mxu0 %v574
      %v894 = vpop.f32.mrf.mxu0
      %v895 = vadd.f32 0.0, %v894
      %v896 = vpop.f32.mrf.mxu0
      %v897 = vadd.f32 0.0, %v896
      %898 = vmatmul.bf16.gmra.mxu0 %v578
      %v899 = vpop.f32.mrf.mxu0
      %v900 = vadd.f32 0.0, %v899
      %v901 = vpop.f32.mrf.mxu0
      %v902 = vadd.f32 0.0, %v901
      %903 = vmatmul.bf16.gmra.mxu0 %v582
      %v904 = vpop.f32.mrf.mxu0
      %v905 = vadd.f32 0.0, %v904
      %v906 = vpop.f32.mrf.mxu0
      %v907 = vadd.f32 0.0, %v906
      %908 = vmatmul.bf16.gmra.mxu0 %v586
      %v909 = vpop.f32.mrf.mxu0
      %v910 = vadd.f32 0.0, %v909
      %v911 = vpop.f32.mrf.mxu0
      %v912 = vadd.f32 0.0, %v911
      %913 = vmatmul.bf16.gmra.mxu0 %v590
      %v914 = vpop.f32.mrf.mxu0
      %v915 = vadd.f32 0.0, %v914
      %v916 = vpop.f32.mrf.mxu0
      %v917 = vadd.f32 0.0, %v916
      %918 = vmatmul.bf16.gmra.mxu0 %v594
      %v919 = vpop.f32.mrf.mxu0
      %v920 = vadd.f32 0.0, %v919
      %v921 = vpop.f32.mrf.mxu0
      %v922 = vadd.f32 0.0, %v921
      %923 = vmatmul.bf16.gmra.mxu0 %v598
      %v924 = vpop.f32.mrf.mxu0
      %v925 = vadd.f32 0.0, %v924
      %v926 = vpop.f32.mrf.mxu0
      %v927 = vadd.f32 0.0, %v926
      %928 = vmatmul.bf16.gmra.mxu0 %v602
      %v929 = vpop.f32.mrf.mxu0
      %v930 = vadd.f32 0.0, %v929
      %v931 = vpop.f32.mrf.mxu0
      %v932 = vadd.f32 0.0, %v931
      %933 = vmatmul.bf16.gmra.mxu0 %v606
      %v934 = vpop.f32.mrf.mxu0
      %v935 = vadd.f32 0.0, %v934
      %v936 = vpop.f32.mrf.mxu0
      %v937 = vadd.f32 0.0, %v936
      %938 = vmatmul.bf16.gmra.mxu0 %v610
      %v939 = vpop.f32.mrf.mxu0
      %v940 = vadd.f32 0.0, %v939
      %v941 = vpop.f32.mrf.mxu0
      %v942 = vadd.f32 0.0, %v941
      %943 = vmatmul.bf16.gmra.mxu0 %v614
      %v944 = vpop.f32.mrf.mxu0
      %v945 = vadd.f32 0.0, %v944
      %v946 = vpop.f32.mrf.mxu0
      %v947 = vadd.f32 0.0, %v946
      %948 = vmatmul.bf16.gmra.mxu0 %v618
      %v949 = vpop.f32.mrf.mxu0
      %v950 = vadd.f32 0.0, %v949
      %v951 = vpop.f32.mrf.mxu0
      %v952 = vadd.f32 0.0, %v951
      %953 = vmatmul.bf16.gmra.mxu0 %v622
      %v954 = vpop.f32.mrf.mxu0
      %v955 = vadd.f32 0.0, %v954
      %v956 = vpop.f32.mrf.mxu0
      %v957 = vadd.f32 0.0, %v956
      %958 = vmatmul.bf16.gmra.mxu0 %v626
      %v959 = vpop.f32.mrf.mxu0
      %v960 = vadd.f32 0.0, %v959
      %v961 = vpop.f32.mrf.mxu0
      %v962 = vadd.f32 0.0, %v961
      %963 = vmatmul.bf16.gmra.mxu0 %v630
      %v964 = vpop.f32.mrf.mxu0
      %v965 = vadd.f32 0.0, %v964
      %v966 = vpop.f32.mrf.mxu0
      %v967 = vadd.f32 0.0, %v966
      %968 = vmatmul.bf16.gmra.mxu0 %v634
      %v969 = vpop.f32.mrf.mxu0
      %v970 = vadd.f32 0.0, %v969
      %v971 = vpop.f32.mrf.mxu0
      %v972 = vadd.f32 0.0, %v971
      %973 = vdwg.mxu0
      %974 = vmatpush.bf16.msra.mxu0 %v801
      %975 = vmatpush.bf16.msra.mxu0 %v800
      %976 = vmatpush.bf16.msra.mxu0 %v799
      %977 = vmatpush.bf16.msra.mxu0 %v798
      %978 = vmatpush.bf16.msra.mxu0 %v797
      %979 = vmatpush.bf16.msra.mxu0 %v796
      %980 = vmatpush.bf16.msra.mxu0 %v795
      %981 = vmatpush.bf16.msra.mxu0 %v794
      %982 = vmatmul.bf16.gmra.mxu0 %v575
      %v983 = vpop.f32.mrf.mxu0
      %v984 = vadd.f32 %v895, %v983
      %v985 = vpop.f32.mrf.mxu0
      %v986 = vadd.f32 %v897, %v985
      %987 = vmatmul.bf16.gmra.mxu0 %v579
      %v988 = vpop.f32.mrf.mxu0
      %v989 = vadd.f32 %v900, %v988
      %v990 = vpop.f32.mrf.mxu0
      %v991 = vadd.f32 %v902, %v990
      %992 = vmatmul.bf16.gmra.mxu0 %v583
      %v993 = vpop.f32.mrf.mxu0
      %v994 = vadd.f32 %v905, %v993
      %v995 = vpop.f32.mrf.mxu0
      %v996 = vadd.f32 %v907, %v995
      %997 = vmatmul.bf16.gmra.mxu0 %v587
      %v998 = vpop.f32.mrf.mxu0
      %v999 = vadd.f32 %v910, %v998
      %v1000 = vpop.f32.mrf.mxu0
      %v1001 = vadd.f32 %v912, %v1000
      %1002 = vmatmul.bf16.gmra.mxu0 %v591
      %v1003 = vpop.f32.mrf.mxu0
      %v1004 = vadd.f32 %v915, %v1003
      %v1005 = vpop.f32.mrf.mxu0
      %v1006 = vadd.f32 %v917, %v1005
      %1007 = vmatmul.bf16.gmra.mxu0 %v595
      %v1008 = vpop.f32.mrf.mxu0
      %v1009 = vadd.f32 %v920, %v1008
      %v1010 = vpop.f32.mrf.mxu0
      %v1011 = vadd.f32 %v922, %v1010
      %1012 = vmatmul.bf16.gmra.mxu0 %v599
      %v1013 = vpop.f32.mrf.mxu0
      %v1014 = vadd.f32 %v925, %v1013
      %v1015 = vpop.f32.mrf.mxu0
      %v1016 = vadd.f32 %v927, %v1015
      %1017 = vmatmul.bf16.gmra.mxu0 %v603
      %v1018 = vpop.f32.mrf.mxu0
      %v1019 = vadd.f32 %v930, %v1018
      %v1020 = vpop.f32.mrf.mxu0
      %v1021 = vadd.f32 %v932, %v1020
      %1022 = vmatmul.bf16.gmra.mxu0 %v607
      %v1023 = vpop.f32.mrf.mxu0
      %v1024 = vadd.f32 %v935, %v1023
      %v1025 = vpop.f32.mrf.mxu0
      %v1026 = vadd.f32 %v937, %v1025
      %1027 = vmatmul.bf16.gmra.mxu0 %v611
      %v1028 = vpop.f32.mrf.mxu0
      %v1029 = vadd.f32 %v940, %v1028
      %v1030 = vpop.f32.mrf.mxu0
      %v1031 = vadd.f32 %v942, %v1030
      %1032 = vmatmul.bf16.gmra.mxu0 %v615
      %v1033 = vpop.f32.mrf.mxu0
      %v1034 = vadd.f32 %v945, %v1033
      %v1035 = vpop.f32.mrf.mxu0
      %v1036 = vadd.f32 %v947, %v1035
      %1037 = vmatmul.bf16.gmra.mxu0 %v619
      %v1038 = vpop.f32.mrf.mxu0
      %v1039 = vadd.f32 %v950, %v1038
      %v1040 = vpop.f32.mrf.mxu0
      %v1041 = vadd.f32 %v952, %v1040
      %1042 = vmatmul.bf16.gmra.mxu0 %v623
      %v1043 = vpop.f32.mrf.mxu0
      %v1044 = vadd.f32 %v955, %v1043
      %v1045 = vpop.f32.mrf.mxu0
      %v1046 = vadd.f32 %v957, %v1045
      %1047 = vmatmul.bf16.gmra.mxu0 %v627
      %v1048 = vpop.f32.mrf.mxu0
      %v1049 = vadd.f32 %v960, %v1048
      %v1050 = vpop.f32.mrf.mxu0
      %v1051 = vadd.f32 %v962, %v1050
      %1052 = vmatmul.bf16.gmra.mxu0 %v631
      %v1053 = vpop.f32.mrf.mxu0
      %v1054 = vadd.f32 %v965, %v1053
      %v1055 = vpop.f32.mrf.mxu0
      %v1056 = vadd.f32 %v967, %v1055
      %1057 = vmatmul.bf16.gmra.mxu0 %v635
      %v1058 = vpop.f32.mrf.mxu0
      %v1059 = vadd.f32 %v970, %v1058
      %v1060 = vpop.f32.mrf.mxu0
      %v1061 = vadd.f32 %v972, %v1060
      %1062 = vdwg.mxu0
      %1063 = vmatpush.bf16.msra.mxu0 %v809
      %1064 = vmatpush.bf16.msra.mxu0 %v808
      %1065 = vmatpush.bf16.msra.mxu0 %v807
      %1066 = vmatpush.bf16.msra.mxu0 %v806
      %1067 = vmatpush.bf16.msra.mxu0 %v805
      %1068 = vmatpush.bf16.msra.mxu0 %v804
      %1069 = vmatpush.bf16.msra.mxu0 %v803
      %1070 = vmatpush.bf16.msra.mxu0 %v802
      %1071 = vmatmul.bf16.gmra.mxu0 %v576
      %v1072 = vpop.f32.mrf.mxu0
      %v1073 = vadd.f32 %v984, %v1072
      %v1074 = vpop.f32.mrf.mxu0
      %v1075 = vadd.f32 %v986, %v1074
      %1076 = vmatmul.bf16.gmra.mxu0 %v580
      %v1077 = vpop.f32.mrf.mxu0
      %v1078 = vadd.f32 %v989, %v1077
      %v1079 = vpop.f32.mrf.mxu0
      %v1080 = vadd.f32 %v991, %v1079
      %1081 = vmatmul.bf16.gmra.mxu0 %v584
      %v1082 = vpop.f32.mrf.mxu0
      %v1083 = vadd.f32 %v994, %v1082
      %v1084 = vpop.f32.mrf.mxu0
      %v1085 = vadd.f32 %v996, %v1084
      %1086 = vmatmul.bf16.gmra.mxu0 %v588
      %v1087 = vpop.f32.mrf.mxu0
      %v1088 = vadd.f32 %v999, %v1087
      %v1089 = vpop.f32.mrf.mxu0
      %v1090 = vadd.f32 %v1001, %v1089
      %1091 = vmatmul.bf16.gmra.mxu0 %v592
      %v1092 = vpop.f32.mrf.mxu0
      %v1093 = vadd.f32 %v1004, %v1092
      %v1094 = vpop.f32.mrf.mxu0
      %v1095 = vadd.f32 %v1006, %v1094
      %1096 = vmatmul.bf16.gmra.mxu0 %v596
      %v1097 = vpop.f32.mrf.mxu0
      %v1098 = vadd.f32 %v1009, %v1097
      %v1099 = vpop.f32.mrf.mxu0
      %v1100 = vadd.f32 %v1011, %v1099
      %1101 = vmatmul.bf16.gmra.mxu0 %v600
      %v1102 = vpop.f32.mrf.mxu0
      %v1103 = vadd.f32 %v1014, %v1102
      %v1104 = vpop.f32.mrf.mxu0
      %v1105 = vadd.f32 %v1016, %v1104
      %1106 = vmatmul.bf16.gmra.mxu0 %v604
      %v1107 = vpop.f32.mrf.mxu0
      %v1108 = vadd.f32 %v1019, %v1107
      %v1109 = vpop.f32.mrf.mxu0
      %v1110 = vadd.f32 %v1021, %v1109
      %1111 = vmatmul.bf16.gmra.mxu0 %v608
      %v1112 = vpop.f32.mrf.mxu0
      %v1113 = vadd.f32 %v1024, %v1112
      %v1114 = vpop.f32.mrf.mxu0
      %v1115 = vadd.f32 %v1026, %v1114
      %1116 = vmatmul.bf16.gmra.mxu0 %v612
      %v1117 = vpop.f32.mrf.mxu0
      %v1118 = vadd.f32 %v1029, %v1117
      %v1119 = vpop.f32.mrf.mxu0
      %v1120 = vadd.f32 %v1031, %v1119
      %1121 = vmatmul.bf16.gmra.mxu0 %v616
      %v1122 = vpop.f32.mrf.mxu0
      %v1123 = vadd.f32 %v1034, %v1122
      %v1124 = vpop.f32.mrf.mxu0
      %v1125 = vadd.f32 %v1036, %v1124
      %1126 = vmatmul.bf16.gmra.mxu0 %v620
      %v1127 = vpop.f32.mrf.mxu0
      %v1128 = vadd.f32 %v1039, %v1127
      %v1129 = vpop.f32.mrf.mxu0
      %v1130 = vadd.f32 %v1041, %v1129
      %1131 = vmatmul.bf16.gmra.mxu0 %v624
      %v1132 = vpop.f32.mrf.mxu0
      %v1133 = vadd.f32 %v1044, %v1132
      %v1134 = vpop.f32.mrf.mxu0
      %v1135 = vadd.f32 %v1046, %v1134
      %1136 = vmatmul.bf16.gmra.mxu0 %v628
      %v1137 = vpop.f32.mrf.mxu0
      %v1138 = vadd.f32 %v1049, %v1137
      %v1139 = vpop.f32.mrf.mxu0
      %v1140 = vadd.f32 %v1051, %v1139
      %1141 = vmatmul.bf16.gmra.mxu0 %v632
      %v1142 = vpop.f32.mrf.mxu0
      %v1143 = vadd.f32 %v1054, %v1142
      %v1144 = vpop.f32.mrf.mxu0
      %v1145 = vadd.f32 %v1056, %v1144
      %1146 = vmatmul.bf16.gmra.mxu0 %v636
      %v1147 = vpop.f32.mrf.mxu0
      %v1148 = vadd.f32 %v1059, %v1147
      %v1149 = vpop.f32.mrf.mxu0
      %v1150 = vadd.f32 %v1061, %v1149
      %1151 = vdwg.mxu0
      %1152 = vmatpush.bf16.msra.mxu0 0
      %1153 = vmatpush.bf16.msra.mxu0 0
      %1154 = vmatpush.bf16.msra.mxu0 0
      %1155 = vmatpush.bf16.msra.mxu0 0
      %1156 = vmatpush.bf16.msra.mxu0 0
      %1157 = vmatpush.bf16.msra.mxu0 0
      %1158 = vmatpush.bf16.msra.mxu0 0
      %1159 = vmatpush.bf16.msra.mxu0 %v810
      %1160 = vmatmul.bf16.gmra.mxu0 %v838
      %v1161 = vpop.f32.mrf.mxu0
      %v1162 = vadd.f32 %v1073, %v1161
      %v1163 = vpop.f32.mrf.mxu0
      %v1164 = vadd.f32 %v1075, %v1163
      %1165 = vmatmul.bf16.gmra.mxu0 %v841
      %v1166 = vpop.f32.mrf.mxu0
      %v1167 = vadd.f32 %v1078, %v1166
      %v1168 = vpop.f32.mrf.mxu0
      %v1169 = vadd.f32 %v1080, %v1168
      %1170 = vmatmul.bf16.gmra.mxu0 %v844
      %v1171 = vpop.f32.mrf.mxu0
      %v1172 = vadd.f32 %v1083, %v1171
      %v1173 = vpop.f32.mrf.mxu0
      %v1174 = vadd.f32 %v1085, %v1173
      %1175 = vmatmul.bf16.gmra.mxu0 %v847
      %v1176 = vpop.f32.mrf.mxu0
      %v1177 = vadd.f32 %v1088, %v1176
      %v1178 = vpop.f32.mrf.mxu0
      %v1179 = vadd.f32 %v1090, %v1178
      %1180 = vmatmul.bf16.gmra.mxu0 %v850
      %v1181 = vpop.f32.mrf.mxu0
      %v1182 = vadd.f32 %v1093, %v1181
      %v1183 = vpop.f32.mrf.mxu0
      %v1184 = vadd.f32 %v1095, %v1183
      %1185 = vmatmul.bf16.gmra.mxu0 %v853
      %v1186 = vpop.f32.mrf.mxu0
      %v1187 = vadd.f32 %v1098, %v1186
      %v1188 = vpop.f32.mrf.mxu0
      %v1189 = vadd.f32 %v1100, %v1188
      %1190 = vmatmul.bf16.gmra.mxu0 %v856
      %v1191 = vpop.f32.mrf.mxu0
      %v1192 = vadd.f32 %v1103, %v1191
      %v1193 = vpop.f32.mrf.mxu0
      %v1194 = vadd.f32 %v1105, %v1193
      %1195 = vmatmul.bf16.gmra.mxu0 %v859
      %v1196 = vpop.f32.mrf.mxu0
      %v1197 = vadd.f32 %v1108, %v1196
      %v1198 = vpop.f32.mrf.mxu0
      %v1199 = vadd.f32 %v1110, %v1198
      %1200 = vmatmul.bf16.gmra.mxu0 %v862
      %v1201 = vpop.f32.mrf.mxu0
      %v1202 = vadd.f32 %v1113, %v1201
      %v1203 = vpop.f32.mrf.mxu0
      %v1204 = vadd.f32 %v1115, %v1203
      %1205 = vmatmul.bf16.gmra.mxu0 %v865
      %v1206 = vpop.f32.mrf.mxu0
      %v1207 = vadd.f32 %v1118, %v1206
      %v1208 = vpop.f32.mrf.mxu0
      %v1209 = vadd.f32 %v1120, %v1208
      %1210 = vmatmul.bf16.gmra.mxu0 %v868
      %v1211 = vpop.f32.mrf.mxu0
      %v1212 = vadd.f32 %v1123, %v1211
      %v1213 = vpop.f32.mrf.mxu0
      %v1214 = vadd.f32 %v1125, %v1213
      %1215 = vmatmul.bf16.gmra.mxu0 %v871
      %v1216 = vpop.f32.mrf.mxu0
      %v1217 = vadd.f32 %v1128, %v1216
      %v1218 = vpop.f32.mrf.mxu0
      %v1219 = vadd.f32 %v1130, %v1218
      %1220 = vmatmul.bf16.gmra.mxu0 %v874
      %v1221 = vpop.f32.mrf.mxu0
      %v1222 = vadd.f32 %v1133, %v1221
      %v1223 = vpop.f32.mrf.mxu0
      %v1224 = vadd.f32 %v1135, %v1223
      %1225 = vmatmul.bf16.gmra.mxu0 %v877
      %v1226 = vpop.f32.mrf.mxu0
      %v1227 = vadd.f32 %v1138, %v1226
      %v1228 = vpop.f32.mrf.mxu0
      %v1229 = vadd.f32 %v1140, %v1228
      %1230 = vmatmul.bf16.gmra.mxu0 %v880
      %v1231 = vpop.f32.mrf.mxu0
      %v1232 = vadd.f32 %v1143, %v1231
      %v1233 = vpop.f32.mrf.mxu0
      %v1234 = vadd.f32 %v1145, %v1233
      %1235 = vmatmul.bf16.gmra.mxu0 %v883
      %v1236 = vpop.f32.mrf.mxu0
      %v1237 = vadd.f32 %v1148, %v1236
      %v1238 = vpop.f32.mrf.mxu0
      %v1239 = vadd.f32 %v1150, %v1238
      %1240 = vdwg.mxu0
      %v1241 = vld [vmem:[%s253] sm:$0xff]
      %v1242 = vld [vmem:[%s253 + $0x8] sm:$0xff]
      %v1243 = vld [vmem:[%s253 + $0x10] sm:$0xff]
      %v1244 = vld [vmem:[%s253 + $0x18] sm:$0xff]
      %v1245 = vld [vmem:[%s253 + $0x20] sm:$0xff]
      %v1246 = vld [vmem:[%s253 + $0x28] sm:$0xff]
      %v1247 = vld [vmem:[%s253 + $0x30] sm:$0xff]
      %v1248 = vld [vmem:[%s253 + $0x38] sm:$0xff]
      %v1249 = vld [vmem:[%s253 + $0x40] sm:$0xff]
      %v1250 = vld [vmem:[%s253 + $0x48] sm:$0xff]
      %v1251 = vld [vmem:[%s253 + $0x50] sm:$0xff]
      %v1252 = vld [vmem:[%s253 + $0x58] sm:$0xff]
      %v1253 = vld [vmem:[%s253 + $0x60] sm:$0xff]
      %v1254 = vld [vmem:[%s253 + $0x68] sm:$0xff]
      %v1255 = vld [vmem:[%s253 + $0x70] sm:$0xff]
      %v1256 = vld [vmem:[%s253 + $0x78] sm:$0xff]
      %v1257 = vld [vmem:[%s253 + $0x80] sm:$0xff]
      %v1258 = vld [vmem:[%s253 + $0x88] sm:$0xff]
      %v1259 = vld [vmem:[%s253 + $0x90] sm:$0xff]
      %v1260 = vld [vmem:[%s253 + $0x98] sm:$0xff]
      %v1261 = vld [vmem:[%s253 + $0xa0] sm:$0xff]
      %v1262 = vld [vmem:[%s253 + $0xa8] sm:$0xff]
      %v1263 = vld [vmem:[%s253 + $0xb0] sm:$0xff]
      %v1264 = vld [vmem:[%s253 + $0xb8] sm:$0xff]
      %v1265 = vld [vmem:[%s253 + $0xc0] sm:$0xff]
      %v1266 = vld [vmem:[%s253 + $0xc8] sm:$0xff]
      %v1267 = vld [vmem:[%s253 + $0xd0] sm:$0xff]
      %v1268 = vld [vmem:[%s253 + $0xd8] sm:$0xff]
      %v1269 = vld [vmem:[%s253 + $0xe0] sm:$0xff]
      %v1270 = vld [vmem:[%s253 + $0xe8] sm:$0xff]
      %v1271 = vld [vmem:[%s253 + $0xf0] sm:$0xff]
      %v1272 = vld [vmem:[%s253 + $0xf8] sm:$0xff]
      %vm1273 = vcmask 203776
      %v1274 = vsel %vm1273, %v1241, 0.0
      %1275 = vadd.xlane.f32.xlu0 %v1274
      %v1276 = vpop.xlane.xlu0 %1275
      %v1277 = vsel %vm1273, %v1242, 0.0
      %1278 = vadd.xlane.f32.xlu0 %v1277
      %v1279 = vpop.xlane.xlu0 %1278
      %v1280 = vsel %vm1273, %v1243, 0.0
      %1281 = vadd.xlane.f32.xlu0 %v1280
      %v1282 = vpop.xlane.xlu0 %1281
      %v1283 = vsel %vm1273, %v1244, 0.0
      %1284 = vadd.xlane.f32.xlu0 %v1283
      %v1285 = vpop.xlane.xlu0 %1284
      %v1286 = vsel %vm1273, %v1245, 0.0
      %1287 = vadd.xlane.f32.xlu0 %v1286
      %v1288 = vpop.xlane.xlu0 %1287
      %v1289 = vsel %vm1273, %v1246, 0.0
      %1290 = vadd.xlane.f32.xlu0 %v1289
      %v1291 = vpop.xlane.xlu0 %1290
      %v1292 = vsel %vm1273, %v1247, 0.0
      %1293 = vadd.xlane.f32.xlu0 %v1292
      %v1294 = vpop.xlane.xlu0 %1293
      %v1295 = vsel %vm1273, %v1248, 0.0
      %1296 = vadd.xlane.f32.xlu0 %v1295
      %v1297 = vpop.xlane.xlu0 %1296
      %v1298 = vsel %vm1273, %v1249, 0.0
      %1299 = vadd.xlane.f32.xlu0 %v1298
      %v1300 = vpop.xlane.xlu0 %1299
      %v1301 = vsel %vm1273, %v1250, 0.0
      %1302 = vadd.xlane.f32.xlu0 %v1301
      %v1303 = vpop.xlane.xlu0 %1302
      %v1304 = vsel %vm1273, %v1251, 0.0
      %1305 = vadd.xlane.f32.xlu0 %v1304
      %v1306 = vpop.xlane.xlu0 %1305
      %v1307 = vsel %vm1273, %v1252, 0.0
      %1308 = vadd.xlane.f32.xlu0 %v1307
      %v1309 = vpop.xlane.xlu0 %1308
      %v1310 = vsel %vm1273, %v1253, 0.0
      %1311 = vadd.xlane.f32.xlu0 %v1310
      %v1312 = vpop.xlane.xlu0 %1311
      %v1313 = vsel %vm1273, %v1254, 0.0
      %1314 = vadd.xlane.f32.xlu0 %v1313
      %v1315 = vpop.xlane.xlu0 %1314
      %v1316 = vsel %vm1273, %v1255, 0.0
      %1317 = vadd.xlane.f32.xlu0 %v1316
      %v1318 = vpop.xlane.xlu0 %1317
      %v1319 = vsel %vm1273, %v1256, 0.0
      %1320 = vadd.xlane.f32.xlu0 %v1319
      %v1321 = vpop.xlane.xlu0 %1320
      %v1322 = vsel %vm1273, %v1257, 0.0
      %1323 = vadd.xlane.f32.xlu0 %v1322
      %v1324 = vpop.xlane.xlu0 %1323
      %v1325 = vsel %vm1273, %v1258, 0.0
      %1326 = vadd.xlane.f32.xlu0 %v1325
      %v1327 = vpop.xlane.xlu0 %1326
      %v1328 = vsel %vm1273, %v1259, 0.0
      %1329 = vadd.xlane.f32.xlu0 %v1328
      %v1330 = vpop.xlane.xlu0 %1329
      %v1331 = vsel %vm1273, %v1260, 0.0
      %1332 = vadd.xlane.f32.xlu0 %v1331
      %v1333 = vpop.xlane.xlu0 %1332
      %v1334 = vsel %vm1273, %v1261, 0.0
      %1335 = vadd.xlane.f32.xlu0 %v1334
      %v1336 = vpop.xlane.xlu0 %1335
      %v1337 = vsel %vm1273, %v1262, 0.0
      %1338 = vadd.xlane.f32.xlu0 %v1337
      %v1339 = vpop.xlane.xlu0 %1338
      %v1340 = vsel %vm1273, %v1263, 0.0
      %1341 = vadd.xlane.f32.xlu0 %v1340
      %v1342 = vpop.xlane.xlu0 %1341
      %v1343 = vsel %vm1273, %v1264, 0.0
      %1344 = vadd.xlane.f32.xlu0 %v1343
      %v1345 = vpop.xlane.xlu0 %1344
      %v1346 = vsel %vm1273, %v1265, 0.0
      %1347 = vadd.xlane.f32.xlu0 %v1346
      %v1348 = vpop.xlane.xlu0 %1347
      %v1349 = vsel %vm1273, %v1266, 0.0
      %1350 = vadd.xlane.f32.xlu0 %v1349
      %v1351 = vpop.xlane.xlu0 %1350
      %v1352 = vsel %vm1273, %v1267, 0.0
      %1353 = vadd.xlane.f32.xlu0 %v1352
      %v1354 = vpop.xlane.xlu0 %1353
      %v1355 = vsel %vm1273, %v1268, 0.0
      %1356 = vadd.xlane.f32.xlu0 %v1355
      %v1357 = vpop.xlane.xlu0 %1356
      %v1358 = vsel %vm1273, %v1269, 0.0
      %1359 = vadd.xlane.f32.xlu0 %v1358
      %v1360 = vpop.xlane.xlu0 %1359
      %v1361 = vsel %vm1273, %v1270, 0.0
      %1362 = vadd.xlane.f32.xlu0 %v1361
      %v1363 = vpop.xlane.xlu0 %1362
      %v1364 = vsel %vm1273, %v1271, 0.0
      %1365 = vadd.xlane.f32.xlu0 %v1364
      %v1366 = vpop.xlane.xlu0 %1365
      %v1367 = vsel %vm1273, %v1272, 0.0
      %1368 = vadd.xlane.f32.xlu0 %v1367
      %v1369 = vpop.xlane.xlu0 %1368
      %v1370 = vadd.f32 %v1276, 1e-08
      %v1371 = vadd.f32 %v1279, 1e-08
      %v1372 = vadd.f32 %v1282, 1e-08
      %v1373 = vadd.f32 %v1285, 1e-08
      %v1374 = vadd.f32 %v1288, 1e-08
      %v1375 = vadd.f32 %v1291, 1e-08
      %v1376 = vadd.f32 %v1294, 1e-08
      %v1377 = vadd.f32 %v1297, 1e-08
      %v1378 = vadd.f32 %v1300, 1e-08
      %v1379 = vadd.f32 %v1303, 1e-08
      %v1380 = vadd.f32 %v1306, 1e-08
      %v1381 = vadd.f32 %v1309, 1e-08
      %v1382 = vadd.f32 %v1312, 1e-08
      %v1383 = vadd.f32 %v1315, 1e-08
      %v1384 = vadd.f32 %v1318, 1e-08
      %v1385 = vadd.f32 %v1321, 1e-08
      %v1386 = vadd.f32 %v1324, 1e-08
      %v1387 = vadd.f32 %v1327, 1e-08
      %v1388 = vadd.f32 %v1330, 1e-08
      %v1389 = vadd.f32 %v1333, 1e-08
      %v1390 = vadd.f32 %v1336, 1e-08
      %v1391 = vadd.f32 %v1339, 1e-08
      %v1392 = vadd.f32 %v1342, 1e-08
      %v1393 = vadd.f32 %v1345, 1e-08
      %v1394 = vadd.f32 %v1348, 1e-08
      %v1395 = vadd.f32 %v1351, 1e-08
      %v1396 = vadd.f32 %v1354, 1e-08
      %v1397 = vadd.f32 %v1357, 1e-08
      %v1398 = vadd.f32 %v1360, 1e-08
      %v1399 = vadd.f32 %v1363, 1e-08
      %v1400 = vadd.f32 %v1366, 1e-08
      %v1401 = vadd.f32 %v1369, 1e-08
      %v1402 = vrcp.pop %v1370
      %v1403 = vrcp.pop %v1371
      %v1404 = vrcp.pop %v1372
      %v1405 = vrcp.pop %v1373
      %v1406 = vrcp.pop %v1374
      %v1407 = vrcp.pop %v1375
      %v1408 = vrcp.pop %v1376
      %v1409 = vrcp.pop %v1377
      %v1410 = vrcp.pop %v1378
      %v1411 = vrcp.pop %v1379
      %v1412 = vrcp.pop %v1380
      %v1413 = vrcp.pop %v1381
      %v1414 = vrcp.pop %v1382
      %v1415 = vrcp.pop %v1383
      %v1416 = vrcp.pop %v1384
      %v1417 = vrcp.pop %v1385
      %v1418 = vrcp.pop %v1386
      %v1419 = vrcp.pop %v1387
      %v1420 = vrcp.pop %v1388
      %v1421 = vrcp.pop %v1389
      %v1422 = vrcp.pop %v1390
      %v1423 = vrcp.pop %v1391
      %v1424 = vrcp.pop %v1392
      %v1425 = vrcp.pop %v1393
      %v1426 = vrcp.pop %v1394
      %v1427 = vrcp.pop %v1395
      %v1428 = vrcp.pop %v1396
      %v1429 = vrcp.pop %v1397
      %v1430 = vrcp.pop %v1398
      %v1431 = vrcp.pop %v1399
      %v1432 = vrcp.pop %v1400
      %v1433 = vrcp.pop %v1401
      %v1434 = vmul.f32 %v1162, %v1402
      %v1435 = vmul.f32 %v1164, %v1403
      %v1436 = vmul.f32 %v1167, %v1404
      %v1437 = vmul.f32 %v1169, %v1405
      %v1438 = vmul.f32 %v1172, %v1406
      %v1439 = vmul.f32 %v1174, %v1407
      %v1440 = vmul.f32 %v1177, %v1408
      %v1441 = vmul.f32 %v1179, %v1409
      %v1442 = vmul.f32 %v1182, %v1410
      %v1443 = vmul.f32 %v1184, %v1411
      %v1444 = vmul.f32 %v1187, %v1412
      %v1445 = vmul.f32 %v1189, %v1413
      %v1446 = vmul.f32 %v1192, %v1414
      %v1447 = vmul.f32 %v1194, %v1415
      %v1448 = vmul.f32 %v1197, %v1416
      %v1449 = vmul.f32 %v1199, %v1417
      %v1450 = vmul.f32 %v1202, %v1418
      %v1451 = vmul.f32 %v1204, %v1419
      %v1452 = vmul.f32 %v1207, %v1420
      %v1453 = vmul.f32 %v1209, %v1421
      %v1454 = vmul.f32 %v1212, %v1422
      %v1455 = vmul.f32 %v1214, %v1423
      %v1456 = vmul.f32 %v1217, %v1424
      %v1457 = vmul.f32 %v1219, %v1425
      %v1458 = vmul.f32 %v1222, %v1426
      %v1459 = vmul.f32 %v1224, %v1427
      %v1460 = vmul.f32 %v1227, %v1428
      %v1461 = vmul.f32 %v1229, %v1429
      %v1462 = vmul.f32 %v1232, %v1430
      %v1463 = vmul.f32 %v1234, %v1431
      %v1464 = vmul.f32 %v1237, %v1432
      %v1465 = vmul.f32 %v1239, %v1433
      %v1466 = vld [vmem:[%s3] sm:$0x1]
      %v1468 = vperm.slane %v1466, 0
      %v1470 = vadd.f32 %v1434, %v1468
      %v1471 = vadd.f32 %v1435, %v1468
      %v1472 = vadd.f32 %v1436, %v1468
      %v1473 = vadd.f32 %v1437, %v1468
      %v1474 = vadd.f32 %v1438, %v1468
      %v1475 = vadd.f32 %v1439, %v1468
      %v1476 = vadd.f32 %v1440, %v1468
      %v1477 = vadd.f32 %v1441, %v1468
      %v1478 = vadd.f32 %v1442, %v1468
      %v1479 = vadd.f32 %v1443, %v1468
      %v1480 = vadd.f32 %v1444, %v1468
      %v1481 = vadd.f32 %v1445, %v1468
      %v1482 = vadd.f32 %v1446, %v1468
      %v1483 = vadd.f32 %v1447, %v1468
      %v1484 = vadd.f32 %v1448, %v1468
      %v1485 = vadd.f32 %v1449, %v1468
      %v1486 = vadd.f32 %v1450, %v1468
      %v1487 = vadd.f32 %v1451, %v1468
      %v1488 = vadd.f32 %v1452, %v1468
      %v1489 = vadd.f32 %v1453, %v1468
      %v1490 = vadd.f32 %v1454, %v1468
      %v1491 = vadd.f32 %v1455, %v1468
      %v1492 = vadd.f32 %v1456, %v1468
      %v1493 = vadd.f32 %v1457, %v1468
      %v1494 = vadd.f32 %v1458, %v1468
      %v1495 = vadd.f32 %v1459, %v1468
      %v1496 = vadd.f32 %v1460, %v1468
      %v1497 = vadd.f32 %v1461, %v1468
      %v1498 = vadd.f32 %v1462, %v1468
      %v1499 = vadd.f32 %v1463, %v1468
      %v1500 = vadd.f32 %v1464, %v1468
      %v1501 = vadd.f32 %v1465, %v1468
      %v1502 = vmax.f32 %v1470, 0.0
      %v1503 = vmax.f32 %v1471, 0.0
      %v1504 = vmax.f32 %v1472, 0.0
      %v1505 = vmax.f32 %v1473, 0.0
      %v1506 = vmax.f32 %v1474, 0.0
      %v1507 = vmax.f32 %v1475, 0.0
      %v1508 = vmax.f32 %v1476, 0.0
      %v1509 = vmax.f32 %v1477, 0.0
      %v1510 = vmax.f32 %v1478, 0.0
      %v1511 = vmax.f32 %v1479, 0.0
      %v1512 = vmax.f32 %v1480, 0.0
      %v1513 = vmax.f32 %v1481, 0.0
      %v1514 = vmax.f32 %v1482, 0.0
      %v1515 = vmax.f32 %v1483, 0.0
      %v1516 = vmax.f32 %v1484, 0.0
      %v1517 = vmax.f32 %v1485, 0.0
      %v1518 = vmax.f32 %v1486, 0.0
      %v1519 = vmax.f32 %v1487, 0.0
      %v1520 = vmax.f32 %v1488, 0.0
      %v1521 = vmax.f32 %v1489, 0.0
      %v1522 = vmax.f32 %v1490, 0.0
      %v1523 = vmax.f32 %v1491, 0.0
      %v1524 = vmax.f32 %v1492, 0.0
      %v1525 = vmax.f32 %v1493, 0.0
      %v1526 = vmax.f32 %v1494, 0.0
      %v1527 = vmax.f32 %v1495, 0.0
      %v1528 = vmax.f32 %v1496, 0.0
      %v1529 = vmax.f32 %v1497, 0.0
      %v1530 = vmax.f32 %v1498, 0.0
      %v1531 = vmax.f32 %v1499, 0.0
      %v1532 = vmax.f32 %v1500, 0.0
      %v1533 = vmax.f32 %v1501, 0.0
      %v1534 = vpack.c.bf16 %v1502, %v1502
      %v1535 = vpack.c.bf16 %v1503, %v1503
      %v1536 = vpack.c.bf16 %v1504, %v1504
      %v1537 = vpack.c.bf16 %v1505, %v1505
      %v1538 = vpack.c.bf16 %v1506, %v1506
      %v1539 = vpack.c.bf16 %v1507, %v1507
      %v1540 = vpack.c.bf16 %v1508, %v1508
      %v1541 = vpack.c.bf16 %v1509, %v1509
      %v1542 = vpack.c.bf16 %v1510, %v1510
      %v1543 = vpack.c.bf16 %v1511, %v1511
      %v1544 = vpack.c.bf16 %v1512, %v1512
      %v1545 = vpack.c.bf16 %v1513, %v1513
      %v1546 = vpack.c.bf16 %v1514, %v1514
      %v1547 = vpack.c.bf16 %v1515, %v1515
      %v1548 = vpack.c.bf16 %v1516, %v1516
      %v1549 = vpack.c.bf16 %v1517, %v1517
      %v1550 = vpack.c.bf16 %v1518, %v1518
      %v1551 = vpack.c.bf16 %v1519, %v1519
      %v1552 = vpack.c.bf16 %v1520, %v1520
      %v1553 = vpack.c.bf16 %v1521, %v1521
      %v1554 = vpack.c.bf16 %v1522, %v1522
      %v1555 = vpack.c.bf16 %v1523, %v1523
      %v1556 = vpack.c.bf16 %v1524, %v1524
      %v1557 = vpack.c.bf16 %v1525, %v1525
      %v1558 = vpack.c.bf16 %v1526, %v1526
      %v1559 = vpack.c.bf16 %v1527, %v1527
      %v1560 = vpack.c.bf16 %v1528, %v1528
      %v1561 = vpack.c.bf16 %v1529, %v1529
      %v1562 = vpack.c.bf16 %v1530, %v1530
      %v1563 = vpack.c.bf16 %v1531, %v1531
      %v1564 = vpack.c.bf16 %v1532, %v1532
      %v1565 = vpack.c.bf16 %v1533, %v1533
      %vm1566 = vcmask 125952
      %1567 = vst.msk [vmem:[%s259] sm:$0xf] %vm1566, %v1534
      %1568 = vst.msk [vmem:[%s259 + $0x4] sm:$0xf] %vm1566, %v1535
      %1569 = vst.msk [vmem:[%s259 + $0x8] sm:$0xf] %vm1566, %v1536
      %1570 = vst.msk [vmem:[%s259 + $0xc] sm:$0xf] %vm1566, %v1537
      %1571 = vst.msk [vmem:[%s259 + $0x10] sm:$0xf] %vm1566, %v1538
      %1572 = vst.msk [vmem:[%s259 + $0x14] sm:$0xf] %vm1566, %v1539
      %1573 = vst.msk [vmem:[%s259 + $0x18] sm:$0xf] %vm1566, %v1540
      %1574 = vst.msk [vmem:[%s259 + $0x1c] sm:$0xf] %vm1566, %v1541
      %1575 = vst.msk [vmem:[%s259 + $0x20] sm:$0xf] %vm1566, %v1542
      %1576 = vst.msk [vmem:[%s259 + $0x24] sm:$0xf] %vm1566, %v1543
      %1577 = vst.msk [vmem:[%s259 + $0x28] sm:$0xf] %vm1566, %v1544
      %1578 = vst.msk [vmem:[%s259 + $0x2c] sm:$0xf] %vm1566, %v1545
      %1579 = vst.msk [vmem:[%s259 + $0x30] sm:$0xf] %vm1566, %v1546
      %1580 = vst.msk [vmem:[%s259 + $0x34] sm:$0xf] %vm1566, %v1547
      %1581 = vst.msk [vmem:[%s259 + $0x38] sm:$0xf] %vm1566, %v1548
      %1582 = vst.msk [vmem:[%s259 + $0x3c] sm:$0xf] %vm1566, %v1549
      %1583 = vst.msk [vmem:[%s259 + $0x40] sm:$0xf] %vm1566, %v1550
      %1584 = vst.msk [vmem:[%s259 + $0x44] sm:$0xf] %vm1566, %v1551
      %1585 = vst.msk [vmem:[%s259 + $0x48] sm:$0xf] %vm1566, %v1552
      %1586 = vst.msk [vmem:[%s259 + $0x4c] sm:$0xf] %vm1566, %v1553
      %1587 = vst.msk [vmem:[%s259 + $0x50] sm:$0xf] %vm1566, %v1554
      %1588 = vst.msk [vmem:[%s259 + $0x54] sm:$0xf] %vm1566, %v1555
      %1589 = vst.msk [vmem:[%s259 + $0x58] sm:$0xf] %vm1566, %v1556
      %1590 = vst.msk [vmem:[%s259 + $0x5c] sm:$0xf] %vm1566, %v1557
      %1591 = vst.msk [vmem:[%s259 + $0x60] sm:$0xf] %vm1566, %v1558
      %1592 = vst.msk [vmem:[%s259 + $0x64] sm:$0xf] %vm1566, %v1559
      %1593 = vst.msk [vmem:[%s259 + $0x68] sm:$0xf] %vm1566, %v1560
      %1594 = vst.msk [vmem:[%s259 + $0x6c] sm:$0xf] %vm1566, %v1561
      %1595 = vst.msk [vmem:[%s259 + $0x70] sm:$0xf] %vm1566, %v1562
      %1596 = vst.msk [vmem:[%s259 + $0x74] sm:$0xf] %vm1566, %v1563
      %1597 = vst.msk [vmem:[%s259 + $0x78] sm:$0xf] %vm1566, %v1564
      %1598 = vst.msk [vmem:[%s259 + $0x7c] sm:$0xf] %vm1566, %v1565
      %v1599 = vsel %vm1273, %v1241, -inf
      %1600 = vmax.xlane.f32.xlu0 %v1599
      %v1601 = vpop.xlane.xlu0 %1600
      %v1602 = vsel %vm1273, %v1242, -inf
      %1603 = vmax.xlane.f32.xlu0 %v1602
      %v1604 = vpop.xlane.xlu0 %1603
      %v1605 = vsel %vm1273, %v1243, -inf
      %1606 = vmax.xlane.f32.xlu0 %v1605
      %v1607 = vpop.xlane.xlu0 %1606
      %v1608 = vsel %vm1273, %v1244, -inf
      %1609 = vmax.xlane.f32.xlu0 %v1608
      %v1610 = vpop.xlane.xlu0 %1609
      %v1611 = vsel %vm1273, %v1245, -inf
      %1612 = vmax.xlane.f32.xlu0 %v1611
      %v1613 = vpop.xlane.xlu0 %1612
      %v1614 = vsel %vm1273, %v1246, -inf
      %1615 = vmax.xlane.f32.xlu0 %v1614
      %v1616 = vpop.xlane.xlu0 %1615
      %v1617 = vsel %vm1273, %v1247, -inf
      %1618 = vmax.xlane.f32.xlu0 %v1617
      %v1619 = vpop.xlane.xlu0 %1618
      %v1620 = vsel %vm1273, %v1248, -inf
      %1621 = vmax.xlane.f32.xlu0 %v1620
      %v1622 = vpop.xlane.xlu0 %1621
      %v1623 = vsel %vm1273, %v1249, -inf
      %1624 = vmax.xlane.f32.xlu0 %v1623
      %v1625 = vpop.xlane.xlu0 %1624
      %v1626 = vsel %vm1273, %v1250, -inf
      %1627 = vmax.xlane.f32.xlu0 %v1626
      %v1628 = vpop.xlane.xlu0 %1627
      %v1629 = vsel %vm1273, %v1251, -inf
      %1630 = vmax.xlane.f32.xlu0 %v1629
      %v1631 = vpop.xlane.xlu0 %1630
      %v1632 = vsel %vm1273, %v1252, -inf
      %1633 = vmax.xlane.f32.xlu0 %v1632
      %v1634 = vpop.xlane.xlu0 %1633
      %v1635 = vsel %vm1273, %v1253, -inf
      %1636 = vmax.xlane.f32.xlu0 %v1635
      %v1637 = vpop.xlane.xlu0 %1636
      %v1638 = vsel %vm1273, %v1254, -inf
      %1639 = vmax.xlane.f32.xlu0 %v1638
      %v1640 = vpop.xlane.xlu0 %1639
      %v1641 = vsel %vm1273, %v1255, -inf
      %1642 = vmax.xlane.f32.xlu0 %v1641
      %v1643 = vpop.xlane.xlu0 %1642
      %v1644 = vsel %vm1273, %v1256, -inf
      %1645 = vmax.xlane.f32.xlu0 %v1644
      %v1646 = vpop.xlane.xlu0 %1645
      %v1647 = vsel %vm1273, %v1257, -inf
      %1648 = vmax.xlane.f32.xlu0 %v1647
      %v1649 = vpop.xlane.xlu0 %1648
      %v1650 = vsel %vm1273, %v1258, -inf
      %1651 = vmax.xlane.f32.xlu0 %v1650
      %v1652 = vpop.xlane.xlu0 %1651
      %v1653 = vsel %vm1273, %v1259, -inf
      %1654 = vmax.xlane.f32.xlu0 %v1653
      %v1655 = vpop.xlane.xlu0 %1654
      %v1656 = vsel %vm1273, %v1260, -inf
      %1657 = vmax.xlane.f32.xlu0 %v1656
      %v1658 = vpop.xlane.xlu0 %1657
      %v1659 = vsel %vm1273, %v1261, -inf
      %1660 = vmax.xlane.f32.xlu0 %v1659
      %v1661 = vpop.xlane.xlu0 %1660
      %v1662 = vsel %vm1273, %v1262, -inf
      %1663 = vmax.xlane.f32.xlu0 %v1662
      %v1664 = vpop.xlane.xlu0 %1663
      %v1665 = vsel %vm1273, %v1263, -inf
      %1666 = vmax.xlane.f32.xlu0 %v1665
      %v1667 = vpop.xlane.xlu0 %1666
      %v1668 = vsel %vm1273, %v1264, -inf
      %1669 = vmax.xlane.f32.xlu0 %v1668
      %v1670 = vpop.xlane.xlu0 %1669
      %v1671 = vsel %vm1273, %v1265, -inf
      %1672 = vmax.xlane.f32.xlu0 %v1671
      %v1673 = vpop.xlane.xlu0 %1672
      %v1674 = vsel %vm1273, %v1266, -inf
      %1675 = vmax.xlane.f32.xlu0 %v1674
      %v1676 = vpop.xlane.xlu0 %1675
      %v1677 = vsel %vm1273, %v1267, -inf
      %1678 = vmax.xlane.f32.xlu0 %v1677
      %v1679 = vpop.xlane.xlu0 %1678
      %v1680 = vsel %vm1273, %v1268, -inf
      %1681 = vmax.xlane.f32.xlu0 %v1680
      %v1682 = vpop.xlane.xlu0 %1681
      %v1683 = vsel %vm1273, %v1269, -inf
      %1684 = vmax.xlane.f32.xlu0 %v1683
      %v1685 = vpop.xlane.xlu0 %1684
      %v1686 = vsel %vm1273, %v1270, -inf
      %1687 = vmax.xlane.f32.xlu0 %v1686
      %v1688 = vpop.xlane.xlu0 %1687
      %v1689 = vsel %vm1273, %v1271, -inf
      %1690 = vmax.xlane.f32.xlu0 %v1689
      %v1691 = vpop.xlane.xlu0 %1690
      %v1692 = vsel %vm1273, %v1272, -inf
      %1693 = vmax.xlane.f32.xlu0 %v1692
      %v1694 = vpop.xlane.xlu0 %1693
      %vm1695 = vcmask 7168
      %1696 = vst.msk [vmem:[%s265] sm:$0xff] %vm1695, %v1601
      %1697 = vst.msk [vmem:[%s265 + $0x8] sm:$0xff] %vm1695, %v1604
      %1698 = vst.msk [vmem:[%s265 + $0x10] sm:$0xff] %vm1695, %v1607
      %1699 = vst.msk [vmem:[%s265 + $0x18] sm:$0xff] %vm1695, %v1610
      %1700 = vst.msk [vmem:[%s265 + $0x20] sm:$0xff] %vm1695, %v1613
      %1701 = vst.msk [vmem:[%s265 + $0x28] sm:$0xff] %vm1695, %v1616
      %1702 = vst.msk [vmem:[%s265 + $0x30] sm:$0xff] %vm1695, %v1619
      %1703 = vst.msk [vmem:[%s265 + $0x38] sm:$0xff] %vm1695, %v1622
      %1704 = vst.msk [vmem:[%s265 + $0x40] sm:$0xff] %vm1695, %v1625
      %1705 = vst.msk [vmem:[%s265 + $0x48] sm:$0xff] %vm1695, %v1628
      %1706 = vst.msk [vmem:[%s265 + $0x50] sm:$0xff] %vm1695, %v1631
      %1707 = vst.msk [vmem:[%s265 + $0x58] sm:$0xff] %vm1695, %v1634
      %1708 = vst.msk [vmem:[%s265 + $0x60] sm:$0xff] %vm1695, %v1637
      %1709 = vst.msk [vmem:[%s265 + $0x68] sm:$0xff] %vm1695, %v1640
      %1710 = vst.msk [vmem:[%s265 + $0x70] sm:$0xff] %vm1695, %v1643
      %1711 = vst.msk [vmem:[%s265 + $0x78] sm:$0xff] %vm1695, %v1646
      %1712 = vst.msk [vmem:[%s265 + $0x80] sm:$0xff] %vm1695, %v1649
      %1713 = vst.msk [vmem:[%s265 + $0x88] sm:$0xff] %vm1695, %v1652
      %1714 = vst.msk [vmem:[%s265 + $0x90] sm:$0xff] %vm1695, %v1655
      %1715 = vst.msk [vmem:[%s265 + $0x98] sm:$0xff] %vm1695, %v1658
      %1716 = vst.msk [vmem:[%s265 + $0xa0] sm:$0xff] %vm1695, %v1661
      %1717 = vst.msk [vmem:[%s265 + $0xa8] sm:$0xff] %vm1695, %v1664
      %1718 = vst.msk [vmem:[%s265 + $0xb0] sm:$0xff] %vm1695, %v1667
      %1719 = vst.msk [vmem:[%s265 + $0xb8] sm:$0xff] %vm1695, %v1670
      %1720 = vst.msk [vmem:[%s265 + $0xc0] sm:$0xff] %vm1695, %v1673
      %1721 = vst.msk [vmem:[%s265 + $0xc8] sm:$0xff] %vm1695, %v1676
      %1722 = vst.msk [vmem:[%s265 + $0xd0] sm:$0xff] %vm1695, %v1679
      %1723 = vst.msk [vmem:[%s265 + $0xd8] sm:$0xff] %vm1695, %v1682
      %1724 = vst.msk [vmem:[%s265 + $0xe0] sm:$0xff] %vm1695, %v1685
      %1725 = vst.msk [vmem:[%s265 + $0xe8] sm:$0xff] %vm1695, %v1688
      %1726 = vst.msk [vmem:[%s265 + $0xf0] sm:$0xff] %vm1695, %v1691
      %1727 = vst.msk [vmem:[%s265 + $0xf8] sm:$0xff] %vm1695, %v1694
      %s1728 = smul.u32 32, %s17
      %p1729 = scmp.lt.s32.totalorder %s1728, 63
      %s1730 = scalar_select %p1729, %s1728, 63
      %s1731 = smul.addr %s1730, 4
      %s1732 = scalar_lea.vmem %s4, %s1731
      %s1733 = smul.u32 32, %s17
      %p1734 = scmp.lt.s32.totalorder %s1733, 63
      %s1735 = scalar_select %p1734, %s1733, 63
      %s1736 = smul.addr %s1735, 8
      %s1737 = scalar_lea.vmem %s5, %s1736
      // Predicated region
      $region37: #{_lambda_.7} parent=35 // pred_check
        %p1738 = pneg %p129
      $region38: #{_lambda_.7} parent=35 // pred_check_branch
        %1740 = sbr.rel (%p1738) target = $region40
      $region39: #{_lambda_.7} parent=35 // pred_region
        %s1741 = smul.u32 32, %s17
      $region40: #{_lambda_.7} parent=35 // pred_fallthru
        _
      // Predicated region
      $region41: #{_lambda_.7} parent=35 // pred_check
        %p1742 = pneg %p155
      $region42: #{_lambda_.7} parent=35 // pred_check_branch
        %1744 = sbr.rel (%p1742) target = $region44
      $region43: #{_lambda_.7} parent=35 // pred_region
        %s1745 = smul.u32 32, %s17
      $region44: #{_lambda_.7} parent=35 // pred_fallthru
        _
    $region36: #{_lambda_.7} parent=5 // pred_fallthru
      _
    %p1746 = scmp.le.s32.totalorder 2, %s12
    // Predicated region
    $region45: #{_lambda_.7} parent=5 // pred_check
      %p1747 = pneg %p1746
    $region46: #{_lambda_.7} parent=5 // pred_check_branch
      %1749 = sbr.rel (%p1747) target = $region48
    $region47: #{_lambda_.7} parent=5 // pred_region
      %s1750 = ssub.s32 %s12, 2
      // Predicated region
      $region49: #{_lambda_.7} parent=47 // pred_check
        %p1751 = pneg %p135
      $region50: #{_lambda_.7} parent=47 // pred_check_branch
        %1753 = sbr.rel (%p1751) target = $region52
      $region51: #{_lambda_.7} parent=47 // pred_region
        %s1754 = smul.u32 32, %s18
        %p1755 = scmp.lt.s32.totalorder %s1754, 63
        %s1756 = scalar_select %p1755, %s1754, 63
        %s1757 = smul.addr %s1756, 4
        %s1758 = scalar_lea.vmem %s4, %s1757
      $region52: #{_lambda_.7} parent=47 // pred_fallthru
        _
      // Predicated region
      $region53: #{_lambda_.7} parent=47 // pred_check
        %p1759 = pneg %p161
      $region54: #{_lambda_.7} parent=47 // pred_check_branch
        %1761 = sbr.rel (%p1759) target = $region56
      $region55: #{_lambda_.7} parent=47 // pred_region
        %s1762 = smul.u32 32, %s18
        %p1763 = scmp.lt.s32.totalorder %s1762, 63
        %s1764 = scalar_select %p1763, %s1762, 63
        %s1765 = smul.addr %s1764, 8
        %s1766 = scalar_lea.vmem %s5, %s1765
      $region56: #{_lambda_.7} parent=47 // pred_fallthru
        _
    $region48: #{_lambda_.7} parent=5 // pred_fallthru
      _
  $region6: #{_lambda_.7} parent=0 // loop_footer
    %s16 = sadd.s32 1, %s12
  $region7: #{_lambda_.7} parent=0 // loop_footer_branch
    %11 = sbr.rel target = $region3
  $region8: #{_lambda_.7} parent=0 // loop_exit
    _

// kernel: _lambda_.8
$region0: #{_lambda_.8}
  #allocation0 [shape = 'u32[]', space=smem, size = 0x4, offset = 0x4, fixed_abs, tag = 'smem constant byte address 0x4 - core index']
  #allocation1 [shape = 'u32[72,128]{1,0:T(1,128)}', space=vmem, size = 0x9000, scoped, tag = 'internal scratch']
  %s0 = inlined_call_operand.vmem [shape: bf16[512,144], index: 0, kind: input, shape index: {}]
  %s1 = inlined_call_operand.vmem [shape: f32[512,9], index: 1, kind: input, shape index: {}]
  %s2 = inlined_call_operand.vmem [shape: bf16[144,16], index: 2, kind: input, shape index: {}]
  %s3 = inlined_call_operand.vmem [shape: f32[1,16], index: 3, kind: input, shape index: {}]
  %s4 = inlined_call_operand.vmem [shape: bf16[512,16], index: 4, kind: output, shape index: {0}]
  %s5 = inlined_call_operand.vmem [shape: f32[512,1], index: 5, kind: output, shape index: {1}]
  %6 = xla_tuple %s4, %s5
  %s7 = sld [smem:[#allocation0]]
  $region57: #{_lambda_.8} parent=0
    _
  %s9 = ssub.s32 1, %s7
  %s10 = scalar_select 0, %s9, %s7
  loop: start=0, step=1, limit=4
  $region2: #{_lambda_.8} parent=0 // loop_pre_header
    _
  $region3: #{_lambda_.8} parent=0 // loop_header
    %s12 = sphi 0, %s16
    %p13 = scmp.ge.s32.totalorder %s12, 4
    %s22 = sphi 0, %s24
    %s25 = sphi 0, %s22
    %s26 = sphi 0, %s25
    %s42 = sphi 0, %s26
    %s48 = sphi 0, %s50
    %s51 = sphi 0, %s48
    %s52 = sphi 0, %s51
    %s68 = sphi 0, %s52
    %s72 = sphi 0, %s72
    %s74 = sphi 0, %s72
    %s75 = sphi 0, %s74
    %s89 = sphi 0, %s75
    %s93 = sphi 0, %s93
    %s95 = sphi 0, %s93
    %s96 = sphi 0, %s95
    %s110 = sphi 0, %s96
    %s116 = sphi 0, %s118
    %s119 = sphi 0, %s116
    %s120 = sphi 0, %s119
    %s136 = sphi 0, %s120
    %s142 = sphi 0, %s144
    %s145 = sphi 0, %s142
    %s146 = sphi 0, %s145
    %s162 = sphi 0, %s146
  $region4: #{_lambda_.8} parent=0 // loop_header_branch
    %15 = sbr.rel (%p13) target = $region8
  $region5: #{_lambda_.8} parent=0 // loop_body
    %s17 = ssub.s32 %s12, 1
    %s18 = ssub.s32 %s12, 2
    %s19 = sadd.s32 %s12, 1
    %s20 = ssub.s32 %s12, %s19
    %p21 = scmp.eq.s32.totalorder %s20, 0
    %s23 = sadd.s32 %s22, 1
    %s24 = scalar_select %p21, %s22, %s23
    %p27 = pneg %p21
    %p28 = scmp.eq.s32.totalorder %s12, 1
    %p29 = por %p27, %p28
    %p30 = scmp.ne.s32.totalorder %s22, %s25
    %p31 = scmp.eq.s32.totalorder %s12, 0
    %p32 = por %p30, %p31
    %p33 = scmp.ne.s32.totalorder %s22, %s25
    %p34 = scmp.eq.s32.totalorder %s17, 1
    %p35 = por %p33, %p34
    %p36 = scmp.ne.s32.totalorder %s25, %s26
    %p37 = scmp.eq.s32.totalorder %s17, 0
    %p38 = por %p36, %p37
    %p39 = scmp.ne.s32.totalorder %s25, %s26
    %p40 = scmp.eq.s32.totalorder %s18, 1
    %p41 = por %p39, %p40
    %p43 = scmp.ne.s32.totalorder %s26, %s42
    %p44 = scmp.eq.s32.totalorder %s18, 0
    %p45 = por %p43, %p44
    %s46 = ssub.s32 %s12, %s19
    %p47 = scmp.eq.s32.totalorder %s46, 0
    %s49 = sadd.s32 %s48, 1
    %s50 = scalar_select %p47, %s48, %s49
    %p53 = pneg %p47
    %p54 = scmp.eq.s32.totalorder %s12, 1
    %p55 = por %p53, %p54
    %p56 = scmp.ne.s32.totalorder %s48, %s51
    %p57 = scmp.eq.s32.totalorder %s12, 0
    %p58 = por %p56, %p57
    %p59 = scmp.ne.s32.totalorder %s48, %s51
    %p60 = scmp.eq.s32.totalorder %s17, 1
    %p61 = por %p59, %p60
    %p62 = scmp.ne.s32.totalorder %s51, %s52
    %p63 = scmp.eq.s32.totalorder %s17, 0
    %p64 = por %p62, %p63
    %p65 = scmp.ne.s32.totalorder %s51, %s52
    %p66 = scmp.eq.s32.totalorder %s18, 1
    %p67 = por %p65, %p66
    %p69 = scmp.ne.s32.totalorder %s52, %s68
    %p70 = scmp.eq.s32.totalorder %s18, 0
    %p71 = por %p69, %p70
    %s73 = sadd.s32 %s72, 1
    %p76 = scmp.eq.s32.totalorder %s12, 1
    %p77 = scmp.ne.s32.totalorder %s72, %s74
    %p78 = scmp.eq.s32.totalorder %s12, 0
    %p79 = por %p77, %p78
    %p80 = scmp.ne.s32.totalorder %s72, %s74
    %p81 = scmp.eq.s32.totalorder %s17, 1
    %p82 = por %p80, %p81
    %p83 = scmp.ne.s32.totalorder %s74, %s75
    %p84 = scmp.eq.s32.totalorder %s17, 0
    %p85 = por %p83, %p84
    %p86 = scmp.ne.s32.totalorder %s74, %s75
    %p87 = scmp.eq.s32.totalorder %s18, 1
    %p88 = por %p86, %p87
    %p90 = scmp.ne.s32.totalorder %s75, %s89
    %p91 = scmp.eq.s32.totalorder %s18, 0
    %p92 = por %p90, %p91
    %s94 = sadd.s32 %s93, 1
    %p97 = scmp.eq.s32.totalorder %s12, 1
    %p98 = scmp.ne.s32.totalorder %s93, %s95
    %p99 = scmp.eq.s32.totalorder %s12, 0
    %p100 = por %p98, %p99
    %p101 = scmp.ne.s32.totalorder %s93, %s95
    %p102 = scmp.eq.s32.totalorder %s17, 1
    %p103 = por %p101, %p102
    %p104 = scmp.ne.s32.totalorder %s95, %s96
    %p105 = scmp.eq.s32.totalorder %s17, 0
    %p106 = por %p104, %p105
    %p107 = scmp.ne.s32.totalorder %s95, %s96
    %p108 = scmp.eq.s32.totalorder %s18, 1
    %p109 = por %p107, %p108
    %p111 = scmp.ne.s32.totalorder %s96, %s110
    %p112 = scmp.eq.s32.totalorder %s18, 0
    %p113 = por %p111, %p112
    %s114 = ssub.s32 %s12, %s19
    %p115 = scmp.eq.s32.totalorder %s114, 0
    %s117 = sadd.s32 %s116, 1
    %s118 = scalar_select %p115, %s116, %s117
    %p121 = pneg %p115
    %p122 = scmp.eq.s32.totalorder %s12, 1
    %p123 = por %p121, %p122
    %p124 = scmp.ne.s32.totalorder %s116, %s119
    %p125 = scmp.eq.s32.totalorder %s12, 0
    %p126 = por %p124, %p125
    %p127 = scmp.ne.s32.totalorder %s116, %s119
    %p128 = scmp.eq.s32.totalorder %s17, 1
    %p129 = por %p127, %p128
    %p130 = scmp.ne.s32.totalorder %s119, %s120
    %p131 = scmp.eq.s32.totalorder %s17, 0
    %p132 = por %p130, %p131
    %p133 = scmp.ne.s32.totalorder %s119, %s120
    %p134 = scmp.eq.s32.totalorder %s18, 1
    %p135 = por %p133, %p134
    %p137 = scmp.ne.s32.totalorder %s120, %s136
    %p138 = scmp.eq.s32.totalorder %s18, 0
    %p139 = por %p137, %p138
    %s140 = ssub.s32 %s12, %s19
    %p141 = scmp.eq.s32.totalorder %s140, 0
    %s143 = sadd.s32 %s142, 1
    %s144 = scalar_select %p141, %s142, %s143
    %p147 = pneg %p141
    %p148 = scmp.eq.s32.totalorder %s12, 1
    %p149 = por %p147, %p148
    %p150 = scmp.ne.s32.totalorder %s142, %s145
    %p151 = scmp.eq.s32.totalorder %s12, 0
    %p152 = por %p150, %p151
    %p153 = scmp.ne.s32.totalorder %s142, %s145
    %p154 = scmp.eq.s32.totalorder %s17, 1
    %p155 = por %p153, %p154
    %p156 = scmp.ne.s32.totalorder %s145, %s146
    %p157 = scmp.eq.s32.totalorder %s17, 0
    %p158 = por %p156, %p157
    %p159 = scmp.ne.s32.totalorder %s145, %s146
    %p160 = scmp.eq.s32.totalorder %s18, 1
    %p161 = por %p159, %p160
    %p163 = scmp.ne.s32.totalorder %s146, %s162
    %p164 = scmp.eq.s32.totalorder %s18, 0
    %p165 = por %p163, %p164
    %p166 = scmp.le.s32.totalorder 1, %s12
    %p167 = scmp.lt.s32.totalorder %s12, 3
    %p168 = pnand %p166, %p167
    %p169 = pneg %p168
    // Predicated region
    $region9: #{_lambda_.8} parent=5 // pred_check
      _
    $region10: #{_lambda_.8} parent=5 // pred_check_branch
      %171 = sbr.rel (%p168) target = $region12
    $region11: #{_lambda_.8} parent=5 // pred_region
      %s172 = ssub.s32 %s12, 1
      // Predicated region
      $region13: #{_lambda_.8} parent=11 // pred_check
        %p173 = pneg %p85
      $region14: #{_lambda_.8} parent=11 // pred_check_branch
        %175 = sbr.rel (%p173) target = $region16
      $region15: #{_lambda_.8} parent=11 // pred_region
        _
      $region16: #{_lambda_.8} parent=11 // pred_fallthru
        _
      // Predicated region
      $region17: #{_lambda_.8} parent=11 // pred_check
        %p176 = pneg %p106
      $region18: #{_lambda_.8} parent=11 // pred_check_branch
        %178 = sbr.rel (%p176) target = $region20
      $region19: #{_lambda_.8} parent=11 // pred_region
        _
      $region20: #{_lambda_.8} parent=11 // pred_fallthru
        _
    $region12: #{_lambda_.8} parent=5 // pred_fallthru
      _
    %p179 = scmp.lt.s32.totalorder %s12, 2
    // Predicated region
    $region21: #{_lambda_.8} parent=5 // pred_check
      %p180 = pneg %p179
    $region22: #{_lambda_.8} parent=5 // pred_check_branch
      %182 = sbr.rel (%p180) target = $region24
    $region23: #{_lambda_.8} parent=5 // pred_region
      // Predicated region
      $region25: #{_lambda_.8} parent=23 // pred_check
        %p183 = pneg %p32
      $region26: #{_lambda_.8} parent=23 // pred_check_branch
        %185 = sbr.rel (%p183) target = $region28
      $region27: #{_lambda_.8} parent=23 // pred_region
        %s186 = smul.u32 32, %s12
        %p187 = scmp.lt.s32.totalorder %s186, 63
        %s188 = scalar_select %p187, %s186, 63
        %s189 = smul.addr %s188, 2
        %s190 = smul.addr %s189, 4
        %s191 = scalar_lea.vmem %s0, %s190
        %s192 = smul.u32 32, %s12
      $region28: #{_lambda_.8} parent=23 // pred_fallthru
        _
      // Predicated region
      $region29: #{_lambda_.8} parent=23 // pred_check
        %p193 = pneg %p58
      $region30: #{_lambda_.8} parent=23 // pred_check_branch
        %195 = sbr.rel (%p193) target = $region32
      $region31: #{_lambda_.8} parent=23 // pred_region
        %s196 = smul.u32 32, %s12
        %p197 = scmp.lt.s32.totalorder %s196, 63
        %s198 = scalar_select %p197, %s196, 63
        %s199 = smul.addr %s198, 8
        %s200 = scalar_lea.vmem %s1, %s199
        %s201 = smul.u32 32, %s12
      $region32: #{_lambda_.8} parent=23 // pred_fallthru
        _
    $region24: #{_lambda_.8} parent=5 // pred_fallthru
      _
    %p202 = scmp.le.s32.totalorder 1, %s12
    %p203 = scmp.lt.s32.totalorder %s12, 3
    %p204 = pnand %p202, %p203
    %p205 = pneg %p204
    // Predicated region
    $region33: #{_lambda_.8} parent=5 // pred_check
      _
    $region34: #{_lambda_.8} parent=5 // pred_check_branch
      %207 = sbr.rel (%p204) target = $region36
    $region35: #{_lambda_.8} parent=5 // pred_region
      %s208 = ssub.s32 %s12, 1
      %s209 = smul.u32 32, %s17
      %p210 = scmp.lt.s32.totalorder %s209, 63
      %s211 = scalar_select %p210, %s209, 63
      %s212 = smul.addr %s211, 2
      %s213 = smul.addr %s212, 4
      %s214 = scalar_lea.vmem %s0, %s213
      %p215 = pneg %p38
      %p216 = pneg %p35
      %s217 = smul.u32 32, %s17
      %p218 = scmp.lt.s32.totalorder %s217, 63
      %s219 = scalar_select %p218, %s217, 63
      %s220 = smul.addr %s219, 8
      %s221 = scalar_lea.vmem %s1, %s220
      %p222 = pneg %p64
      %p223 = pneg %p61
      %p224 = pneg %p85
      %p225 = pneg %p82
      %p226 = pneg %p106
      %p227 = pneg %p103
      %p228 = pneg %p132
      %p229 = pneg %p129
      %s230 = smul.u32 32, %s17
      %p231 = scmp.lt.s32.totalorder %s230, 63
      %s232 = scalar_select %p231, %s230, 63
      %s233 = smul.addr %s232, 4
      %s234 = scalar_lea.vmem %s4, %s233
      %p235 = pneg %p158
      %p236 = pneg %p155
      %s237 = smul.u32 32, %s17
      %p238 = scmp.lt.s32.totalorder %s237, 63
      %s239 = scalar_select %p238, %s237, 63
      %s240 = smul.addr %s239, 8
      %s241 = scalar_lea.vmem %s5, %s240
      %s242 = smul.u32 32, %s17
      %p243 = scmp.lt.s32.totalorder %s242, 63
      %s244 = scalar_select %p243, %s242, 63
      %s245 = smul.addr %s244, 2
      %s246 = smul.addr %s245, 4
      %s247 = scalar_lea.vmem %s0, %s246
      %s248 = smul.u32 32, %s17
      %s249 = smul.u32 32, %s17
      %p250 = scmp.lt.s32.totalorder %s249, 63
      %s251 = scalar_select %p250, %s249, 63
      %s252 = smul.addr %s251, 8
      %s253 = scalar_lea.vmem %s1, %s252
      %s254 = smul.u32 32, %s17
      %s255 = smul.u32 32, %s17
      %p256 = scmp.lt.s32.totalorder %s255, 63
      %s257 = scalar_select %p256, %s255, 63
      %s258 = smul.addr %s257, 4
      %s259 = scalar_lea.vmem %s4, %s258
      %s260 = smul.u32 32, %s17
      %s261 = smul.u32 32, %s17
      %p262 = scmp.lt.s32.totalorder %s261, 63
      %s263 = scalar_select %p262, %s261, 63
      %s264 = smul.addr %s263, 8
      %s265 = scalar_lea.vmem %s5, %s264
      %s266 = smul.u32 32, %s17
      %v268 = vld [vmem:[%s247] sm:$0xff]
      %v269 = vld [vmem:[%s247 + $0x8] sm:$0xff]
      %v270 = vld [vmem:[%s247 + $0x10] sm:$0xff]
      %v271 = vld [vmem:[%s247 + $0x18] sm:$0xff]
      %v272 = vld [vmem:[%s247 + $0x20] sm:$0xff]
      %v273 = vld [vmem:[%s247 + $0x28] sm:$0xff]
      %v274 = vld [vmem:[%s247 + $0x30] sm:$0xff]
      %v275 = vld [vmem:[%s247 + $0x38] sm:$0xff]
      %v276 = vld [vmem:[%s247 + $0x40] sm:$0xff]
      %v277 = vld [vmem:[%s247 + $0x48] sm:$0xff]
      %v278 = vld [vmem:[%s247 + $0x50] sm:$0xff]
      %v279 = vld [vmem:[%s247 + $0x58] sm:$0xff]
      %v280 = vld [vmem:[%s247 + $0x60] sm:$0xff]
      %v281 = vld [vmem:[%s247 + $0x68] sm:$0xff]
      %v282 = vld [vmem:[%s247 + $0x70] sm:$0xff]
      %v283 = vld [vmem:[%s247 + $0x78] sm:$0xff]
      %v284 = vld [vmem:[%s247 + $0x80] sm:$0xff]
      %v285 = vld [vmem:[%s247 + $0x88] sm:$0xff]
      %v286 = vld [vmem:[%s247 + $0x90] sm:$0xff]
      %v287 = vld [vmem:[%s247 + $0x98] sm:$0xff]
      %v288 = vld [vmem:[%s247 + $0xa0] sm:$0xff]
      %v289 = vld [vmem:[%s247 + $0xa8] sm:$0xff]
      %v290 = vld [vmem:[%s247 + $0xb0] sm:$0xff]
      %v291 = vld [vmem:[%s247 + $0xb8] sm:$0xff]
      %v292 = vld [vmem:[%s247 + $0xc0] sm:$0xff]
      %v293 = vld [vmem:[%s247 + $0xc8] sm:$0xff]
      %v294 = vld [vmem:[%s247 + $0xd0] sm:$0xff]
      %v295 = vld [vmem:[%s247 + $0xd8] sm:$0xff]
      %v296 = vld [vmem:[%s247 + $0xe0] sm:$0xff]
      %v297 = vld [vmem:[%s247 + $0xe8] sm:$0xff]
      %v298 = vld [vmem:[%s247 + $0xf0] sm:$0xff]
      %v299 = vld [vmem:[%s247 + $0xf8] sm:$0xff]
      %v300 = vld [vmem:[%s2] sm:$0xf]
      %v301 = vld [vmem:[%s2 + $0x4] sm:$0xf]
      %v302 = vld [vmem:[%s2 + $0x8] sm:$0xf]
      %v303 = vld [vmem:[%s2 + $0xc] sm:$0xf]
      %v304 = vld [vmem:[%s2 + $0x10] sm:$0xf]
      %v305 = vld [vmem:[%s2 + $0x14] sm:$0xf]
      %v306 = vld [vmem:[%s2 + $0x18] sm:$0xf]
      %v307 = vld [vmem:[%s2 + $0x1c] sm:$0xf]
      %v308 = vld [vmem:[%s2 + $0x20] sm:$0xf]
      %v309 = vld [vmem:[%s2 + $0x24] sm:$0xf]
      %v310 = vld [vmem:[%s2 + $0x28] sm:$0xf]
      %v311 = vld [vmem:[%s2 + $0x2c] sm:$0xf]
      %v312 = vld [vmem:[%s2 + $0x30] sm:$0xf]
      %v313 = vld [vmem:[%s2 + $0x34] sm:$0xf]
      %v314 = vld [vmem:[%s2 + $0x38] sm:$0xf]
      %v315 = vld [vmem:[%s2 + $0x3c] sm:$0xf]
      %v316 = vld [vmem:[%s2 + $0x40] sm:$0xf]
      %v317 = vld [vmem:[%s2 + $0x44] sm:$0xf]
      %v350 = vunpack.c.l.b16 %v268
      %v351 = vunpack.c.h.b16 %v268
      %v352 = vunpack.c.l.b16 %v269
      %v353 = vunpack.c.h.b16 %v269
      %v354 = vunpack.c.l.b16 %v270
      %v355 = vunpack.c.h.b16 %v270
      %v356 = vunpack.c.l.b16 %v271
      %v357 = vunpack.c.h.b16 %v271
      %v358 = vunpack.c.l.b16 %v272
      %v359 = vunpack.c.h.b16 %v272
      %v360 = vunpack.c.l.b16 %v273
      %v361 = vunpack.c.h.b16 %v273
      %v362 = vunpack.c.l.b16 %v274
      %v363 = vunpack.c.h.b16 %v274
      %v364 = vunpack.c.l.b16 %v275
      %v365 = vunpack.c.h.b16 %v275
      %v366 = vunpack.c.l.b16 %v276
      %v367 = vunpack.c.h.b16 %v276
      %v368 = vunpack.c.l.b16 %v277
      %v369 = vunpack.c.h.b16 %v277
      %v370 = vunpack.c.l.b16 %v278
      %v371 = vunpack.c.h.b16 %v278
      %v372 = vunpack.c.l.b16 %v279
      %v373 = vunpack.c.h.b16 %v279
      %v374 = vunpack.c.l.b16 %v280
      %v375 = vunpack.c.h.b16 %v280
      %v376 = vunpack.c.l.b16 %v281
      %v377 = vunpack.c.h.b16 %v281
      %v378 = vunpack.c.l.b16 %v282
      %v379 = vunpack.c.h.b16 %v282
      %v380 = vunpack.c.l.b16 %v283
      %v381 = vunpack.c.h.b16 %v283
      %v382 = vunpack.c.l.b16 %v284
      %v383 = vunpack.c.h.b16 %v284
      %v384 = vunpack.c.l.b16 %v285
      %v385 = vunpack.c.h.b16 %v285
      %v386 = vunpack.c.l.b16 %v286
      %v387 = vunpack.c.h.b16 %v286
      %v388 = vunpack.c.l.b16 %v287
      %v389 = vunpack.c.h.b16 %v287
      %v390 = vunpack.c.l.b16 %v288
      %v391 = vunpack.c.h.b16 %v288
      %v392 = vunpack.c.l.b16 %v289
      %v393 = vunpack.c.h.b16 %v289
      %v394 = vunpack.c.l.b16 %v290
      %v395 = vunpack.c.h.b16 %v290
      %v396 = vunpack.c.l.b16 %v291
      %v397 = vunpack.c.h.b16 %v291
      %v398 = vunpack.c.l.b16 %v292
      %v399 = vunpack.c.h.b16 %v292
      %v400 = vunpack.c.l.b16 %v293
      %v401 = vunpack.c.h.b16 %v293
      %v402 = vunpack.c.l.b16 %v294
      %v403 = vunpack.c.h.b16 %v294
      %v404 = vunpack.c.l.b16 %v295
      %v405 = vunpack.c.h.b16 %v295
      %v406 = vunpack.c.l.b16 %v296
      %v407 = vunpack.c.h.b16 %v296
      %v408 = vunpack.c.l.b16 %v297
      %v409 = vunpack.c.h.b16 %v297
      %v410 = vunpack.c.l.b16 %v298
      %v411 = vunpack.c.h.b16 %v298
      %v412 = vunpack.c.l.b16 %v299
      %v413 = vunpack.c.h.b16 %v299
      %v414 = vpack.c.b16 %v352, %v350
      %v415 = vpack.c.b16 %v353, %v351
      %v416 = vpack.c.b16 %v356, %v354
      %v417 = vpack.c.b16 %v357, %v355
      %v418 = vpack.c.b16 %v360, %v358
      %v419 = vpack.c.b16 %v361, %v359
      %v420 = vpack.c.b16 %v364, %v362
      %v421 = vpack.c.b16 %v365, %v363
      %v422 = vpack.c.b16 %v368, %v366
      %v423 = vpack.c.b16 %v369, %v367
      %v424 = vpack.c.b16 %v372, %v370
      %v425 = vpack.c.b16 %v373, %v371
      %v426 = vpack.c.b16 %v376, %v374
      %v427 = vpack.c.b16 %v377, %v375
      %v428 = vpack.c.b16 %v380, %v378
      %v429 = vpack.c.b16 %v381, %v379
      %v430 = vpack.c.b16 %v384, %v382
      %v431 = vpack.c.b16 %v385, %v383
      %v432 = vpack.c.b16 %v388, %v386
      %v433 = vpack.c.b16 %v389, %v387
      %v434 = vpack.c.b16 %v392, %v390
      %v435 = vpack.c.b16 %v393, %v391
      %v436 = vpack.c.b16 %v396, %v394
      %v437 = vpack.c.b16 %v397, %v395
      %v438 = vpack.c.b16 %v400, %v398
      %v439 = vpack.c.b16 %v401, %v399
      %v440 = vpack.c.b16 %v404, %v402
      %v441 = vpack.c.b16 %v405, %v403
      %v442 = vpack.c.b16 %v408, %v406
      %v443 = vpack.c.b16 %v409, %v407
      %v444 = vpack.c.b16 %v412, %v410
      %v445 = vpack.c.b16 %v413, %v411
      %v480 = vunpack.c.l.b16 %v300
      %v481 = vunpack.c.l.b16 %v301
      %v482 = vunpack.c.l.b16 %v302
      %v483 = vunpack.c.l.b16 %v303
      %v484 = vunpack.c.l.b16 %v304
      %v485 = vunpack.c.l.b16 %v305
      %v486 = vunpack.c.l.b16 %v306
      %v487 = vunpack.c.l.b16 %v307
      %v488 = vunpack.c.l.b16 %v308
      %v489 = vunpack.c.l.b16 %v309
      %v490 = vunpack.c.l.b16 %v310
      %v491 = vunpack.c.l.b16 %v311
      %v492 = vunpack.c.l.b16 %v312
      %v493 = vunpack.c.l.b16 %v313
      %v494 = vunpack.c.l.b16 %v314
      %v495 = vunpack.c.l.b16 %v315
      %v496 = vunpack.c.l.b16 %v316
      %v497 = vunpack.c.l.b16 %v317
      %v498 = vpack.c.b16 %v481, %v480
      %v499 = vpack.c.b16 %v483, %v482
      %v500 = vpack.c.b16 %v485, %v484
      %v501 = vpack.c.b16 %v487, %v486
      %v502 = vpack.c.b16 %v489, %v488
      %v503 = vpack.c.b16 %v491, %v490
      %v504 = vpack.c.b16 %v493, %v492
      %v505 = vpack.c.b16 %v495, %v494
      %v506 = vpack.c.b16 %v497, %v496
      %vm516 = vcmask 130048
      %v518 = vsel %vm516, %v415, 0
      %v521 = vsel %vm516, %v417, 0
      %v524 = vsel %vm516, %v419, 0
      %v527 = vsel %vm516, %v421, 0
      %v530 = vsel %vm516, %v423, 0
      %v533 = vsel %vm516, %v425, 0
      %v536 = vsel %vm516, %v427, 0
      %v539 = vsel %vm516, %v429, 0
      %v542 = vsel %vm516, %v431, 0
      %v545 = vsel %vm516, %v433, 0
      %v548 = vsel %vm516, %v435, 0
      %v551 = vsel %vm516, %v437, 0
      %v554 = vsel %vm516, %v439, 0
      %v557 = vsel %vm516, %v441, 0
      %v560 = vsel %vm516, %v443, 0
      %v563 = vsel %vm516, %v445, 0
      %565 = vmatpush.bf16.msra.mxu0 %v505
      %566 = vmatpush.bf16.msra.mxu0 %v504
      %567 = vmatpush.bf16.msra.mxu0 %v503
      %568 = vmatpush.bf16.msra.mxu0 %v502
      %569 = vmatpush.bf16.msra.mxu0 %v501
      %570 = vmatpush.bf16.msra.mxu0 %v500
      %571 = vmatpush.bf16.msra.mxu0 %v499
      %572 = vmatpush.bf16.msra.mxu0 %v498
      %573 = vmatmul.bf16.gmra.mxu0 %v414
      %v574 = vpop.f32.mrf.mxu0
      %v575 = vadd.f32 0.0, %v574
      %v576 = vpop.f32.mrf.mxu0
      %v577 = vadd.f32 0.0, %v576
      %578 = vmatmul.bf16.gmra.mxu0 %v416
      %v579 = vpop.f32.mrf.mxu0
      %v580 = vadd.f32 0.0, %v579
      %v581 = vpop.f32.mrf.mxu0
      %v582 = vadd.f32 0.0, %v581
      %583 = vmatmul.bf16.gmra.mxu0 %v418
      %v584 = vpop.f32.mrf.mxu0
      %v585 = vadd.f32 0.0, %v584
      %v586 = vpop.f32.mrf.mxu0
      %v587 = vadd.f32 0.0, %v586
      %588 = vmatmul.bf16.gmra.mxu0 %v420
      %v589 = vpop.f32.mrf.mxu0
      %v590 = vadd.f32 0.0, %v589
      %v591 = vpop.f32.mrf.mxu0
      %v592 = vadd.f32 0.0, %v591
      %593 = vmatmul.bf16.gmra.mxu0 %v422
      %v594 = vpop.f32.mrf.mxu0
      %v595 = vadd.f32 0.0, %v594
      %v596 = vpop.f32.mrf.mxu0
      %v597 = vadd.f32 0.0, %v596
      %598 = vmatmul.bf16.gmra.mxu0 %v424
      %v599 = vpop.f32.mrf.mxu0
      %v600 = vadd.f32 0.0, %v599
      %v601 = vpop.f32.mrf.mxu0
      %v602 = vadd.f32 0.0, %v601
      %603 = vmatmul.bf16.gmra.mxu0 %v426
      %v604 = vpop.f32.mrf.mxu0
      %v605 = vadd.f32 0.0, %v604
      %v606 = vpop.f32.mrf.mxu0
      %v607 = vadd.f32 0.0, %v606
      %608 = vmatmul.bf16.gmra.mxu0 %v428
      %v609 = vpop.f32.mrf.mxu0
      %v610 = vadd.f32 0.0, %v609
      %v611 = vpop.f32.mrf.mxu0
      %v612 = vadd.f32 0.0, %v611
      %613 = vmatmul.bf16.gmra.mxu0 %v430
      %v614 = vpop.f32.mrf.mxu0
      %v615 = vadd.f32 0.0, %v614
      %v616 = vpop.f32.mrf.mxu0
      %v617 = vadd.f32 0.0, %v616
      %618 = vmatmul.bf16.gmra.mxu0 %v432
      %v619 = vpop.f32.mrf.mxu0
      %v620 = vadd.f32 0.0, %v619
      %v621 = vpop.f32.mrf.mxu0
      %v622 = vadd.f32 0.0, %v621
      %623 = vmatmul.bf16.gmra.mxu0 %v434
      %v624 = vpop.f32.mrf.mxu0
      %v625 = vadd.f32 0.0, %v624
      %v626 = vpop.f32.mrf.mxu0
      %v627 = vadd.f32 0.0, %v626
      %628 = vmatmul.bf16.gmra.mxu0 %v436
      %v629 = vpop.f32.mrf.mxu0
      %v630 = vadd.f32 0.0, %v629
      %v631 = vpop.f32.mrf.mxu0
      %v632 = vadd.f32 0.0, %v631
      %633 = vmatmul.bf16.gmra.mxu0 %v438
      %v634 = vpop.f32.mrf.mxu0
      %v635 = vadd.f32 0.0, %v634
      %v636 = vpop.f32.mrf.mxu0
      %v637 = vadd.f32 0.0, %v636
      %638 = vmatmul.bf16.gmra.mxu0 %v440
      %v639 = vpop.f32.mrf.mxu0
      %v640 = vadd.f32 0.0, %v639
      %v641 = vpop.f32.mrf.mxu0
      %v642 = vadd.f32 0.0, %v641
      %643 = vmatmul.bf16.gmra.mxu0 %v442
      %v644 = vpop.f32.mrf.mxu0
      %v645 = vadd.f32 0.0, %v644
      %v646 = vpop.f32.mrf.mxu0
      %v647 = vadd.f32 0.0, %v646
      %648 = vmatmul.bf16.gmra.mxu0 %v444
      %v649 = vpop.f32.mrf.mxu0
      %v650 = vadd.f32 0.0, %v649
      %v651 = vpop.f32.mrf.mxu0
      %v652 = vadd.f32 0.0, %v651
      %653 = vdwg.mxu0
      %654 = vmatpush.bf16.msra.mxu0 0
      %655 = vmatpush.bf16.msra.mxu0 0
      %656 = vmatpush.bf16.msra.mxu0 0
      %657 = vmatpush.bf16.msra.mxu0 0
      %658 = vmatpush.bf16.msra.mxu0 0
      %659 = vmatpush.bf16.msra.mxu0 0
      %660 = vmatpush.bf16.msra.mxu0 0
      %661 = vmatpush.bf16.msra.mxu0 %v506
      %662 = vmatmul.bf16.gmra.mxu0 %v518
      %v663 = vpop.f32.mrf.mxu0
      %v664 = vadd.f32 %v575, %v663
      %v665 = vpop.f32.mrf.mxu0
      %v666 = vadd.f32 %v577, %v665
      %667 = vmatmul.bf16.gmra.mxu0 %v521
      %v668 = vpop.f32.mrf.mxu0
      %v669 = vadd.f32 %v580, %v668
      %v670 = vpop.f32.mrf.mxu0
      %v671 = vadd.f32 %v582, %v670
      %672 = vmatmul.bf16.gmra.mxu0 %v524
      %v673 = vpop.f32.mrf.mxu0
      %v674 = vadd.f32 %v585, %v673
      %v675 = vpop.f32.mrf.mxu0
      %v676 = vadd.f32 %v587, %v675
      %677 = vmatmul.bf16.gmra.mxu0 %v527
      %v678 = vpop.f32.mrf.mxu0
      %v679 = vadd.f32 %v590, %v678
      %v680 = vpop.f32.mrf.mxu0
      %v681 = vadd.f32 %v592, %v680
      %682 = vmatmul.bf16.gmra.mxu0 %v530
      %v683 = vpop.f32.mrf.mxu0
      %v684 = vadd.f32 %v595, %v683
      %v685 = vpop.f32.mrf.mxu0
      %v686 = vadd.f32 %v597, %v685
      %687 = vmatmul.bf16.gmra.mxu0 %v533
      %v688 = vpop.f32.mrf.mxu0
      %v689 = vadd.f32 %v600, %v688
      %v690 = vpop.f32.mrf.mxu0
      %v691 = vadd.f32 %v602, %v690
      %692 = vmatmul.bf16.gmra.mxu0 %v536
      %v693 = vpop.f32.mrf.mxu0
      %v694 = vadd.f32 %v605, %v693
      %v695 = vpop.f32.mrf.mxu0
      %v696 = vadd.f32 %v607, %v695
      %697 = vmatmul.bf16.gmra.mxu0 %v539
      %v698 = vpop.f32.mrf.mxu0
      %v699 = vadd.f32 %v610, %v698
      %v700 = vpop.f32.mrf.mxu0
      %v701 = vadd.f32 %v612, %v700
      %702 = vmatmul.bf16.gmra.mxu0 %v542
      %v703 = vpop.f32.mrf.mxu0
      %v704 = vadd.f32 %v615, %v703
      %v705 = vpop.f32.mrf.mxu0
      %v706 = vadd.f32 %v617, %v705
      %707 = vmatmul.bf16.gmra.mxu0 %v545
      %v708 = vpop.f32.mrf.mxu0
      %v709 = vadd.f32 %v620, %v708
      %v710 = vpop.f32.mrf.mxu0
      %v711 = vadd.f32 %v622, %v710
      %712 = vmatmul.bf16.gmra.mxu0 %v548
      %v713 = vpop.f32.mrf.mxu0
      %v714 = vadd.f32 %v625, %v713
      %v715 = vpop.f32.mrf.mxu0
      %v716 = vadd.f32 %v627, %v715
      %717 = vmatmul.bf16.gmra.mxu0 %v551
      %v718 = vpop.f32.mrf.mxu0
      %v719 = vadd.f32 %v630, %v718
      %v720 = vpop.f32.mrf.mxu0
      %v721 = vadd.f32 %v632, %v720
      %722 = vmatmul.bf16.gmra.mxu0 %v554
      %v723 = vpop.f32.mrf.mxu0
      %v724 = vadd.f32 %v635, %v723
      %v725 = vpop.f32.mrf.mxu0
      %v726 = vadd.f32 %v637, %v725
      %727 = vmatmul.bf16.gmra.mxu0 %v557
      %v728 = vpop.f32.mrf.mxu0
      %v729 = vadd.f32 %v640, %v728
      %v730 = vpop.f32.mrf.mxu0
      %v731 = vadd.f32 %v642, %v730
      %732 = vmatmul.bf16.gmra.mxu0 %v560
      %v733 = vpop.f32.mrf.mxu0
      %v734 = vadd.f32 %v645, %v733
      %v735 = vpop.f32.mrf.mxu0
      %v736 = vadd.f32 %v647, %v735
      %737 = vmatmul.bf16.gmra.mxu0 %v563
      %v738 = vpop.f32.mrf.mxu0
      %v739 = vadd.f32 %v650, %v738
      %v740 = vpop.f32.mrf.mxu0
      %v741 = vadd.f32 %v652, %v740
      %742 = vdwg.mxu0
      %v743 = vld [vmem:[%s253] sm:$0xff]
      %v744 = vld [vmem:[%s253 + $0x8] sm:$0xff]
      %v745 = vld [vmem:[%s253 + $0x10] sm:$0xff]
      %v746 = vld [vmem:[%s253 + $0x18] sm:$0xff]
      %v747 = vld [vmem:[%s253 + $0x20] sm:$0xff]
      %v748 = vld [vmem:[%s253 + $0x28] sm:$0xff]
      %v749 = vld [vmem:[%s253 + $0x30] sm:$0xff]
      %v750 = vld [vmem:[%s253 + $0x38] sm:$0xff]
      %v751 = vld [vmem:[%s253 + $0x40] sm:$0xff]
      %v752 = vld [vmem:[%s253 + $0x48] sm:$0xff]
      %v753 = vld [vmem:[%s253 + $0x50] sm:$0xff]
      %v754 = vld [vmem:[%s253 + $0x58] sm:$0xff]
      %v755 = vld [vmem:[%s253 + $0x60] sm:$0xff]
      %v756 = vld [vmem:[%s253 + $0x68] sm:$0xff]
      %v757 = vld [vmem:[%s253 + $0x70] sm:$0xff]
      %v758 = vld [vmem:[%s253 + $0x78] sm:$0xff]
      %v759 = vld [vmem:[%s253 + $0x80] sm:$0xff]
      %v760 = vld [vmem:[%s253 + $0x88] sm:$0xff]
      %v761 = vld [vmem:[%s253 + $0x90] sm:$0xff]
      %v762 = vld [vmem:[%s253 + $0x98] sm:$0xff]
      %v763 = vld [vmem:[%s253 + $0xa0] sm:$0xff]
      %v764 = vld [vmem:[%s253 + $0xa8] sm:$0xff]
      %v765 = vld [vmem:[%s253 + $0xb0] sm:$0xff]
      %v766 = vld [vmem:[%s253 + $0xb8] sm:$0xff]
      %v767 = vld [vmem:[%s253 + $0xc0] sm:$0xff]
      %v768 = vld [vmem:[%s253 + $0xc8] sm:$0xff]
      %v769 = vld [vmem:[%s253 + $0xd0] sm:$0xff]
      %v770 = vld [vmem:[%s253 + $0xd8] sm:$0xff]
      %v771 = vld [vmem:[%s253 + $0xe0] sm:$0xff]
      %v772 = vld [vmem:[%s253 + $0xe8] sm:$0xff]
      %v773 = vld [vmem:[%s253 + $0xf0] sm:$0xff]
      %v774 = vld [vmem:[%s253 + $0xf8] sm:$0xff]
      %vm775 = vcmask 72704
      %v776 = vsel %vm775, %v743, 0.0
      %777 = vadd.xlane.f32.xlu0 %v776
      %v778 = vpop.xlane.xlu0 %777
      %v779 = vsel %vm775, %v744, 0.0
      %780 = vadd.xlane.f32.xlu0 %v779
      %v781 = vpop.xlane.xlu0 %780
      %v782 = vsel %vm775, %v745, 0.0
      %783 = vadd.xlane.f32.xlu0 %v782
      %v784 = vpop.xlane.xlu0 %783
      %v785 = vsel %vm775, %v746, 0.0
      %786 = vadd.xlane.f32.xlu0 %v785
      %v787 = vpop.xlane.xlu0 %786
      %v788 = vsel %vm775, %v747, 0.0
      %789 = vadd.xlane.f32.xlu0 %v788
      %v790 = vpop.xlane.xlu0 %789
      %v791 = vsel %vm775, %v748, 0.0
      %792 = vadd.xlane.f32.xlu0 %v791
      %v793 = vpop.xlane.xlu0 %792
      %v794 = vsel %vm775, %v749, 0.0
      %795 = vadd.xlane.f32.xlu0 %v794
      %v796 = vpop.xlane.xlu0 %795
      %v797 = vsel %vm775, %v750, 0.0
      %798 = vadd.xlane.f32.xlu0 %v797
      %v799 = vpop.xlane.xlu0 %798
      %v800 = vsel %vm775, %v751, 0.0
      %801 = vadd.xlane.f32.xlu0 %v800
      %v802 = vpop.xlane.xlu0 %801
      %v803 = vsel %vm775, %v752, 0.0
      %804 = vadd.xlane.f32.xlu0 %v803
      %v805 = vpop.xlane.xlu0 %804
      %v806 = vsel %vm775, %v753, 0.0
      %807 = vadd.xlane.f32.xlu0 %v806
      %v808 = vpop.xlane.xlu0 %807
      %v809 = vsel %vm775, %v754, 0.0
      %810 = vadd.xlane.f32.xlu0 %v809
      %v811 = vpop.xlane.xlu0 %810
      %v812 = vsel %vm775, %v755, 0.0
      %813 = vadd.xlane.f32.xlu0 %v812
      %v814 = vpop.xlane.xlu0 %813
      %v815 = vsel %vm775, %v756, 0.0
      %816 = vadd.xlane.f32.xlu0 %v815
      %v817 = vpop.xlane.xlu0 %816
      %v818 = vsel %vm775, %v757, 0.0
      %819 = vadd.xlane.f32.xlu0 %v818
      %v820 = vpop.xlane.xlu0 %819
      %v821 = vsel %vm775, %v758, 0.0
      %822 = vadd.xlane.f32.xlu0 %v821
      %v823 = vpop.xlane.xlu0 %822
      %v824 = vsel %vm775, %v759, 0.0
      %825 = vadd.xlane.f32.xlu0 %v824
      %v826 = vpop.xlane.xlu0 %825
      %v827 = vsel %vm775, %v760, 0.0
      %828 = vadd.xlane.f32.xlu0 %v827
      %v829 = vpop.xlane.xlu0 %828
      %v830 = vsel %vm775, %v761, 0.0
      %831 = vadd.xlane.f32.xlu0 %v830
      %v832 = vpop.xlane.xlu0 %831
      %v833 = vsel %vm775, %v762, 0.0
      %834 = vadd.xlane.f32.xlu0 %v833
      %v835 = vpop.xlane.xlu0 %834
      %v836 = vsel %vm775, %v763, 0.0
      %837 = vadd.xlane.f32.xlu0 %v836
      %v838 = vpop.xlane.xlu0 %837
      %v839 = vsel %vm775, %v764, 0.0
      %840 = vadd.xlane.f32.xlu0 %v839
      %v841 = vpop.xlane.xlu0 %840
      %v842 = vsel %vm775, %v765, 0.0
      %843 = vadd.xlane.f32.xlu0 %v842
      %v844 = vpop.xlane.xlu0 %843
      %v845 = vsel %vm775, %v766, 0.0
      %846 = vadd.xlane.f32.xlu0 %v845
      %v847 = vpop.xlane.xlu0 %846
      %v848 = vsel %vm775, %v767, 0.0
      %849 = vadd.xlane.f32.xlu0 %v848
      %v850 = vpop.xlane.xlu0 %849
      %v851 = vsel %vm775, %v768, 0.0
      %852 = vadd.xlane.f32.xlu0 %v851
      %v853 = vpop.xlane.xlu0 %852
      %v854 = vsel %vm775, %v769, 0.0
      %855 = vadd.xlane.f32.xlu0 %v854
      %v856 = vpop.xlane.xlu0 %855
      %v857 = vsel %vm775, %v770, 0.0
      %858 = vadd.xlane.f32.xlu0 %v857
      %v859 = vpop.xlane.xlu0 %858
      %v860 = vsel %vm775, %v771, 0.0
      %861 = vadd.xlane.f32.xlu0 %v860
      %v862 = vpop.xlane.xlu0 %861
      %v863 = vsel %vm775, %v772, 0.0
      %864 = vadd.xlane.f32.xlu0 %v863
      %v865 = vpop.xlane.xlu0 %864
      %v866 = vsel %vm775, %v773, 0.0
      %867 = vadd.xlane.f32.xlu0 %v866
      %v868 = vpop.xlane.xlu0 %867
      %v869 = vsel %vm775, %v774, 0.0
      %870 = vadd.xlane.f32.xlu0 %v869
      %v871 = vpop.xlane.xlu0 %870
      %v872 = vadd.f32 %v778, 1e-08
      %v873 = vadd.f32 %v781, 1e-08
      %v874 = vadd.f32 %v784, 1e-08
      %v875 = vadd.f32 %v787, 1e-08
      %v876 = vadd.f32 %v790, 1e-08
      %v877 = vadd.f32 %v793, 1e-08
      %v878 = vadd.f32 %v796, 1e-08
      %v879 = vadd.f32 %v799, 1e-08
      %v880 = vadd.f32 %v802, 1e-08
      %v881 = vadd.f32 %v805, 1e-08
      %v882 = vadd.f32 %v808, 1e-08
      %v883 = vadd.f32 %v811, 1e-08
      %v884 = vadd.f32 %v814, 1e-08
      %v885 = vadd.f32 %v817, 1e-08
      %v886 = vadd.f32 %v820, 1e-08
      %v887 = vadd.f32 %v823, 1e-08
      %v888 = vadd.f32 %v826, 1e-08
      %v889 = vadd.f32 %v829, 1e-08
      %v890 = vadd.f32 %v832, 1e-08
      %v891 = vadd.f32 %v835, 1e-08
      %v892 = vadd.f32 %v838, 1e-08
      %v893 = vadd.f32 %v841, 1e-08
      %v894 = vadd.f32 %v844, 1e-08
      %v895 = vadd.f32 %v847, 1e-08
      %v896 = vadd.f32 %v850, 1e-08
      %v897 = vadd.f32 %v853, 1e-08
      %v898 = vadd.f32 %v856, 1e-08
      %v899 = vadd.f32 %v859, 1e-08
      %v900 = vadd.f32 %v862, 1e-08
      %v901 = vadd.f32 %v865, 1e-08
      %v902 = vadd.f32 %v868, 1e-08
      %v903 = vadd.f32 %v871, 1e-08
      %v904 = vrcp.pop %v872
      %v905 = vrcp.pop %v873
      %v906 = vrcp.pop %v874
      %v907 = vrcp.pop %v875
      %v908 = vrcp.pop %v876
      %v909 = vrcp.pop %v877
      %v910 = vrcp.pop %v878
      %v911 = vrcp.pop %v879
      %v912 = vrcp.pop %v880
      %v913 = vrcp.pop %v881
      %v914 = vrcp.pop %v882
      %v915 = vrcp.pop %v883
      %v916 = vrcp.pop %v884
      %v917 = vrcp.pop %v885
      %v918 = vrcp.pop %v886
      %v919 = vrcp.pop %v887
      %v920 = vrcp.pop %v888
      %v921 = vrcp.pop %v889
      %v922 = vrcp.pop %v890
      %v923 = vrcp.pop %v891
      %v924 = vrcp.pop %v892
      %v925 = vrcp.pop %v893
      %v926 = vrcp.pop %v894
      %v927 = vrcp.pop %v895
      %v928 = vrcp.pop %v896
      %v929 = vrcp.pop %v897
      %v930 = vrcp.pop %v898
      %v931 = vrcp.pop %v899
      %v932 = vrcp.pop %v900
      %v933 = vrcp.pop %v901
      %v934 = vrcp.pop %v902
      %v935 = vrcp.pop %v903
      %v936 = vmul.f32 %v664, %v904
      %v937 = vmul.f32 %v666, %v905
      %v938 = vmul.f32 %v669, %v906
      %v939 = vmul.f32 %v671, %v907
      %v940 = vmul.f32 %v674, %v908
      %v941 = vmul.f32 %v676, %v909
      %v942 = vmul.f32 %v679, %v910
      %v943 = vmul.f32 %v681, %v911
      %v944 = vmul.f32 %v684, %v912
      %v945 = vmul.f32 %v686, %v913
      %v946 = vmul.f32 %v689, %v914
      %v947 = vmul.f32 %v691, %v915
      %v948 = vmul.f32 %v694, %v916
      %v949 = vmul.f32 %v696, %v917
      %v950 = vmul.f32 %v699, %v918
      %v951 = vmul.f32 %v701, %v919
      %v952 = vmul.f32 %v704, %v920
      %v953 = vmul.f32 %v706, %v921
      %v954 = vmul.f32 %v709, %v922
      %v955 = vmul.f32 %v711, %v923
      %v956 = vmul.f32 %v714, %v924
      %v957 = vmul.f32 %v716, %v925
      %v958 = vmul.f32 %v719, %v926
      %v959 = vmul.f32 %v721, %v927
      %v960 = vmul.f32 %v724, %v928
      %v961 = vmul.f32 %v726, %v929
      %v962 = vmul.f32 %v729, %v930
      %v963 = vmul.f32 %v731, %v931
      %v964 = vmul.f32 %v734, %v932
      %v965 = vmul.f32 %v736, %v933
      %v966 = vmul.f32 %v739, %v934
      %v967 = vmul.f32 %v741, %v935
      %v968 = vld [vmem:[%s3] sm:$0x1]
      %v970 = vperm.slane %v968, 0
      %v972 = vadd.f32 %v936, %v970
      %v973 = vadd.f32 %v937, %v970
      %v974 = vadd.f32 %v938, %v970
      %v975 = vadd.f32 %v939, %v970
      %v976 = vadd.f32 %v940, %v970
      %v977 = vadd.f32 %v941, %v970
      %v978 = vadd.f32 %v942, %v970
      %v979 = vadd.f32 %v943, %v970
      %v980 = vadd.f32 %v944, %v970
      %v981 = vadd.f32 %v945, %v970
      %v982 = vadd.f32 %v946, %v970
      %v983 = vadd.f32 %v947, %v970
      %v984 = vadd.f32 %v948, %v970
      %v985 = vadd.f32 %v949, %v970
      %v986 = vadd.f32 %v950, %v970
      %v987 = vadd.f32 %v951, %v970
      %v988 = vadd.f32 %v952, %v970
      %v989 = vadd.f32 %v953, %v970
      %v990 = vadd.f32 %v954, %v970
      %v991 = vadd.f32 %v955, %v970
      %v992 = vadd.f32 %v956, %v970
      %v993 = vadd.f32 %v957, %v970
      %v994 = vadd.f32 %v958, %v970
      %v995 = vadd.f32 %v959, %v970
      %v996 = vadd.f32 %v960, %v970
      %v997 = vadd.f32 %v961, %v970
      %v998 = vadd.f32 %v962, %v970
      %v999 = vadd.f32 %v963, %v970
      %v1000 = vadd.f32 %v964, %v970
      %v1001 = vadd.f32 %v965, %v970
      %v1002 = vadd.f32 %v966, %v970
      %v1003 = vadd.f32 %v967, %v970
      %v1004 = vmax.f32 %v972, 0.0
      %v1005 = vmax.f32 %v973, 0.0
      %v1006 = vmax.f32 %v974, 0.0
      %v1007 = vmax.f32 %v975, 0.0
      %v1008 = vmax.f32 %v976, 0.0
      %v1009 = vmax.f32 %v977, 0.0
      %v1010 = vmax.f32 %v978, 0.0
      %v1011 = vmax.f32 %v979, 0.0
      %v1012 = vmax.f32 %v980, 0.0
      %v1013 = vmax.f32 %v981, 0.0
      %v1014 = vmax.f32 %v982, 0.0
      %v1015 = vmax.f32 %v983, 0.0
      %v1016 = vmax.f32 %v984, 0.0
      %v1017 = vmax.f32 %v985, 0.0
      %v1018 = vmax.f32 %v986, 0.0
      %v1019 = vmax.f32 %v987, 0.0
      %v1020 = vmax.f32 %v988, 0.0
      %v1021 = vmax.f32 %v989, 0.0
      %v1022 = vmax.f32 %v990, 0.0
      %v1023 = vmax.f32 %v991, 0.0
      %v1024 = vmax.f32 %v992, 0.0
      %v1025 = vmax.f32 %v993, 0.0
      %v1026 = vmax.f32 %v994, 0.0
      %v1027 = vmax.f32 %v995, 0.0
      %v1028 = vmax.f32 %v996, 0.0
      %v1029 = vmax.f32 %v997, 0.0
      %v1030 = vmax.f32 %v998, 0.0
      %v1031 = vmax.f32 %v999, 0.0
      %v1032 = vmax.f32 %v1000, 0.0
      %v1033 = vmax.f32 %v1001, 0.0
      %v1034 = vmax.f32 %v1002, 0.0
      %v1035 = vmax.f32 %v1003, 0.0
      %v1036 = vpack.c.bf16 %v1004, %v1004
      %v1037 = vpack.c.bf16 %v1005, %v1005
      %v1038 = vpack.c.bf16 %v1006, %v1006
      %v1039 = vpack.c.bf16 %v1007, %v1007
      %v1040 = vpack.c.bf16 %v1008, %v1008
      %v1041 = vpack.c.bf16 %v1009, %v1009
      %v1042 = vpack.c.bf16 %v1010, %v1010
      %v1043 = vpack.c.bf16 %v1011, %v1011
      %v1044 = vpack.c.bf16 %v1012, %v1012
      %v1045 = vpack.c.bf16 %v1013, %v1013
      %v1046 = vpack.c.bf16 %v1014, %v1014
      %v1047 = vpack.c.bf16 %v1015, %v1015
      %v1048 = vpack.c.bf16 %v1016, %v1016
      %v1049 = vpack.c.bf16 %v1017, %v1017
      %v1050 = vpack.c.bf16 %v1018, %v1018
      %v1051 = vpack.c.bf16 %v1019, %v1019
      %v1052 = vpack.c.bf16 %v1020, %v1020
      %v1053 = vpack.c.bf16 %v1021, %v1021
      %v1054 = vpack.c.bf16 %v1022, %v1022
      %v1055 = vpack.c.bf16 %v1023, %v1023
      %v1056 = vpack.c.bf16 %v1024, %v1024
      %v1057 = vpack.c.bf16 %v1025, %v1025
      %v1058 = vpack.c.bf16 %v1026, %v1026
      %v1059 = vpack.c.bf16 %v1027, %v1027
      %v1060 = vpack.c.bf16 %v1028, %v1028
      %v1061 = vpack.c.bf16 %v1029, %v1029
      %v1062 = vpack.c.bf16 %v1030, %v1030
      %v1063 = vpack.c.bf16 %v1031, %v1031
      %v1064 = vpack.c.bf16 %v1032, %v1032
      %v1065 = vpack.c.bf16 %v1033, %v1033
      %v1066 = vpack.c.bf16 %v1034, %v1034
      %v1067 = vpack.c.bf16 %v1035, %v1035
      %vm1068 = vcmask 125952
      %1069 = vst.msk [vmem:[%s259] sm:$0xf] %vm1068, %v1036
      %1070 = vst.msk [vmem:[%s259 + $0x4] sm:$0xf] %vm1068, %v1037
      %1071 = vst.msk [vmem:[%s259 + $0x8] sm:$0xf] %vm1068, %v1038
      %1072 = vst.msk [vmem:[%s259 + $0xc] sm:$0xf] %vm1068, %v1039
      %1073 = vst.msk [vmem:[%s259 + $0x10] sm:$0xf] %vm1068, %v1040
      %1074 = vst.msk [vmem:[%s259 + $0x14] sm:$0xf] %vm1068, %v1041
      %1075 = vst.msk [vmem:[%s259 + $0x18] sm:$0xf] %vm1068, %v1042
      %1076 = vst.msk [vmem:[%s259 + $0x1c] sm:$0xf] %vm1068, %v1043
      %1077 = vst.msk [vmem:[%s259 + $0x20] sm:$0xf] %vm1068, %v1044
      %1078 = vst.msk [vmem:[%s259 + $0x24] sm:$0xf] %vm1068, %v1045
      %1079 = vst.msk [vmem:[%s259 + $0x28] sm:$0xf] %vm1068, %v1046
      %1080 = vst.msk [vmem:[%s259 + $0x2c] sm:$0xf] %vm1068, %v1047
      %1081 = vst.msk [vmem:[%s259 + $0x30] sm:$0xf] %vm1068, %v1048
      %1082 = vst.msk [vmem:[%s259 + $0x34] sm:$0xf] %vm1068, %v1049
      %1083 = vst.msk [vmem:[%s259 + $0x38] sm:$0xf] %vm1068, %v1050
      %1084 = vst.msk [vmem:[%s259 + $0x3c] sm:$0xf] %vm1068, %v1051
      %1085 = vst.msk [vmem:[%s259 + $0x40] sm:$0xf] %vm1068, %v1052
      %1086 = vst.msk [vmem:[%s259 + $0x44] sm:$0xf] %vm1068, %v1053
      %1087 = vst.msk [vmem:[%s259 + $0x48] sm:$0xf] %vm1068, %v1054
      %1088 = vst.msk [vmem:[%s259 + $0x4c] sm:$0xf] %vm1068, %v1055
      %1089 = vst.msk [vmem:[%s259 + $0x50] sm:$0xf] %vm1068, %v1056
      %1090 = vst.msk [vmem:[%s259 + $0x54] sm:$0xf] %vm1068, %v1057
      %1091 = vst.msk [vmem:[%s259 + $0x58] sm:$0xf] %vm1068, %v1058
      %1092 = vst.msk [vmem:[%s259 + $0x5c] sm:$0xf] %vm1068, %v1059
      %1093 = vst.msk [vmem:[%s259 + $0x60] sm:$0xf] %vm1068, %v1060
      %1094 = vst.msk [vmem:[%s259 + $0x64] sm:$0xf] %vm1068, %v1061
      %1095 = vst.msk [vmem:[%s259 + $0x68] sm:$0xf] %vm1068, %v1062
      %1096 = vst.msk [vmem:[%s259 + $0x6c] sm:$0xf] %vm1068, %v1063
      %1097 = vst.msk [vmem:[%s259 + $0x70] sm:$0xf] %vm1068, %v1064
      %1098 = vst.msk [vmem:[%s259 + $0x74] sm:$0xf] %vm1068, %v1065
      %1099 = vst.msk [vmem:[%s259 + $0x78] sm:$0xf] %vm1068, %v1066
      %1100 = vst.msk [vmem:[%s259 + $0x7c] sm:$0xf] %vm1068, %v1067
      %v1101 = vsel %vm775, %v743, -inf
      %1102 = vmax.xlane.f32.xlu0 %v1101
      %v1103 = vpop.xlane.xlu0 %1102
      %v1104 = vsel %vm775, %v744, -inf
      %1105 = vmax.xlane.f32.xlu0 %v1104
      %v1106 = vpop.xlane.xlu0 %1105
      %v1107 = vsel %vm775, %v745, -inf
      %1108 = vmax.xlane.f32.xlu0 %v1107
      %v1109 = vpop.xlane.xlu0 %1108
      %v1110 = vsel %vm775, %v746, -inf
      %1111 = vmax.xlane.f32.xlu0 %v1110
      %v1112 = vpop.xlane.xlu0 %1111
      %v1113 = vsel %vm775, %v747, -inf
      %1114 = vmax.xlane.f32.xlu0 %v1113
      %v1115 = vpop.xlane.xlu0 %1114
      %v1116 = vsel %vm775, %v748, -inf
      %1117 = vmax.xlane.f32.xlu0 %v1116
      %v1118 = vpop.xlane.xlu0 %1117
      %v1119 = vsel %vm775, %v749, -inf
      %1120 = vmax.xlane.f32.xlu0 %v1119
      %v1121 = vpop.xlane.xlu0 %1120
      %v1122 = vsel %vm775, %v750, -inf
      %1123 = vmax.xlane.f32.xlu0 %v1122
      %v1124 = vpop.xlane.xlu0 %1123
      %v1125 = vsel %vm775, %v751, -inf
      %1126 = vmax.xlane.f32.xlu0 %v1125
      %v1127 = vpop.xlane.xlu0 %1126
      %v1128 = vsel %vm775, %v752, -inf
      %1129 = vmax.xlane.f32.xlu0 %v1128
      %v1130 = vpop.xlane.xlu0 %1129
      %v1131 = vsel %vm775, %v753, -inf
      %1132 = vmax.xlane.f32.xlu0 %v1131
      %v1133 = vpop.xlane.xlu0 %1132
      %v1134 = vsel %vm775, %v754, -inf
      %1135 = vmax.xlane.f32.xlu0 %v1134
      %v1136 = vpop.xlane.xlu0 %1135
      %v1137 = vsel %vm775, %v755, -inf
      %1138 = vmax.xlane.f32.xlu0 %v1137
      %v1139 = vpop.xlane.xlu0 %1138
      %v1140 = vsel %vm775, %v756, -inf
      %1141 = vmax.xlane.f32.xlu0 %v1140
      %v1142 = vpop.xlane.xlu0 %1141
      %v1143 = vsel %vm775, %v757, -inf
      %1144 = vmax.xlane.f32.xlu0 %v1143
      %v1145 = vpop.xlane.xlu0 %1144
      %v1146 = vsel %vm775, %v758, -inf
      %1147 = vmax.xlane.f32.xlu0 %v1146
      %v1148 = vpop.xlane.xlu0 %1147
      %v1149 = vsel %vm775, %v759, -inf
      %1150 = vmax.xlane.f32.xlu0 %v1149
      %v1151 = vpop.xlane.xlu0 %1150
      %v1152 = vsel %vm775, %v760, -inf
      %1153 = vmax.xlane.f32.xlu0 %v1152
      %v1154 = vpop.xlane.xlu0 %1153
      %v1155 = vsel %vm775, %v761, -inf
      %1156 = vmax.xlane.f32.xlu0 %v1155
      %v1157 = vpop.xlane.xlu0 %1156
      %v1158 = vsel %vm775, %v762, -inf
      %1159 = vmax.xlane.f32.xlu0 %v1158
      %v1160 = vpop.xlane.xlu0 %1159
      %v1161 = vsel %vm775, %v763, -inf
      %1162 = vmax.xlane.f32.xlu0 %v1161
      %v1163 = vpop.xlane.xlu0 %1162
      %v1164 = vsel %vm775, %v764, -inf
      %1165 = vmax.xlane.f32.xlu0 %v1164
      %v1166 = vpop.xlane.xlu0 %1165
      %v1167 = vsel %vm775, %v765, -inf
      %1168 = vmax.xlane.f32.xlu0 %v1167
      %v1169 = vpop.xlane.xlu0 %1168
      %v1170 = vsel %vm775, %v766, -inf
      %1171 = vmax.xlane.f32.xlu0 %v1170
      %v1172 = vpop.xlane.xlu0 %1171
      %v1173 = vsel %vm775, %v767, -inf
      %1174 = vmax.xlane.f32.xlu0 %v1173
      %v1175 = vpop.xlane.xlu0 %1174
      %v1176 = vsel %vm775, %v768, -inf
      %1177 = vmax.xlane.f32.xlu0 %v1176
      %v1178 = vpop.xlane.xlu0 %1177
      %v1179 = vsel %vm775, %v769, -inf
      %1180 = vmax.xlane.f32.xlu0 %v1179
      %v1181 = vpop.xlane.xlu0 %1180
      %v1182 = vsel %vm775, %v770, -inf
      %1183 = vmax.xlane.f32.xlu0 %v1182
      %v1184 = vpop.xlane.xlu0 %1183
      %v1185 = vsel %vm775, %v771, -inf
      %1186 = vmax.xlane.f32.xlu0 %v1185
      %v1187 = vpop.xlane.xlu0 %1186
      %v1188 = vsel %vm775, %v772, -inf
      %1189 = vmax.xlane.f32.xlu0 %v1188
      %v1190 = vpop.xlane.xlu0 %1189
      %v1191 = vsel %vm775, %v773, -inf
      %1192 = vmax.xlane.f32.xlu0 %v1191
      %v1193 = vpop.xlane.xlu0 %1192
      %v1194 = vsel %vm775, %v774, -inf
      %1195 = vmax.xlane.f32.xlu0 %v1194
      %v1196 = vpop.xlane.xlu0 %1195
      %vm1197 = vcmask 7168
      %1198 = vst.msk [vmem:[%s265] sm:$0xff] %vm1197, %v1103
      %1199 = vst.msk [vmem:[%s265 + $0x8] sm:$0xff] %vm1197, %v1106
      %1200 = vst.msk [vmem:[%s265 + $0x10] sm:$0xff] %vm1197, %v1109
      %1201 = vst.msk [vmem:[%s265 + $0x18] sm:$0xff] %vm1197, %v1112
      %1202 = vst.msk [vmem:[%s265 + $0x20] sm:$0xff] %vm1197, %v1115
      %1203 = vst.msk [vmem:[%s265 + $0x28] sm:$0xff] %vm1197, %v1118
      %1204 = vst.msk [vmem:[%s265 + $0x30] sm:$0xff] %vm1197, %v1121
      %1205 = vst.msk [vmem:[%s265 + $0x38] sm:$0xff] %vm1197, %v1124
      %1206 = vst.msk [vmem:[%s265 + $0x40] sm:$0xff] %vm1197, %v1127
      %1207 = vst.msk [vmem:[%s265 + $0x48] sm:$0xff] %vm1197, %v1130
      %1208 = vst.msk [vmem:[%s265 + $0x50] sm:$0xff] %vm1197, %v1133
      %1209 = vst.msk [vmem:[%s265 + $0x58] sm:$0xff] %vm1197, %v1136
      %1210 = vst.msk [vmem:[%s265 + $0x60] sm:$0xff] %vm1197, %v1139
      %1211 = vst.msk [vmem:[%s265 + $0x68] sm:$0xff] %vm1197, %v1142
      %1212 = vst.msk [vmem:[%s265 + $0x70] sm:$0xff] %vm1197, %v1145
      %1213 = vst.msk [vmem:[%s265 + $0x78] sm:$0xff] %vm1197, %v1148
      %1214 = vst.msk [vmem:[%s265 + $0x80] sm:$0xff] %vm1197, %v1151
      %1215 = vst.msk [vmem:[%s265 + $0x88] sm:$0xff] %vm1197, %v1154
      %1216 = vst.msk [vmem:[%s265 + $0x90] sm:$0xff] %vm1197, %v1157
      %1217 = vst.msk [vmem:[%s265 + $0x98] sm:$0xff] %vm1197, %v1160
      %1218 = vst.msk [vmem:[%s265 + $0xa0] sm:$0xff] %vm1197, %v1163
      %1219 = vst.msk [vmem:[%s265 + $0xa8] sm:$0xff] %vm1197, %v1166
      %1220 = vst.msk [vmem:[%s265 + $0xb0] sm:$0xff] %vm1197, %v1169
      %1221 = vst.msk [vmem:[%s265 + $0xb8] sm:$0xff] %vm1197, %v1172
      %1222 = vst.msk [vmem:[%s265 + $0xc0] sm:$0xff] %vm1197, %v1175
      %1223 = vst.msk [vmem:[%s265 + $0xc8] sm:$0xff] %vm1197, %v1178
      %1224 = vst.msk [vmem:[%s265 + $0xd0] sm:$0xff] %vm1197, %v1181
      %1225 = vst.msk [vmem:[%s265 + $0xd8] sm:$0xff] %vm1197, %v1184
      %1226 = vst.msk [vmem:[%s265 + $0xe0] sm:$0xff] %vm1197, %v1187
      %1227 = vst.msk [vmem:[%s265 + $0xe8] sm:$0xff] %vm1197, %v1190
      %1228 = vst.msk [vmem:[%s265 + $0xf0] sm:$0xff] %vm1197, %v1193
      %1229 = vst.msk [vmem:[%s265 + $0xf8] sm:$0xff] %vm1197, %v1196
      %s1230 = smul.u32 32, %s17
      %p1231 = scmp.lt.s32.totalorder %s1230, 63
      %s1232 = scalar_select %p1231, %s1230, 63
      %s1233 = smul.addr %s1232, 4
      %s1234 = scalar_lea.vmem %s4, %s1233
      %s1235 = smul.u32 32, %s17
      %p1236 = scmp.lt.s32.totalorder %s1235, 63
      %s1237 = scalar_select %p1236, %s1235, 63
      %s1238 = smul.addr %s1237, 8
      %s1239 = scalar_lea.vmem %s5, %s1238
      // Predicated region
      $region37: #{_lambda_.8} parent=35 // pred_check
        %p1240 = pneg %p129
      $region38: #{_lambda_.8} parent=35 // pred_check_branch
        %1242 = sbr.rel (%p1240) target = $region40
      $region39: #{_lambda_.8} parent=35 // pred_region
        %s1243 = smul.u32 32, %s17
      $region40: #{_lambda_.8} parent=35 // pred_fallthru
        _
      // Predicated region
      $region41: #{_lambda_.8} parent=35 // pred_check
        %p1244 = pneg %p155
      $region42: #{_lambda_.8} parent=35 // pred_check_branch
        %1246 = sbr.rel (%p1244) target = $region44
      $region43: #{_lambda_.8} parent=35 // pred_region
        %s1247 = smul.u32 32, %s17
      $region44: #{_lambda_.8} parent=35 // pred_fallthru
        _
    $region36: #{_lambda_.8} parent=5 // pred_fallthru
      _
    %p1248 = scmp.le.s32.totalorder 2, %s12
    // Predicated region
    $region45: #{_lambda_.8} parent=5 // pred_check
      %p1249 = pneg %p1248
    $region46: #{_lambda_.8} parent=5 // pred_check_branch
      %1251 = sbr.rel (%p1249) target = $region48
    $region47: #{_lambda_.8} parent=5 // pred_region
      %s1252 = ssub.s32 %s12, 2
      // Predicated region
      $region49: #{_lambda_.8} parent=47 // pred_check
        %p1253 = pneg %p135
      $region50: #{_lambda_.8} parent=47 // pred_check_branch
        %1255 = sbr.rel (%p1253) target = $region52
      $region51: #{_lambda_.8} parent=47 // pred_region
        %s1256 = smul.u32 32, %s18
        %p1257 = scmp.lt.s32.totalorder %s1256, 63
        %s1258 = scalar_select %p1257, %s1256, 63
        %s1259 = smul.addr %s1258, 4
        %s1260 = scalar_lea.vmem %s4, %s1259
      $region52: #{_lambda_.8} parent=47 // pred_fallthru
        _
      // Predicated region
      $region53: #{_lambda_.8} parent=47 // pred_check
        %p1261 = pneg %p161
      $region54: #{_lambda_.8} parent=47 // pred_check_branch
        %1263 = sbr.rel (%p1261) target = $region56
      $region55: #{_lambda_.8} parent=47 // pred_region
        %s1264 = smul.u32 32, %s18
        %p1265 = scmp.lt.s32.totalorder %s1264, 63
        %s1266 = scalar_select %p1265, %s1264, 63
        %s1267 = smul.addr %s1266, 8
        %s1268 = scalar_lea.vmem %s5, %s1267
      $region56: #{_lambda_.8} parent=47 // pred_fallthru
        _
    $region48: #{_lambda_.8} parent=5 // pred_fallthru
      _
  $region6: #{_lambda_.8} parent=0 // loop_footer
    %s16 = sadd.s32 1, %s12
  $region7: #{_lambda_.8} parent=0 // loop_footer_branch
    %11 = sbr.rel target = $region3
  $region8: #{_lambda_.8} parent=0 // loop_exit
    _

// kernel: _lambda_.9
$region0: #{_lambda_.9}
  #allocation0 [shape = 'u32[]', space=smem, size = 0x4, offset = 0x4, fixed_abs, tag = 'smem constant byte address 0x4 - core index']
  #allocation1 [shape = 'u32[72,128]{1,0:T(1,128)}', space=vmem, size = 0x9000, scoped, tag = 'internal scratch']
  #allocation2 [shape = 'f32[1,1]{1,0:T(1,128)S(1)}', space=vmem, size = 0x200, scoped, tag = 'scoped memory for _lambda_.9']
  %s0 = inlined_call_operand.vmem [shape: bf16[512,144], index: 0, kind: input, shape index: {}]
  %s1 = inlined_call_operand.vmem [shape: f32[512,9], index: 1, kind: input, shape index: {}]
  %s2 = inlined_call_operand.vmem [shape: bf16[144,16], index: 2, kind: input, shape index: {}]
  %s3 = inlined_call_operand.vmem [shape: f32[1,16], index: 3, kind: input, shape index: {}]
  %s4 = inlined_call_operand.vmem [shape: f32[1,16], index: 4, kind: input, shape index: {}]
  %s5 = inlined_call_operand.<no memory space> [shape: f32[1,1], index: 5, kind: input, shape index: {}]
  %s6 = inlined_call_operand.vmem [shape: f32[512,1], index: 6, kind: output, shape index: {}]
  %s7 = sld [smem:[#allocation0]]
  $region57: #{_lambda_.9} parent=0
    _
  %s9 = ssub.s32 1, %s7
  %s10 = scalar_select 0, %s9, %s7
  %v11 = vstv %s5
  %12 = vst [vmem:[#allocation2] sm:$0x1] %v11
  loop: start=0, step=1, limit=4
  $region2: #{_lambda_.9} parent=0 // loop_pre_header
    _
  $region3: #{_lambda_.9} parent=0 // loop_header
    %s14 = sphi 0, %s18
    %p15 = scmp.ge.s32.totalorder %s14, 4
    %s24 = sphi 0, %s26
    %s27 = sphi 0, %s24
    %s28 = sphi 0, %s27
    %s44 = sphi 0, %s28
    %s50 = sphi 0, %s52
    %s53 = sphi 0, %s50
    %s54 = sphi 0, %s53
    %s70 = sphi 0, %s54
    %s74 = sphi 0, %s74
    %s76 = sphi 0, %s74
    %s77 = sphi 0, %s76
    %s91 = sphi 0, %s77
    %s95 = sphi 0, %s95
    %s97 = sphi 0, %s95
    %s98 = sphi 0, %s97
    %s112 = sphi 0, %s98
    %s116 = sphi 0, %s116
    %s118 = sphi 0, %s116
    %s119 = sphi 0, %s118
    %s133 = sphi 0, %s119
    %s137 = sphi 0, %s137
    %s139 = sphi 0, %s137
    %s140 = sphi 0, %s139
    %s154 = sphi 0, %s140
    %s160 = sphi 0, %s162
    %s163 = sphi 0, %s160
    %s164 = sphi 0, %s163
    %s180 = sphi 0, %s164
  $region4: #{_lambda_.9} parent=0 // loop_header_branch
    %17 = sbr.rel (%p15) target = $region8
  $region5: #{_lambda_.9} parent=0 // loop_body
    %s19 = ssub.s32 %s14, 1
    %s20 = ssub.s32 %s14, 2
    %s21 = sadd.s32 %s14, 1
    %s22 = ssub.s32 %s14, %s21
    %p23 = scmp.eq.s32.totalorder %s22, 0
    %s25 = sadd.s32 %s24, 1
    %s26 = scalar_select %p23, %s24, %s25
    %p29 = pneg %p23
    %p30 = scmp.eq.s32.totalorder %s14, 1
    %p31 = por %p29, %p30
    %p32 = scmp.ne.s32.totalorder %s24, %s27
    %p33 = scmp.eq.s32.totalorder %s14, 0
    %p34 = por %p32, %p33
    %p35 = scmp.ne.s32.totalorder %s24, %s27
    %p36 = scmp.eq.s32.totalorder %s19, 1
    %p37 = por %p35, %p36
    %p38 = scmp.ne.s32.totalorder %s27, %s28
    %p39 = scmp.eq.s32.totalorder %s19, 0
    %p40 = por %p38, %p39
    %p41 = scmp.ne.s32.totalorder %s27, %s28
    %p42 = scmp.eq.s32.totalorder %s20, 1
    %p43 = por %p41, %p42
    %p45 = scmp.ne.s32.totalorder %s28, %s44
    %p46 = scmp.eq.s32.totalorder %s20, 0
    %p47 = por %p45, %p46
    %s48 = ssub.s32 %s14, %s21
    %p49 = scmp.eq.s32.totalorder %s48, 0
    %s51 = sadd.s32 %s50, 1
    %s52 = scalar_select %p49, %s50, %s51
    %p55 = pneg %p49
    %p56 = scmp.eq.s32.totalorder %s14, 1
    %p57 = por %p55, %p56
    %p58 = scmp.ne.s32.totalorder %s50, %s53
    %p59 = scmp.eq.s32.totalorder %s14, 0
    %p60 = por %p58, %p59
    %p61 = scmp.ne.s32.totalorder %s50, %s53
    %p62 = scmp.eq.s32.totalorder %s19, 1
    %p63 = por %p61, %p62
    %p64 = scmp.ne.s32.totalorder %s53, %s54
    %p65 = scmp.eq.s32.totalorder %s19, 0
    %p66 = por %p64, %p65
    %p67 = scmp.ne.s32.totalorder %s53, %s54
    %p68 = scmp.eq.s32.totalorder %s20, 1
    %p69 = por %p67, %p68
    %p71 = scmp.ne.s32.totalorder %s54, %s70
    %p72 = scmp.eq.s32.totalorder %s20, 0
    %p73 = por %p71, %p72
    %s75 = sadd.s32 %s74, 1
    %p78 = scmp.eq.s32.totalorder %s14, 1
    %p79 = scmp.ne.s32.totalorder %s74, %s76
    %p80 = scmp.eq.s32.totalorder %s14, 0
    %p81 = por %p79, %p80
    %p82 = scmp.ne.s32.totalorder %s74, %s76
    %p83 = scmp.eq.s32.totalorder %s19, 1
    %p84 = por %p82, %p83
    %p85 = scmp.ne.s32.totalorder %s76, %s77
    %p86 = scmp.eq.s32.totalorder %s19, 0
    %p87 = por %p85, %p86
    %p88 = scmp.ne.s32.totalorder %s76, %s77
    %p89 = scmp.eq.s32.totalorder %s20, 1
    %p90 = por %p88, %p89
    %p92 = scmp.ne.s32.totalorder %s77, %s91
    %p93 = scmp.eq.s32.totalorder %s20, 0
    %p94 = por %p92, %p93
    %s96 = sadd.s32 %s95, 1
    %p99 = scmp.eq.s32.totalorder %s14, 1
    %p100 = scmp.ne.s32.totalorder %s95, %s97
    %p101 = scmp.eq.s32.totalorder %s14, 0
    %p102 = por %p100, %p101
    %p103 = scmp.ne.s32.totalorder %s95, %s97
    %p104 = scmp.eq.s32.totalorder %s19, 1
    %p105 = por %p103, %p104
    %p106 = scmp.ne.s32.totalorder %s97, %s98
    %p107 = scmp.eq.s32.totalorder %s19, 0
    %p108 = por %p106, %p107
    %p109 = scmp.ne.s32.totalorder %s97, %s98
    %p110 = scmp.eq.s32.totalorder %s20, 1
    %p111 = por %p109, %p110
    %p113 = scmp.ne.s32.totalorder %s98, %s112
    %p114 = scmp.eq.s32.totalorder %s20, 0
    %p115 = por %p113, %p114
    %s117 = sadd.s32 %s116, 1
    %p120 = scmp.eq.s32.totalorder %s14, 1
    %p121 = scmp.ne.s32.totalorder %s116, %s118
    %p122 = scmp.eq.s32.totalorder %s14, 0
    %p123 = por %p121, %p122
    %p124 = scmp.ne.s32.totalorder %s116, %s118
    %p125 = scmp.eq.s32.totalorder %s19, 1
    %p126 = por %p124, %p125
    %p127 = scmp.ne.s32.totalorder %s118, %s119
    %p128 = scmp.eq.s32.totalorder %s19, 0
    %p129 = por %p127, %p128
    %p130 = scmp.ne.s32.totalorder %s118, %s119
    %p131 = scmp.eq.s32.totalorder %s20, 1
    %p132 = por %p130, %p131
    %p134 = scmp.ne.s32.totalorder %s119, %s133
    %p135 = scmp.eq.s32.totalorder %s20, 0
    %p136 = por %p134, %p135
    %s138 = sadd.s32 %s137, 1
    %p141 = scmp.eq.s32.totalorder %s14, 1
    %p142 = scmp.ne.s32.totalorder %s137, %s139
    %p143 = scmp.eq.s32.totalorder %s14, 0
    %p144 = por %p142, %p143
    %p145 = scmp.ne.s32.totalorder %s137, %s139
    %p146 = scmp.eq.s32.totalorder %s19, 1
    %p147 = por %p145, %p146
    %p148 = scmp.ne.s32.totalorder %s139, %s140
    %p149 = scmp.eq.s32.totalorder %s19, 0
    %p150 = por %p148, %p149
    %p151 = scmp.ne.s32.totalorder %s139, %s140
    %p152 = scmp.eq.s32.totalorder %s20, 1
    %p153 = por %p151, %p152
    %p155 = scmp.ne.s32.totalorder %s140, %s154
    %p156 = scmp.eq.s32.totalorder %s20, 0
    %p157 = por %p155, %p156
    %s158 = ssub.s32 %s14, %s21
    %p159 = scmp.eq.s32.totalorder %s158, 0
    %s161 = sadd.s32 %s160, 1
    %s162 = scalar_select %p159, %s160, %s161
    %p165 = pneg %p159
    %p166 = scmp.eq.s32.totalorder %s14, 1
    %p167 = por %p165, %p166
    %p168 = scmp.ne.s32.totalorder %s160, %s163
    %p169 = scmp.eq.s32.totalorder %s14, 0
    %p170 = por %p168, %p169
    %p171 = scmp.ne.s32.totalorder %s160, %s163
    %p172 = scmp.eq.s32.totalorder %s19, 1
    %p173 = por %p171, %p172
    %p174 = scmp.ne.s32.totalorder %s163, %s164
    %p175 = scmp.eq.s32.totalorder %s19, 0
    %p176 = por %p174, %p175
    %p177 = scmp.ne.s32.totalorder %s163, %s164
    %p178 = scmp.eq.s32.totalorder %s20, 1
    %p179 = por %p177, %p178
    %p181 = scmp.ne.s32.totalorder %s164, %s180
    %p182 = scmp.eq.s32.totalorder %s20, 0
    %p183 = por %p181, %p182
    %p184 = scmp.le.s32.totalorder 1, %s14
    %p185 = scmp.lt.s32.totalorder %s14, 3
    %p186 = pnand %p184, %p185
    %p187 = pneg %p186
    // Predicated region
    $region9: #{_lambda_.9} parent=5 // pred_check
      _
    $region10: #{_lambda_.9} parent=5 // pred_check_branch
      %189 = sbr.rel (%p186) target = $region12
    $region11: #{_lambda_.9} parent=5 // pred_region
      %s190 = ssub.s32 %s14, 1
      // Predicated region
      $region13: #{_lambda_.9} parent=11 // pred_check
        %p191 = pneg %p87
      $region14: #{_lambda_.9} parent=11 // pred_check_branch
        %193 = sbr.rel (%p191) target = $region16
      $region15: #{_lambda_.9} parent=11 // pred_region
        _
      $region16: #{_lambda_.9} parent=11 // pred_fallthru
        _
      // Predicated region
      $region17: #{_lambda_.9} parent=11 // pred_check
        %p194 = pneg %p108
      $region18: #{_lambda_.9} parent=11 // pred_check_branch
        %196 = sbr.rel (%p194) target = $region20
      $region19: #{_lambda_.9} parent=11 // pred_region
        _
      $region20: #{_lambda_.9} parent=11 // pred_fallthru
        _
      // Predicated region
      $region21: #{_lambda_.9} parent=11 // pred_check
        %p197 = pneg %p129
      $region22: #{_lambda_.9} parent=11 // pred_check_branch
        %199 = sbr.rel (%p197) target = $region24
      $region23: #{_lambda_.9} parent=11 // pred_region
        _
      $region24: #{_lambda_.9} parent=11 // pred_fallthru
        _
      // Predicated region
      $region25: #{_lambda_.9} parent=11 // pred_check
        %p200 = pneg %p150
      $region26: #{_lambda_.9} parent=11 // pred_check_branch
        %202 = sbr.rel (%p200) target = $region28
      $region27: #{_lambda_.9} parent=11 // pred_region
        _
      $region28: #{_lambda_.9} parent=11 // pred_fallthru
        _
    $region12: #{_lambda_.9} parent=5 // pred_fallthru
      _
    %p203 = scmp.lt.s32.totalorder %s14, 2
    // Predicated region
    $region29: #{_lambda_.9} parent=5 // pred_check
      %p204 = pneg %p203
    $region30: #{_lambda_.9} parent=5 // pred_check_branch
      %206 = sbr.rel (%p204) target = $region32
    $region31: #{_lambda_.9} parent=5 // pred_region
      // Predicated region
      $region33: #{_lambda_.9} parent=31 // pred_check
        %p207 = pneg %p34
      $region34: #{_lambda_.9} parent=31 // pred_check_branch
        %209 = sbr.rel (%p207) target = $region36
      $region35: #{_lambda_.9} parent=31 // pred_region
        %s210 = smul.u32 32, %s14
        %p211 = scmp.lt.s32.totalorder %s210, 63
        %s212 = scalar_select %p211, %s210, 63
        %s213 = smul.addr %s212, 2
        %s214 = smul.addr %s213, 4
        %s215 = scalar_lea.vmem %s0, %s214
        %s216 = smul.u32 32, %s14
      $region36: #{_lambda_.9} parent=31 // pred_fallthru
        _
      // Predicated region
      $region37: #{_lambda_.9} parent=31 // pred_check
        %p217 = pneg %p60
      $region38: #{_lambda_.9} parent=31 // pred_check_branch
        %219 = sbr.rel (%p217) target = $region40
      $region39: #{_lambda_.9} parent=31 // pred_region
        %s220 = smul.u32 32, %s14
        %p221 = scmp.lt.s32.totalorder %s220, 63
        %s222 = scalar_select %p221, %s220, 63
        %s223 = smul.addr %s222, 8
        %s224 = scalar_lea.vmem %s1, %s223
        %s225 = smul.u32 32, %s14
      $region40: #{_lambda_.9} parent=31 // pred_fallthru
        _
    $region32: #{_lambda_.9} parent=5 // pred_fallthru
      _
    %p226 = scmp.le.s32.totalorder 1, %s14
    %p227 = scmp.lt.s32.totalorder %s14, 3
    %p228 = pnand %p226, %p227
    %p229 = pneg %p228
    // Predicated region
    $region41: #{_lambda_.9} parent=5 // pred_check
      _
    $region42: #{_lambda_.9} parent=5 // pred_check_branch
      %231 = sbr.rel (%p228) target = $region44
    $region43: #{_lambda_.9} parent=5 // pred_region
      %s232 = ssub.s32 %s14, 1
      %s233 = smul.u32 32, %s19
      %p234 = scmp.lt.s32.totalorder %s233, 63
      %s235 = scalar_select %p234, %s233, 63
      %s236 = smul.addr %s235, 2
      %s237 = smul.addr %s236, 4
      %s238 = scalar_lea.vmem %s0, %s237
      %p239 = pneg %p40
      %p240 = pneg %p37
      %s241 = smul.u32 32, %s19
      %p242 = scmp.lt.s32.totalorder %s241, 63
      %s243 = scalar_select %p242, %s241, 63
      %s244 = smul.addr %s243, 8
      %s245 = scalar_lea.vmem %s1, %s244
      %p246 = pneg %p66
      %p247 = pneg %p63
      %p248 = pneg %p87
      %p249 = pneg %p84
      %p250 = pneg %p108
      %p251 = pneg %p105
      %p252 = pneg %p129
      %p253 = pneg %p126
      %p254 = pneg %p150
      %p255 = pneg %p147
      %p256 = pneg %p176
      %p257 = pneg %p173
      %s258 = smul.u32 32, %s19
      %p259 = scmp.lt.s32.totalorder %s258, 63
      %s260 = scalar_select %p259, %s258, 63
      %s261 = smul.addr %s260, 8
      %s262 = scalar_lea.vmem %s6, %s261
      %s263 = smul.u32 32, %s19
      %p264 = scmp.lt.s32.totalorder %s263, 63
      %s265 = scalar_select %p264, %s263, 63
      %s266 = smul.addr %s265, 2
      %s267 = smul.addr %s266, 4
      %s268 = scalar_lea.vmem %s0, %s267
      %s269 = smul.u32 32, %s19
      %s270 = smul.u32 32, %s19
      %p271 = scmp.lt.s32.totalorder %s270, 63
      %s272 = scalar_select %p271, %s270, 63
      %s273 = smul.addr %s272, 8
      %s274 = scalar_lea.vmem %s1, %s273
      %s275 = smul.u32 32, %s19
      %s276 = smul.u32 32, %s19
      %p277 = scmp.lt.s32.totalorder %s276, 63
      %s278 = scalar_select %p277, %s276, 63
      %s279 = smul.addr %s278, 8
      %s280 = scalar_lea.vmem %s6, %s279
      %s281 = smul.u32 32, %s19
      %v283 = vld [vmem:[%s268] sm:$0xff]
      %v284 = vld [vmem:[%s268 + $0x8] sm:$0xff]
      %v285 = vld [vmem:[%s268 + $0x10] sm:$0xff]
      %v286 = vld [vmem:[%s268 + $0x18] sm:$0xff]
      %v287 = vld [vmem:[%s268 + $0x20] sm:$0xff]
      %v288 = vld [vmem:[%s268 + $0x28] sm:$0xff]
      %v289 = vld [vmem:[%s268 + $0x30] sm:$0xff]
      %v290 = vld [vmem:[%s268 + $0x38] sm:$0xff]
      %v291 = vld [vmem:[%s268 + $0x40] sm:$0xff]
      %v292 = vld [vmem:[%s268 + $0x48] sm:$0xff]
      %v293 = vld [vmem:[%s268 + $0x50] sm:$0xff]
      %v294 = vld [vmem:[%s268 + $0x58] sm:$0xff]
      %v295 = vld [vmem:[%s268 + $0x60] sm:$0xff]
      %v296 = vld [vmem:[%s268 + $0x68] sm:$0xff]
      %v297 = vld [vmem:[%s268 + $0x70] sm:$0xff]
      %v298 = vld [vmem:[%s268 + $0x78] sm:$0xff]
      %v299 = vld [vmem:[%s268 + $0x80] sm:$0xff]
      %v300 = vld [vmem:[%s268 + $0x88] sm:$0xff]
      %v301 = vld [vmem:[%s268 + $0x90] sm:$0xff]
      %v302 = vld [vmem:[%s268 + $0x98] sm:$0xff]
      %v303 = vld [vmem:[%s268 + $0xa0] sm:$0xff]
      %v304 = vld [vmem:[%s268 + $0xa8] sm:$0xff]
      %v305 = vld [vmem:[%s268 + $0xb0] sm:$0xff]
      %v306 = vld [vmem:[%s268 + $0xb8] sm:$0xff]
      %v307 = vld [vmem:[%s268 + $0xc0] sm:$0xff]
      %v308 = vld [vmem:[%s268 + $0xc8] sm:$0xff]
      %v309 = vld [vmem:[%s268 + $0xd0] sm:$0xff]
      %v310 = vld [vmem:[%s268 + $0xd8] sm:$0xff]
      %v311 = vld [vmem:[%s268 + $0xe0] sm:$0xff]
      %v312 = vld [vmem:[%s268 + $0xe8] sm:$0xff]
      %v313 = vld [vmem:[%s268 + $0xf0] sm:$0xff]
      %v314 = vld [vmem:[%s268 + $0xf8] sm:$0xff]
      %v315 = vld [vmem:[%s2] sm:$0xf]
      %v316 = vld [vmem:[%s2 + $0x4] sm:$0xf]
      %v317 = vld [vmem:[%s2 + $0x8] sm:$0xf]
      %v318 = vld [vmem:[%s2 + $0xc] sm:$0xf]
      %v319 = vld [vmem:[%s2 + $0x10] sm:$0xf]
      %v320 = vld [vmem:[%s2 + $0x14] sm:$0xf]
      %v321 = vld [vmem:[%s2 + $0x18] sm:$0xf]
      %v322 = vld [vmem:[%s2 + $0x1c] sm:$0xf]
      %v323 = vld [vmem:[%s2 + $0x20] sm:$0xf]
      %v324 = vld [vmem:[%s2 + $0x24] sm:$0xf]
      %v325 = vld [vmem:[%s2 + $0x28] sm:$0xf]
      %v326 = vld [vmem:[%s2 + $0x2c] sm:$0xf]
      %v327 = vld [vmem:[%s2 + $0x30] sm:$0xf]
      %v328 = vld [vmem:[%s2 + $0x34] sm:$0xf]
      %v329 = vld [vmem:[%s2 + $0x38] sm:$0xf]
      %v330 = vld [vmem:[%s2 + $0x3c] sm:$0xf]
      %v331 = vld [vmem:[%s2 + $0x40] sm:$0xf]
      %v332 = vld [vmem:[%s2 + $0x44] sm:$0xf]
      %v365 = vunpack.c.l.b16 %v283
      %v366 = vunpack.c.h.b16 %v283
      %v367 = vunpack.c.l.b16 %v284
      %v368 = vunpack.c.h.b16 %v284
      %v369 = vunpack.c.l.b16 %v285
      %v370 = vunpack.c.h.b16 %v285
      %v371 = vunpack.c.l.b16 %v286
      %v372 = vunpack.c.h.b16 %v286
      %v373 = vunpack.c.l.b16 %v287
      %v374 = vunpack.c.h.b16 %v287
      %v375 = vunpack.c.l.b16 %v288
      %v376 = vunpack.c.h.b16 %v288
      %v377 = vunpack.c.l.b16 %v289
      %v378 = vunpack.c.h.b16 %v289
      %v379 = vunpack.c.l.b16 %v290
      %v380 = vunpack.c.h.b16 %v290
      %v381 = vunpack.c.l.b16 %v291
      %v382 = vunpack.c.h.b16 %v291
      %v383 = vunpack.c.l.b16 %v292
      %v384 = vunpack.c.h.b16 %v292
      %v385 = vunpack.c.l.b16 %v293
      %v386 = vunpack.c.h.b16 %v293
      %v387 = vunpack.c.l.b16 %v294
      %v388 = vunpack.c.h.b16 %v294
      %v389 = vunpack.c.l.b16 %v295
      %v390 = vunpack.c.h.b16 %v295
      %v391 = vunpack.c.l.b16 %v296
      %v392 = vunpack.c.h.b16 %v296
      %v393 = vunpack.c.l.b16 %v297
      %v394 = vunpack.c.h.b16 %v297
      %v395 = vunpack.c.l.b16 %v298
      %v396 = vunpack.c.h.b16 %v298
      %v397 = vunpack.c.l.b16 %v299
      %v398 = vunpack.c.h.b16 %v299
      %v399 = vunpack.c.l.b16 %v300
      %v400 = vunpack.c.h.b16 %v300
      %v401 = vunpack.c.l.b16 %v301
      %v402 = vunpack.c.h.b16 %v301
      %v403 = vunpack.c.l.b16 %v302
      %v404 = vunpack.c.h.b16 %v302
      %v405 = vunpack.c.l.b16 %v303
      %v406 = vunpack.c.h.b16 %v303
      %v407 = vunpack.c.l.b16 %v304
      %v408 = vunpack.c.h.b16 %v304
      %v409 = vunpack.c.l.b16 %v305
      %v410 = vunpack.c.h.b16 %v305
      %v411 = vunpack.c.l.b16 %v306
      %v412 = vunpack.c.h.b16 %v306
      %v413 = vunpack.c.l.b16 %v307
      %v414 = vunpack.c.h.b16 %v307
      %v415 = vunpack.c.l.b16 %v308
      %v416 = vunpack.c.h.b16 %v308
      %v417 = vunpack.c.l.b16 %v309
      %v418 = vunpack.c.h.b16 %v309
      %v419 = vunpack.c.l.b16 %v310
      %v420 = vunpack.c.h.b16 %v310
      %v421 = vunpack.c.l.b16 %v311
      %v422 = vunpack.c.h.b16 %v311
      %v423 = vunpack.c.l.b16 %v312
      %v424 = vunpack.c.h.b16 %v312
      %v425 = vunpack.c.l.b16 %v313
      %v426 = vunpack.c.h.b16 %v313
      %v427 = vunpack.c.l.b16 %v314
      %v428 = vunpack.c.h.b16 %v314
      %v429 = vpack.c.b16 %v367, %v365
      %v430 = vpack.c.b16 %v368, %v366
      %v431 = vpack.c.b16 %v371, %v369
      %v432 = vpack.c.b16 %v372, %v370
      %v433 = vpack.c.b16 %v375, %v373
      %v434 = vpack.c.b16 %v376, %v374
      %v435 = vpack.c.b16 %v379, %v377
      %v436 = vpack.c.b16 %v380, %v378
      %v437 = vpack.c.b16 %v383, %v381
      %v438 = vpack.c.b16 %v384, %v382
      %v439 = vpack.c.b16 %v387, %v385
      %v440 = vpack.c.b16 %v388, %v386
      %v441 = vpack.c.b16 %v391, %v389
      %v442 = vpack.c.b16 %v392, %v390
      %v443 = vpack.c.b16 %v395, %v393
      %v444 = vpack.c.b16 %v396, %v394
      %v445 = vpack.c.b16 %v399, %v397
      %v446 = vpack.c.b16 %v400, %v398
      %v447 = vpack.c.b16 %v403, %v401
      %v448 = vpack.c.b16 %v404, %v402
      %v449 = vpack.c.b16 %v407, %v405
      %v450 = vpack.c.b16 %v408, %v406
      %v451 = vpack.c.b16 %v411, %v409
      %v452 = vpack.c.b16 %v412, %v410
      %v453 = vpack.c.b16 %v415, %v413
      %v454 = vpack.c.b16 %v416, %v414
      %v455 = vpack.c.b16 %v419, %v417
      %v456 = vpack.c.b16 %v420, %v418
      %v457 = vpack.c.b16 %v423, %v421
      %v458 = vpack.c.b16 %v424, %v422
      %v459 = vpack.c.b16 %v427, %v425
      %v460 = vpack.c.b16 %v428, %v426
      %v495 = vunpack.c.l.b16 %v315
      %v496 = vunpack.c.l.b16 %v316
      %v497 = vunpack.c.l.b16 %v317
      %v498 = vunpack.c.l.b16 %v318
      %v499 = vunpack.c.l.b16 %v319
      %v500 = vunpack.c.l.b16 %v320
      %v501 = vunpack.c.l.b16 %v321
      %v502 = vunpack.c.l.b16 %v322
      %v503 = vunpack.c.l.b16 %v323
      %v504 = vunpack.c.l.b16 %v324
      %v505 = vunpack.c.l.b16 %v325
      %v506 = vunpack.c.l.b16 %v326
      %v507 = vunpack.c.l.b16 %v327
      %v508 = vunpack.c.l.b16 %v328
      %v509 = vunpack.c.l.b16 %v329
      %v510 = vunpack.c.l.b16 %v330
      %v511 = vunpack.c.l.b16 %v331
      %v512 = vunpack.c.l.b16 %v332
      %v513 = vpack.c.b16 %v496, %v495
      %v514 = vpack.c.b16 %v498, %v497
      %v515 = vpack.c.b16 %v500, %v499
      %v516 = vpack.c.b16 %v502, %v501
      %v517 = vpack.c.b16 %v504, %v503
      %v518 = vpack.c.b16 %v506, %v505
      %v519 = vpack.c.b16 %v508, %v507
      %v520 = vpack.c.b16 %v510, %v509
      %v521 = vpack.c.b16 %v512, %v511
      %vm531 = vcmask 130048
      %v533 = vsel %vm531, %v430, 0
      %v536 = vsel %vm531, %v432, 0
      %v539 = vsel %vm531, %v434, 0
      %v542 = vsel %vm531, %v436, 0
      %v545 = vsel %vm531, %v438, 0
      %v548 = vsel %vm531, %v440, 0
      %v551 = vsel %vm531, %v442, 0
      %v554 = vsel %vm531, %v444, 0
      %v557 = vsel %vm531, %v446, 0
      %v560 = vsel %vm531, %v448, 0
      %v563 = vsel %vm531, %v450, 0
      %v566 = vsel %vm531, %v452, 0
      %v569 = vsel %vm531, %v454, 0
      %v572 = vsel %vm531, %v456, 0
      %v575 = vsel %vm531, %v458, 0
      %v578 = vsel %vm531, %v460, 0
      %580 = vmatpush.bf16.msra.mxu0 %v520
      %581 = vmatpush.bf16.msra.mxu0 %v519
      %582 = vmatpush.bf16.msra.mxu0 %v518
      %583 = vmatpush.bf16.msra.mxu0 %v517
      %584 = vmatpush.bf16.msra.mxu0 %v516
      %585 = vmatpush.bf16.msra.mxu0 %v515
      %586 = vmatpush.bf16.msra.mxu0 %v514
      %587 = vmatpush.bf16.msra.mxu0 %v513
      %588 = vmatmul.bf16.gmra.mxu0 %v429
      %v589 = vpop.f32.mrf.mxu0
      %v590 = vadd.f32 0.0, %v589
      %v591 = vpop.f32.mrf.mxu0
      %v592 = vadd.f32 0.0, %v591
      %593 = vmatmul.bf16.gmra.mxu0 %v431
      %v594 = vpop.f32.mrf.mxu0
      %v595 = vadd.f32 0.0, %v594
      %v596 = vpop.f32.mrf.mxu0
      %v597 = vadd.f32 0.0, %v596
      %598 = vmatmul.bf16.gmra.mxu0 %v433
      %v599 = vpop.f32.mrf.mxu0
      %v600 = vadd.f32 0.0, %v599
      %v601 = vpop.f32.mrf.mxu0
      %v602 = vadd.f32 0.0, %v601
      %603 = vmatmul.bf16.gmra.mxu0 %v435
      %v604 = vpop.f32.mrf.mxu0
      %v605 = vadd.f32 0.0, %v604
      %v606 = vpop.f32.mrf.mxu0
      %v607 = vadd.f32 0.0, %v606
      %608 = vmatmul.bf16.gmra.mxu0 %v437
      %v609 = vpop.f32.mrf.mxu0
      %v610 = vadd.f32 0.0, %v609
      %v611 = vpop.f32.mrf.mxu0
      %v612 = vadd.f32 0.0, %v611
      %613 = vmatmul.bf16.gmra.mxu0 %v439
      %v614 = vpop.f32.mrf.mxu0
      %v615 = vadd.f32 0.0, %v614
      %v616 = vpop.f32.mrf.mxu0
      %v617 = vadd.f32 0.0, %v616
      %618 = vmatmul.bf16.gmra.mxu0 %v441
      %v619 = vpop.f32.mrf.mxu0
      %v620 = vadd.f32 0.0, %v619
      %v621 = vpop.f32.mrf.mxu0
      %v622 = vadd.f32 0.0, %v621
      %623 = vmatmul.bf16.gmra.mxu0 %v443
      %v624 = vpop.f32.mrf.mxu0
      %v625 = vadd.f32 0.0, %v624
      %v626 = vpop.f32.mrf.mxu0
      %v627 = vadd.f32 0.0, %v626
      %628 = vmatmul.bf16.gmra.mxu0 %v445
      %v629 = vpop.f32.mrf.mxu0
      %v630 = vadd.f32 0.0, %v629
      %v631 = vpop.f32.mrf.mxu0
      %v632 = vadd.f32 0.0, %v631
      %633 = vmatmul.bf16.gmra.mxu0 %v447
      %v634 = vpop.f32.mrf.mxu0
      %v635 = vadd.f32 0.0, %v634
      %v636 = vpop.f32.mrf.mxu0
      %v637 = vadd.f32 0.0, %v636
      %638 = vmatmul.bf16.gmra.mxu0 %v449
      %v639 = vpop.f32.mrf.mxu0
      %v640 = vadd.f32 0.0, %v639
      %v641 = vpop.f32.mrf.mxu0
      %v642 = vadd.f32 0.0, %v641
      %643 = vmatmul.bf16.gmra.mxu0 %v451
      %v644 = vpop.f32.mrf.mxu0
      %v645 = vadd.f32 0.0, %v644
      %v646 = vpop.f32.mrf.mxu0
      %v647 = vadd.f32 0.0, %v646
      %648 = vmatmul.bf16.gmra.mxu0 %v453
      %v649 = vpop.f32.mrf.mxu0
      %v650 = vadd.f32 0.0, %v649
      %v651 = vpop.f32.mrf.mxu0
      %v652 = vadd.f32 0.0, %v651
      %653 = vmatmul.bf16.gmra.mxu0 %v455
      %v654 = vpop.f32.mrf.mxu0
      %v655 = vadd.f32 0.0, %v654
      %v656 = vpop.f32.mrf.mxu0
      %v657 = vadd.f32 0.0, %v656
      %658 = vmatmul.bf16.gmra.mxu0 %v457
      %v659 = vpop.f32.mrf.mxu0
      %v660 = vadd.f32 0.0, %v659
      %v661 = vpop.f32.mrf.mxu0
      %v662 = vadd.f32 0.0, %v661
      %663 = vmatmul.bf16.gmra.mxu0 %v459
      %v664 = vpop.f32.mrf.mxu0
      %v665 = vadd.f32 0.0, %v664
      %v666 = vpop.f32.mrf.mxu0
      %v667 = vadd.f32 0.0, %v666
      %668 = vdwg.mxu0
      %669 = vmatpush.bf16.msra.mxu0 0
      %670 = vmatpush.bf16.msra.mxu0 0
      %671 = vmatpush.bf16.msra.mxu0 0
      %672 = vmatpush.bf16.msra.mxu0 0
      %673 = vmatpush.bf16.msra.mxu0 0
      %674 = vmatpush.bf16.msra.mxu0 0
      %675 = vmatpush.bf16.msra.mxu0 0
      %676 = vmatpush.bf16.msra.mxu0 %v521
      %677 = vmatmul.bf16.gmra.mxu0 %v533
      %v678 = vpop.f32.mrf.mxu0
      %v679 = vadd.f32 %v590, %v678
      %v680 = vpop.f32.mrf.mxu0
      %v681 = vadd.f32 %v592, %v680
      %682 = vmatmul.bf16.gmra.mxu0 %v536
      %v683 = vpop.f32.mrf.mxu0
      %v684 = vadd.f32 %v595, %v683
      %v685 = vpop.f32.mrf.mxu0
      %v686 = vadd.f32 %v597, %v685
      %687 = vmatmul.bf16.gmra.mxu0 %v539
      %v688 = vpop.f32.mrf.mxu0
      %v689 = vadd.f32 %v600, %v688
      %v690 = vpop.f32.mrf.mxu0
      %v691 = vadd.f32 %v602, %v690
      %692 = vmatmul.bf16.gmra.mxu0 %v542
      %v693 = vpop.f32.mrf.mxu0
      %v694 = vadd.f32 %v605, %v693
      %v695 = vpop.f32.mrf.mxu0
      %v696 = vadd.f32 %v607, %v695
      %697 = vmatmul.bf16.gmra.mxu0 %v545
      %v698 = vpop.f32.mrf.mxu0
      %v699 = vadd.f32 %v610, %v698
      %v700 = vpop.f32.mrf.mxu0
      %v701 = vadd.f32 %v612, %v700
      %702 = vmatmul.bf16.gmra.mxu0 %v548
      %v703 = vpop.f32.mrf.mxu0
      %v704 = vadd.f32 %v615, %v703
      %v705 = vpop.f32.mrf.mxu0
      %v706 = vadd.f32 %v617, %v705
      %707 = vmatmul.bf16.gmra.mxu0 %v551
      %v708 = vpop.f32.mrf.mxu0
      %v709 = vadd.f32 %v620, %v708
      %v710 = vpop.f32.mrf.mxu0
      %v711 = vadd.f32 %v622, %v710
      %712 = vmatmul.bf16.gmra.mxu0 %v554
      %v713 = vpop.f32.mrf.mxu0
      %v714 = vadd.f32 %v625, %v713
      %v715 = vpop.f32.mrf.mxu0
      %v716 = vadd.f32 %v627, %v715
      %717 = vmatmul.bf16.gmra.mxu0 %v557
      %v718 = vpop.f32.mrf.mxu0
      %v719 = vadd.f32 %v630, %v718
      %v720 = vpop.f32.mrf.mxu0
      %v721 = vadd.f32 %v632, %v720
      %722 = vmatmul.bf16.gmra.mxu0 %v560
      %v723 = vpop.f32.mrf.mxu0
      %v724 = vadd.f32 %v635, %v723
      %v725 = vpop.f32.mrf.mxu0
      %v726 = vadd.f32 %v637, %v725
      %727 = vmatmul.bf16.gmra.mxu0 %v563
      %v728 = vpop.f32.mrf.mxu0
      %v729 = vadd.f32 %v640, %v728
      %v730 = vpop.f32.mrf.mxu0
      %v731 = vadd.f32 %v642, %v730
      %732 = vmatmul.bf16.gmra.mxu0 %v566
      %v733 = vpop.f32.mrf.mxu0
      %v734 = vadd.f32 %v645, %v733
      %v735 = vpop.f32.mrf.mxu0
      %v736 = vadd.f32 %v647, %v735
      %737 = vmatmul.bf16.gmra.mxu0 %v569
      %v738 = vpop.f32.mrf.mxu0
      %v739 = vadd.f32 %v650, %v738
      %v740 = vpop.f32.mrf.mxu0
      %v741 = vadd.f32 %v652, %v740
      %742 = vmatmul.bf16.gmra.mxu0 %v572
      %v743 = vpop.f32.mrf.mxu0
      %v744 = vadd.f32 %v655, %v743
      %v745 = vpop.f32.mrf.mxu0
      %v746 = vadd.f32 %v657, %v745
      %747 = vmatmul.bf16.gmra.mxu0 %v575
      %v748 = vpop.f32.mrf.mxu0
      %v749 = vadd.f32 %v660, %v748
      %v750 = vpop.f32.mrf.mxu0
      %v751 = vadd.f32 %v662, %v750
      %752 = vmatmul.bf16.gmra.mxu0 %v578
      %v753 = vpop.f32.mrf.mxu0
      %v754 = vadd.f32 %v665, %v753
      %v755 = vpop.f32.mrf.mxu0
      %v756 = vadd.f32 %v667, %v755
      %757 = vdwg.mxu0
      %v758 = vld [vmem:[%s274] sm:$0xff]
      %v759 = vld [vmem:[%s274 + $0x8] sm:$0xff]
      %v760 = vld [vmem:[%s274 + $0x10] sm:$0xff]
      %v761 = vld [vmem:[%s274 + $0x18] sm:$0xff]
      %v762 = vld [vmem:[%s274 + $0x20] sm:$0xff]
      %v763 = vld [vmem:[%s274 + $0x28] sm:$0xff]
      %v764 = vld [vmem:[%s274 + $0x30] sm:$0xff]
      %v765 = vld [vmem:[%s274 + $0x38] sm:$0xff]
      %v766 = vld [vmem:[%s274 + $0x40] sm:$0xff]
      %v767 = vld [vmem:[%s274 + $0x48] sm:$0xff]
      %v768 = vld [vmem:[%s274 + $0x50] sm:$0xff]
      %v769 = vld [vmem:[%s274 + $0x58] sm:$0xff]
      %v770 = vld [vmem:[%s274 + $0x60] sm:$0xff]
      %v771 = vld [vmem:[%s274 + $0x68] sm:$0xff]
      %v772 = vld [vmem:[%s274 + $0x70] sm:$0xff]
      %v773 = vld [vmem:[%s274 + $0x78] sm:$0xff]
      %v774 = vld [vmem:[%s274 + $0x80] sm:$0xff]
      %v775 = vld [vmem:[%s274 + $0x88] sm:$0xff]
      %v776 = vld [vmem:[%s274 + $0x90] sm:$0xff]
      %v777 = vld [vmem:[%s274 + $0x98] sm:$0xff]
      %v778 = vld [vmem:[%s274 + $0xa0] sm:$0xff]
      %v779 = vld [vmem:[%s274 + $0xa8] sm:$0xff]
      %v780 = vld [vmem:[%s274 + $0xb0] sm:$0xff]
      %v781 = vld [vmem:[%s274 + $0xb8] sm:$0xff]
      %v782 = vld [vmem:[%s274 + $0xc0] sm:$0xff]
      %v783 = vld [vmem:[%s274 + $0xc8] sm:$0xff]
      %v784 = vld [vmem:[%s274 + $0xd0] sm:$0xff]
      %v785 = vld [vmem:[%s274 + $0xd8] sm:$0xff]
      %v786 = vld [vmem:[%s274 + $0xe0] sm:$0xff]
      %v787 = vld [vmem:[%s274 + $0xe8] sm:$0xff]
      %v788 = vld [vmem:[%s274 + $0xf0] sm:$0xff]
      %v789 = vld [vmem:[%s274 + $0xf8] sm:$0xff]
      %vm790 = vcmask 72704
      %v791 = vsel %vm790, %v758, 0.0
      %792 = vadd.xlane.f32.xlu0 %v791
      %v793 = vpop.xlane.xlu0 %792
      %v794 = vsel %vm790, %v759, 0.0
      %795 = vadd.xlane.f32.xlu0 %v794
      %v796 = vpop.xlane.xlu0 %795
      %v797 = vsel %vm790, %v760, 0.0
      %798 = vadd.xlane.f32.xlu0 %v797
      %v799 = vpop.xlane.xlu0 %798
      %v800 = vsel %vm790, %v761, 0.0
      %801 = vadd.xlane.f32.xlu0 %v800
      %v802 = vpop.xlane.xlu0 %801
      %v803 = vsel %vm790, %v762, 0.0
      %804 = vadd.xlane.f32.xlu0 %v803
      %v805 = vpop.xlane.xlu0 %804
      %v806 = vsel %vm790, %v763, 0.0
      %807 = vadd.xlane.f32.xlu0 %v806
      %v808 = vpop.xlane.xlu0 %807
      %v809 = vsel %vm790, %v764, 0.0
      %810 = vadd.xlane.f32.xlu0 %v809
      %v811 = vpop.xlane.xlu0 %810
      %v812 = vsel %vm790, %v765, 0.0
      %813 = vadd.xlane.f32.xlu0 %v812
      %v814 = vpop.xlane.xlu0 %813
      %v815 = vsel %vm790, %v766, 0.0
      %816 = vadd.xlane.f32.xlu0 %v815
      %v817 = vpop.xlane.xlu0 %816
      %v818 = vsel %vm790, %v767, 0.0
      %819 = vadd.xlane.f32.xlu0 %v818
      %v820 = vpop.xlane.xlu0 %819
      %v821 = vsel %vm790, %v768, 0.0
      %822 = vadd.xlane.f32.xlu0 %v821
      %v823 = vpop.xlane.xlu0 %822
      %v824 = vsel %vm790, %v769, 0.0
      %825 = vadd.xlane.f32.xlu0 %v824
      %v826 = vpop.xlane.xlu0 %825
      %v827 = vsel %vm790, %v770, 0.0
      %828 = vadd.xlane.f32.xlu0 %v827
      %v829 = vpop.xlane.xlu0 %828
      %v830 = vsel %vm790, %v771, 0.0
      %831 = vadd.xlane.f32.xlu0 %v830
      %v832 = vpop.xlane.xlu0 %831
      %v833 = vsel %vm790, %v772, 0.0
      %834 = vadd.xlane.f32.xlu0 %v833
      %v835 = vpop.xlane.xlu0 %834
      %v836 = vsel %vm790, %v773, 0.0
      %837 = vadd.xlane.f32.xlu0 %v836
      %v838 = vpop.xlane.xlu0 %837
      %v839 = vsel %vm790, %v774, 0.0
      %840 = vadd.xlane.f32.xlu0 %v839
      %v841 = vpop.xlane.xlu0 %840
      %v842 = vsel %vm790, %v775, 0.0
      %843 = vadd.xlane.f32.xlu0 %v842
      %v844 = vpop.xlane.xlu0 %843
      %v845 = vsel %vm790, %v776, 0.0
      %846 = vadd.xlane.f32.xlu0 %v845
      %v847 = vpop.xlane.xlu0 %846
      %v848 = vsel %vm790, %v777, 0.0
      %849 = vadd.xlane.f32.xlu0 %v848
      %v850 = vpop.xlane.xlu0 %849
      %v851 = vsel %vm790, %v778, 0.0
      %852 = vadd.xlane.f32.xlu0 %v851
      %v853 = vpop.xlane.xlu0 %852
      %v854 = vsel %vm790, %v779, 0.0
      %855 = vadd.xlane.f32.xlu0 %v854
      %v856 = vpop.xlane.xlu0 %855
      %v857 = vsel %vm790, %v780, 0.0
      %858 = vadd.xlane.f32.xlu0 %v857
      %v859 = vpop.xlane.xlu0 %858
      %v860 = vsel %vm790, %v781, 0.0
      %861 = vadd.xlane.f32.xlu0 %v860
      %v862 = vpop.xlane.xlu0 %861
      %v863 = vsel %vm790, %v782, 0.0
      %864 = vadd.xlane.f32.xlu0 %v863
      %v865 = vpop.xlane.xlu0 %864
      %v866 = vsel %vm790, %v783, 0.0
      %867 = vadd.xlane.f32.xlu0 %v866
      %v868 = vpop.xlane.xlu0 %867
      %v869 = vsel %vm790, %v784, 0.0
      %870 = vadd.xlane.f32.xlu0 %v869
      %v871 = vpop.xlane.xlu0 %870
      %v872 = vsel %vm790, %v785, 0.0
      %873 = vadd.xlane.f32.xlu0 %v872
      %v874 = vpop.xlane.xlu0 %873
      %v875 = vsel %vm790, %v786, 0.0
      %876 = vadd.xlane.f32.xlu0 %v875
      %v877 = vpop.xlane.xlu0 %876
      %v878 = vsel %vm790, %v787, 0.0
      %879 = vadd.xlane.f32.xlu0 %v878
      %v880 = vpop.xlane.xlu0 %879
      %v881 = vsel %vm790, %v788, 0.0
      %882 = vadd.xlane.f32.xlu0 %v881
      %v883 = vpop.xlane.xlu0 %882
      %v884 = vsel %vm790, %v789, 0.0
      %885 = vadd.xlane.f32.xlu0 %v884
      %v886 = vpop.xlane.xlu0 %885
      %v887 = vadd.f32 %v793, 1e-08
      %v888 = vadd.f32 %v796, 1e-08
      %v889 = vadd.f32 %v799, 1e-08
      %v890 = vadd.f32 %v802, 1e-08
      %v891 = vadd.f32 %v805, 1e-08
      %v892 = vadd.f32 %v808, 1e-08
      %v893 = vadd.f32 %v811, 1e-08
      %v894 = vadd.f32 %v814, 1e-08
      %v895 = vadd.f32 %v817, 1e-08
      %v896 = vadd.f32 %v820, 1e-08
      %v897 = vadd.f32 %v823, 1e-08
      %v898 = vadd.f32 %v826, 1e-08
      %v899 = vadd.f32 %v829, 1e-08
      %v900 = vadd.f32 %v832, 1e-08
      %v901 = vadd.f32 %v835, 1e-08
      %v902 = vadd.f32 %v838, 1e-08
      %v903 = vadd.f32 %v841, 1e-08
      %v904 = vadd.f32 %v844, 1e-08
      %v905 = vadd.f32 %v847, 1e-08
      %v906 = vadd.f32 %v850, 1e-08
      %v907 = vadd.f32 %v853, 1e-08
      %v908 = vadd.f32 %v856, 1e-08
      %v909 = vadd.f32 %v859, 1e-08
      %v910 = vadd.f32 %v862, 1e-08
      %v911 = vadd.f32 %v865, 1e-08
      %v912 = vadd.f32 %v868, 1e-08
      %v913 = vadd.f32 %v871, 1e-08
      %v914 = vadd.f32 %v874, 1e-08
      %v915 = vadd.f32 %v877, 1e-08
      %v916 = vadd.f32 %v880, 1e-08
      %v917 = vadd.f32 %v883, 1e-08
      %v918 = vadd.f32 %v886, 1e-08
      %v919 = vrcp.pop %v887
      %v920 = vrcp.pop %v888
      %v921 = vrcp.pop %v889
      %v922 = vrcp.pop %v890
      %v923 = vrcp.pop %v891
      %v924 = vrcp.pop %v892
      %v925 = vrcp.pop %v893
      %v926 = vrcp.pop %v894
      %v927 = vrcp.pop %v895
      %v928 = vrcp.pop %v896
      %v929 = vrcp.pop %v897
      %v930 = vrcp.pop %v898
      %v931 = vrcp.pop %v899
      %v932 = vrcp.pop %v900
      %v933 = vrcp.pop %v901
      %v934 = vrcp.pop %v902
      %v935 = vrcp.pop %v903
      %v936 = vrcp.pop %v904
      %v937 = vrcp.pop %v905
      %v938 = vrcp.pop %v906
      %v939 = vrcp.pop %v907
      %v940 = vrcp.pop %v908
      %v941 = vrcp.pop %v909
      %v942 = vrcp.pop %v910
      %v943 = vrcp.pop %v911
      %v944 = vrcp.pop %v912
      %v945 = vrcp.pop %v913
      %v946 = vrcp.pop %v914
      %v947 = vrcp.pop %v915
      %v948 = vrcp.pop %v916
      %v949 = vrcp.pop %v917
      %v950 = vrcp.pop %v918
      %v951 = vmul.f32 %v679, %v919
      %v952 = vmul.f32 %v681, %v920
      %v953 = vmul.f32 %v684, %v921
      %v954 = vmul.f32 %v686, %v922
      %v955 = vmul.f32 %v689, %v923
      %v956 = vmul.f32 %v691, %v924
      %v957 = vmul.f32 %v694, %v925
      %v958 = vmul.f32 %v696, %v926
      %v959 = vmul.f32 %v699, %v927
      %v960 = vmul.f32 %v701, %v928
      %v961 = vmul.f32 %v704, %v929
      %v962 = vmul.f32 %v706, %v930
      %v963 = vmul.f32 %v709, %v931
      %v964 = vmul.f32 %v711, %v932
      %v965 = vmul.f32 %v714, %v933
      %v966 = vmul.f32 %v716, %v934
      %v967 = vmul.f32 %v719, %v935
      %v968 = vmul.f32 %v721, %v936
      %v969 = vmul.f32 %v724, %v937
      %v970 = vmul.f32 %v726, %v938
      %v971 = vmul.f32 %v729, %v939
      %v972 = vmul.f32 %v731, %v940
      %v973 = vmul.f32 %v734, %v941
      %v974 = vmul.f32 %v736, %v942
      %v975 = vmul.f32 %v739, %v943
      %v976 = vmul.f32 %v741, %v944
      %v977 = vmul.f32 %v744, %v945
      %v978 = vmul.f32 %v746, %v946
      %v979 = vmul.f32 %v749, %v947
      %v980 = vmul.f32 %v751, %v948
      %v981 = vmul.f32 %v754, %v949
      %v982 = vmul.f32 %v756, %v950
      %v983 = vld [vmem:[%s3] sm:$0x1]
      %v985 = vperm.slane %v983, 0
      %v987 = vadd.f32 %v951, %v985
      %v988 = vadd.f32 %v952, %v985
      %v989 = vadd.f32 %v953, %v985
      %v990 = vadd.f32 %v954, %v985
      %v991 = vadd.f32 %v955, %v985
      %v992 = vadd.f32 %v956, %v985
      %v993 = vadd.f32 %v957, %v985
      %v994 = vadd.f32 %v958, %v985
      %v995 = vadd.f32 %v959, %v985
      %v996 = vadd.f32 %v960, %v985
      %v997 = vadd.f32 %v961, %v985
      %v998 = vadd.f32 %v962, %v985
      %v999 = vadd.f32 %v963, %v985
      %v1000 = vadd.f32 %v964, %v985
      %v1001 = vadd.f32 %v965, %v985
      %v1002 = vadd.f32 %v966, %v985
      %v1003 = vadd.f32 %v967, %v985
      %v1004 = vadd.f32 %v968, %v985
      %v1005 = vadd.f32 %v969, %v985
      %v1006 = vadd.f32 %v970, %v985
      %v1007 = vadd.f32 %v971, %v985
      %v1008 = vadd.f32 %v972, %v985
      %v1009 = vadd.f32 %v973, %v985
      %v1010 = vadd.f32 %v974, %v985
      %v1011 = vadd.f32 %v975, %v985
      %v1012 = vadd.f32 %v976, %v985
      %v1013 = vadd.f32 %v977, %v985
      %v1014 = vadd.f32 %v978, %v985
      %v1015 = vadd.f32 %v979, %v985
      %v1016 = vadd.f32 %v980, %v985
      %v1017 = vadd.f32 %v981, %v985
      %v1018 = vadd.f32 %v982, %v985
      %v1019 = vmax.f32 %v987, 0.0
      %v1020 = vmax.f32 %v988, 0.0
      %v1021 = vmax.f32 %v989, 0.0
      %v1022 = vmax.f32 %v990, 0.0
      %v1023 = vmax.f32 %v991, 0.0
      %v1024 = vmax.f32 %v992, 0.0
      %v1025 = vmax.f32 %v993, 0.0
      %v1026 = vmax.f32 %v994, 0.0
      %v1027 = vmax.f32 %v995, 0.0
      %v1028 = vmax.f32 %v996, 0.0
      %v1029 = vmax.f32 %v997, 0.0
      %v1030 = vmax.f32 %v998, 0.0
      %v1031 = vmax.f32 %v999, 0.0
      %v1032 = vmax.f32 %v1000, 0.0
      %v1033 = vmax.f32 %v1001, 0.0
      %v1034 = vmax.f32 %v1002, 0.0
      %v1035 = vmax.f32 %v1003, 0.0
      %v1036 = vmax.f32 %v1004, 0.0
      %v1037 = vmax.f32 %v1005, 0.0
      %v1038 = vmax.f32 %v1006, 0.0
      %v1039 = vmax.f32 %v1007, 0.0
      %v1040 = vmax.f32 %v1008, 0.0
      %v1041 = vmax.f32 %v1009, 0.0
      %v1042 = vmax.f32 %v1010, 0.0
      %v1043 = vmax.f32 %v1011, 0.0
      %v1044 = vmax.f32 %v1012, 0.0
      %v1045 = vmax.f32 %v1013, 0.0
      %v1046 = vmax.f32 %v1014, 0.0
      %v1047 = vmax.f32 %v1015, 0.0
      %v1048 = vmax.f32 %v1016, 0.0
      %v1049 = vmax.f32 %v1017, 0.0
      %v1050 = vmax.f32 %v1018, 0.0
      %v1051 = vsel %vm790, %v758, -inf
      %1052 = vmax.xlane.f32.xlu0 %v1051
      %v1053 = vpop.xlane.xlu0 %1052
      %v1054 = vsel %vm790, %v759, -inf
      %1055 = vmax.xlane.f32.xlu0 %v1054
      %v1056 = vpop.xlane.xlu0 %1055
      %v1057 = vsel %vm790, %v760, -inf
      %1058 = vmax.xlane.f32.xlu0 %v1057
      %v1059 = vpop.xlane.xlu0 %1058
      %v1060 = vsel %vm790, %v761, -inf
      %1061 = vmax.xlane.f32.xlu0 %v1060
      %v1062 = vpop.xlane.xlu0 %1061
      %v1063 = vsel %vm790, %v762, -inf
      %1064 = vmax.xlane.f32.xlu0 %v1063
      %v1065 = vpop.xlane.xlu0 %1064
      %v1066 = vsel %vm790, %v763, -inf
      %1067 = vmax.xlane.f32.xlu0 %v1066
      %v1068 = vpop.xlane.xlu0 %1067
      %v1069 = vsel %vm790, %v764, -inf
      %1070 = vmax.xlane.f32.xlu0 %v1069
      %v1071 = vpop.xlane.xlu0 %1070
      %v1072 = vsel %vm790, %v765, -inf
      %1073 = vmax.xlane.f32.xlu0 %v1072
      %v1074 = vpop.xlane.xlu0 %1073
      %v1075 = vsel %vm790, %v766, -inf
      %1076 = vmax.xlane.f32.xlu0 %v1075
      %v1077 = vpop.xlane.xlu0 %1076
      %v1078 = vsel %vm790, %v767, -inf
      %1079 = vmax.xlane.f32.xlu0 %v1078
      %v1080 = vpop.xlane.xlu0 %1079
      %v1081 = vsel %vm790, %v768, -inf
      %1082 = vmax.xlane.f32.xlu0 %v1081
      %v1083 = vpop.xlane.xlu0 %1082
      %v1084 = vsel %vm790, %v769, -inf
      %1085 = vmax.xlane.f32.xlu0 %v1084
      %v1086 = vpop.xlane.xlu0 %1085
      %v1087 = vsel %vm790, %v770, -inf
      %1088 = vmax.xlane.f32.xlu0 %v1087
      %v1089 = vpop.xlane.xlu0 %1088
      %v1090 = vsel %vm790, %v771, -inf
      %1091 = vmax.xlane.f32.xlu0 %v1090
      %v1092 = vpop.xlane.xlu0 %1091
      %v1093 = vsel %vm790, %v772, -inf
      %1094 = vmax.xlane.f32.xlu0 %v1093
      %v1095 = vpop.xlane.xlu0 %1094
      %v1096 = vsel %vm790, %v773, -inf
      %1097 = vmax.xlane.f32.xlu0 %v1096
      %v1098 = vpop.xlane.xlu0 %1097
      %v1099 = vsel %vm790, %v774, -inf
      %1100 = vmax.xlane.f32.xlu0 %v1099
      %v1101 = vpop.xlane.xlu0 %1100
      %v1102 = vsel %vm790, %v775, -inf
      %1103 = vmax.xlane.f32.xlu0 %v1102
      %v1104 = vpop.xlane.xlu0 %1103
      %v1105 = vsel %vm790, %v776, -inf
      %1106 = vmax.xlane.f32.xlu0 %v1105
      %v1107 = vpop.xlane.xlu0 %1106
      %v1108 = vsel %vm790, %v777, -inf
      %1109 = vmax.xlane.f32.xlu0 %v1108
      %v1110 = vpop.xlane.xlu0 %1109
      %v1111 = vsel %vm790, %v778, -inf
      %1112 = vmax.xlane.f32.xlu0 %v1111
      %v1113 = vpop.xlane.xlu0 %1112
      %v1114 = vsel %vm790, %v779, -inf
      %1115 = vmax.xlane.f32.xlu0 %v1114
      %v1116 = vpop.xlane.xlu0 %1115
      %v1117 = vsel %vm790, %v780, -inf
      %1118 = vmax.xlane.f32.xlu0 %v1117
      %v1119 = vpop.xlane.xlu0 %1118
      %v1120 = vsel %vm790, %v781, -inf
      %1121 = vmax.xlane.f32.xlu0 %v1120
      %v1122 = vpop.xlane.xlu0 %1121
      %v1123 = vsel %vm790, %v782, -inf
      %1124 = vmax.xlane.f32.xlu0 %v1123
      %v1125 = vpop.xlane.xlu0 %1124
      %v1126 = vsel %vm790, %v783, -inf
      %1127 = vmax.xlane.f32.xlu0 %v1126
      %v1128 = vpop.xlane.xlu0 %1127
      %v1129 = vsel %vm790, %v784, -inf
      %1130 = vmax.xlane.f32.xlu0 %v1129
      %v1131 = vpop.xlane.xlu0 %1130
      %v1132 = vsel %vm790, %v785, -inf
      %1133 = vmax.xlane.f32.xlu0 %v1132
      %v1134 = vpop.xlane.xlu0 %1133
      %v1135 = vsel %vm790, %v786, -inf
      %1136 = vmax.xlane.f32.xlu0 %v1135
      %v1137 = vpop.xlane.xlu0 %1136
      %v1138 = vsel %vm790, %v787, -inf
      %1139 = vmax.xlane.f32.xlu0 %v1138
      %v1140 = vpop.xlane.xlu0 %1139
      %v1141 = vsel %vm790, %v788, -inf
      %1142 = vmax.xlane.f32.xlu0 %v1141
      %v1143 = vpop.xlane.xlu0 %1142
      %v1144 = vsel %vm790, %v789, -inf
      %1145 = vmax.xlane.f32.xlu0 %v1144
      %v1146 = vpop.xlane.xlu0 %1145
      %v1147 = vmul.f32 %v1019, %v1053
      %v1148 = vmul.f32 %v1020, %v1056
      %v1149 = vmul.f32 %v1021, %v1059
      %v1150 = vmul.f32 %v1022, %v1062
      %v1151 = vmul.f32 %v1023, %v1065
      %v1152 = vmul.f32 %v1024, %v1068
      %v1153 = vmul.f32 %v1025, %v1071
      %v1154 = vmul.f32 %v1026, %v1074
      %v1155 = vmul.f32 %v1027, %v1077
      %v1156 = vmul.f32 %v1028, %v1080
      %v1157 = vmul.f32 %v1029, %v1083
      %v1158 = vmul.f32 %v1030, %v1086
      %v1159 = vmul.f32 %v1031, %v1089
      %v1160 = vmul.f32 %v1032, %v1092
      %v1161 = vmul.f32 %v1033, %v1095
      %v1162 = vmul.f32 %v1034, %v1098
      %v1163 = vmul.f32 %v1035, %v1101
      %v1164 = vmul.f32 %v1036, %v1104
      %v1165 = vmul.f32 %v1037, %v1107
      %v1166 = vmul.f32 %v1038, %v1110
      %v1167 = vmul.f32 %v1039, %v1113
      %v1168 = vmul.f32 %v1040, %v1116
      %v1169 = vmul.f32 %v1041, %v1119
      %v1170 = vmul.f32 %v1042, %v1122
      %v1171 = vmul.f32 %v1043, %v1125
      %v1172 = vmul.f32 %v1044, %v1128
      %v1173 = vmul.f32 %v1045, %v1131
      %v1174 = vmul.f32 %v1046, %v1134
      %v1175 = vmul.f32 %v1047, %v1137
      %v1176 = vmul.f32 %v1048, %v1140
      %v1177 = vmul.f32 %v1049, %v1143
      %v1178 = vmul.f32 %v1050, %v1146
      %v1179 = vld [vmem:[%s4] sm:$0x1]
      %v1181 = vperm.slane %v1179, 0
      %v1183 = vmul.f32 %v1147, %v1181
      %v1184 = vmul.f32 %v1148, %v1181
      %v1185 = vmul.f32 %v1149, %v1181
      %v1186 = vmul.f32 %v1150, %v1181
      %v1187 = vmul.f32 %v1151, %v1181
      %v1188 = vmul.f32 %v1152, %v1181
      %v1189 = vmul.f32 %v1153, %v1181
      %v1190 = vmul.f32 %v1154, %v1181
      %v1191 = vmul.f32 %v1155, %v1181
      %v1192 = vmul.f32 %v1156, %v1181
      %v1193 = vmul.f32 %v1157, %v1181
      %v1194 = vmul.f32 %v1158, %v1181
      %v1195 = vmul.f32 %v1159, %v1181
      %v1196 = vmul.f32 %v1160, %v1181
      %v1197 = vmul.f32 %v1161, %v1181
      %v1198 = vmul.f32 %v1162, %v1181
      %v1199 = vmul.f32 %v1163, %v1181
      %v1200 = vmul.f32 %v1164, %v1181
      %v1201 = vmul.f32 %v1165, %v1181
      %v1202 = vmul.f32 %v1166, %v1181
      %v1203 = vmul.f32 %v1167, %v1181
      %v1204 = vmul.f32 %v1168, %v1181
      %v1205 = vmul.f32 %v1169, %v1181
      %v1206 = vmul.f32 %v1170, %v1181
      %v1207 = vmul.f32 %v1171, %v1181
      %v1208 = vmul.f32 %v1172, %v1181
      %v1209 = vmul.f32 %v1173, %v1181
      %v1210 = vmul.f32 %v1174, %v1181
      %v1211 = vmul.f32 %v1175, %v1181
      %v1212 = vmul.f32 %v1176, %v1181
      %v1213 = vmul.f32 %v1177, %v1181
      %v1214 = vmul.f32 %v1178, %v1181
      %v1215 = vsel %vm531, %v1183, 0.0
      %1216 = vadd.xlane.f32.xlu0 %v1215
      %v1217 = vpop.xlane.xlu0 %1216
      %v1218 = vsel %vm531, %v1184, 0.0
      %1219 = vadd.xlane.f32.xlu0 %v1218
      %v1220 = vpop.xlane.xlu0 %1219
      %v1221 = vsel %vm531, %v1185, 0.0
      %1222 = vadd.xlane.f32.xlu0 %v1221
      %v1223 = vpop.xlane.xlu0 %1222
      %v1224 = vsel %vm531, %v1186, 0.0
      %1225 = vadd.xlane.f32.xlu0 %v1224
      %v1226 = vpop.xlane.xlu0 %1225
      %v1227 = vsel %vm531, %v1187, 0.0
      %1228 = vadd.xlane.f32.xlu0 %v1227
      %v1229 = vpop.xlane.xlu0 %1228
      %v1230 = vsel %vm531, %v1188, 0.0
      %1231 = vadd.xlane.f32.xlu0 %v1230
      %v1232 = vpop.xlane.xlu0 %1231
      %v1233 = vsel %vm531, %v1189, 0.0
      %1234 = vadd.xlane.f32.xlu0 %v1233
      %v1235 = vpop.xlane.xlu0 %1234
      %v1236 = vsel %vm531, %v1190, 0.0
      %1237 = vadd.xlane.f32.xlu0 %v1236
      %v1238 = vpop.xlane.xlu0 %1237
      %v1239 = vsel %vm531, %v1191, 0.0
      %1240 = vadd.xlane.f32.xlu0 %v1239
      %v1241 = vpop.xlane.xlu0 %1240
      %v1242 = vsel %vm531, %v1192, 0.0
      %1243 = vadd.xlane.f32.xlu0 %v1242
      %v1244 = vpop.xlane.xlu0 %1243
      %v1245 = vsel %vm531, %v1193, 0.0
      %1246 = vadd.xlane.f32.xlu0 %v1245
      %v1247 = vpop.xlane.xlu0 %1246
      %v1248 = vsel %vm531, %v1194, 0.0
      %1249 = vadd.xlane.f32.xlu0 %v1248
      %v1250 = vpop.xlane.xlu0 %1249
      %v1251 = vsel %vm531, %v1195, 0.0
      %1252 = vadd.xlane.f32.xlu0 %v1251
      %v1253 = vpop.xlane.xlu0 %1252
      %v1254 = vsel %vm531, %v1196, 0.0
      %1255 = vadd.xlane.f32.xlu0 %v1254
      %v1256 = vpop.xlane.xlu0 %1255
      %v1257 = vsel %vm531, %v1197, 0.0
      %1258 = vadd.xlane.f32.xlu0 %v1257
      %v1259 = vpop.xlane.xlu0 %1258
      %v1260 = vsel %vm531, %v1198, 0.0
      %1261 = vadd.xlane.f32.xlu0 %v1260
      %v1262 = vpop.xlane.xlu0 %1261
      %v1263 = vsel %vm531, %v1199, 0.0
      %1264 = vadd.xlane.f32.xlu0 %v1263
      %v1265 = vpop.xlane.xlu0 %1264
      %v1266 = vsel %vm531, %v1200, 0.0
      %1267 = vadd.xlane.f32.xlu0 %v1266
      %v1268 = vpop.xlane.xlu0 %1267
      %v1269 = vsel %vm531, %v1201, 0.0
      %1270 = vadd.xlane.f32.xlu0 %v1269
      %v1271 = vpop.xlane.xlu0 %1270
      %v1272 = vsel %vm531, %v1202, 0.0
      %1273 = vadd.xlane.f32.xlu0 %v1272
      %v1274 = vpop.xlane.xlu0 %1273
      %v1275 = vsel %vm531, %v1203, 0.0
      %1276 = vadd.xlane.f32.xlu0 %v1275
      %v1277 = vpop.xlane.xlu0 %1276
      %v1278 = vsel %vm531, %v1204, 0.0
      %1279 = vadd.xlane.f32.xlu0 %v1278
      %v1280 = vpop.xlane.xlu0 %1279
      %v1281 = vsel %vm531, %v1205, 0.0
      %1282 = vadd.xlane.f32.xlu0 %v1281
      %v1283 = vpop.xlane.xlu0 %1282
      %v1284 = vsel %vm531, %v1206, 0.0
      %1285 = vadd.xlane.f32.xlu0 %v1284
      %v1286 = vpop.xlane.xlu0 %1285
      %v1287 = vsel %vm531, %v1207, 0.0
      %1288 = vadd.xlane.f32.xlu0 %v1287
      %v1289 = vpop.xlane.xlu0 %1288
      %v1290 = vsel %vm531, %v1208, 0.0
      %1291 = vadd.xlane.f32.xlu0 %v1290
      %v1292 = vpop.xlane.xlu0 %1291
      %v1293 = vsel %vm531, %v1209, 0.0
      %1294 = vadd.xlane.f32.xlu0 %v1293
      %v1295 = vpop.xlane.xlu0 %1294
      %v1296 = vsel %vm531, %v1210, 0.0
      %1297 = vadd.xlane.f32.xlu0 %v1296
      %v1298 = vpop.xlane.xlu0 %1297
      %v1299 = vsel %vm531, %v1211, 0.0
      %1300 = vadd.xlane.f32.xlu0 %v1299
      %v1301 = vpop.xlane.xlu0 %1300
      %v1302 = vsel %vm531, %v1212, 0.0
      %1303 = vadd.xlane.f32.xlu0 %v1302
      %v1304 = vpop.xlane.xlu0 %1303
      %v1305 = vsel %vm531, %v1213, 0.0
      %1306 = vadd.xlane.f32.xlu0 %v1305
      %v1307 = vpop.xlane.xlu0 %1306
      %v1308 = vsel %vm531, %v1214, 0.0
      %1309 = vadd.xlane.f32.xlu0 %v1308
      %v1310 = vpop.xlane.xlu0 %1309
      %v1311 = vadd.f32 %v1053, 1e-08
      %v1312 = vadd.f32 %v1056, 1e-08
      %v1313 = vadd.f32 %v1059, 1e-08
      %v1314 = vadd.f32 %v1062, 1e-08
      %v1315 = vadd.f32 %v1065, 1e-08
      %v1316 = vadd.f32 %v1068, 1e-08
      %v1317 = vadd.f32 %v1071, 1e-08
      %v1318 = vadd.f32 %v1074, 1e-08
      %v1319 = vadd.f32 %v1077, 1e-08
      %v1320 = vadd.f32 %v1080, 1e-08
      %v1321 = vadd.f32 %v1083, 1e-08
      %v1322 = vadd.f32 %v1086, 1e-08
      %v1323 = vadd.f32 %v1089, 1e-08
      %v1324 = vadd.f32 %v1092, 1e-08
      %v1325 = vadd.f32 %v1095, 1e-08
      %v1326 = vadd.f32 %v1098, 1e-08
      %v1327 = vadd.f32 %v1101, 1e-08
      %v1328 = vadd.f32 %v1104, 1e-08
      %v1329 = vadd.f32 %v1107, 1e-08
      %v1330 = vadd.f32 %v1110, 1e-08
      %v1331 = vadd.f32 %v1113, 1e-08
      %v1332 = vadd.f32 %v1116, 1e-08
      %v1333 = vadd.f32 %v1119, 1e-08
      %v1334 = vadd.f32 %v1122, 1e-08
      %v1335 = vadd.f32 %v1125, 1e-08
      %v1336 = vadd.f32 %v1128, 1e-08
      %v1337 = vadd.f32 %v1131, 1e-08
      %v1338 = vadd.f32 %v1134, 1e-08
      %v1339 = vadd.f32 %v1137, 1e-08
      %v1340 = vadd.f32 %v1140, 1e-08
      %v1341 = vadd.f32 %v1143, 1e-08
      %v1342 = vadd.f32 %v1146, 1e-08
      %v1343 = vrcp.pop %v1311
      %v1344 = vrcp.pop %v1312
      %v1345 = vrcp.pop %v1313
      %v1346 = vrcp.pop %v1314
      %v1347 = vrcp.pop %v1315
      %v1348 = vrcp.pop %v1316
      %v1349 = vrcp.pop %v1317
      %v1350 = vrcp.pop %v1318
      %v1351 = vrcp.pop %v1319
      %v1352 = vrcp.pop %v1320
      %v1353 = vrcp.pop %v1321
      %v1354 = vrcp.pop %v1322
      %v1355 = vrcp.pop %v1323
      %v1356 = vrcp.pop %v1324
      %v1357 = vrcp.pop %v1325
      %v1358 = vrcp.pop %v1326
      %v1359 = vrcp.pop %v1327
      %v1360 = vrcp.pop %v1328
      %v1361 = vrcp.pop %v1329
      %v1362 = vrcp.pop %v1330
      %v1363 = vrcp.pop %v1331
      %v1364 = vrcp.pop %v1332
      %v1365 = vrcp.pop %v1333
      %v1366 = vrcp.pop %v1334
      %v1367 = vrcp.pop %v1335
      %v1368 = vrcp.pop %v1336
      %v1369 = vrcp.pop %v1337
      %v1370 = vrcp.pop %v1338
      %v1371 = vrcp.pop %v1339
      %v1372 = vrcp.pop %v1340
      %v1373 = vrcp.pop %v1341
      %v1374 = vrcp.pop %v1342
      %v1375 = vmul.f32 %v1217, %v1343
      %v1376 = vmul.f32 %v1220, %v1344
      %v1377 = vmul.f32 %v1223, %v1345
      %v1378 = vmul.f32 %v1226, %v1346
      %v1379 = vmul.f32 %v1229, %v1347
      %v1380 = vmul.f32 %v1232, %v1348
      %v1381 = vmul.f32 %v1235, %v1349
      %v1382 = vmul.f32 %v1238, %v1350
      %v1383 = vmul.f32 %v1241, %v1351
      %v1384 = vmul.f32 %v1244, %v1352
      %v1385 = vmul.f32 %v1247, %v1353
      %v1386 = vmul.f32 %v1250, %v1354
      %v1387 = vmul.f32 %v1253, %v1355
      %v1388 = vmul.f32 %v1256, %v1356
      %v1389 = vmul.f32 %v1259, %v1357
      %v1390 = vmul.f32 %v1262, %v1358
      %v1391 = vmul.f32 %v1265, %v1359
      %v1392 = vmul.f32 %v1268, %v1360
      %v1393 = vmul.f32 %v1271, %v1361
      %v1394 = vmul.f32 %v1274, %v1362
      %v1395 = vmul.f32 %v1277, %v1363
      %v1396 = vmul.f32 %v1280, %v1364
      %v1397 = vmul.f32 %v1283, %v1365
      %v1398 = vmul.f32 %v1286, %v1366
      %v1399 = vmul.f32 %v1289, %v1367
      %v1400 = vmul.f32 %v1292, %v1368
      %v1401 = vmul.f32 %v1295, %v1369
      %v1402 = vmul.f32 %v1298, %v1370
      %v1403 = vmul.f32 %v1301, %v1371
      %v1404 = vmul.f32 %v1304, %v1372
      %v1405 = vmul.f32 %v1307, %v1373
      %v1406 = vmul.f32 %v1310, %v1374
      %v1407 = vld [vmem:[#allocation2] sm:$0x1]
      %v1409 = vperm.slane %v1407, 0
      %v1411 = vadd.f32 %v1375, %v1409
      %v1412 = vadd.f32 %v1376, %v1409
      %v1413 = vadd.f32 %v1377, %v1409
      %v1414 = vadd.f32 %v1378, %v1409
      %v1415 = vadd.f32 %v1379, %v1409
      %v1416 = vadd.f32 %v1380, %v1409
      %v1417 = vadd.f32 %v1381, %v1409
      %v1418 = vadd.f32 %v1382, %v1409
      %v1419 = vadd.f32 %v1383, %v1409
      %v1420 = vadd.f32 %v1384, %v1409
      %v1421 = vadd.f32 %v1385, %v1409
      %v1422 = vadd.f32 %v1386, %v1409
      %v1423 = vadd.f32 %v1387, %v1409
      %v1424 = vadd.f32 %v1388, %v1409
      %v1425 = vadd.f32 %v1389, %v1409
      %v1426 = vadd.f32 %v1390, %v1409
      %v1427 = vadd.f32 %v1391, %v1409
      %v1428 = vadd.f32 %v1392, %v1409
      %v1429 = vadd.f32 %v1393, %v1409
      %v1430 = vadd.f32 %v1394, %v1409
      %v1431 = vadd.f32 %v1395, %v1409
      %v1432 = vadd.f32 %v1396, %v1409
      %v1433 = vadd.f32 %v1397, %v1409
      %v1434 = vadd.f32 %v1398, %v1409
      %v1435 = vadd.f32 %v1399, %v1409
      %v1436 = vadd.f32 %v1400, %v1409
      %v1437 = vadd.f32 %v1401, %v1409
      %v1438 = vadd.f32 %v1402, %v1409
      %v1439 = vadd.f32 %v1403, %v1409
      %v1440 = vadd.f32 %v1404, %v1409
      %v1441 = vadd.f32 %v1405, %v1409
      %v1442 = vadd.f32 %v1406, %v1409
      %v1443 = vmax.f32 %v1411, 0.0
      %v1444 = vmax.f32 %v1412, 0.0
      %v1445 = vmax.f32 %v1413, 0.0
      %v1446 = vmax.f32 %v1414, 0.0
      %v1447 = vmax.f32 %v1415, 0.0
      %v1448 = vmax.f32 %v1416, 0.0
      %v1449 = vmax.f32 %v1417, 0.0
      %v1450 = vmax.f32 %v1418, 0.0
      %v1451 = vmax.f32 %v1419, 0.0
      %v1452 = vmax.f32 %v1420, 0.0
      %v1453 = vmax.f32 %v1421, 0.0
      %v1454 = vmax.f32 %v1422, 0.0
      %v1455 = vmax.f32 %v1423, 0.0
      %v1456 = vmax.f32 %v1424, 0.0
      %v1457 = vmax.f32 %v1425, 0.0
      %v1458 = vmax.f32 %v1426, 0.0
      %v1459 = vmax.f32 %v1427, 0.0
      %v1460 = vmax.f32 %v1428, 0.0
      %v1461 = vmax.f32 %v1429, 0.0
      %v1462 = vmax.f32 %v1430, 0.0
      %v1463 = vmax.f32 %v1431, 0.0
      %v1464 = vmax.f32 %v1432, 0.0
      %v1465 = vmax.f32 %v1433, 0.0
      %v1466 = vmax.f32 %v1434, 0.0
      %v1467 = vmax.f32 %v1435, 0.0
      %v1468 = vmax.f32 %v1436, 0.0
      %v1469 = vmax.f32 %v1437, 0.0
      %v1470 = vmax.f32 %v1438, 0.0
      %v1471 = vmax.f32 %v1439, 0.0
      %v1472 = vmax.f32 %v1440, 0.0
      %v1473 = vmax.f32 %v1441, 0.0
      %v1474 = vmax.f32 %v1442, 0.0
      %vm1475 = vcmask 7168
      %1476 = vst.msk [vmem:[%s280] sm:$0xff] %vm1475, %v1443
      %1477 = vst.msk [vmem:[%s280 + $0x8] sm:$0xff] %vm1475, %v1444
      %1478 = vst.msk [vmem:[%s280 + $0x10] sm:$0xff] %vm1475, %v1445
      %1479 = vst.msk [vmem:[%s280 + $0x18] sm:$0xff] %vm1475, %v1446
      %1480 = vst.msk [vmem:[%s280 + $0x20] sm:$0xff] %vm1475, %v1447
      %1481 = vst.msk [vmem:[%s280 + $0x28] sm:$0xff] %vm1475, %v1448
      %1482 = vst.msk [vmem:[%s280 + $0x30] sm:$0xff] %vm1475, %v1449
      %1483 = vst.msk [vmem:[%s280 + $0x38] sm:$0xff] %vm1475, %v1450
      %1484 = vst.msk [vmem:[%s280 + $0x40] sm:$0xff] %vm1475, %v1451
      %1485 = vst.msk [vmem:[%s280 + $0x48] sm:$0xff] %vm1475, %v1452
      %1486 = vst.msk [vmem:[%s280 + $0x50] sm:$0xff] %vm1475, %v1453
      %1487 = vst.msk [vmem:[%s280 + $0x58] sm:$0xff] %vm1475, %v1454
      %1488 = vst.msk [vmem:[%s280 + $0x60] sm:$0xff] %vm1475, %v1455
      %1489 = vst.msk [vmem:[%s280 + $0x68] sm:$0xff] %vm1475, %v1456
      %1490 = vst.msk [vmem:[%s280 + $0x70] sm:$0xff] %vm1475, %v1457
      %1491 = vst.msk [vmem:[%s280 + $0x78] sm:$0xff] %vm1475, %v1458
      %1492 = vst.msk [vmem:[%s280 + $0x80] sm:$0xff] %vm1475, %v1459
      %1493 = vst.msk [vmem:[%s280 + $0x88] sm:$0xff] %vm1475, %v1460
      %1494 = vst.msk [vmem:[%s280 + $0x90] sm:$0xff] %vm1475, %v1461
      %1495 = vst.msk [vmem:[%s280 + $0x98] sm:$0xff] %vm1475, %v1462
      %1496 = vst.msk [vmem:[%s280 + $0xa0] sm:$0xff] %vm1475, %v1463
      %1497 = vst.msk [vmem:[%s280 + $0xa8] sm:$0xff] %vm1475, %v1464
      %1498 = vst.msk [vmem:[%s280 + $0xb0] sm:$0xff] %vm1475, %v1465
      %1499 = vst.msk [vmem:[%s280 + $0xb8] sm:$0xff] %vm1475, %v1466
      %1500 = vst.msk [vmem:[%s280 + $0xc0] sm:$0xff] %vm1475, %v1467
      %1501 = vst.msk [vmem:[%s280 + $0xc8] sm:$0xff] %vm1475, %v1468
      %1502 = vst.msk [vmem:[%s280 + $0xd0] sm:$0xff] %vm1475, %v1469
      %1503 = vst.msk [vmem:[%s280 + $0xd8] sm:$0xff] %vm1475, %v1470
      %1504 = vst.msk [vmem:[%s280 + $0xe0] sm:$0xff] %vm1475, %v1471
      %1505 = vst.msk [vmem:[%s280 + $0xe8] sm:$0xff] %vm1475, %v1472
      %1506 = vst.msk [vmem:[%s280 + $0xf0] sm:$0xff] %vm1475, %v1473
      %1507 = vst.msk [vmem:[%s280 + $0xf8] sm:$0xff] %vm1475, %v1474
      %s1508 = smul.u32 32, %s19
      %p1509 = scmp.lt.s32.totalorder %s1508, 63
      %s1510 = scalar_select %p1509, %s1508, 63
      %s1511 = smul.addr %s1510, 8
      %s1512 = scalar_lea.vmem %s6, %s1511
      // Predicated region
      $region45: #{_lambda_.9} parent=43 // pred_check
        %p1513 = pneg %p173
      $region46: #{_lambda_.9} parent=43 // pred_check_branch
        %1515 = sbr.rel (%p1513) target = $region48
      $region47: #{_lambda_.9} parent=43 // pred_region
        %s1516 = smul.u32 32, %s19
      $region48: #{_lambda_.9} parent=43 // pred_fallthru
        _
    $region44: #{_lambda_.9} parent=5 // pred_fallthru
      _
    %p1517 = scmp.le.s32.totalorder 2, %s14
    // Predicated region
    $region49: #{_lambda_.9} parent=5 // pred_check
      %p1518 = pneg %p1517
    $region50: #{_lambda_.9} parent=5 // pred_check_branch
      %1520 = sbr.rel (%p1518) target = $region52
    $region51: #{_lambda_.9} parent=5 // pred_region
      %s1521 = ssub.s32 %s14, 2
      // Predicated region
      $region53: #{_lambda_.9} parent=51 // pred_check
        %p1522 = pneg %p179
      $region54: #{_lambda_.9} parent=51 // pred_check_branch
        %1524 = sbr.rel (%p1522) target = $region56
      $region55: #{_lambda_.9} parent=51 // pred_region
        %s1525 = smul.u32 32, %s20
        %p1526 = scmp.lt.s32.totalorder %s1525, 63
        %s1527 = scalar_select %p1526, %s1525, 63
        %s1528 = smul.addr %s1527, 8
        %s1529 = scalar_lea.vmem %s6, %s1528
      $region56: #{_lambda_.9} parent=51 // pred_fallthru
        _
    $region52: #{_lambda_.9} parent=5 // pred_fallthru
      _
  $region6: #{_lambda_.9} parent=0 // loop_footer
    %s18 = sadd.s32 1, %s14
  $region7: #{_lambda_.9} parent=0 // loop_footer_branch
    %13 = sbr.rel target = $region3
  $region8: #{_lambda_.9} parent=0 // loop_exit
    _

</llo_original>
